<compile_context>
chip_gen: v7x
topology: tpu7x:2x2x1
jax: 0.10.0
libtpu: 0.0.40
codegen_flags: <defaults>
</compile_context>

<pallas_src>
import math

import jax
import jax.numpy as jnp
from jax.experimental import pallas as pl
from jax.experimental.pallas import tpu as pltpu

HIDDEN_SIZE = 768


def _sigmoid(v):
    # Explicit form (EUP exp + VPU add/div); sigmoid(-inf) == 0 exactly, which is
    # what the module relies on to disable the update gate.
    return 1.0 / (1.0 + jnp.exp(-v))


def _gru_kernel(x_ref, h0_ref, w_ih_ref, w_hh_ref, b_ih_ref, b_hh_ref,
                out_ref, h_state):
    t = pl.program_id(1)
    Hd = h_state.shape[-1]

    @pl.when(t == 0)
    def _():
        h_state[...] = h0_ref[...]

    h_prev = h_state[...]                       # (TB, H) f32
    x_t = x_ref[...]                            # (TB, H) f32

    gi = jnp.dot(x_t, w_ih_ref[...], preferred_element_type=jnp.float32) + b_ih_ref[...]
    gh = jnp.dot(h_prev, w_hh_ref[...], preferred_element_type=jnp.float32) + b_hh_ref[...]

    r = _sigmoid(gi[:, 0:Hd] + gh[:, 0:Hd])
    z = _sigmoid(gi[:, Hd:2 * Hd] + gh[:, Hd:2 * Hd])          # == 0 with -inf biases
    n = jnp.tanh(gi[:, 2 * Hd:3 * Hd] + r * gh[:, 2 * Hd:3 * Hd])

    h_new = (1.0 - z) * n + z * h_prev
    h_state[...] = h_new
    out_ref[...] = h_new.astype(out_ref.dtype)


def _pick_batch_tile(B):
    # Largest tile that divides B (no partial-tile masking needed); fall back to B.
    for tb in (256, 128, 64, 32, 16, 8):
        if B % tb == 0:
            return tb
    return B


def prepare_params(w_ih, w_hh, b_ih, b_hh):
    """One-time parameter plumbing (hoisted out of the forward per perf review):
    transpose the PyTorch [3H, H] weights to [H, 3H] so the kernel computes
    x @ W, and reshape biases to (1, 3H) rows."""
    return (jnp.asarray(w_ih).T, jnp.asarray(w_hh).T,
            jnp.asarray(b_ih).reshape(1, -1), jnp.asarray(b_hh).reshape(1, -1))


@jax.jit
def state_transition_forward(x, h0, w_ih_t, w_hh_t, b_ih_r, b_hh_r):
    """x: (B, T, H) f32, h0: (1, B, H) f32  ->  all hidden states (B, T, H) f32."""
    B, T, Hd = x.shape
    G = 3 * Hd
    TB = _pick_batch_tile(B)
    nb = B // TB

    x_tm = jnp.transpose(x, (1, 0, 2))          # (T, B, H) time-major
    h0_2d = h0[0]                               # (B, H)

    cost = pl.CostEstimate(
        flops=int(4 * B * T * Hd * G + 12 * B * T * Hd),
        transcendentals=int(3 * B * T * Hd),
        bytes_accessed=int(4 * (2 * B * T * Hd + B * Hd + 2 * Hd * G + 2 * G)),
    )

    out_tm = pl.pallas_call(
        _gru_kernel,
        out_shape=jax.ShapeDtypeStruct((T, B, Hd), x.dtype),
        grid_spec=pltpu.PrefetchScalarGridSpec(
            num_scalar_prefetch=0,
            grid=(nb, T),
            in_specs=[
                pl.BlockSpec((None, TB, Hd), lambda b, t: (t, b, 0)),   # x, time-major
                pl.BlockSpec((TB, Hd), lambda b, t: (b, 0)),            # h0
                pl.BlockSpec((Hd, G), lambda b, t: (0, 0)),             # W_ih^T (VMEM-resident)
                pl.BlockSpec((Hd, G), lambda b, t: (0, 0)),             # W_hh^T (VMEM-resident)
                pl.BlockSpec((1, G), lambda b, t: (0, 0)),              # b_ih
                pl.BlockSpec((1, G), lambda b, t: (0, 0)),              # b_hh
            ],
            out_specs=pl.BlockSpec((None, TB, Hd), lambda b, t: (t, b, 0)),
            scratch_shapes=[pltpu.VMEM((TB, Hd), jnp.float32)],         # carried hidden state
        ),
        compiler_params=pltpu.CompilerParams(
            dimension_semantics=("parallel", "arbitrary"),
            vmem_limit_bytes=48 * 1024 * 1024,
        ),
        cost_estimate=cost,
    )(x_tm, h0_2d, w_ih_t, w_hh_t, b_ih_r, b_hh_r)

    return jnp.transpose(out_tm, (1, 0, 2))     # back to batch-first


def gru_reference(x, h0, w_ih, w_hh, b_ih, b_hh):
    """Pure-JAX reference mirroring torch.nn.GRU's forward (gate order r, z, n)."""
    Hd = h0.shape[-1]
    hp = jax.lax.Precision.HIGHEST

    def step(h, xt):
        gi = jnp.dot(xt, w_ih.T, precision=hp) + b_ih
        gh = jnp.dot(h, w_hh.T, precision=hp) + b_hh
        r = jax.nn.sigmoid(gi[:, :Hd] + gh[:, :Hd])
        z = jax.nn.sigmoid(gi[:, Hd:2 * Hd] + gh[:, Hd:2 * Hd])
        n = jnp.tanh(gi[:, 2 * Hd:] + r * gh[:, 2 * Hd:])
        h_new = (1.0 - z) * n + z * h
        return h_new, h_new

    _, ys = jax.lax.scan(step, h0[0], jnp.transpose(x, (1, 0, 2)))
    return jnp.transpose(ys, (1, 0, 2))


def init_params(key, hidden=HIDDEN_SIZE):
    """PyTorch GRU default init U(-1/sqrt(H), 1/sqrt(H)), then the module's
    __init__ override: update-gate biases (indices H:2H) filled with -inf."""
    k1, k2, k3, k4 = jax.random.split(key, 4)
    bound = 1.0 / math.sqrt(hidden)
    w_ih = jax.random.uniform(k1, (3 * hidden, hidden), jnp.float32, -bound, bound)
    w_hh = jax.random.uniform(k2, (3 * hidden, hidden), jnp.float32, -bound, bound)
    b_ih = jax.random.uniform(k3, (3 * hidden,), jnp.float32, -bound, bound)
    b_hh = jax.random.uniform(k4, (3 * hidden,), jnp.float32, -bound, bound)
    b_ih = b_ih.at[hidden:2 * hidden].set(-jnp.inf)
    b_hh = b_hh.at[hidden:2 * hidden].set(-jnp.inf)
    return w_ih, w_hh, b_ih, b_hh


if __name__ == "__main__":
    key = jax.random.PRNGKey(0)
    k_x, k_h, k_p = jax.random.split(key, 3)

    batch, seq_len = 2, 4
    x = jax.random.normal(k_x, (batch, seq_len, HIDDEN_SIZE), jnp.float32)
    h0 = jax.random.normal(k_h, (1, batch, HIDDEN_SIZE), jnp.float32)

    w_ih, w_hh, b_ih, b_hh = init_params(k_p)
    params = prepare_params(w_ih, w_hh, b_ih, b_hh)   # hoisted: done once, not per forward

    out = state_transition_forward(x, h0, *params)
    out = jax.block_until_ready(out)

    ref = gru_reference(x, h0, w_ih, w_hh, b_ih, b_hh)
    assert out.shape == (batch, seq_len, HIDDEN_SIZE)
    max_err = float(jnp.max(jnp.abs(out - ref)))
    # Tolerance covers MXU f32 matmul pass-precision differences vs the XLA reference.
    assert jnp.allclose(out, ref, atol=2e-2, rtol=2e-2), f"max_abs_err={max_err}"

    print("KERNEL_OK")
</pallas_src>

<mosaic_0001>
module attributes {stable_mosaic.version = 11 : i64} {
  func.func @_gru_kernel(%arg0: i32, %arg1: i32, %arg2: memref<1x2x768xf32, #tpu.memory_space<vmem>>, %arg3: memref<2x768xf32, #tpu.memory_space<vmem>>, %arg4: memref<768x2304xf32, #tpu.memory_space<vmem>>, %arg5: memref<768x2304xf32, #tpu.memory_space<vmem>>, %arg6: memref<1x2304xf32, #tpu.memory_space<vmem>>, %arg7: memref<1x2304xf32, #tpu.memory_space<vmem>>, %arg8: memref<1x2x768xf32, #tpu.memory_space<vmem>>, %arg9: memref<2x768xf32, #tpu.memory_space<vmem>>) attributes {dimension_semantics = [#tpu.dimension_semantics<parallel>, #tpu.dimension_semantics<arbitrary>], iteration_bounds = array<i64: 1, 4>, scalar_prefetch = 0 : i64, scratch_operands = 1 : i64, tpu.core_type = #tpu.core_type<tc>, window_params = [{transform_indices = @transform_0, window_bounds = array<i64: 1, 2, 768>}, {transform_indices = @transform_1, window_bounds = array<i64: 2, 768>}, {pipeline_mode = #tpu.pipeline_mode<synchronous>, transform_indices = @transform_2, window_bounds = array<i64: 768, 2304>}, {pipeline_mode = #tpu.pipeline_mode<synchronous>, transform_indices = @transform_3, window_bounds = array<i64: 768, 2304>}, {pipeline_mode = #tpu.pipeline_mode<synchronous>, transform_indices = @transform_4, window_bounds = array<i64: 1, 2304>}, {pipeline_mode = #tpu.pipeline_mode<synchronous>, transform_indices = @transform_5, window_bounds = array<i64: 1, 2304>}, {transform_indices = @transform_6, window_bounds = array<i64: 1, 2, 768>}]} {
    %c0_i32 = arith.constant 0 : i32
    %0 = arith.cmpi eq, %arg1, %c0_i32 : i32
    %1 = arith.extui %0 : i1 to i32
    %c0_i32_0 = arith.constant 0 : i32
    %2 = arith.cmpi ne, %1, %c0_i32_0 : i32
    scf.if %2 {
      %c0_26 = arith.constant 0 : index
      %c0_27 = arith.constant 0 : index
      %50 = vector.load %arg3[%c0_26, %c0_27] : memref<2x768xf32, #tpu.memory_space<vmem>>, vector<2x768xf32>
      %c0_28 = arith.constant 0 : index
      %c0_29 = arith.constant 0 : index
      %51 = vector.load %arg9[%c0_28, %c0_29] : memref<2x768xf32, #tpu.memory_space<vmem>>, vector<2x768xf32>
      tpu.vector_store %arg9[%c0_28, %c0_29], %50 {strides = array<i32>} : memref<2x768xf32, #tpu.memory_space<vmem>>, vector<2x768xf32>,
    } else {
    }
    %c0 = arith.constant 0 : index
    %c0_1 = arith.constant 0 : index
    %3 = vector.load %arg9[%c0, %c0_1] : memref<2x768xf32, #tpu.memory_space<vmem>>, vector<2x768xf32>
    %c0_2 = arith.constant 0 : index
    %c0_3 = arith.constant 0 : index
    %c0_4 = arith.constant 0 : index
    %4 = vector.load %arg2[%c0_2, %c0_3, %c0_4] : memref<1x2x768xf32, #tpu.memory_space<vmem>>, vector<1x2x768xf32>
    %5 = vector.shape_cast %4 : vector<1x2x768xf32> to vector<2x768xf32>
    %c0_5 = arith.constant 0 : index
    %c0_6 = arith.constant 0 : index
    %6 = vector.load %arg4[%c0_5, %c0_6] : memref<768x2304xf32, #tpu.memory_space<vmem>>, vector<768x2304xf32>
    %cst = arith.constant dense<0.000000e+00> : vector<2x2304xf32>
    %7 = tpu.matmul %5, %6, %cst {dimension_numbers = #tpu.dot_dimension_numbers<[1], [0], [0], [1], [0, 0, 1, 1], [], []>} : vector<2x768xf32>, vector<768x2304xf32>, vector<2x2304xf32> -> vector<2x2304xf32>
    %c0_7 = arith.constant 0 : index
    %c0_8 = arith.constant 0 : index
    %8 = vector.load %arg6[%c0_7, %c0_8] : memref<1x2304xf32, #tpu.memory_space<vmem>>, vector<1x2304xf32>
    %9 = vector.broadcast %8 : vector<1x2304xf32> to vector<2x2304xf32>
    %10 = arith.addf %7, %9 : vector<2x2304xf32>
    %c0_9 = arith.constant 0 : index
    %c0_10 = arith.constant 0 : index
    %11 = vector.load %arg5[%c0_9, %c0_10] : memref<768x2304xf32, #tpu.memory_space<vmem>>, vector<768x2304xf32>
    %cst_11 = arith.constant dense<0.000000e+00> : vector<2x2304xf32>
    %12 = tpu.matmul %3, %11, %cst_11 {dimension_numbers = #tpu.dot_dimension_numbers<[1], [0], [0], [1], [0, 0, 1, 1], [], []>} : vector<2x768xf32>, vector<768x2304xf32>, vector<2x2304xf32> -> vector<2x2304xf32>
    %c0_12 = arith.constant 0 : index
    %c0_13 = arith.constant 0 : index
    %13 = vector.load %arg7[%c0_12, %c0_13] : memref<1x2304xf32, #tpu.memory_space<vmem>>, vector<1x2304xf32>
    %14 = vector.broadcast %13 : vector<1x2304xf32> to vector<2x2304xf32>
    %15 = arith.addf %12, %14 : vector<2x2304xf32>
    %16 = vector.extract_strided_slice %10 {offsets = [0, 0], sizes = [2, 768], strides = [1, 1]} : vector<2x2304xf32> to vector<2x768xf32>
    %17 = vector.extract_strided_slice %15 {offsets = [0, 0], sizes = [2, 768], strides = [1, 1]} : vector<2x2304xf32> to vector<2x768xf32>
    %18 = arith.addf %16, %17 : vector<2x768xf32>
    %cst_14 = arith.constant 0.000000e+00 : f32
    %19 = vector.broadcast %cst_14 : f32 to vector<2x768xf32>
    %20 = arith.subf %19, %18 : vector<2x768xf32>
    %21 = math.exp %20 : vector<2x768xf32>
    %cst_15 = arith.constant 1.000000e+00 : f32
    %22 = vector.broadcast %cst_15 : f32 to vector<2x768xf32>
    %23 = arith.addf %22, %21 : vector<2x768xf32>
    %cst_16 = arith.constant 1.000000e+00 : f32
    %24 = vector.broadcast %cst_16 : f32 to vector<2x768xf32>
    %25 = arith.divf %24, %23 : vector<2x768xf32>
    %26 = vector.extract_strided_slice %10 {offsets = [0, 768], sizes = [2, 768], strides = [1, 1]} : vector<2x2304xf32> to vector<2x768xf32>
    %27 = vector.extract_strided_slice %15 {offsets = [0, 768], sizes = [2, 768], strides = [1, 1]} : vector<2x2304xf32> to vector<2x768xf32>
    %28 = arith.addf %26, %27 : vector<2x768xf32>
    %cst_17 = arith.constant 0.000000e+00 : f32
    %29 = vector.broadcast %cst_17 : f32 to vector<2x768xf32>
    %30 = arith.subf %29, %28 : vector<2x768xf32>
    %31 = math.exp %30 : vector<2x768xf32>
    %cst_18 = arith.constant 1.000000e+00 : f32
    %32 = vector.broadcast %cst_18 : f32 to vector<2x768xf32>
    %33 = arith.addf %32, %31 : vector<2x768xf32>
    %cst_19 = arith.constant 1.000000e+00 : f32
    %34 = vector.broadcast %cst_19 : f32 to vector<2x768xf32>
    %35 = arith.divf %34, %33 : vector<2x768xf32>
    %36 = vector.extract_strided_slice %10 {offsets = [0, 1536], sizes = [2, 768], strides = [1, 1]} : vector<2x2304xf32> to vector<2x768xf32>
    %37 = vector.extract_strided_slice %15 {offsets = [0, 1536], sizes = [2, 768], strides = [1, 1]} : vector<2x2304xf32> to vector<2x768xf32>
    %38 = arith.mulf %25, %37 : vector<2x768xf32>
    %39 = arith.addf %36, %38 : vector<2x768xf32>
    %40 = math.tanh %39 : vector<2x768xf32>
    %cst_20 = arith.constant 1.000000e+00 : f32
    %41 = vector.broadcast %cst_20 : f32 to vector<2x768xf32>
    %42 = arith.subf %41, %35 : vector<2x768xf32>
    %43 = arith.mulf %42, %40 : vector<2x768xf32>
    %44 = arith.mulf %35, %3 : vector<2x768xf32>
    %45 = arith.addf %43, %44 : vector<2x768xf32>
    %c0_21 = arith.constant 0 : index
    %c0_22 = arith.constant 0 : index
    %46 = vector.load %arg9[%c0_21, %c0_22] : memref<2x768xf32, #tpu.memory_space<vmem>>, vector<2x768xf32>
    tpu.vector_store %arg9[%c0_21, %c0_22], %45 {strides = array<i32>} : memref<2x768xf32, #tpu.memory_space<vmem>>, vector<2x768xf32>,
    %c0_23 = arith.constant 0 : index
    %c0_24 = arith.constant 0 : index
    %c0_25 = arith.constant 0 : index
    %47 = vector.load %arg8[%c0_23, %c0_24, %c0_25] : memref<1x2x768xf32, #tpu.memory_space<vmem>>, vector<1x2x768xf32>
    %48 = vector.shape_cast %47 : vector<1x2x768xf32> to vector<2x768xf32>
    %49 = vector.shape_cast %45 : vector<2x768xf32> to vector<1x2x768xf32>
    tpu.vector_store %arg8[%c0_23, %c0_24, %c0_25], %49 {strides = array<i32>} : memref<1x2x768xf32, #tpu.memory_space<vmem>>, vector<1x2x768xf32>,
    return
  }
  func.func @transform_0(%arg0: i32, %arg1: i32) -> (i32, i32, i32) {
    %c0_i32 = arith.constant 0 : i32
    %c0_i32_0 = arith.constant 0 : i32
    return %arg1, %arg0, %c0_i32 : i32, i32, i32
  }
  func.func @transform_1(%arg0: i32, %arg1: i32) -> (i32, i32) {
    %c0_i32 = arith.constant 0 : i32
    %c0_i32_0 = arith.constant 0 : i32
    return %arg0, %c0_i32 : i32, i32
  }
  func.func @transform_2(%arg0: i32, %arg1: i32) -> (i32, i32) {
    %c0_i32 = arith.constant 0 : i32
    %c0_i32_0 = arith.constant 0 : i32
    %c0_i32_1 = arith.constant 0 : i32
    return %c0_i32, %c0_i32_0 : i32, i32
  }
  func.func @transform_3(%arg0: i32, %arg1: i32) -> (i32, i32) {
    %c0_i32 = arith.constant 0 : i32
    %c0_i32_0 = arith.constant 0 : i32
    %c0_i32_1 = arith.constant 0 : i32
    return %c0_i32, %c0_i32_0 : i32, i32
  }
  func.func @transform_4(%arg0: i32, %arg1: i32) -> (i32, i32) {
    %c0_i32 = arith.constant 0 : i32
    %c0_i32_0 = arith.constant 0 : i32
    %c0_i32_1 = arith.constant 0 : i32
    return %c0_i32, %c0_i32_0 : i32, i32
  }
  func.func @transform_5(%arg0: i32, %arg1: i32) -> (i32, i32) {
    %c0_i32 = arith.constant 0 : i32
    %c0_i32_0 = arith.constant 0 : i32
    %c0_i32_1 = arith.constant 0 : i32
    return %c0_i32, %c0_i32_0 : i32, i32
  }
  func.func @transform_6(%arg0: i32, %arg1: i32) -> (i32, i32, i32) {
    %c0_i32 = arith.constant 0 : i32
    %c0_i32_0 = arith.constant 0 : i32
    return %arg1, %arg0, %c0_i32 : i32, i32, i32
  }
}

</mosaic_0001>

<llo_original>
// kernel: state_transition_forward.1
$region0: #{state_transition_forward.1}
  #allocation0 [shape = 'u32[]', space=smem, size = 0x4, offset = 0x4, fixed_abs, tag = 'smem constant byte address 0x4 - core index']
  #allocation1 [shape = 'u32[144,128]{1,0:T(1,128)}', space=vmem, size = 0x12000, scoped, tag = 'internal scratch']
  #allocation2 [shape = 'f32[2,768]{1,0:T(2,128)}', space=vmem, size = 0x1800, scoped, tag = 'scratch operand']
  %s0 = inlined_call_operand.vmem [shape: f32[4,2,768], index: 0, kind: input, shape index: {}]
  %s1 = inlined_call_operand.hbm [shape: f32[2,768], index: 1, kind: input, shape index: {}]
  %s2 = inlined_call_operand.hbm [shape: f32[768,2304], index: 2, kind: input, shape index: {}]
  %s3 = inlined_call_operand.hbm [shape: f32[768,2304], index: 3, kind: input, shape index: {}]
  %s4 = inlined_call_operand.hbm [shape: f32[1,2304], index: 4, kind: input, shape index: {}]
  %s5 = inlined_call_operand.hbm [shape: f32[1,2304], index: 5, kind: input, shape index: {}]
  %s6 = inlined_call_operand.vmem [shape: f32[4,2,768], index: 6, kind: output, shape index: {}]
  %s7 = sld [smem:[#allocation0]]
  $region81: #{state_transition_forward.1} parent=0
    _
  %s9 = ssub.s32 1, %s7
  %s10 = scalar_select 0, %s9, %s7
  $region1: #{state_transition_forward.1} parent=0
    #allocation3 [shape = 'u8[6144]{0}', space=vmem, size = 0x1800, scoped, tag = 'input window, operand 1, single buffered']
    #allocation4 [shape = 's32[2]{0}', space=sflag, size = 0x8, scoped, tag = 'scoped memory for state_transition_forward.1']
    #allocation5 [shape = 'u8[7077888]{0}', space=vmem, size = 0x6c0000, scoped, tag = 'input window, operand 2, single buffered']
    #allocation6 [shape = 's32[1]{0}', space=sflag, size = 0x4, scoped, tag = 'scoped memory for state_transition_forward.1']
    #allocation7 [shape = 'u8[7077888]{0}', space=vmem, size = 0x6c0000, scoped, tag = 'input window, operand 3, single buffered']
    #allocation8 [shape = 'u8[9216]{0}', space=vmem, size = 0x2400, scoped, tag = 'input window, operand 4, single buffered']
    #allocation9 [shape = 's32[1]{0}', space=sflag, size = 0x4, scoped, tag = 'scoped memory for state_transition_forward.1']
    #allocation10 [shape = 'u8[9216]{0}', space=vmem, size = 0x2400, scoped, tag = 'input window, operand 5, single buffered']
    %11 = vsyncpa [#allocation4], 0
    %12 = vsyncpa [#allocation6], 0
    %13 = vsyncpa [#allocation9], 0
    loop: start=0, step=1, limit=6
    $region2: #{state_transition_forward.1} parent=1 // loop_pre_header
      _
    $region3: #{state_transition_forward.1} parent=1 // loop_header
      %s15 = sphi 0, %s19
      %p16 = scmp.ge.s32.totalorder %s15, 6
      %s22 = sphi 0, %s34
      %s23 = sphi 0, %s30
      %s24 = sphi 0, %s22
      %s25 = sphi 0, %s23
      %s26 = sphi 0, %s24
      %s27 = sphi 0, %s25
      %s39 = sphi 0, %s41
      %s42 = sphi 0, %s39
      %s43 = sphi 0, %s42
      %s59 = sphi 0, %s43
      %s65 = sphi 0, %s67
      %s68 = sphi 0, %s65
      %s69 = sphi 0, %s68
      %s85 = sphi 0, %s69
      %s89 = sphi 0, %s89
      %s91 = sphi 0, %s89
      %s92 = sphi 0, %s91
      %s106 = sphi 0, %s92
      %s110 = sphi 0, %s110
      %s112 = sphi 0, %s110
      %s113 = sphi 0, %s112
      %s127 = sphi 0, %s113
      %s131 = sphi 0, %s131
      %s133 = sphi 0, %s131
      %s134 = sphi 0, %s133
      %s148 = sphi 0, %s134
      %s152 = sphi 0, %s152
      %s154 = sphi 0, %s152
      %s155 = sphi 0, %s154
      %s169 = sphi 0, %s155
      %s177 = sphi 0, %s179
      %s180 = sphi 0, %s177
      %s181 = sphi 0, %s180
      %s197 = sphi 0, %s181
    $region4: #{state_transition_forward.1} parent=1 // loop_header_branch
      %18 = sbr.rel (%p16) target = $region8
    $region5: #{state_transition_forward.1} parent=1 // loop_body
      %s20 = ssub.s32 %s15, 1
      %s21 = ssub.s32 %s15, 2
      %s28 = sadd.s32 1, %s23
      %p29 = scmp.ge.s32.totalorder %s28, 4
      %s30 = scalar_select %p29, 0, %s28
      %s31 = sadd.s32 1, %s22
      %s32 = scalar_select %p29, %s31, %s22
      %p33 = scmp.ge.s32.totalorder %s32, 1
      %s34 = scalar_select %p33, 0, %s32
      %s35 = ssub.s32 %s23, %s30
      %s36 = ssub.s32 %s22, %s34
      %s37 = sor.u32 %s35, %s36
      %p38 = scmp.eq.s32.totalorder %s37, 0
      %s40 = sadd.s32 %s39, 1
      %s41 = scalar_select %p38, %s39, %s40
      %p44 = pneg %p38
      %p45 = scmp.eq.s32.totalorder %s15, 3
      %p46 = por %p44, %p45
      %p47 = scmp.ne.s32.totalorder %s39, %s42
      %p48 = scmp.eq.s32.totalorder %s15, 0
      %p49 = por %p47, %p48
      %p50 = scmp.ne.s32.totalorder %s39, %s42
      %p51 = scmp.eq.s32.totalorder %s20, 3
      %p52 = por %p50, %p51
      %p53 = scmp.ne.s32.totalorder %s42, %s43
      %p54 = scmp.eq.s32.totalorder %s20, 0
      %p55 = por %p53, %p54
      %p56 = scmp.ne.s32.totalorder %s42, %s43
      %p57 = scmp.eq.s32.totalorder %s21, 3
      %p58 = por %p56, %p57
      %p60 = scmp.ne.s32.totalorder %s43, %s59
      %p61 = scmp.eq.s32.totalorder %s21, 0
      %p62 = por %p60, %p61
      %s63 = ssub.s32 %s22, %s34
      %p64 = scmp.eq.s32.totalorder %s63, 0
      %s66 = sadd.s32 %s65, 1
      %s67 = scalar_select %p64, %s65, %s66
      %p70 = pneg %p64
      %p71 = scmp.eq.s32.totalorder %s15, 3
      %p72 = por %p70, %p71
      %p73 = scmp.ne.s32.totalorder %s65, %s68
      %p74 = scmp.eq.s32.totalorder %s15, 0
      %p75 = por %p73, %p74
      %p76 = scmp.ne.s32.totalorder %s65, %s68
      %p77 = scmp.eq.s32.totalorder %s20, 3
      %p78 = por %p76, %p77
      %p79 = scmp.ne.s32.totalorder %s68, %s69
      %p80 = scmp.eq.s32.totalorder %s20, 0
      %p81 = por %p79, %p80
      %p82 = scmp.ne.s32.totalorder %s68, %s69
      %p83 = scmp.eq.s32.totalorder %s21, 3
      %p84 = por %p82, %p83
      %p86 = scmp.ne.s32.totalorder %s69, %s85
      %p87 = scmp.eq.s32.totalorder %s21, 0
      %p88 = por %p86, %p87
      %s90 = sadd.s32 %s89, 1
      %p93 = scmp.eq.s32.totalorder %s15, 3
      %p94 = scmp.ne.s32.totalorder %s89, %s91
      %p95 = scmp.eq.s32.totalorder %s15, 0
      %p96 = por %p94, %p95
      %p97 = scmp.ne.s32.totalorder %s89, %s91
      %p98 = scmp.eq.s32.totalorder %s20, 3
      %p99 = por %p97, %p98
      %p100 = scmp.ne.s32.totalorder %s91, %s92
      %p101 = scmp.eq.s32.totalorder %s20, 0
      %p102 = por %p100, %p101
      %p103 = scmp.ne.s32.totalorder %s91, %s92
      %p104 = scmp.eq.s32.totalorder %s21, 3
      %p105 = por %p103, %p104
      %p107 = scmp.ne.s32.totalorder %s92, %s106
      %p108 = scmp.eq.s32.totalorder %s21, 0
      %p109 = por %p107, %p108
      %s111 = sadd.s32 %s110, 1
      %p114 = scmp.eq.s32.totalorder %s15, 3
      %p115 = scmp.ne.s32.totalorder %s110, %s112
      %p116 = scmp.eq.s32.totalorder %s15, 0
      %p117 = por %p115, %p116
      %p118 = scmp.ne.s32.totalorder %s110, %s112
      %p119 = scmp.eq.s32.totalorder %s20, 3
      %p120 = por %p118, %p119
      %p121 = scmp.ne.s32.totalorder %s112, %s113
      %p122 = scmp.eq.s32.totalorder %s20, 0
      %p123 = por %p121, %p122
      %p124 = scmp.ne.s32.totalorder %s112, %s113
      %p125 = scmp.eq.s32.totalorder %s21, 3
      %p126 = por %p124, %p125
      %p128 = scmp.ne.s32.totalorder %s113, %s127
      %p129 = scmp.eq.s32.totalorder %s21, 0
      %p130 = por %p128, %p129
      %s132 = sadd.s32 %s131, 1
      %p135 = scmp.eq.s32.totalorder %s15, 3
      %p136 = scmp.ne.s32.totalorder %s131, %s133
      %p137 = scmp.eq.s32.totalorder %s15, 0
      %p138 = por %p136, %p137
      %p139 = scmp.ne.s32.totalorder %s131, %s133
      %p140 = scmp.eq.s32.totalorder %s20, 3
      %p141 = por %p139, %p140
      %p142 = scmp.ne.s32.totalorder %s133, %s134
      %p143 = scmp.eq.s32.totalorder %s20, 0
      %p144 = por %p142, %p143
      %p145 = scmp.ne.s32.totalorder %s133, %s134
      %p146 = scmp.eq.s32.totalorder %s21, 3
      %p147 = por %p145, %p146
      %p149 = scmp.ne.s32.totalorder %s134, %s148
      %p150 = scmp.eq.s32.totalorder %s21, 0
      %p151 = por %p149, %p150
      %s153 = sadd.s32 %s152, 1
      %p156 = scmp.eq.s32.totalorder %s15, 3
      %p157 = scmp.ne.s32.totalorder %s152, %s154
      %p158 = scmp.eq.s32.totalorder %s15, 0
      %p159 = por %p157, %p158
      %p160 = scmp.ne.s32.totalorder %s152, %s154
      %p161 = scmp.eq.s32.totalorder %s20, 3
      %p162 = por %p160, %p161
      %p163 = scmp.ne.s32.totalorder %s154, %s155
      %p164 = scmp.eq.s32.totalorder %s20, 0
      %p165 = por %p163, %p164
      %p166 = scmp.ne.s32.totalorder %s154, %s155
      %p167 = scmp.eq.s32.totalorder %s21, 3
      %p168 = por %p166, %p167
      %p170 = scmp.ne.s32.totalorder %s155, %s169
      %p171 = scmp.eq.s32.totalorder %s21, 0
      %p172 = por %p170, %p171
      %s173 = ssub.s32 %s23, %s30
      %s174 = ssub.s32 %s22, %s34
      %s175 = sor.u32 %s173, %s174
      %p176 = scmp.eq.s32.totalorder %s175, 0
      %s178 = sadd.s32 %s177, 1
      %s179 = scalar_select %p176, %s177, %s178
      %p182 = pneg %p176
      %p183 = scmp.eq.s32.totalorder %s15, 3
      %p184 = por %p182, %p183
      %p185 = scmp.ne.s32.totalorder %s177, %s180
      %p186 = scmp.eq.s32.totalorder %s15, 0
      %p187 = por %p185, %p186
      %p188 = scmp.ne.s32.totalorder %s177, %s180
      %p189 = scmp.eq.s32.totalorder %s20, 3
      %p190 = por %p188, %p189
      %p191 = scmp.ne.s32.totalorder %s180, %s181
      %p192 = scmp.eq.s32.totalorder %s20, 0
      %p193 = por %p191, %p192
      %p194 = scmp.ne.s32.totalorder %s180, %s181
      %p195 = scmp.eq.s32.totalorder %s21, 3
      %p196 = por %p194, %p195
      %p198 = scmp.ne.s32.totalorder %s181, %s197
      %p199 = scmp.eq.s32.totalorder %s21, 0
      %p200 = por %p198, %p199
      %p201 = scmp.le.s32.totalorder 1, %s15
      %p202 = scmp.lt.s32.totalorder %s15, 5
      %p203 = pnand %p201, %p202
      %p204 = pneg %p203
      // Predicated region
      $region9: #{state_transition_forward.1} parent=5 // pred_check
        _
      $region10: #{state_transition_forward.1} parent=5 // pred_check_branch
        %206 = sbr.rel (%p203) target = $region12
      $region11: #{state_transition_forward.1} parent=5 // pred_region
        %s207 = ssub.s32 %s15, 1
        // Predicated region
        $region13: #{state_transition_forward.1} parent=11 // pred_check
          %p208 = pneg %p81
        $region14: #{state_transition_forward.1} parent=11 // pred_check_branch
          %210 = sbr.rel (%p208) target = $region16
        $region15: #{state_transition_forward.1} parent=11 // pred_region
          %s212 = ssub.s32 192, 192
          %213 = vsyncadd [#allocation4], %s212
          %s214 = smul.addr %s24, 6
          %s215 = smul.addr %s214, 32
          %s216 = scalar_lea.hbm %s1, %s215
          %s218 = sshll.u32 [#allocation3], 4
          %s219 = int_to_ptr.vmem [resolvable:$true] %s218
          %221 = dma.hbm_to_vmem [thread:$0]  %s216, 192, %s219, [#allocation4]
        $region16: #{state_transition_forward.1} parent=11 // pred_fallthru
          _
        // Predicated region
        $region17: #{state_transition_forward.1} parent=11 // pred_check
          %p222 = pneg %p102
        $region18: #{state_transition_forward.1} parent=11 // pred_check_branch
          %224 = sbr.rel (%p222) target = $region20
        $region19: #{state_transition_forward.1} parent=11 // pred_region
          %s226 = ssub.s32 221184, 221184
          %227 = vsyncadd [#allocation6], %s226
          %s228 = sshll.u32 [#allocation5], 4
          %s229 = int_to_ptr.vmem [resolvable:$true] %s228
          %234 = dma.hbm_to_vmem [thread:$0]  %s2, 221184, %s229, [#allocation6], 2304, 2304, 144
        $region20: #{state_transition_forward.1} parent=11 // pred_fallthru
          _
        // Predicated region
        $region21: #{state_transition_forward.1} parent=11 // pred_check
          %p235 = pneg %p123
        $region22: #{state_transition_forward.1} parent=11 // pred_check_branch
          %237 = sbr.rel (%p235) target = $region24
        $region23: #{state_transition_forward.1} parent=11 // pred_region
          %s239 = ssub.s32 221184, 221184
          %240 = vsyncadd [#allocation6], %s239
          %s241 = sshll.u32 [#allocation7], 4
          %s242 = int_to_ptr.vmem [resolvable:$true] %s241
          %247 = dma.hbm_to_vmem [thread:$0]  %s3, 221184, %s242, [#allocation6], 2304, 2304, 144
        $region24: #{state_transition_forward.1} parent=11 // pred_fallthru
          _
        // Predicated region
        $region25: #{state_transition_forward.1} parent=11 // pred_check
          %p248 = pneg %p144
        $region26: #{state_transition_forward.1} parent=11 // pred_check_branch
          %250 = sbr.rel (%p248) target = $region28
        $region27: #{state_transition_forward.1} parent=11 // pred_region
          %s252 = ssub.s32 288, 288
          %253 = vsyncadd [#allocation9], %s252
          %s255 = sshll.u32 [#allocation8], 4
          %s256 = int_to_ptr.vmem [resolvable:$true] %s255
          %258 = dma.hbm_to_vmem [thread:$0]  %s4, 288, %s256, [#allocation9]
        $region28: #{state_transition_forward.1} parent=11 // pred_fallthru
          _
        // Predicated region
        $region29: #{state_transition_forward.1} parent=11 // pred_check
          %p259 = pneg %p165
        $region30: #{state_transition_forward.1} parent=11 // pred_check_branch
          %261 = sbr.rel (%p259) target = $region32
        $region31: #{state_transition_forward.1} parent=11 // pred_region
          %s263 = ssub.s32 288, 288
          %264 = vsyncadd [#allocation9], %s263
          %s266 = sshll.u32 [#allocation10], 4
          %s267 = int_to_ptr.vmem [resolvable:$true] %s266
          %269 = dma.hbm_to_vmem [thread:$0]  %s5, 288, %s267, [#allocation9]
        $region32: #{state_transition_forward.1} parent=11 // pred_fallthru
          _
      $region12: #{state_transition_forward.1} parent=5 // pred_fallthru
        _
      %p270 = scmp.lt.s32.totalorder %s15, 4
      // Predicated region
      $region33: #{state_transition_forward.1} parent=5 // pred_check
        %p271 = pneg %p270
      $region34: #{state_transition_forward.1} parent=5 // pred_check_branch
        %273 = sbr.rel (%p271) target = $region36
      $region35: #{state_transition_forward.1} parent=5 // pred_region
        // Predicated region
        $region37: #{state_transition_forward.1} parent=35 // pred_check
          %p274 = pneg %p49
        $region38: #{state_transition_forward.1} parent=35 // pred_check_branch
          %276 = sbr.rel (%p274) target = $region40
        $region39: #{state_transition_forward.1} parent=35 // pred_region
          %p277 = scmp.lt.s32.totalorder %s23, 3
          %s278 = scalar_select %p277, %s23, 3
          %p279 = scmp.lt.s32.totalorder %s22, 0
          %s280 = scalar_select %p279, %s22, 0
          %s281 = smul.addr %s280, 6
          %s282 = smul.addr %s278, 6
          %s283 = sadd.s32 %s281, %s282
          %s284 = smul.addr %s283, 2
          %s285 = scalar_lea.vmem %s0, %s284
        $region40: #{state_transition_forward.1} parent=35 // pred_fallthru
          _
      $region36: #{state_transition_forward.1} parent=5 // pred_fallthru
        _
      %p286 = scmp.le.s32.totalorder 1, %s15
      %p287 = scmp.lt.s32.totalorder %s15, 5
      %p288 = pnand %p286, %p287
      %p289 = pneg %p288
      // Predicated region
      $region41: #{state_transition_forward.1} parent=5 // pred_check
        _
      $region42: #{state_transition_forward.1} parent=5 // pred_check_branch
        %291 = sbr.rel (%p288) target = $region44
      $region43: #{state_transition_forward.1} parent=5 // pred_region
        %s292 = ssub.s32 %s15, 1
        // Predicated region
        $region45: #{state_transition_forward.1} parent=43 // pred_check
          %p293 = pneg %p81
        $region46: #{state_transition_forward.1} parent=43 // pred_check_branch
          %295 = sbr.rel (%p293) target = $region48
        $region47: #{state_transition_forward.1} parent=43 // pred_region
          %296 = dma.done [#allocation4], 192
        $region48: #{state_transition_forward.1} parent=43 // pred_fallthru
          _
        // Predicated region
        $region49: #{state_transition_forward.1} parent=43 // pred_check
          %p297 = pneg %p102
        $region50: #{state_transition_forward.1} parent=43 // pred_check_branch
          %299 = sbr.rel (%p297) target = $region52
        $region51: #{state_transition_forward.1} parent=43 // pred_region
          %300 = dma.done [#allocation6], 221184
        $region52: #{state_transition_forward.1} parent=43 // pred_fallthru
          _
        // Predicated region
        $region53: #{state_transition_forward.1} parent=43 // pred_check
          %p301 = pneg %p123
        $region54: #{state_transition_forward.1} parent=43 // pred_check_branch
          %303 = sbr.rel (%p301) target = $region56
        $region55: #{state_transition_forward.1} parent=43 // pred_region
          %304 = dma.done [#allocation6], 221184
        $region56: #{state_transition_forward.1} parent=43 // pred_fallthru
          _
        // Predicated region
        $region57: #{state_transition_forward.1} parent=43 // pred_check
          %p305 = pneg %p144
        $region58: #{state_transition_forward.1} parent=43 // pred_check_branch
          %307 = sbr.rel (%p305) target = $region60
        $region59: #{state_transition_forward.1} parent=43 // pred_region
          %308 = dma.done [#allocation9], 288
        $region60: #{state_transition_forward.1} parent=43 // pred_fallthru
          _
        // Predicated region
        $region61: #{state_transition_forward.1} parent=43 // pred_check
          %p309 = pneg %p165
        $region62: #{state_transition_forward.1} parent=43 // pred_check_branch
          %311 = sbr.rel (%p309) target = $region64
        $region63: #{state_transition_forward.1} parent=43 // pred_region
          %312 = dma.done [#allocation9], 288
        $region64: #{state_transition_forward.1} parent=43 // pred_fallthru
          _
        %p313 = scmp.lt.s32.totalorder %s25, 3
        %s314 = scalar_select %p313, %s25, 3
        %p315 = scmp.lt.s32.totalorder %s24, 0
        %s316 = scalar_select %p315, %s24, 0
        %s317 = smul.addr %s316, 6
        %s318 = smul.addr %s314, 6
        %s319 = sadd.s32 %s317, %s318
        %s320 = smul.addr %s319, 2
        %s321 = scalar_lea.vmem %s0, %s320
        %p322 = pneg %p55
        %p323 = pneg %p52
        %p324 = pneg %p81
        %p325 = pneg %p78
        %p326 = pneg %p102
        %p327 = pneg %p99
        %p328 = pneg %p123
        %p329 = pneg %p120
        %p330 = pneg %p144
        %p331 = pneg %p141
        %p332 = pneg %p165
        %p333 = pneg %p162
        %p334 = pneg %p193
        %p335 = pneg %p190
        %p336 = scmp.lt.s32.totalorder %s25, 3
        %s337 = scalar_select %p336, %s25, 3
        %p338 = scmp.lt.s32.totalorder %s24, 0
        %s339 = scalar_select %p338, %s24, 0
        %s340 = smul.addr %s339, 6
        %s341 = smul.addr %s337, 6
        %s342 = sadd.s32 %s340, %s341
        %s343 = smul.addr %s342, 2
        %s344 = scalar_lea.vmem %s6, %s343
        %p345 = scmp.lt.s32.totalorder %s25, 3
        %s346 = scalar_select %p345, %s25, 3
        %p347 = scmp.lt.s32.totalorder %s24, 0
        %s348 = scalar_select %p347, %s24, 0
        %s349 = smul.addr %s348, 6
        %s350 = smul.addr %s346, 6
        %s351 = sadd.s32 %s349, %s350
        %s352 = smul.addr %s351, 2
        %s353 = scalar_lea.vmem %s0, %s352
        %p354 = scmp.lt.s32.totalorder %s25, 3
        %s355 = scalar_select %p354, %s25, 3
        %p356 = scmp.lt.s32.totalorder %s24, 0
        %s357 = scalar_select %p356, %s24, 0
        %s358 = smul.addr %s357, 6
        %s359 = smul.addr %s355, 6
        %s360 = sadd.s32 %s358, %s359
        %s361 = smul.addr %s360, 2
        %s362 = scalar_lea.vmem %s6, %s361
        %p363 = scmp.eq.s32.totalorder %s25, 0
        // Predicated region
        $region65: #{state_transition_forward.1} parent=43 // pred_check
          %p364 = pneg %p363
        $region66: #{state_transition_forward.1} parent=43 // pred_check_branch
          %366 = sbr.rel (%p364) target = $region68
        $region67: #{state_transition_forward.1} parent=43 // pred_region
          %v367 = vld [vmem:[#allocation3] sm:$0xff]
          %v368 = vld [vmem:[#allocation3 + $0x8] sm:$0xf]
          %369 = vst [vmem:[#allocation2] sm:$0xff] %v367
          %370 = vst [vmem:[#allocation2 + $0x8] sm:$0xf] %v368
        $region68: #{state_transition_forward.1} parent=43 // pred_fallthru
          _
        %v371 = vld [vmem:[#allocation2] sm:$0xff]
        %v372 = vld [vmem:[#allocation2 + $0x8] sm:$0xf]
        %v373 = vld [vmem:[%s353] sm:$0xff]
        %v374 = vld [vmem:[%s353 + $0x8] sm:$0xf]
        %v375 = vld [vmem:[#allocation5] sm:$0xff]
        %v376 = vld [vmem:[#allocation5 + $0x8] sm:$0xff]
        %v377 = vld [vmem:[#allocation5 + $0x10] sm:$0xff]
        %v378 = vld [vmem:[#allocation5 + $0x18] sm:$0xff]
        %v379 = vld [vmem:[#allocation5 + $0x20] sm:$0xff]
        %v380 = vld [vmem:[#allocation5 + $0x28] sm:$0xff]
        %v381 = vld [vmem:[#allocation5 + $0x30] sm:$0xff]
        %v382 = vld [vmem:[#allocation5 + $0x38] sm:$0xff]
        %v383 = vld [vmem:[#allocation5 + $0x40] sm:$0xff]
        %v384 = vld [vmem:[#allocation5 + $0x48] sm:$0xff]
        %v385 = vld [vmem:[#allocation5 + $0x50] sm:$0xff]
        %v386 = vld [vmem:[#allocation5 + $0x58] sm:$0xff]
        %v387 = vld [vmem:[#allocation5 + $0x60] sm:$0xff]
        %v388 = vld [vmem:[#allocation5 + $0x68] sm:$0xff]
        %v389 = vld [vmem:[#allocation5 + $0x70] sm:$0xff]
        %v390 = vld [vmem:[#allocation5 + $0x78] sm:$0xff]
        %v391 = vld [vmem:[#allocation5 + $0x80] sm:$0xff]
        %v392 = vld [vmem:[#allocation5 + $0x88] sm:$0xff]
        %v393 = vld [vmem:[#allocation5 + $0x90] sm:$0xff]
        %v394 = vld [vmem:[#allocation5 + $0x98] sm:$0xff]
        %v395 = vld [vmem:[#allocation5 + $0xa0] sm:$0xff]
        %v396 = vld [vmem:[#allocation5 + $0xa8] sm:$0xff]
        %v397 = vld [vmem:[#allocation5 + $0xb0] sm:$0xff]
        %v398 = vld [vmem:[#allocation5 + $0xb8] sm:$0xff]
        %v399 = vld [vmem:[#allocation5 + $0xc0] sm:$0xff]
        %v400 = vld [vmem:[#allocation5 + $0xc8] sm:$0xff]
        %v401 = vld [vmem:[#allocation5 + $0xd0] sm:$0xff]
        %v402 = vld [vmem:[#allocation5 + $0xd8] sm:$0xff]
        %v403 = vld [vmem:[#allocation5 + $0xe0] sm:$0xff]
        %v404 = vld [vmem:[#allocation5 + $0xe8] sm:$0xff]
        %v405 = vld [vmem:[#allocation5 + $0xf0] sm:$0xff]
        %v406 = vld [vmem:[#allocation5 + $0xf8] sm:$0xff]
        %v407 = vld [vmem:[#allocation5 + $0x100] sm:$0xff]
        %v408 = vld [vmem:[#allocation5 + $0x108] sm:$0xff]
        %v409 = vld [vmem:[#allocation5 + $0x110] sm:$0xff]
        %v410 = vld [vmem:[#allocation5 + $0x118] sm:$0xff]
        %v411 = vld [vmem:[#allocation5 + $0x120] sm:$0xff]
        %v412 = vld [vmem:[#allocation5 + $0x128] sm:$0xff]
        %v413 = vld [vmem:[#allocation5 + $0x130] sm:$0xff]
        %v414 = vld [vmem:[#allocation5 + $0x138] sm:$0xff]
        %v415 = vld [vmem:[#allocation5 + $0x140] sm:$0xff]
        %v416 = vld [vmem:[#allocation5 + $0x148] sm:$0xff]
        %v417 = vld [vmem:[#allocation5 + $0x150] sm:$0xff]
        %v418 = vld [vmem:[#allocation5 + $0x158] sm:$0xff]
        %v419 = vld [vmem:[#allocation5 + $0x160] sm:$0xff]
        %v420 = vld [vmem:[#allocation5 + $0x168] sm:$0xff]
        %v421 = vld [vmem:[#allocation5 + $0x170] sm:$0xff]
        %v422 = vld [vmem:[#allocation5 + $0x178] sm:$0xff]
        %v423 = vld [vmem:[#allocation5 + $0x180] sm:$0xff]
        %v424 = vld [vmem:[#allocation5 + $0x188] sm:$0xff]
        %v425 = vld [vmem:[#allocation5 + $0x190] sm:$0xff]
        %v426 = vld [vmem:[#allocation5 + $0x198] sm:$0xff]
        %v427 = vld [vmem:[#allocation5 + $0x1a0] sm:$0xff]
        %v428 = vld [vmem:[#allocation5 + $0x1a8] sm:$0xff]
        %v429 = vld [vmem:[#allocation5 + $0x1b0] sm:$0xff]
        %v430 = vld [vmem:[#allocation5 + $0x1b8] sm:$0xff]
        %v431 = vld [vmem:[#allocation5 + $0x1c0] sm:$0xff]
        %v432 = vld [vmem:[#allocation5 + $0x1c8] sm:$0xff]
        %v433 = vld [vmem:[#allocation5 + $0x1d0] sm:$0xff]
        %v434 = vld [vmem:[#allocation5 + $0x1d8] sm:$0xff]
        %v435 = vld [vmem:[#allocation5 + $0x1e0] sm:$0xff]
        %v436 = vld [vmem:[#allocation5 + $0x1e8] sm:$0xff]
        %v437 = vld [vmem:[#allocation5 + $0x1f0] sm:$0xff]
        %v438 = vld [vmem:[#allocation5 + $0x1f8] sm:$0xff]
        %v439 = vld [vmem:[#allocation5 + $0x200] sm:$0xff]
        %v440 = vld [vmem:[#allocation5 + $0x208] sm:$0xff]
        %v441 = vld [vmem:[#allocation5 + $0x210] sm:$0xff]
        %v442 = vld [vmem:[#allocation5 + $0x218] sm:$0xff]
        %v443 = vld [vmem:[#allocation5 + $0x220] sm:$0xff]
        %v444 = vld [vmem:[#allocation5 + $0x228] sm:$0xff]
        %v445 = vld [vmem:[#allocation5 + $0x230] sm:$0xff]
        %v446 = vld [vmem:[#allocation5 + $0x238] sm:$0xff]
        %v447 = vld [vmem:[#allocation5 + $0x240] sm:$0xff]
        %v448 = vld [vmem:[#allocation5 + $0x248] sm:$0xff]
        %v449 = vld [vmem:[#allocation5 + $0x250] sm:$0xff]
        %v450 = vld [vmem:[#allocation5 + $0x258] sm:$0xff]
        %v451 = vld [vmem:[#allocation5 + $0x260] sm:$0xff]
        %v452 = vld [vmem:[#allocation5 + $0x268] sm:$0xff]
        %v453 = vld [vmem:[#allocation5 + $0x270] sm:$0xff]
        %v454 = vld [vmem:[#allocation5 + $0x278] sm:$0xff]
        %v455 = vld [vmem:[#allocation5 + $0x280] sm:$0xff]
        %v456 = vld [vmem:[#allocation5 + $0x288] sm:$0xff]
        %v457 = vld [vmem:[#allocation5 + $0x290] sm:$0xff]
        %v458 = vld [vmem:[#allocation5 + $0x298] sm:$0xff]
        %v459 = vld [vmem:[#allocation5 + $0x2a0] sm:$0xff]
        %v460 = vld [vmem:[#allocation5 + $0x2a8] sm:$0xff]
        %v461 = vld [vmem:[#allocation5 + $0x2b0] sm:$0xff]
        %v462 = vld [vmem:[#allocation5 + $0x2b8] sm:$0xff]
        %v463 = vld [vmem:[#allocation5 + $0x2c0] sm:$0xff]
        %v464 = vld [vmem:[#allocation5 + $0x2c8] sm:$0xff]
        %v465 = vld [vmem:[#allocation5 + $0x2d0] sm:$0xff]
        %v466 = vld [vmem:[#allocation5 + $0x2d8] sm:$0xff]
        %v467 = vld [vmem:[#allocation5 + $0x2e0] sm:$0xff]
        %v468 = vld [vmem:[#allocation5 + $0x2e8] sm:$0xff]
        %v469 = vld [vmem:[#allocation5 + $0x2f0] sm:$0xff]
        %v470 = vld [vmem:[#allocation5 + $0x2f8] sm:$0xff]
        %v471 = vld [vmem:[#allocation5 + $0x300] sm:$0xff]
        %v472 = vld [vmem:[#allocation5 + $0x308] sm:$0xff]
        %v473 = vld [vmem:[#allocation5 + $0x310] sm:$0xff]
        %v474 = vld [vmem:[#allocation5 + $0x318] sm:$0xff]
        %v475 = vld [vmem:[#allocation5 + $0x320] sm:$0xff]
        %v476 = vld [vmem:[#allocation5 + $0x328] sm:$0xff]
        %v477 = vld [vmem:[#allocation5 + $0x330] sm:$0xff]
        %v478 = vld [vmem:[#allocation5 + $0x338] sm:$0xff]
        %v479 = vld [vmem:[#allocation5 + $0x340] sm:$0xff]
        %v480 = vld [vmem:[#allocation5 + $0x348] sm:$0xff]
        %v481 = vld [vmem:[#allocation5 + $0x350] sm:$0xff]
        %v482 = vld [vmem:[#allocation5 + $0x358] sm:$0xff]
        %v483 = vld [vmem:[#allocation5 + $0x360] sm:$0xff]
        %v484 = vld [vmem:[#allocation5 + $0x368] sm:$0xff]
        %v485 = vld [vmem:[#allocation5 + $0x370] sm:$0xff]
        %v486 = vld [vmem:[#allocation5 + $0x378] sm:$0xff]
        %v487 = vld [vmem:[#allocation5 + $0x380] sm:$0xff]
        %v488 = vld [vmem:[#allocation5 + $0x388] sm:$0xff]
        %v489 = vld [vmem:[#allocation5 + $0x390] sm:$0xff]
        %v490 = vld [vmem:[#allocation5 + $0x398] sm:$0xff]
        %v491 = vld [vmem:[#allocation5 + $0x3a0] sm:$0xff]
        %v492 = vld [vmem:[#allocation5 + $0x3a8] sm:$0xff]
        %v493 = vld [vmem:[#allocation5 + $0x3b0] sm:$0xff]
        %v494 = vld [vmem:[#allocation5 + $0x3b8] sm:$0xff]
        %v495 = vld [vmem:[#allocation5 + $0x3c0] sm:$0xff]
        %v496 = vld [vmem:[#allocation5 + $0x3c8] sm:$0xff]
        %v497 = vld [vmem:[#allocation5 + $0x3d0] sm:$0xff]
        %v498 = vld [vmem:[#allocation5 + $0x3d8] sm:$0xff]
        %v499 = vld [vmem:[#allocation5 + $0x3e0] sm:$0xff]
        %v500 = vld [vmem:[#allocation5 + $0x3e8] sm:$0xff]
        %v501 = vld [vmem:[#allocation5 + $0x3f0] sm:$0xff]
        %v502 = vld [vmem:[#allocation5 + $0x3f8] sm:$0xff]
        %v503 = vld [vmem:[#allocation5 + $0x400] sm:$0xff]
        %v504 = vld [vmem:[#allocation5 + $0x408] sm:$0xff]
        %v505 = vld [vmem:[#allocation5 + $0x410] sm:$0xff]
        %v506 = vld [vmem:[#allocation5 + $0x418] sm:$0xff]
        %v507 = vld [vmem:[#allocation5 + $0x420] sm:$0xff]
        %v508 = vld [vmem:[#allocation5 + $0x428] sm:$0xff]
        %v509 = vld [vmem:[#allocation5 + $0x430] sm:$0xff]
        %v510 = vld [vmem:[#allocation5 + $0x438] sm:$0xff]
        %v511 = vld [vmem:[#allocation5 + $0x440] sm:$0xff]
        %v512 = vld [vmem:[#allocation5 + $0x448] sm:$0xff]
        %v513 = vld [vmem:[#allocation5 + $0x450] sm:$0xff]
        %v514 = vld [vmem:[#allocation5 + $0x458] sm:$0xff]
        %v515 = vld [vmem:[#allocation5 + $0x460] sm:$0xff]
        %v516 = vld [vmem:[#allocation5 + $0x468] sm:$0xff]
        %v517 = vld [vmem:[#allocation5 + $0x470] sm:$0xff]
        %v518 = vld [vmem:[#allocation5 + $0x478] sm:$0xff]
        %v519 = vld [vmem:[#allocation5 + $0x480] sm:$0xff]
        %v520 = vld [vmem:[#allocation5 + $0x488] sm:$0xff]
        %v521 = vld [vmem:[#allocation5 + $0x490] sm:$0xff]
        %v522 = vld [vmem:[#allocation5 + $0x498] sm:$0xff]
        %v523 = vld [vmem:[#allocation5 + $0x4a0] sm:$0xff]
        %v524 = vld [vmem:[#allocation5 + $0x4a8] sm:$0xff]
        %v525 = vld [vmem:[#allocation5 + $0x4b0] sm:$0xff]
        %v526 = vld [vmem:[#allocation5 + $0x4b8] sm:$0xff]
        %v527 = vld [vmem:[#allocation5 + $0x4c0] sm:$0xff]
        %v528 = vld [vmem:[#allocation5 + $0x4c8] sm:$0xff]
        %v529 = vld [vmem:[#allocation5 + $0x4d0] sm:$0xff]
        %v530 = vld [vmem:[#allocation5 + $0x4d8] sm:$0xff]
        %v531 = vld [vmem:[#allocation5 + $0x4e0] sm:$0xff]
        %v532 = vld [vmem:[#allocation5 + $0x4e8] sm:$0xff]
        %v533 = vld [vmem:[#allocation5 + $0x4f0] sm:$0xff]
        %v534 = vld [vmem:[#allocation5 + $0x4f8] sm:$0xff]
        %v535 = vld [vmem:[#allocation5 + $0x500] sm:$0xff]
        %v536 = vld [vmem:[#allocation5 + $0x508] sm:$0xff]
        %v537 = vld [vmem:[#allocation5 + $0x510] sm:$0xff]
        %v538 = vld [vmem:[#allocation5 + $0x518] sm:$0xff]
        %v539 = vld [vmem:[#allocation5 + $0x520] sm:$0xff]
        %v540 = vld [vmem:[#allocation5 + $0x528] sm:$0xff]
        %v541 = vld [vmem:[#allocation5 + $0x530] sm:$0xff]
        %v542 = vld [vmem:[#allocation5 + $0x538] sm:$0xff]
        %v543 = vld [vmem:[#allocation5 + $0x540] sm:$0xff]
        %v544 = vld [vmem:[#allocation5 + $0x548] sm:$0xff]
        %v545 = vld [vmem:[#allocation5 + $0x550] sm:$0xff]
        %v546 = vld [vmem:[#allocation5 + $0x558] sm:$0xff]
        %v547 = vld [vmem:[#allocation5 + $0x560] sm:$0xff]
        %v548 = vld [vmem:[#allocation5 + $0x568] sm:$0xff]
        %v549 = vld [vmem:[#allocation5 + $0x570] sm:$0xff]
        %v550 = vld [vmem:[#allocation5 + $0x578] sm:$0xff]
        %v551 = vld [vmem:[#allocation5 + $0x580] sm:$0xff]
        %v552 = vld [vmem:[#allocation5 + $0x588] sm:$0xff]
        %v553 = vld [vmem:[#allocation5 + $0x590] sm:$0xff]
        %v554 = vld [vmem:[#allocation5 + $0x598] sm:$0xff]
        %v555 = vld [vmem:[#allocation5 + $0x5a0] sm:$0xff]
        %v556 = vld [vmem:[#allocation5 + $0x5a8] sm:$0xff]
        %v557 = vld [vmem:[#allocation5 + $0x5b0] sm:$0xff]
        %v558 = vld [vmem:[#allocation5 + $0x5b8] sm:$0xff]
        %v559 = vld [vmem:[#allocation5 + $0x5c0] sm:$0xff]
        %v560 = vld [vmem:[#allocation5 + $0x5c8] sm:$0xff]
        %v561 = vld [vmem:[#allocation5 + $0x5d0] sm:$0xff]
        %v562 = vld [vmem:[#allocation5 + $0x5d8] sm:$0xff]
        %v563 = vld [vmem:[#allocation5 + $0x5e0] sm:$0xff]
        %v564 = vld [vmem:[#allocation5 + $0x5e8] sm:$0xff]
        %v565 = vld [vmem:[#allocation5 + $0x5f0] sm:$0xff]
        %v566 = vld [vmem:[#allocation5 + $0x5f8] sm:$0xff]
        %v567 = vld [vmem:[#allocation5 + $0x600] sm:$0xff]
        %v568 = vld [vmem:[#allocation5 + $0x608] sm:$0xff]
        %v569 = vld [vmem:[#allocation5 + $0x610] sm:$0xff]
        %v570 = vld [vmem:[#allocation5 + $0x618] sm:$0xff]
        %v571 = vld [vmem:[#allocation5 + $0x620] sm:$0xff]
        %v572 = vld [vmem:[#allocation5 + $0x628] sm:$0xff]
        %v573 = vld [vmem:[#allocation5 + $0x630] sm:$0xff]
        %v574 = vld [vmem:[#allocation5 + $0x638] sm:$0xff]
        %v575 = vld [vmem:[#allocation5 + $0x640] sm:$0xff]
        %v576 = vld [vmem:[#allocation5 + $0x648] sm:$0xff]
        %v577 = vld [vmem:[#allocation5 + $0x650] sm:$0xff]
        %v578 = vld [vmem:[#allocation5 + $0x658] sm:$0xff]
        %v579 = vld [vmem:[#allocation5 + $0x660] sm:$0xff]
        %v580 = vld [vmem:[#allocation5 + $0x668] sm:$0xff]
        %v581 = vld [vmem:[#allocation5 + $0x670] sm:$0xff]
        %v582 = vld [vmem:[#allocation5 + $0x678] sm:$0xff]
        %v583 = vld [vmem:[#allocation5 + $0x680] sm:$0xff]
        %v584 = vld [vmem:[#allocation5 + $0x688] sm:$0xff]
        %v585 = vld [vmem:[#allocation5 + $0x690] sm:$0xff]
        %v586 = vld [vmem:[#allocation5 + $0x698] sm:$0xff]
        %v587 = vld [vmem:[#allocation5 + $0x6a0] sm:$0xff]
        %v588 = vld [vmem:[#allocation5 + $0x6a8] sm:$0xff]
        %v589 = vld [vmem:[#allocation5 + $0x6b0] sm:$0xff]
        %v590 = vld [vmem:[#allocation5 + $0x6b8] sm:$0xff]
        %v591 = vld [vmem:[#allocation5 + $0x6c0] sm:$0xff]
        %v592 = vld [vmem:[#allocation5 + $0x6c8] sm:$0xff]
        %v593 = vld [vmem:[#allocation5 + $0x6d0] sm:$0xff]
        %v594 = vld [vmem:[#allocation5 + $0x6d8] sm:$0xff]
        %v595 = vld [vmem:[#allocation5 + $0x6e0] sm:$0xff]
        %v596 = vld [vmem:[#allocation5 + $0x6e8] sm:$0xff]
        %v597 = vld [vmem:[#allocation5 + $0x6f0] sm:$0xff]
        %v598 = vld [vmem:[#allocation5 + $0x6f8] sm:$0xff]
        %v599 = vld [vmem:[#allocation5 + $0x700] sm:$0xff]
        %v600 = vld [vmem:[#allocation5 + $0x708] sm:$0xff]
        %v601 = vld [vmem:[#allocation5 + $0x710] sm:$0xff]
        %v602 = vld [vmem:[#allocation5 + $0x718] sm:$0xff]
        %v603 = vld [vmem:[#allocation5 + $0x720] sm:$0xff]
        %v604 = vld [vmem:[#allocation5 + $0x728] sm:$0xff]
        %v605 = vld [vmem:[#allocation5 + $0x730] sm:$0xff]
        %v606 = vld [vmem:[#allocation5 + $0x738] sm:$0xff]
        %v607 = vld [vmem:[#allocation5 + $0x740] sm:$0xff]
        %v608 = vld [vmem:[#allocation5 + $0x748] sm:$0xff]
        %v609 = vld [vmem:[#allocation5 + $0x750] sm:$0xff]
        %v610 = vld [vmem:[#allocation5 + $0x758] sm:$0xff]
        %v611 = vld [vmem:[#allocation5 + $0x760] sm:$0xff]
        %v612 = vld [vmem:[#allocation5 + $0x768] sm:$0xff]
        %v613 = vld [vmem:[#allocation5 + $0x770] sm:$0xff]
        %v614 = vld [vmem:[#allocation5 + $0x778] sm:$0xff]
        %v615 = vld [vmem:[#allocation5 + $0x780] sm:$0xff]
        %v616 = vld [vmem:[#allocation5 + $0x788] sm:$0xff]
        %v617 = vld [vmem:[#allocation5 + $0x790] sm:$0xff]
        %v618 = vld [vmem:[#allocation5 + $0x798] sm:$0xff]
        %v619 = vld [vmem:[#allocation5 + $0x7a0] sm:$0xff]
        %v620 = vld [vmem:[#allocation5 + $0x7a8] sm:$0xff]
        %v621 = vld [vmem:[#allocation5 + $0x7b0] sm:$0xff]
        %v622 = vld [vmem:[#allocation5 + $0x7b8] sm:$0xff]
        %v623 = vld [vmem:[#allocation5 + $0x7c0] sm:$0xff]
        %v624 = vld [vmem:[#allocation5 + $0x7c8] sm:$0xff]
        %v625 = vld [vmem:[#allocation5 + $0x7d0] sm:$0xff]
        %v626 = vld [vmem:[#allocation5 + $0x7d8] sm:$0xff]
        %v627 = vld [vmem:[#allocation5 + $0x7e0] sm:$0xff]
        %v628 = vld [vmem:[#allocation5 + $0x7e8] sm:$0xff]
        %v629 = vld [vmem:[#allocation5 + $0x7f0] sm:$0xff]
        %v630 = vld [vmem:[#allocation5 + $0x7f8] sm:$0xff]
        %v631 = vld [vmem:[#allocation5 + $0x800] sm:$0xff]
        %v632 = vld [vmem:[#allocation5 + $0x808] sm:$0xff]
        %v633 = vld [vmem:[#allocation5 + $0x810] sm:$0xff]
        %v634 = vld [vmem:[#allocation5 + $0x818] sm:$0xff]
        %v635 = vld [vmem:[#allocation5 + $0x820] sm:$0xff]
        %v636 = vld [vmem:[#allocation5 + $0x828] sm:$0xff]
        %v637 = vld [vmem:[#allocation5 + $0x830] sm:$0xff]
        %v638 = vld [vmem:[#allocation5 + $0x838] sm:$0xff]
        %v639 = vld [vmem:[#allocation5 + $0x840] sm:$0xff]
        %v640 = vld [vmem:[#allocation5 + $0x848] sm:$0xff]
        %v641 = vld [vmem:[#allocation5 + $0x850] sm:$0xff]
        %v642 = vld [vmem:[#allocation5 + $0x858] sm:$0xff]
        %v643 = vld [vmem:[#allocation5 + $0x860] sm:$0xff]
        %v644 = vld [vmem:[#allocation5 + $0x868] sm:$0xff]
        %v645 = vld [vmem:[#allocation5 + $0x870] sm:$0xff]
        %v646 = vld [vmem:[#allocation5 + $0x878] sm:$0xff]
        %v647 = vld [vmem:[#allocation5 + $0x880] sm:$0xff]
        %v648 = vld [vmem:[#allocation5 + $0x888] sm:$0xff]
        %v649 = vld [vmem:[#allocation5 + $0x890] sm:$0xff]
        %v650 = vld [vmem:[#allocation5 + $0x898] sm:$0xff]
        %v651 = vld [vmem:[#allocation5 + $0x8a0] sm:$0xff]
        %v652 = vld [vmem:[#allocation5 + $0x8a8] sm:$0xff]
        %v653 = vld [vmem:[#allocation5 + $0x8b0] sm:$0xff]
        %v654 = vld [vmem:[#allocation5 + $0x8b8] sm:$0xff]
        %v655 = vld [vmem:[#allocation5 + $0x8c0] sm:$0xff]
        %v656 = vld [vmem:[#allocation5 + $0x8c8] sm:$0xff]
        %v657 = vld [vmem:[#allocation5 + $0x8d0] sm:$0xff]
        %v658 = vld [vmem:[#allocation5 + $0x8d8] sm:$0xff]
        %v659 = vld [vmem:[#allocation5 + $0x8e0] sm:$0xff]
        %v660 = vld [vmem:[#allocation5 + $0x8e8] sm:$0xff]
        %v661 = vld [vmem:[#allocation5 + $0x8f0] sm:$0xff]
        %v662 = vld [vmem:[#allocation5 + $0x8f8] sm:$0xff]
        %v663 = vld [vmem:[#allocation5 + $0x900] sm:$0xff]
        %v664 = vld [vmem:[#allocation5 + $0x908] sm:$0xff]
        %v665 = vld [vmem:[#allocation5 + $0x910] sm:$0xff]
        %v666 = vld [vmem:[#allocation5 + $0x918] sm:$0xff]
        %v667 = vld [vmem:[#allocation5 + $0x920] sm:$0xff]
        %v668 = vld [vmem:[#allocation5 + $0x928] sm:$0xff]
        %v669 = vld [vmem:[#allocation5 + $0x930] sm:$0xff]
        %v670 = vld [vmem:[#allocation5 + $0x938] sm:$0xff]
        %v671 = vld [vmem:[#allocation5 + $0x940] sm:$0xff]
        %v672 = vld [vmem:[#allocation5 + $0x948] sm:$0xff]
        %v673 = vld [vmem:[#allocation5 + $0x950] sm:$0xff]
        %v674 = vld [vmem:[#allocation5 + $0x958] sm:$0xff]
        %v675 = vld [vmem:[#allocation5 + $0x960] sm:$0xff]
        %v676 = vld [vmem:[#allocation5 + $0x968] sm:$0xff]
        %v677 = vld [vmem:[#allocation5 + $0x970] sm:$0xff]
        %v678 = vld [vmem:[#allocation5 + $0x978] sm:$0xff]
        %v679 = vld [vmem:[#allocation5 + $0x980] sm:$0xff]
        %v680 = vld [vmem:[#allocation5 + $0x988] sm:$0xff]
        %v681 = vld [vmem:[#allocation5 + $0x990] sm:$0xff]
        %v682 = vld [vmem:[#allocation5 + $0x998] sm:$0xff]
        %v683 = vld [vmem:[#allocation5 + $0x9a0] sm:$0xff]
        %v684 = vld [vmem:[#allocation5 + $0x9a8] sm:$0xff]
        %v685 = vld [vmem:[#allocation5 + $0x9b0] sm:$0xff]
        %v686 = vld [vmem:[#allocation5 + $0x9b8] sm:$0xff]
        %v687 = vld [vmem:[#allocation5 + $0x9c0] sm:$0xff]
        %v688 = vld [vmem:[#allocation5 + $0x9c8] sm:$0xff]
        %v689 = vld [vmem:[#allocation5 + $0x9d0] sm:$0xff]
        %v690 = vld [vmem:[#allocation5 + $0x9d8] sm:$0xff]
        %v691 = vld [vmem:[#allocation5 + $0x9e0] sm:$0xff]
        %v692 = vld [vmem:[#allocation5 + $0x9e8] sm:$0xff]
        %v693 = vld [vmem:[#allocation5 + $0x9f0] sm:$0xff]
        %v694 = vld [vmem:[#allocation5 + $0x9f8] sm:$0xff]
        %v695 = vld [vmem:[#allocation5 + $0xa00] sm:$0xff]
        %v696 = vld [vmem:[#allocation5 + $0xa08] sm:$0xff]
        %v697 = vld [vmem:[#allocation5 + $0xa10] sm:$0xff]
        %v698 = vld [vmem:[#allocation5 + $0xa18] sm:$0xff]
        %v699 = vld [vmem:[#allocation5 + $0xa20] sm:$0xff]
        %v700 = vld [vmem:[#allocation5 + $0xa28] sm:$0xff]
        %v701 = vld [vmem:[#allocation5 + $0xa30] sm:$0xff]
        %v702 = vld [vmem:[#allocation5 + $0xa38] sm:$0xff]
        %v703 = vld [vmem:[#allocation5 + $0xa40] sm:$0xff]
        %v704 = vld [vmem:[#allocation5 + $0xa48] sm:$0xff]
        %v705 = vld [vmem:[#allocation5 + $0xa50] sm:$0xff]
        %v706 = vld [vmem:[#allocation5 + $0xa58] sm:$0xff]
        %v707 = vld [vmem:[#allocation5 + $0xa60] sm:$0xff]
        %v708 = vld [vmem:[#allocation5 + $0xa68] sm:$0xff]
        %v709 = vld [vmem:[#allocation5 + $0xa70] sm:$0xff]
        %v710 = vld [vmem:[#allocation5 + $0xa78] sm:$0xff]
        %v711 = vld [vmem:[#allocation5 + $0xa80] sm:$0xff]
        %v712 = vld [vmem:[#allocation5 + $0xa88] sm:$0xff]
        %v713 = vld [vmem:[#allocation5 + $0xa90] sm:$0xff]
        %v714 = vld [vmem:[#allocation5 + $0xa98] sm:$0xff]
        %v715 = vld [vmem:[#allocation5 + $0xaa0] sm:$0xff]
        %v716 = vld [vmem:[#allocation5 + $0xaa8] sm:$0xff]
        %v717 = vld [vmem:[#allocation5 + $0xab0] sm:$0xff]
        %v718 = vld [vmem:[#allocation5 + $0xab8] sm:$0xff]
        %v719 = vld [vmem:[#allocation5 + $0xac0] sm:$0xff]
        %v720 = vld [vmem:[#allocation5 + $0xac8] sm:$0xff]
        %v721 = vld [vmem:[#allocation5 + $0xad0] sm:$0xff]
        %v722 = vld [vmem:[#allocation5 + $0xad8] sm:$0xff]
        %v723 = vld [vmem:[#allocation5 + $0xae0] sm:$0xff]
        %v724 = vld [vmem:[#allocation5 + $0xae8] sm:$0xff]
        %v725 = vld [vmem:[#allocation5 + $0xaf0] sm:$0xff]
        %v726 = vld [vmem:[#allocation5 + $0xaf8] sm:$0xff]
        %v727 = vld [vmem:[#allocation5 + $0xb00] sm:$0xff]
        %v728 = vld [vmem:[#allocation5 + $0xb08] sm:$0xff]
        %v729 = vld [vmem:[#allocation5 + $0xb10] sm:$0xff]
        %v730 = vld [vmem:[#allocation5 + $0xb18] sm:$0xff]
        %v731 = vld [vmem:[#allocation5 + $0xb20] sm:$0xff]
        %v732 = vld [vmem:[#allocation5 + $0xb28] sm:$0xff]
        %v733 = vld [vmem:[#allocation5 + $0xb30] sm:$0xff]
        %v734 = vld [vmem:[#allocation5 + $0xb38] sm:$0xff]
        %v735 = vld [vmem:[#allocation5 + $0xb40] sm:$0xff]
        %v736 = vld [vmem:[#allocation5 + $0xb48] sm:$0xff]
        %v737 = vld [vmem:[#allocation5 + $0xb50] sm:$0xff]
        %v738 = vld [vmem:[#allocation5 + $0xb58] sm:$0xff]
        %v739 = vld [vmem:[#allocation5 + $0xb60] sm:$0xff]
        %v740 = vld [vmem:[#allocation5 + $0xb68] sm:$0xff]
        %v741 = vld [vmem:[#allocation5 + $0xb70] sm:$0xff]
        %v742 = vld [vmem:[#allocation5 + $0xb78] sm:$0xff]
        %v743 = vld [vmem:[#allocation5 + $0xb80] sm:$0xff]
        %v744 = vld [vmem:[#allocation5 + $0xb88] sm:$0xff]
        %v745 = vld [vmem:[#allocation5 + $0xb90] sm:$0xff]
        %v746 = vld [vmem:[#allocation5 + $0xb98] sm:$0xff]
        %v747 = vld [vmem:[#allocation5 + $0xba0] sm:$0xff]
        %v748 = vld [vmem:[#allocation5 + $0xba8] sm:$0xff]
        %v749 = vld [vmem:[#allocation5 + $0xbb0] sm:$0xff]
        %v750 = vld [vmem:[#allocation5 + $0xbb8] sm:$0xff]
        %v751 = vld [vmem:[#allocation5 + $0xbc0] sm:$0xff]
        %v752 = vld [vmem:[#allocation5 + $0xbc8] sm:$0xff]
        %v753 = vld [vmem:[#allocation5 + $0xbd0] sm:$0xff]
        %v754 = vld [vmem:[#allocation5 + $0xbd8] sm:$0xff]
        %v755 = vld [vmem:[#allocation5 + $0xbe0] sm:$0xff]
        %v756 = vld [vmem:[#allocation5 + $0xbe8] sm:$0xff]
        %v757 = vld [vmem:[#allocation5 + $0xbf0] sm:$0xff]
        %v758 = vld [vmem:[#allocation5 + $0xbf8] sm:$0xff]
        %v759 = vld [vmem:[#allocation5 + $0xc00] sm:$0xff]
        %v760 = vld [vmem:[#allocation5 + $0xc08] sm:$0xff]
        %v761 = vld [vmem:[#allocation5 + $0xc10] sm:$0xff]
        %v762 = vld [vmem:[#allocation5 + $0xc18] sm:$0xff]
        %v763 = vld [vmem:[#allocation5 + $0xc20] sm:$0xff]
        %v764 = vld [vmem:[#allocation5 + $0xc28] sm:$0xff]
        %v765 = vld [vmem:[#allocation5 + $0xc30] sm:$0xff]
        %v766 = vld [vmem:[#allocation5 + $0xc38] sm:$0xff]
        %v767 = vld [vmem:[#allocation5 + $0xc40] sm:$0xff]
        %v768 = vld [vmem:[#allocation5 + $0xc48] sm:$0xff]
        %v769 = vld [vmem:[#allocation5 + $0xc50] sm:$0xff]
        %v770 = vld [vmem:[#allocation5 + $0xc58] sm:$0xff]
        %v771 = vld [vmem:[#allocation5 + $0xc60] sm:$0xff]
        %v772 = vld [vmem:[#allocation5 + $0xc68] sm:$0xff]
        %v773 = vld [vmem:[#allocation5 + $0xc70] sm:$0xff]
        %v774 = vld [vmem:[#allocation5 + $0xc78] sm:$0xff]
        %v775 = vld [vmem:[#allocation5 + $0xc80] sm:$0xff]
        %v776 = vld [vmem:[#allocation5 + $0xc88] sm:$0xff]
        %v777 = vld [vmem:[#allocation5 + $0xc90] sm:$0xff]
        %v778 = vld [vmem:[#allocation5 + $0xc98] sm:$0xff]
        %v779 = vld [vmem:[#allocation5 + $0xca0] sm:$0xff]
        %v780 = vld [vmem:[#allocation5 + $0xca8] sm:$0xff]
        %v781 = vld [vmem:[#allocation5 + $0xcb0] sm:$0xff]
        %v782 = vld [vmem:[#allocation5 + $0xcb8] sm:$0xff]
        %v783 = vld [vmem:[#allocation5 + $0xcc0] sm:$0xff]
        %v784 = vld [vmem:[#allocation5 + $0xcc8] sm:$0xff]
        %v785 = vld [vmem:[#allocation5 + $0xcd0] sm:$0xff]
        %v786 = vld [vmem:[#allocation5 + $0xcd8] sm:$0xff]
        %v787 = vld [vmem:[#allocation5 + $0xce0] sm:$0xff]
        %v788 = vld [vmem:[#allocation5 + $0xce8] sm:$0xff]
        %v789 = vld [vmem:[#allocation5 + $0xcf0] sm:$0xff]
        %v790 = vld [vmem:[#allocation5 + $0xcf8] sm:$0xff]
        %v791 = vld [vmem:[#allocation5 + $0xd00] sm:$0xff]
        %v792 = vld [vmem:[#allocation5 + $0xd08] sm:$0xff]
        %v793 = vld [vmem:[#allocation5 + $0xd10] sm:$0xff]
        %v794 = vld [vmem:[#allocation5 + $0xd18] sm:$0xff]
        %v795 = vld [vmem:[#allocation5 + $0xd20] sm:$0xff]
        %v796 = vld [vmem:[#allocation5 + $0xd28] sm:$0xff]
        %v797 = vld [vmem:[#allocation5 + $0xd30] sm:$0xff]
        %v798 = vld [vmem:[#allocation5 + $0xd38] sm:$0xff]
        %v799 = vld [vmem:[#allocation5 + $0xd40] sm:$0xff]
        %v800 = vld [vmem:[#allocation5 + $0xd48] sm:$0xff]
        %v801 = vld [vmem:[#allocation5 + $0xd50] sm:$0xff]
        %v802 = vld [vmem:[#allocation5 + $0xd58] sm:$0xff]
        %v803 = vld [vmem:[#allocation5 + $0xd60] sm:$0xff]
        %v804 = vld [vmem:[#allocation5 + $0xd68] sm:$0xff]
        %v805 = vld [vmem:[#allocation5 + $0xd70] sm:$0xff]
        %v806 = vld [vmem:[#allocation5 + $0xd78] sm:$0xff]
        %v807 = vld [vmem:[#allocation5 + $0xd80] sm:$0xff]
        %v808 = vld [vmem:[#allocation5 + $0xd88] sm:$0xff]
        %v809 = vld [vmem:[#allocation5 + $0xd90] sm:$0xff]
        %v810 = vld [vmem:[#allocation5 + $0xd98] sm:$0xff]
        %v811 = vld [vmem:[#allocation5 + $0xda0] sm:$0xff]
        %v812 = vld [vmem:[#allocation5 + $0xda8] sm:$0xff]
        %v813 = vld [vmem:[#allocation5 + $0xdb0] sm:$0xff]
        %v814 = vld [vmem:[#allocation5 + $0xdb8] sm:$0xff]
        %v815 = vld [vmem:[#allocation5 + $0xdc0] sm:$0xff]
        %v816 = vld [vmem:[#allocation5 + $0xdc8] sm:$0xff]
        %v817 = vld [vmem:[#allocation5 + $0xdd0] sm:$0xff]
        %v818 = vld [vmem:[#allocation5 + $0xdd8] sm:$0xff]
        %v819 = vld [vmem:[#allocation5 + $0xde0] sm:$0xff]
        %v820 = vld [vmem:[#allocation5 + $0xde8] sm:$0xff]
        %v821 = vld [vmem:[#allocation5 + $0xdf0] sm:$0xff]
        %v822 = vld [vmem:[#allocation5 + $0xdf8] sm:$0xff]
        %v823 = vld [vmem:[#allocation5 + $0xe00] sm:$0xff]
        %v824 = vld [vmem:[#allocation5 + $0xe08] sm:$0xff]
        %v825 = vld [vmem:[#allocation5 + $0xe10] sm:$0xff]
        %v826 = vld [vmem:[#allocation5 + $0xe18] sm:$0xff]
        %v827 = vld [vmem:[#allocation5 + $0xe20] sm:$0xff]
        %v828 = vld [vmem:[#allocation5 + $0xe28] sm:$0xff]
        %v829 = vld [vmem:[#allocation5 + $0xe30] sm:$0xff]
        %v830 = vld [vmem:[#allocation5 + $0xe38] sm:$0xff]
        %v831 = vld [vmem:[#allocation5 + $0xe40] sm:$0xff]
        %v832 = vld [vmem:[#allocation5 + $0xe48] sm:$0xff]
        %v833 = vld [vmem:[#allocation5 + $0xe50] sm:$0xff]
        %v834 = vld [vmem:[#allocation5 + $0xe58] sm:$0xff]
        %v835 = vld [vmem:[#allocation5 + $0xe60] sm:$0xff]
        %v836 = vld [vmem:[#allocation5 + $0xe68] sm:$0xff]
        %v837 = vld [vmem:[#allocation5 + $0xe70] sm:$0xff]
        %v838 = vld [vmem:[#allocation5 + $0xe78] sm:$0xff]
        %v839 = vld [vmem:[#allocation5 + $0xe80] sm:$0xff]
        %v840 = vld [vmem:[#allocation5 + $0xe88] sm:$0xff]
        %v841 = vld [vmem:[#allocation5 + $0xe90] sm:$0xff]
        %v842 = vld [vmem:[#allocation5 + $0xe98] sm:$0xff]
        %v843 = vld [vmem:[#allocation5 + $0xea0] sm:$0xff]
        %v844 = vld [vmem:[#allocation5 + $0xea8] sm:$0xff]
        %v845 = vld [vmem:[#allocation5 + $0xeb0] sm:$0xff]
        %v846 = vld [vmem:[#allocation5 + $0xeb8] sm:$0xff]
        %v847 = vld [vmem:[#allocation5 + $0xec0] sm:$0xff]
        %v848 = vld [vmem:[#allocation5 + $0xec8] sm:$0xff]
        %v849 = vld [vmem:[#allocation5 + $0xed0] sm:$0xff]
        %v850 = vld [vmem:[#allocation5 + $0xed8] sm:$0xff]
        %v851 = vld [vmem:[#allocation5 + $0xee0] sm:$0xff]
        %v852 = vld [vmem:[#allocation5 + $0xee8] sm:$0xff]
        %v853 = vld [vmem:[#allocation5 + $0xef0] sm:$0xff]
        %v854 = vld [vmem:[#allocation5 + $0xef8] sm:$0xff]
        %v855 = vld [vmem:[#allocation5 + $0xf00] sm:$0xff]
        %v856 = vld [vmem:[#allocation5 + $0xf08] sm:$0xff]
        %v857 = vld [vmem:[#allocation5 + $0xf10] sm:$0xff]
        %v858 = vld [vmem:[#allocation5 + $0xf18] sm:$0xff]
        %v859 = vld [vmem:[#allocation5 + $0xf20] sm:$0xff]
        %v860 = vld [vmem:[#allocation5 + $0xf28] sm:$0xff]
        %v861 = vld [vmem:[#allocation5 + $0xf30] sm:$0xff]
        %v862 = vld [vmem:[#allocation5 + $0xf38] sm:$0xff]
        %v863 = vld [vmem:[#allocation5 + $0xf40] sm:$0xff]
        %v864 = vld [vmem:[#allocation5 + $0xf48] sm:$0xff]
        %v865 = vld [vmem:[#allocation5 + $0xf50] sm:$0xff]
        %v866 = vld [vmem:[#allocation5 + $0xf58] sm:$0xff]
        %v867 = vld [vmem:[#allocation5 + $0xf60] sm:$0xff]
        %v868 = vld [vmem:[#allocation5 + $0xf68] sm:$0xff]
        %v869 = vld [vmem:[#allocation5 + $0xf70] sm:$0xff]
        %v870 = vld [vmem:[#allocation5 + $0xf78] sm:$0xff]
        %v871 = vld [vmem:[#allocation5 + $0xf80] sm:$0xff]
        %v872 = vld [vmem:[#allocation5 + $0xf88] sm:$0xff]
        %v873 = vld [vmem:[#allocation5 + $0xf90] sm:$0xff]
        %v874 = vld [vmem:[#allocation5 + $0xf98] sm:$0xff]
        %v875 = vld [vmem:[#allocation5 + $0xfa0] sm:$0xff]
        %v876 = vld [vmem:[#allocation5 + $0xfa8] sm:$0xff]
        %v877 = vld [vmem:[#allocation5 + $0xfb0] sm:$0xff]
        %v878 = vld [vmem:[#allocation5 + $0xfb8] sm:$0xff]
        %v879 = vld [vmem:[#allocation5 + $0xfc0] sm:$0xff]
        %v880 = vld [vmem:[#allocation5 + $0xfc8] sm:$0xff]
        %v881 = vld [vmem:[#allocation5 + $0xfd0] sm:$0xff]
        %v882 = vld [vmem:[#allocation5 + $0xfd8] sm:$0xff]
        %v883 = vld [vmem:[#allocation5 + $0xfe0] sm:$0xff]
        %v884 = vld [vmem:[#allocation5 + $0xfe8] sm:$0xff]
        %v885 = vld [vmem:[#allocation5 + $0xff0] sm:$0xff]
        %v886 = vld [vmem:[#allocation5 + $0xff8] sm:$0xff]
        %v887 = vld [vmem:[#allocation5 + $0x1000] sm:$0xff]
        %v888 = vld [vmem:[#allocation5 + $0x1008] sm:$0xff]
        %v889 = vld [vmem:[#allocation5 + $0x1010] sm:$0xff]
        %v890 = vld [vmem:[#allocation5 + $0x1018] sm:$0xff]
        %v891 = vld [vmem:[#allocation5 + $0x1020] sm:$0xff]
        %v892 = vld [vmem:[#allocation5 + $0x1028] sm:$0xff]
        %v893 = vld [vmem:[#allocation5 + $0x1030] sm:$0xff]
        %v894 = vld [vmem:[#allocation5 + $0x1038] sm:$0xff]
        %v895 = vld [vmem:[#allocation5 + $0x1040] sm:$0xff]
        %v896 = vld [vmem:[#allocation5 + $0x1048] sm:$0xff]
        %v897 = vld [vmem:[#allocation5 + $0x1050] sm:$0xff]
        %v898 = vld [vmem:[#allocation5 + $0x1058] sm:$0xff]
        %v899 = vld [vmem:[#allocation5 + $0x1060] sm:$0xff]
        %v900 = vld [vmem:[#allocation5 + $0x1068] sm:$0xff]
        %v901 = vld [vmem:[#allocation5 + $0x1070] sm:$0xff]
        %v902 = vld [vmem:[#allocation5 + $0x1078] sm:$0xff]
        %v903 = vld [vmem:[#allocation5 + $0x1080] sm:$0xff]
        %v904 = vld [vmem:[#allocation5 + $0x1088] sm:$0xff]
        %v905 = vld [vmem:[#allocation5 + $0x1090] sm:$0xff]
        %v906 = vld [vmem:[#allocation5 + $0x1098] sm:$0xff]
        %v907 = vld [vmem:[#allocation5 + $0x10a0] sm:$0xff]
        %v908 = vld [vmem:[#allocation5 + $0x10a8] sm:$0xff]
        %v909 = vld [vmem:[#allocation5 + $0x10b0] sm:$0xff]
        %v910 = vld [vmem:[#allocation5 + $0x10b8] sm:$0xff]
        %v911 = vld [vmem:[#allocation5 + $0x10c0] sm:$0xff]
        %v912 = vld [vmem:[#allocation5 + $0x10c8] sm:$0xff]
        %v913 = vld [vmem:[#allocation5 + $0x10d0] sm:$0xff]
        %v914 = vld [vmem:[#allocation5 + $0x10d8] sm:$0xff]
        %v915 = vld [vmem:[#allocation5 + $0x10e0] sm:$0xff]
        %v916 = vld [vmem:[#allocation5 + $0x10e8] sm:$0xff]
        %v917 = vld [vmem:[#allocation5 + $0x10f0] sm:$0xff]
        %v918 = vld [vmem:[#allocation5 + $0x10f8] sm:$0xff]
        %v919 = vld [vmem:[#allocation5 + $0x1100] sm:$0xff]
        %v920 = vld [vmem:[#allocation5 + $0x1108] sm:$0xff]
        %v921 = vld [vmem:[#allocation5 + $0x1110] sm:$0xff]
        %v922 = vld [vmem:[#allocation5 + $0x1118] sm:$0xff]
        %v923 = vld [vmem:[#allocation5 + $0x1120] sm:$0xff]
        %v924 = vld [vmem:[#allocation5 + $0x1128] sm:$0xff]
        %v925 = vld [vmem:[#allocation5 + $0x1130] sm:$0xff]
        %v926 = vld [vmem:[#allocation5 + $0x1138] sm:$0xff]
        %v927 = vld [vmem:[#allocation5 + $0x1140] sm:$0xff]
        %v928 = vld [vmem:[#allocation5 + $0x1148] sm:$0xff]
        %v929 = vld [vmem:[#allocation5 + $0x1150] sm:$0xff]
        %v930 = vld [vmem:[#allocation5 + $0x1158] sm:$0xff]
        %v931 = vld [vmem:[#allocation5 + $0x1160] sm:$0xff]
        %v932 = vld [vmem:[#allocation5 + $0x1168] sm:$0xff]
        %v933 = vld [vmem:[#allocation5 + $0x1170] sm:$0xff]
        %v934 = vld [vmem:[#allocation5 + $0x1178] sm:$0xff]
        %v935 = vld [vmem:[#allocation5 + $0x1180] sm:$0xff]
        %v936 = vld [vmem:[#allocation5 + $0x1188] sm:$0xff]
        %v937 = vld [vmem:[#allocation5 + $0x1190] sm:$0xff]
        %v938 = vld [vmem:[#allocation5 + $0x1198] sm:$0xff]
        %v939 = vld [vmem:[#allocation5 + $0x11a0] sm:$0xff]
        %v940 = vld [vmem:[#allocation5 + $0x11a8] sm:$0xff]
        %v941 = vld [vmem:[#allocation5 + $0x11b0] sm:$0xff]
        %v942 = vld [vmem:[#allocation5 + $0x11b8] sm:$0xff]
        %v943 = vld [vmem:[#allocation5 + $0x11c0] sm:$0xff]
        %v944 = vld [vmem:[#allocation5 + $0x11c8] sm:$0xff]
        %v945 = vld [vmem:[#allocation5 + $0x11d0] sm:$0xff]
        %v946 = vld [vmem:[#allocation5 + $0x11d8] sm:$0xff]
        %v947 = vld [vmem:[#allocation5 + $0x11e0] sm:$0xff]
        %v948 = vld [vmem:[#allocation5 + $0x11e8] sm:$0xff]
        %v949 = vld [vmem:[#allocation5 + $0x11f0] sm:$0xff]
        %v950 = vld [vmem:[#allocation5 + $0x11f8] sm:$0xff]
        %v951 = vld [vmem:[#allocation5 + $0x1200] sm:$0xff]
        %v952 = vld [vmem:[#allocation5 + $0x1208] sm:$0xff]
        %v953 = vld [vmem:[#allocation5 + $0x1210] sm:$0xff]
        %v954 = vld [vmem:[#allocation5 + $0x1218] sm:$0xff]
        %v955 = vld [vmem:[#allocation5 + $0x1220] sm:$0xff]
        %v956 = vld [vmem:[#allocation5 + $0x1228] sm:$0xff]
        %v957 = vld [vmem:[#allocation5 + $0x1230] sm:$0xff]
        %v958 = vld [vmem:[#allocation5 + $0x1238] sm:$0xff]
        %v959 = vld [vmem:[#allocation5 + $0x1240] sm:$0xff]
        %v960 = vld [vmem:[#allocation5 + $0x1248] sm:$0xff]
        %v961 = vld [vmem:[#allocation5 + $0x1250] sm:$0xff]
        %v962 = vld [vmem:[#allocation5 + $0x1258] sm:$0xff]
        %v963 = vld [vmem:[#allocation5 + $0x1260] sm:$0xff]
        %v964 = vld [vmem:[#allocation5 + $0x1268] sm:$0xff]
        %v965 = vld [vmem:[#allocation5 + $0x1270] sm:$0xff]
        %v966 = vld [vmem:[#allocation5 + $0x1278] sm:$0xff]
        %v967 = vld [vmem:[#allocation5 + $0x1280] sm:$0xff]
        %v968 = vld [vmem:[#allocation5 + $0x1288] sm:$0xff]
        %v969 = vld [vmem:[#allocation5 + $0x1290] sm:$0xff]
        %v970 = vld [vmem:[#allocation5 + $0x1298] sm:$0xff]
        %v971 = vld [vmem:[#allocation5 + $0x12a0] sm:$0xff]
        %v972 = vld [vmem:[#allocation5 + $0x12a8] sm:$0xff]
        %v973 = vld [vmem:[#allocation5 + $0x12b0] sm:$0xff]
        %v974 = vld [vmem:[#allocation5 + $0x12b8] sm:$0xff]
        %v975 = vld [vmem:[#allocation5 + $0x12c0] sm:$0xff]
        %v976 = vld [vmem:[#allocation5 + $0x12c8] sm:$0xff]
        %v977 = vld [vmem:[#allocation5 + $0x12d0] sm:$0xff]
        %v978 = vld [vmem:[#allocation5 + $0x12d8] sm:$0xff]
        %v979 = vld [vmem:[#allocation5 + $0x12e0] sm:$0xff]
        %v980 = vld [vmem:[#allocation5 + $0x12e8] sm:$0xff]
        %v981 = vld [vmem:[#allocation5 + $0x12f0] sm:$0xff]
        %v982 = vld [vmem:[#allocation5 + $0x12f8] sm:$0xff]
        %v983 = vld [vmem:[#allocation5 + $0x1300] sm:$0xff]
        %v984 = vld [vmem:[#allocation5 + $0x1308] sm:$0xff]
        %v985 = vld [vmem:[#allocation5 + $0x1310] sm:$0xff]
        %v986 = vld [vmem:[#allocation5 + $0x1318] sm:$0xff]
        %v987 = vld [vmem:[#allocation5 + $0x1320] sm:$0xff]
        %v988 = vld [vmem:[#allocation5 + $0x1328] sm:$0xff]
        %v989 = vld [vmem:[#allocation5 + $0x1330] sm:$0xff]
        %v990 = vld [vmem:[#allocation5 + $0x1338] sm:$0xff]
        %v991 = vld [vmem:[#allocation5 + $0x1340] sm:$0xff]
        %v992 = vld [vmem:[#allocation5 + $0x1348] sm:$0xff]
        %v993 = vld [vmem:[#allocation5 + $0x1350] sm:$0xff]
        %v994 = vld [vmem:[#allocation5 + $0x1358] sm:$0xff]
        %v995 = vld [vmem:[#allocation5 + $0x1360] sm:$0xff]
        %v996 = vld [vmem:[#allocation5 + $0x1368] sm:$0xff]
        %v997 = vld [vmem:[#allocation5 + $0x1370] sm:$0xff]
        %v998 = vld [vmem:[#allocation5 + $0x1378] sm:$0xff]
        %v999 = vld [vmem:[#allocation5 + $0x1380] sm:$0xff]
        %v1000 = vld [vmem:[#allocation5 + $0x1388] sm:$0xff]
        %v1001 = vld [vmem:[#allocation5 + $0x1390] sm:$0xff]
        %v1002 = vld [vmem:[#allocation5 + $0x1398] sm:$0xff]
        %v1003 = vld [vmem:[#allocation5 + $0x13a0] sm:$0xff]
        %v1004 = vld [vmem:[#allocation5 + $0x13a8] sm:$0xff]
        %v1005 = vld [vmem:[#allocation5 + $0x13b0] sm:$0xff]
        %v1006 = vld [vmem:[#allocation5 + $0x13b8] sm:$0xff]
        %v1007 = vld [vmem:[#allocation5 + $0x13c0] sm:$0xff]
        %v1008 = vld [vmem:[#allocation5 + $0x13c8] sm:$0xff]
        %v1009 = vld [vmem:[#allocation5 + $0x13d0] sm:$0xff]
        %v1010 = vld [vmem:[#allocation5 + $0x13d8] sm:$0xff]
        %v1011 = vld [vmem:[#allocation5 + $0x13e0] sm:$0xff]
        %v1012 = vld [vmem:[#allocation5 + $0x13e8] sm:$0xff]
        %v1013 = vld [vmem:[#allocation5 + $0x13f0] sm:$0xff]
        %v1014 = vld [vmem:[#allocation5 + $0x13f8] sm:$0xff]
        %v1015 = vld [vmem:[#allocation5 + $0x1400] sm:$0xff]
        %v1016 = vld [vmem:[#allocation5 + $0x1408] sm:$0xff]
        %v1017 = vld [vmem:[#allocation5 + $0x1410] sm:$0xff]
        %v1018 = vld [vmem:[#allocation5 + $0x1418] sm:$0xff]
        %v1019 = vld [vmem:[#allocation5 + $0x1420] sm:$0xff]
        %v1020 = vld [vmem:[#allocation5 + $0x1428] sm:$0xff]
        %v1021 = vld [vmem:[#allocation5 + $0x1430] sm:$0xff]
        %v1022 = vld [vmem:[#allocation5 + $0x1438] sm:$0xff]
        %v1023 = vld [vmem:[#allocation5 + $0x1440] sm:$0xff]
        %v1024 = vld [vmem:[#allocation5 + $0x1448] sm:$0xff]
        %v1025 = vld [vmem:[#allocation5 + $0x1450] sm:$0xff]
        %v1026 = vld [vmem:[#allocation5 + $0x1458] sm:$0xff]
        %v1027 = vld [vmem:[#allocation5 + $0x1460] sm:$0xff]
        %v1028 = vld [vmem:[#allocation5 + $0x1468] sm:$0xff]
        %v1029 = vld [vmem:[#allocation5 + $0x1470] sm:$0xff]
        %v1030 = vld [vmem:[#allocation5 + $0x1478] sm:$0xff]
        %v1031 = vld [vmem:[#allocation5 + $0x1480] sm:$0xff]
        %v1032 = vld [vmem:[#allocation5 + $0x1488] sm:$0xff]
        %v1033 = vld [vmem:[#allocation5 + $0x1490] sm:$0xff]
        %v1034 = vld [vmem:[#allocation5 + $0x1498] sm:$0xff]
        %v1035 = vld [vmem:[#allocation5 + $0x14a0] sm:$0xff]
        %v1036 = vld [vmem:[#allocation5 + $0x14a8] sm:$0xff]
        %v1037 = vld [vmem:[#allocation5 + $0x14b0] sm:$0xff]
        %v1038 = vld [vmem:[#allocation5 + $0x14b8] sm:$0xff]
        %v1039 = vld [vmem:[#allocation5 + $0x14c0] sm:$0xff]
        %v1040 = vld [vmem:[#allocation5 + $0x14c8] sm:$0xff]
        %v1041 = vld [vmem:[#allocation5 + $0x14d0] sm:$0xff]
        %v1042 = vld [vmem:[#allocation5 + $0x14d8] sm:$0xff]
        %v1043 = vld [vmem:[#allocation5 + $0x14e0] sm:$0xff]
        %v1044 = vld [vmem:[#allocation5 + $0x14e8] sm:$0xff]
        %v1045 = vld [vmem:[#allocation5 + $0x14f0] sm:$0xff]
        %v1046 = vld [vmem:[#allocation5 + $0x14f8] sm:$0xff]
        %v1047 = vld [vmem:[#allocation5 + $0x1500] sm:$0xff]
        %v1048 = vld [vmem:[#allocation5 + $0x1508] sm:$0xff]
        %v1049 = vld [vmem:[#allocation5 + $0x1510] sm:$0xff]
        %v1050 = vld [vmem:[#allocation5 + $0x1518] sm:$0xff]
        %v1051 = vld [vmem:[#allocation5 + $0x1520] sm:$0xff]
        %v1052 = vld [vmem:[#allocation5 + $0x1528] sm:$0xff]
        %v1053 = vld [vmem:[#allocation5 + $0x1530] sm:$0xff]
        %v1054 = vld [vmem:[#allocation5 + $0x1538] sm:$0xff]
        %v1055 = vld [vmem:[#allocation5 + $0x1540] sm:$0xff]
        %v1056 = vld [vmem:[#allocation5 + $0x1548] sm:$0xff]
        %v1057 = vld [vmem:[#allocation5 + $0x1550] sm:$0xff]
        %v1058 = vld [vmem:[#allocation5 + $0x1558] sm:$0xff]
        %v1059 = vld [vmem:[#allocation5 + $0x1560] sm:$0xff]
        %v1060 = vld [vmem:[#allocation5 + $0x1568] sm:$0xff]
        %v1061 = vld [vmem:[#allocation5 + $0x1570] sm:$0xff]
        %v1062 = vld [vmem:[#allocation5 + $0x1578] sm:$0xff]
        %v1063 = vld [vmem:[#allocation5 + $0x1580] sm:$0xff]
        %v1064 = vld [vmem:[#allocation5 + $0x1588] sm:$0xff]
        %v1065 = vld [vmem:[#allocation5 + $0x1590] sm:$0xff]
        %v1066 = vld [vmem:[#allocation5 + $0x1598] sm:$0xff]
        %v1067 = vld [vmem:[#allocation5 + $0x15a0] sm:$0xff]
        %v1068 = vld [vmem:[#allocation5 + $0x15a8] sm:$0xff]
        %v1069 = vld [vmem:[#allocation5 + $0x15b0] sm:$0xff]
        %v1070 = vld [vmem:[#allocation5 + $0x15b8] sm:$0xff]
        %v1071 = vld [vmem:[#allocation5 + $0x15c0] sm:$0xff]
        %v1072 = vld [vmem:[#allocation5 + $0x15c8] sm:$0xff]
        %v1073 = vld [vmem:[#allocation5 + $0x15d0] sm:$0xff]
        %v1074 = vld [vmem:[#allocation5 + $0x15d8] sm:$0xff]
        %v1075 = vld [vmem:[#allocation5 + $0x15e0] sm:$0xff]
        %v1076 = vld [vmem:[#allocation5 + $0x15e8] sm:$0xff]
        %v1077 = vld [vmem:[#allocation5 + $0x15f0] sm:$0xff]
        %v1078 = vld [vmem:[#allocation5 + $0x15f8] sm:$0xff]
        %v1079 = vld [vmem:[#allocation5 + $0x1600] sm:$0xff]
        %v1080 = vld [vmem:[#allocation5 + $0x1608] sm:$0xff]
        %v1081 = vld [vmem:[#allocation5 + $0x1610] sm:$0xff]
        %v1082 = vld [vmem:[#allocation5 + $0x1618] sm:$0xff]
        %v1083 = vld [vmem:[#allocation5 + $0x1620] sm:$0xff]
        %v1084 = vld [vmem:[#allocation5 + $0x1628] sm:$0xff]
        %v1085 = vld [vmem:[#allocation5 + $0x1630] sm:$0xff]
        %v1086 = vld [vmem:[#allocation5 + $0x1638] sm:$0xff]
        %v1087 = vld [vmem:[#allocation5 + $0x1640] sm:$0xff]
        %v1088 = vld [vmem:[#allocation5 + $0x1648] sm:$0xff]
        %v1089 = vld [vmem:[#allocation5 + $0x1650] sm:$0xff]
        %v1090 = vld [vmem:[#allocation5 + $0x1658] sm:$0xff]
        %v1091 = vld [vmem:[#allocation5 + $0x1660] sm:$0xff]
        %v1092 = vld [vmem:[#allocation5 + $0x1668] sm:$0xff]
        %v1093 = vld [vmem:[#allocation5 + $0x1670] sm:$0xff]
        %v1094 = vld [vmem:[#allocation5 + $0x1678] sm:$0xff]
        %v1095 = vld [vmem:[#allocation5 + $0x1680] sm:$0xff]
        %v1096 = vld [vmem:[#allocation5 + $0x1688] sm:$0xff]
        %v1097 = vld [vmem:[#allocation5 + $0x1690] sm:$0xff]
        %v1098 = vld [vmem:[#allocation5 + $0x1698] sm:$0xff]
        %v1099 = vld [vmem:[#allocation5 + $0x16a0] sm:$0xff]
        %v1100 = vld [vmem:[#allocation5 + $0x16a8] sm:$0xff]
        %v1101 = vld [vmem:[#allocation5 + $0x16b0] sm:$0xff]
        %v1102 = vld [vmem:[#allocation5 + $0x16b8] sm:$0xff]
        %v1103 = vld [vmem:[#allocation5 + $0x16c0] sm:$0xff]
        %v1104 = vld [vmem:[#allocation5 + $0x16c8] sm:$0xff]
        %v1105 = vld [vmem:[#allocation5 + $0x16d0] sm:$0xff]
        %v1106 = vld [vmem:[#allocation5 + $0x16d8] sm:$0xff]
        %v1107 = vld [vmem:[#allocation5 + $0x16e0] sm:$0xff]
        %v1108 = vld [vmem:[#allocation5 + $0x16e8] sm:$0xff]
        %v1109 = vld [vmem:[#allocation5 + $0x16f0] sm:$0xff]
        %v1110 = vld [vmem:[#allocation5 + $0x16f8] sm:$0xff]
        %v1111 = vld [vmem:[#allocation5 + $0x1700] sm:$0xff]
        %v1112 = vld [vmem:[#allocation5 + $0x1708] sm:$0xff]
        %v1113 = vld [vmem:[#allocation5 + $0x1710] sm:$0xff]
        %v1114 = vld [vmem:[#allocation5 + $0x1718] sm:$0xff]
        %v1115 = vld [vmem:[#allocation5 + $0x1720] sm:$0xff]
        %v1116 = vld [vmem:[#allocation5 + $0x1728] sm:$0xff]
        %v1117 = vld [vmem:[#allocation5 + $0x1730] sm:$0xff]
        %v1118 = vld [vmem:[#allocation5 + $0x1738] sm:$0xff]
        %v1119 = vld [vmem:[#allocation5 + $0x1740] sm:$0xff]
        %v1120 = vld [vmem:[#allocation5 + $0x1748] sm:$0xff]
        %v1121 = vld [vmem:[#allocation5 + $0x1750] sm:$0xff]
        %v1122 = vld [vmem:[#allocation5 + $0x1758] sm:$0xff]
        %v1123 = vld [vmem:[#allocation5 + $0x1760] sm:$0xff]
        %v1124 = vld [vmem:[#allocation5 + $0x1768] sm:$0xff]
        %v1125 = vld [vmem:[#allocation5 + $0x1770] sm:$0xff]
        %v1126 = vld [vmem:[#allocation5 + $0x1778] sm:$0xff]
        %v1127 = vld [vmem:[#allocation5 + $0x1780] sm:$0xff]
        %v1128 = vld [vmem:[#allocation5 + $0x1788] sm:$0xff]
        %v1129 = vld [vmem:[#allocation5 + $0x1790] sm:$0xff]
        %v1130 = vld [vmem:[#allocation5 + $0x1798] sm:$0xff]
        %v1131 = vld [vmem:[#allocation5 + $0x17a0] sm:$0xff]
        %v1132 = vld [vmem:[#allocation5 + $0x17a8] sm:$0xff]
        %v1133 = vld [vmem:[#allocation5 + $0x17b0] sm:$0xff]
        %v1134 = vld [vmem:[#allocation5 + $0x17b8] sm:$0xff]
        %v1135 = vld [vmem:[#allocation5 + $0x17c0] sm:$0xff]
        %v1136 = vld [vmem:[#allocation5 + $0x17c8] sm:$0xff]
        %v1137 = vld [vmem:[#allocation5 + $0x17d0] sm:$0xff]
        %v1138 = vld [vmem:[#allocation5 + $0x17d8] sm:$0xff]
        %v1139 = vld [vmem:[#allocation5 + $0x17e0] sm:$0xff]
        %v1140 = vld [vmem:[#allocation5 + $0x17e8] sm:$0xff]
        %v1141 = vld [vmem:[#allocation5 + $0x17f0] sm:$0xff]
        %v1142 = vld [vmem:[#allocation5 + $0x17f8] sm:$0xff]
        %v1143 = vld [vmem:[#allocation5 + $0x1800] sm:$0xff]
        %v1144 = vld [vmem:[#allocation5 + $0x1808] sm:$0xff]
        %v1145 = vld [vmem:[#allocation5 + $0x1810] sm:$0xff]
        %v1146 = vld [vmem:[#allocation5 + $0x1818] sm:$0xff]
        %v1147 = vld [vmem:[#allocation5 + $0x1820] sm:$0xff]
        %v1148 = vld [vmem:[#allocation5 + $0x1828] sm:$0xff]
        %v1149 = vld [vmem:[#allocation5 + $0x1830] sm:$0xff]
        %v1150 = vld [vmem:[#allocation5 + $0x1838] sm:$0xff]
        %v1151 = vld [vmem:[#allocation5 + $0x1840] sm:$0xff]
        %v1152 = vld [vmem:[#allocation5 + $0x1848] sm:$0xff]
        %v1153 = vld [vmem:[#allocation5 + $0x1850] sm:$0xff]
        %v1154 = vld [vmem:[#allocation5 + $0x1858] sm:$0xff]
        %v1155 = vld [vmem:[#allocation5 + $0x1860] sm:$0xff]
        %v1156 = vld [vmem:[#allocation5 + $0x1868] sm:$0xff]
        %v1157 = vld [vmem:[#allocation5 + $0x1870] sm:$0xff]
        %v1158 = vld [vmem:[#allocation5 + $0x1878] sm:$0xff]
        %v1159 = vld [vmem:[#allocation5 + $0x1880] sm:$0xff]
        %v1160 = vld [vmem:[#allocation5 + $0x1888] sm:$0xff]
        %v1161 = vld [vmem:[#allocation5 + $0x1890] sm:$0xff]
        %v1162 = vld [vmem:[#allocation5 + $0x1898] sm:$0xff]
        %v1163 = vld [vmem:[#allocation5 + $0x18a0] sm:$0xff]
        %v1164 = vld [vmem:[#allocation5 + $0x18a8] sm:$0xff]
        %v1165 = vld [vmem:[#allocation5 + $0x18b0] sm:$0xff]
        %v1166 = vld [vmem:[#allocation5 + $0x18b8] sm:$0xff]
        %v1167 = vld [vmem:[#allocation5 + $0x18c0] sm:$0xff]
        %v1168 = vld [vmem:[#allocation5 + $0x18c8] sm:$0xff]
        %v1169 = vld [vmem:[#allocation5 + $0x18d0] sm:$0xff]
        %v1170 = vld [vmem:[#allocation5 + $0x18d8] sm:$0xff]
        %v1171 = vld [vmem:[#allocation5 + $0x18e0] sm:$0xff]
        %v1172 = vld [vmem:[#allocation5 + $0x18e8] sm:$0xff]
        %v1173 = vld [vmem:[#allocation5 + $0x18f0] sm:$0xff]
        %v1174 = vld [vmem:[#allocation5 + $0x18f8] sm:$0xff]
        %v1175 = vld [vmem:[#allocation5 + $0x1900] sm:$0xff]
        %v1176 = vld [vmem:[#allocation5 + $0x1908] sm:$0xff]
        %v1177 = vld [vmem:[#allocation5 + $0x1910] sm:$0xff]
        %v1178 = vld [vmem:[#allocation5 + $0x1918] sm:$0xff]
        %v1179 = vld [vmem:[#allocation5 + $0x1920] sm:$0xff]
        %v1180 = vld [vmem:[#allocation5 + $0x1928] sm:$0xff]
        %v1181 = vld [vmem:[#allocation5 + $0x1930] sm:$0xff]
        %v1182 = vld [vmem:[#allocation5 + $0x1938] sm:$0xff]
        %v1183 = vld [vmem:[#allocation5 + $0x1940] sm:$0xff]
        %v1184 = vld [vmem:[#allocation5 + $0x1948] sm:$0xff]
        %v1185 = vld [vmem:[#allocation5 + $0x1950] sm:$0xff]
        %v1186 = vld [vmem:[#allocation5 + $0x1958] sm:$0xff]
        %v1187 = vld [vmem:[#allocation5 + $0x1960] sm:$0xff]
        %v1188 = vld [vmem:[#allocation5 + $0x1968] sm:$0xff]
        %v1189 = vld [vmem:[#allocation5 + $0x1970] sm:$0xff]
        %v1190 = vld [vmem:[#allocation5 + $0x1978] sm:$0xff]
        %v1191 = vld [vmem:[#allocation5 + $0x1980] sm:$0xff]
        %v1192 = vld [vmem:[#allocation5 + $0x1988] sm:$0xff]
        %v1193 = vld [vmem:[#allocation5 + $0x1990] sm:$0xff]
        %v1194 = vld [vmem:[#allocation5 + $0x1998] sm:$0xff]
        %v1195 = vld [vmem:[#allocation5 + $0x19a0] sm:$0xff]
        %v1196 = vld [vmem:[#allocation5 + $0x19a8] sm:$0xff]
        %v1197 = vld [vmem:[#allocation5 + $0x19b0] sm:$0xff]
        %v1198 = vld [vmem:[#allocation5 + $0x19b8] sm:$0xff]
        %v1199 = vld [vmem:[#allocation5 + $0x19c0] sm:$0xff]
        %v1200 = vld [vmem:[#allocation5 + $0x19c8] sm:$0xff]
        %v1201 = vld [vmem:[#allocation5 + $0x19d0] sm:$0xff]
        %v1202 = vld [vmem:[#allocation5 + $0x19d8] sm:$0xff]
        %v1203 = vld [vmem:[#allocation5 + $0x19e0] sm:$0xff]
        %v1204 = vld [vmem:[#allocation5 + $0x19e8] sm:$0xff]
        %v1205 = vld [vmem:[#allocation5 + $0x19f0] sm:$0xff]
        %v1206 = vld [vmem:[#allocation5 + $0x19f8] sm:$0xff]
        %v1207 = vld [vmem:[#allocation5 + $0x1a00] sm:$0xff]
        %v1208 = vld [vmem:[#allocation5 + $0x1a08] sm:$0xff]
        %v1209 = vld [vmem:[#allocation5 + $0x1a10] sm:$0xff]
        %v1210 = vld [vmem:[#allocation5 + $0x1a18] sm:$0xff]
        %v1211 = vld [vmem:[#allocation5 + $0x1a20] sm:$0xff]
        %v1212 = vld [vmem:[#allocation5 + $0x1a28] sm:$0xff]
        %v1213 = vld [vmem:[#allocation5 + $0x1a30] sm:$0xff]
        %v1214 = vld [vmem:[#allocation5 + $0x1a38] sm:$0xff]
        %v1215 = vld [vmem:[#allocation5 + $0x1a40] sm:$0xff]
        %v1216 = vld [vmem:[#allocation5 + $0x1a48] sm:$0xff]
        %v1217 = vld [vmem:[#allocation5 + $0x1a50] sm:$0xff]
        %v1218 = vld [vmem:[#allocation5 + $0x1a58] sm:$0xff]
        %v1219 = vld [vmem:[#allocation5 + $0x1a60] sm:$0xff]
        %v1220 = vld [vmem:[#allocation5 + $0x1a68] sm:$0xff]
        %v1221 = vld [vmem:[#allocation5 + $0x1a70] sm:$0xff]
        %v1222 = vld [vmem:[#allocation5 + $0x1a78] sm:$0xff]
        %v1223 = vld [vmem:[#allocation5 + $0x1a80] sm:$0xff]
        %v1224 = vld [vmem:[#allocation5 + $0x1a88] sm:$0xff]
        %v1225 = vld [vmem:[#allocation5 + $0x1a90] sm:$0xff]
        %v1226 = vld [vmem:[#allocation5 + $0x1a98] sm:$0xff]
        %v1227 = vld [vmem:[#allocation5 + $0x1aa0] sm:$0xff]
        %v1228 = vld [vmem:[#allocation5 + $0x1aa8] sm:$0xff]
        %v1229 = vld [vmem:[#allocation5 + $0x1ab0] sm:$0xff]
        %v1230 = vld [vmem:[#allocation5 + $0x1ab8] sm:$0xff]
        %v1231 = vld [vmem:[#allocation5 + $0x1ac0] sm:$0xff]
        %v1232 = vld [vmem:[#allocation5 + $0x1ac8] sm:$0xff]
        %v1233 = vld [vmem:[#allocation5 + $0x1ad0] sm:$0xff]
        %v1234 = vld [vmem:[#allocation5 + $0x1ad8] sm:$0xff]
        %v1235 = vld [vmem:[#allocation5 + $0x1ae0] sm:$0xff]
        %v1236 = vld [vmem:[#allocation5 + $0x1ae8] sm:$0xff]
        %v1237 = vld [vmem:[#allocation5 + $0x1af0] sm:$0xff]
        %v1238 = vld [vmem:[#allocation5 + $0x1af8] sm:$0xff]
        %v1239 = vld [vmem:[#allocation5 + $0x1b00] sm:$0xff]
        %v1240 = vld [vmem:[#allocation5 + $0x1b08] sm:$0xff]
        %v1241 = vld [vmem:[#allocation5 + $0x1b10] sm:$0xff]
        %v1242 = vld [vmem:[#allocation5 + $0x1b18] sm:$0xff]
        %v1243 = vld [vmem:[#allocation5 + $0x1b20] sm:$0xff]
        %v1244 = vld [vmem:[#allocation5 + $0x1b28] sm:$0xff]
        %v1245 = vld [vmem:[#allocation5 + $0x1b30] sm:$0xff]
        %v1246 = vld [vmem:[#allocation5 + $0x1b38] sm:$0xff]
        %v1247 = vld [vmem:[#allocation5 + $0x1b40] sm:$0xff]
        %v1248 = vld [vmem:[#allocation5 + $0x1b48] sm:$0xff]
        %v1249 = vld [vmem:[#allocation5 + $0x1b50] sm:$0xff]
        %v1250 = vld [vmem:[#allocation5 + $0x1b58] sm:$0xff]
        %v1251 = vld [vmem:[#allocation5 + $0x1b60] sm:$0xff]
        %v1252 = vld [vmem:[#allocation5 + $0x1b68] sm:$0xff]
        %v1253 = vld [vmem:[#allocation5 + $0x1b70] sm:$0xff]
        %v1254 = vld [vmem:[#allocation5 + $0x1b78] sm:$0xff]
        %v1255 = vld [vmem:[#allocation5 + $0x1b80] sm:$0xff]
        %v1256 = vld [vmem:[#allocation5 + $0x1b88] sm:$0xff]
        %v1257 = vld [vmem:[#allocation5 + $0x1b90] sm:$0xff]
        %v1258 = vld [vmem:[#allocation5 + $0x1b98] sm:$0xff]
        %v1259 = vld [vmem:[#allocation5 + $0x1ba0] sm:$0xff]
        %v1260 = vld [vmem:[#allocation5 + $0x1ba8] sm:$0xff]
        %v1261 = vld [vmem:[#allocation5 + $0x1bb0] sm:$0xff]
        %v1262 = vld [vmem:[#allocation5 + $0x1bb8] sm:$0xff]
        %v1263 = vld [vmem:[#allocation5 + $0x1bc0] sm:$0xff]
        %v1264 = vld [vmem:[#allocation5 + $0x1bc8] sm:$0xff]
        %v1265 = vld [vmem:[#allocation5 + $0x1bd0] sm:$0xff]
        %v1266 = vld [vmem:[#allocation5 + $0x1bd8] sm:$0xff]
        %v1267 = vld [vmem:[#allocation5 + $0x1be0] sm:$0xff]
        %v1268 = vld [vmem:[#allocation5 + $0x1be8] sm:$0xff]
        %v1269 = vld [vmem:[#allocation5 + $0x1bf0] sm:$0xff]
        %v1270 = vld [vmem:[#allocation5 + $0x1bf8] sm:$0xff]
        %v1271 = vld [vmem:[#allocation5 + $0x1c00] sm:$0xff]
        %v1272 = vld [vmem:[#allocation5 + $0x1c08] sm:$0xff]
        %v1273 = vld [vmem:[#allocation5 + $0x1c10] sm:$0xff]
        %v1274 = vld [vmem:[#allocation5 + $0x1c18] sm:$0xff]
        %v1275 = vld [vmem:[#allocation5 + $0x1c20] sm:$0xff]
        %v1276 = vld [vmem:[#allocation5 + $0x1c28] sm:$0xff]
        %v1277 = vld [vmem:[#allocation5 + $0x1c30] sm:$0xff]
        %v1278 = vld [vmem:[#allocation5 + $0x1c38] sm:$0xff]
        %v1279 = vld [vmem:[#allocation5 + $0x1c40] sm:$0xff]
        %v1280 = vld [vmem:[#allocation5 + $0x1c48] sm:$0xff]
        %v1281 = vld [vmem:[#allocation5 + $0x1c50] sm:$0xff]
        %v1282 = vld [vmem:[#allocation5 + $0x1c58] sm:$0xff]
        %v1283 = vld [vmem:[#allocation5 + $0x1c60] sm:$0xff]
        %v1284 = vld [vmem:[#allocation5 + $0x1c68] sm:$0xff]
        %v1285 = vld [vmem:[#allocation5 + $0x1c70] sm:$0xff]
        %v1286 = vld [vmem:[#allocation5 + $0x1c78] sm:$0xff]
        %v1287 = vld [vmem:[#allocation5 + $0x1c80] sm:$0xff]
        %v1288 = vld [vmem:[#allocation5 + $0x1c88] sm:$0xff]
        %v1289 = vld [vmem:[#allocation5 + $0x1c90] sm:$0xff]
        %v1290 = vld [vmem:[#allocation5 + $0x1c98] sm:$0xff]
        %v1291 = vld [vmem:[#allocation5 + $0x1ca0] sm:$0xff]
        %v1292 = vld [vmem:[#allocation5 + $0x1ca8] sm:$0xff]
        %v1293 = vld [vmem:[#allocation5 + $0x1cb0] sm:$0xff]
        %v1294 = vld [vmem:[#allocation5 + $0x1cb8] sm:$0xff]
        %v1295 = vld [vmem:[#allocation5 + $0x1cc0] sm:$0xff]
        %v1296 = vld [vmem:[#allocation5 + $0x1cc8] sm:$0xff]
        %v1297 = vld [vmem:[#allocation5 + $0x1cd0] sm:$0xff]
        %v1298 = vld [vmem:[#allocation5 + $0x1cd8] sm:$0xff]
        %v1299 = vld [vmem:[#allocation5 + $0x1ce0] sm:$0xff]
        %v1300 = vld [vmem:[#allocation5 + $0x1ce8] sm:$0xff]
        %v1301 = vld [vmem:[#allocation5 + $0x1cf0] sm:$0xff]
        %v1302 = vld [vmem:[#allocation5 + $0x1cf8] sm:$0xff]
        %v1303 = vld [vmem:[#allocation5 + $0x1d00] sm:$0xff]
        %v1304 = vld [vmem:[#allocation5 + $0x1d08] sm:$0xff]
        %v1305 = vld [vmem:[#allocation5 + $0x1d10] sm:$0xff]
        %v1306 = vld [vmem:[#allocation5 + $0x1d18] sm:$0xff]
        %v1307 = vld [vmem:[#allocation5 + $0x1d20] sm:$0xff]
        %v1308 = vld [vmem:[#allocation5 + $0x1d28] sm:$0xff]
        %v1309 = vld [vmem:[#allocation5 + $0x1d30] sm:$0xff]
        %v1310 = vld [vmem:[#allocation5 + $0x1d38] sm:$0xff]
        %v1311 = vld [vmem:[#allocation5 + $0x1d40] sm:$0xff]
        %v1312 = vld [vmem:[#allocation5 + $0x1d48] sm:$0xff]
        %v1313 = vld [vmem:[#allocation5 + $0x1d50] sm:$0xff]
        %v1314 = vld [vmem:[#allocation5 + $0x1d58] sm:$0xff]
        %v1315 = vld [vmem:[#allocation5 + $0x1d60] sm:$0xff]
        %v1316 = vld [vmem:[#allocation5 + $0x1d68] sm:$0xff]
        %v1317 = vld [vmem:[#allocation5 + $0x1d70] sm:$0xff]
        %v1318 = vld [vmem:[#allocation5 + $0x1d78] sm:$0xff]
        %v1319 = vld [vmem:[#allocation5 + $0x1d80] sm:$0xff]
        %v1320 = vld [vmem:[#allocation5 + $0x1d88] sm:$0xff]
        %v1321 = vld [vmem:[#allocation5 + $0x1d90] sm:$0xff]
        %v1322 = vld [vmem:[#allocation5 + $0x1d98] sm:$0xff]
        %v1323 = vld [vmem:[#allocation5 + $0x1da0] sm:$0xff]
        %v1324 = vld [vmem:[#allocation5 + $0x1da8] sm:$0xff]
        %v1325 = vld [vmem:[#allocation5 + $0x1db0] sm:$0xff]
        %v1326 = vld [vmem:[#allocation5 + $0x1db8] sm:$0xff]
        %v1327 = vld [vmem:[#allocation5 + $0x1dc0] sm:$0xff]
        %v1328 = vld [vmem:[#allocation5 + $0x1dc8] sm:$0xff]
        %v1329 = vld [vmem:[#allocation5 + $0x1dd0] sm:$0xff]
        %v1330 = vld [vmem:[#allocation5 + $0x1dd8] sm:$0xff]
        %v1331 = vld [vmem:[#allocation5 + $0x1de0] sm:$0xff]
        %v1332 = vld [vmem:[#allocation5 + $0x1de8] sm:$0xff]
        %v1333 = vld [vmem:[#allocation5 + $0x1df0] sm:$0xff]
        %v1334 = vld [vmem:[#allocation5 + $0x1df8] sm:$0xff]
        %v1335 = vld [vmem:[#allocation5 + $0x1e00] sm:$0xff]
        %v1336 = vld [vmem:[#allocation5 + $0x1e08] sm:$0xff]
        %v1337 = vld [vmem:[#allocation5 + $0x1e10] sm:$0xff]
        %v1338 = vld [vmem:[#allocation5 + $0x1e18] sm:$0xff]
        %v1339 = vld [vmem:[#allocation5 + $0x1e20] sm:$0xff]
        %v1340 = vld [vmem:[#allocation5 + $0x1e28] sm:$0xff]
        %v1341 = vld [vmem:[#allocation5 + $0x1e30] sm:$0xff]
        %v1342 = vld [vmem:[#allocation5 + $0x1e38] sm:$0xff]
        %v1343 = vld [vmem:[#allocation5 + $0x1e40] sm:$0xff]
        %v1344 = vld [vmem:[#allocation5 + $0x1e48] sm:$0xff]
        %v1345 = vld [vmem:[#allocation5 + $0x1e50] sm:$0xff]
        %v1346 = vld [vmem:[#allocation5 + $0x1e58] sm:$0xff]
        %v1347 = vld [vmem:[#allocation5 + $0x1e60] sm:$0xff]
        %v1348 = vld [vmem:[#allocation5 + $0x1e68] sm:$0xff]
        %v1349 = vld [vmem:[#allocation5 + $0x1e70] sm:$0xff]
        %v1350 = vld [vmem:[#allocation5 + $0x1e78] sm:$0xff]
        %v1351 = vld [vmem:[#allocation5 + $0x1e80] sm:$0xff]
        %v1352 = vld [vmem:[#allocation5 + $0x1e88] sm:$0xff]
        %v1353 = vld [vmem:[#allocation5 + $0x1e90] sm:$0xff]
        %v1354 = vld [vmem:[#allocation5 + $0x1e98] sm:$0xff]
        %v1355 = vld [vmem:[#allocation5 + $0x1ea0] sm:$0xff]
        %v1356 = vld [vmem:[#allocation5 + $0x1ea8] sm:$0xff]
        %v1357 = vld [vmem:[#allocation5 + $0x1eb0] sm:$0xff]
        %v1358 = vld [vmem:[#allocation5 + $0x1eb8] sm:$0xff]
        %v1359 = vld [vmem:[#allocation5 + $0x1ec0] sm:$0xff]
        %v1360 = vld [vmem:[#allocation5 + $0x1ec8] sm:$0xff]
        %v1361 = vld [vmem:[#allocation5 + $0x1ed0] sm:$0xff]
        %v1362 = vld [vmem:[#allocation5 + $0x1ed8] sm:$0xff]
        %v1363 = vld [vmem:[#allocation5 + $0x1ee0] sm:$0xff]
        %v1364 = vld [vmem:[#allocation5 + $0x1ee8] sm:$0xff]
        %v1365 = vld [vmem:[#allocation5 + $0x1ef0] sm:$0xff]
        %v1366 = vld [vmem:[#allocation5 + $0x1ef8] sm:$0xff]
        %v1367 = vld [vmem:[#allocation5 + $0x1f00] sm:$0xff]
        %v1368 = vld [vmem:[#allocation5 + $0x1f08] sm:$0xff]
        %v1369 = vld [vmem:[#allocation5 + $0x1f10] sm:$0xff]
        %v1370 = vld [vmem:[#allocation5 + $0x1f18] sm:$0xff]
        %v1371 = vld [vmem:[#allocation5 + $0x1f20] sm:$0xff]
        %v1372 = vld [vmem:[#allocation5 + $0x1f28] sm:$0xff]
        %v1373 = vld [vmem:[#allocation5 + $0x1f30] sm:$0xff]
        %v1374 = vld [vmem:[#allocation5 + $0x1f38] sm:$0xff]
        %v1375 = vld [vmem:[#allocation5 + $0x1f40] sm:$0xff]
        %v1376 = vld [vmem:[#allocation5 + $0x1f48] sm:$0xff]
        %v1377 = vld [vmem:[#allocation5 + $0x1f50] sm:$0xff]
        %v1378 = vld [vmem:[#allocation5 + $0x1f58] sm:$0xff]
        %v1379 = vld [vmem:[#allocation5 + $0x1f60] sm:$0xff]
        %v1380 = vld [vmem:[#allocation5 + $0x1f68] sm:$0xff]
        %v1381 = vld [vmem:[#allocation5 + $0x1f70] sm:$0xff]
        %v1382 = vld [vmem:[#allocation5 + $0x1f78] sm:$0xff]
        %v1383 = vld [vmem:[#allocation5 + $0x1f80] sm:$0xff]
        %v1384 = vld [vmem:[#allocation5 + $0x1f88] sm:$0xff]
        %v1385 = vld [vmem:[#allocation5 + $0x1f90] sm:$0xff]
        %v1386 = vld [vmem:[#allocation5 + $0x1f98] sm:$0xff]
        %v1387 = vld [vmem:[#allocation5 + $0x1fa0] sm:$0xff]
        %v1388 = vld [vmem:[#allocation5 + $0x1fa8] sm:$0xff]
        %v1389 = vld [vmem:[#allocation5 + $0x1fb0] sm:$0xff]
        %v1390 = vld [vmem:[#allocation5 + $0x1fb8] sm:$0xff]
        %v1391 = vld [vmem:[#allocation5 + $0x1fc0] sm:$0xff]
        %v1392 = vld [vmem:[#allocation5 + $0x1fc8] sm:$0xff]
        %v1393 = vld [vmem:[#allocation5 + $0x1fd0] sm:$0xff]
        %v1394 = vld [vmem:[#allocation5 + $0x1fd8] sm:$0xff]
        %v1395 = vld [vmem:[#allocation5 + $0x1fe0] sm:$0xff]
        %v1396 = vld [vmem:[#allocation5 + $0x1fe8] sm:$0xff]
        %v1397 = vld [vmem:[#allocation5 + $0x1ff0] sm:$0xff]
        %v1398 = vld [vmem:[#allocation5 + $0x1ff8] sm:$0xff]
        %v1399 = vld [vmem:[#allocation5 + $0x2000] sm:$0xff]
        %v1400 = vld [vmem:[#allocation5 + $0x2008] sm:$0xff]
        %v1401 = vld [vmem:[#allocation5 + $0x2010] sm:$0xff]
        %v1402 = vld [vmem:[#allocation5 + $0x2018] sm:$0xff]
        %v1403 = vld [vmem:[#allocation5 + $0x2020] sm:$0xff]
        %v1404 = vld [vmem:[#allocation5 + $0x2028] sm:$0xff]
        %v1405 = vld [vmem:[#allocation5 + $0x2030] sm:$0xff]
        %v1406 = vld [vmem:[#allocation5 + $0x2038] sm:$0xff]
        %v1407 = vld [vmem:[#allocation5 + $0x2040] sm:$0xff]
        %v1408 = vld [vmem:[#allocation5 + $0x2048] sm:$0xff]
        %v1409 = vld [vmem:[#allocation5 + $0x2050] sm:$0xff]
        %v1410 = vld [vmem:[#allocation5 + $0x2058] sm:$0xff]
        %v1411 = vld [vmem:[#allocation5 + $0x2060] sm:$0xff]
        %v1412 = vld [vmem:[#allocation5 + $0x2068] sm:$0xff]
        %v1413 = vld [vmem:[#allocation5 + $0x2070] sm:$0xff]
        %v1414 = vld [vmem:[#allocation5 + $0x2078] sm:$0xff]
        %v1415 = vld [vmem:[#allocation5 + $0x2080] sm:$0xff]
        %v1416 = vld [vmem:[#allocation5 + $0x2088] sm:$0xff]
        %v1417 = vld [vmem:[#allocation5 + $0x2090] sm:$0xff]
        %v1418 = vld [vmem:[#allocation5 + $0x2098] sm:$0xff]
        %v1419 = vld [vmem:[#allocation5 + $0x20a0] sm:$0xff]
        %v1420 = vld [vmem:[#allocation5 + $0x20a8] sm:$0xff]
        %v1421 = vld [vmem:[#allocation5 + $0x20b0] sm:$0xff]
        %v1422 = vld [vmem:[#allocation5 + $0x20b8] sm:$0xff]
        %v1423 = vld [vmem:[#allocation5 + $0x20c0] sm:$0xff]
        %v1424 = vld [vmem:[#allocation5 + $0x20c8] sm:$0xff]
        %v1425 = vld [vmem:[#allocation5 + $0x20d0] sm:$0xff]
        %v1426 = vld [vmem:[#allocation5 + $0x20d8] sm:$0xff]
        %v1427 = vld [vmem:[#allocation5 + $0x20e0] sm:$0xff]
        %v1428 = vld [vmem:[#allocation5 + $0x20e8] sm:$0xff]
        %v1429 = vld [vmem:[#allocation5 + $0x20f0] sm:$0xff]
        %v1430 = vld [vmem:[#allocation5 + $0x20f8] sm:$0xff]
        %v1431 = vld [vmem:[#allocation5 + $0x2100] sm:$0xff]
        %v1432 = vld [vmem:[#allocation5 + $0x2108] sm:$0xff]
        %v1433 = vld [vmem:[#allocation5 + $0x2110] sm:$0xff]
        %v1434 = vld [vmem:[#allocation5 + $0x2118] sm:$0xff]
        %v1435 = vld [vmem:[#allocation5 + $0x2120] sm:$0xff]
        %v1436 = vld [vmem:[#allocation5 + $0x2128] sm:$0xff]
        %v1437 = vld [vmem:[#allocation5 + $0x2130] sm:$0xff]
        %v1438 = vld [vmem:[#allocation5 + $0x2138] sm:$0xff]
        %v1439 = vld [vmem:[#allocation5 + $0x2140] sm:$0xff]
        %v1440 = vld [vmem:[#allocation5 + $0x2148] sm:$0xff]
        %v1441 = vld [vmem:[#allocation5 + $0x2150] sm:$0xff]
        %v1442 = vld [vmem:[#allocation5 + $0x2158] sm:$0xff]
        %v1443 = vld [vmem:[#allocation5 + $0x2160] sm:$0xff]
        %v1444 = vld [vmem:[#allocation5 + $0x2168] sm:$0xff]
        %v1445 = vld [vmem:[#allocation5 + $0x2170] sm:$0xff]
        %v1446 = vld [vmem:[#allocation5 + $0x2178] sm:$0xff]
        %v1447 = vld [vmem:[#allocation5 + $0x2180] sm:$0xff]
        %v1448 = vld [vmem:[#allocation5 + $0x2188] sm:$0xff]
        %v1449 = vld [vmem:[#allocation5 + $0x2190] sm:$0xff]
        %v1450 = vld [vmem:[#allocation5 + $0x2198] sm:$0xff]
        %v1451 = vld [vmem:[#allocation5 + $0x21a0] sm:$0xff]
        %v1452 = vld [vmem:[#allocation5 + $0x21a8] sm:$0xff]
        %v1453 = vld [vmem:[#allocation5 + $0x21b0] sm:$0xff]
        %v1454 = vld [vmem:[#allocation5 + $0x21b8] sm:$0xff]
        %v1455 = vld [vmem:[#allocation5 + $0x21c0] sm:$0xff]
        %v1456 = vld [vmem:[#allocation5 + $0x21c8] sm:$0xff]
        %v1457 = vld [vmem:[#allocation5 + $0x21d0] sm:$0xff]
        %v1458 = vld [vmem:[#allocation5 + $0x21d8] sm:$0xff]
        %v1459 = vld [vmem:[#allocation5 + $0x21e0] sm:$0xff]
        %v1460 = vld [vmem:[#allocation5 + $0x21e8] sm:$0xff]
        %v1461 = vld [vmem:[#allocation5 + $0x21f0] sm:$0xff]
        %v1462 = vld [vmem:[#allocation5 + $0x21f8] sm:$0xff]
        %v1463 = vld [vmem:[#allocation5 + $0x2200] sm:$0xff]
        %v1464 = vld [vmem:[#allocation5 + $0x2208] sm:$0xff]
        %v1465 = vld [vmem:[#allocation5 + $0x2210] sm:$0xff]
        %v1466 = vld [vmem:[#allocation5 + $0x2218] sm:$0xff]
        %v1467 = vld [vmem:[#allocation5 + $0x2220] sm:$0xff]
        %v1468 = vld [vmem:[#allocation5 + $0x2228] sm:$0xff]
        %v1469 = vld [vmem:[#allocation5 + $0x2230] sm:$0xff]
        %v1470 = vld [vmem:[#allocation5 + $0x2238] sm:$0xff]
        %v1471 = vld [vmem:[#allocation5 + $0x2240] sm:$0xff]
        %v1472 = vld [vmem:[#allocation5 + $0x2248] sm:$0xff]
        %v1473 = vld [vmem:[#allocation5 + $0x2250] sm:$0xff]
        %v1474 = vld [vmem:[#allocation5 + $0x2258] sm:$0xff]
        %v1475 = vld [vmem:[#allocation5 + $0x2260] sm:$0xff]
        %v1476 = vld [vmem:[#allocation5 + $0x2268] sm:$0xff]
        %v1477 = vld [vmem:[#allocation5 + $0x2270] sm:$0xff]
        %v1478 = vld [vmem:[#allocation5 + $0x2278] sm:$0xff]
        %v1479 = vld [vmem:[#allocation5 + $0x2280] sm:$0xff]
        %v1480 = vld [vmem:[#allocation5 + $0x2288] sm:$0xff]
        %v1481 = vld [vmem:[#allocation5 + $0x2290] sm:$0xff]
        %v1482 = vld [vmem:[#allocation5 + $0x2298] sm:$0xff]
        %v1483 = vld [vmem:[#allocation5 + $0x22a0] sm:$0xff]
        %v1484 = vld [vmem:[#allocation5 + $0x22a8] sm:$0xff]
        %v1485 = vld [vmem:[#allocation5 + $0x22b0] sm:$0xff]
        %v1486 = vld [vmem:[#allocation5 + $0x22b8] sm:$0xff]
        %v1487 = vld [vmem:[#allocation5 + $0x22c0] sm:$0xff]
        %v1488 = vld [vmem:[#allocation5 + $0x22c8] sm:$0xff]
        %v1489 = vld [vmem:[#allocation5 + $0x22d0] sm:$0xff]
        %v1490 = vld [vmem:[#allocation5 + $0x22d8] sm:$0xff]
        %v1491 = vld [vmem:[#allocation5 + $0x22e0] sm:$0xff]
        %v1492 = vld [vmem:[#allocation5 + $0x22e8] sm:$0xff]
        %v1493 = vld [vmem:[#allocation5 + $0x22f0] sm:$0xff]
        %v1494 = vld [vmem:[#allocation5 + $0x22f8] sm:$0xff]
        %v1495 = vld [vmem:[#allocation5 + $0x2300] sm:$0xff]
        %v1496 = vld [vmem:[#allocation5 + $0x2308] sm:$0xff]
        %v1497 = vld [vmem:[#allocation5 + $0x2310] sm:$0xff]
        %v1498 = vld [vmem:[#allocation5 + $0x2318] sm:$0xff]
        %v1499 = vld [vmem:[#allocation5 + $0x2320] sm:$0xff]
        %v1500 = vld [vmem:[#allocation5 + $0x2328] sm:$0xff]
        %v1501 = vld [vmem:[#allocation5 + $0x2330] sm:$0xff]
        %v1502 = vld [vmem:[#allocation5 + $0x2338] sm:$0xff]
        %v1503 = vld [vmem:[#allocation5 + $0x2340] sm:$0xff]
        %v1504 = vld [vmem:[#allocation5 + $0x2348] sm:$0xff]
        %v1505 = vld [vmem:[#allocation5 + $0x2350] sm:$0xff]
        %v1506 = vld [vmem:[#allocation5 + $0x2358] sm:$0xff]
        %v1507 = vld [vmem:[#allocation5 + $0x2360] sm:$0xff]
        %v1508 = vld [vmem:[#allocation5 + $0x2368] sm:$0xff]
        %v1509 = vld [vmem:[#allocation5 + $0x2370] sm:$0xff]
        %v1510 = vld [vmem:[#allocation5 + $0x2378] sm:$0xff]
        %v1511 = vld [vmem:[#allocation5 + $0x2380] sm:$0xff]
        %v1512 = vld [vmem:[#allocation5 + $0x2388] sm:$0xff]
        %v1513 = vld [vmem:[#allocation5 + $0x2390] sm:$0xff]
        %v1514 = vld [vmem:[#allocation5 + $0x2398] sm:$0xff]
        %v1515 = vld [vmem:[#allocation5 + $0x23a0] sm:$0xff]
        %v1516 = vld [vmem:[#allocation5 + $0x23a8] sm:$0xff]
        %v1517 = vld [vmem:[#allocation5 + $0x23b0] sm:$0xff]
        %v1518 = vld [vmem:[#allocation5 + $0x23b8] sm:$0xff]
        %v1519 = vld [vmem:[#allocation5 + $0x23c0] sm:$0xff]
        %v1520 = vld [vmem:[#allocation5 + $0x23c8] sm:$0xff]
        %v1521 = vld [vmem:[#allocation5 + $0x23d0] sm:$0xff]
        %v1522 = vld [vmem:[#allocation5 + $0x23d8] sm:$0xff]
        %v1523 = vld [vmem:[#allocation5 + $0x23e0] sm:$0xff]
        %v1524 = vld [vmem:[#allocation5 + $0x23e8] sm:$0xff]
        %v1525 = vld [vmem:[#allocation5 + $0x23f0] sm:$0xff]
        %v1526 = vld [vmem:[#allocation5 + $0x23f8] sm:$0xff]
        %v1527 = vld [vmem:[#allocation5 + $0x2400] sm:$0xff]
        %v1528 = vld [vmem:[#allocation5 + $0x2408] sm:$0xff]
        %v1529 = vld [vmem:[#allocation5 + $0x2410] sm:$0xff]
        %v1530 = vld [vmem:[#allocation5 + $0x2418] sm:$0xff]
        %v1531 = vld [vmem:[#allocation5 + $0x2420] sm:$0xff]
        %v1532 = vld [vmem:[#allocation5 + $0x2428] sm:$0xff]
        %v1533 = vld [vmem:[#allocation5 + $0x2430] sm:$0xff]
        %v1534 = vld [vmem:[#allocation5 + $0x2438] sm:$0xff]
        %v1535 = vld [vmem:[#allocation5 + $0x2440] sm:$0xff]
        %v1536 = vld [vmem:[#allocation5 + $0x2448] sm:$0xff]
        %v1537 = vld [vmem:[#allocation5 + $0x2450] sm:$0xff]
        %v1538 = vld [vmem:[#allocation5 + $0x2458] sm:$0xff]
        %v1539 = vld [vmem:[#allocation5 + $0x2460] sm:$0xff]
        %v1540 = vld [vmem:[#allocation5 + $0x2468] sm:$0xff]
        %v1541 = vld [vmem:[#allocation5 + $0x2470] sm:$0xff]
        %v1542 = vld [vmem:[#allocation5 + $0x2478] sm:$0xff]
        %v1543 = vld [vmem:[#allocation5 + $0x2480] sm:$0xff]
        %v1544 = vld [vmem:[#allocation5 + $0x2488] sm:$0xff]
        %v1545 = vld [vmem:[#allocation5 + $0x2490] sm:$0xff]
        %v1546 = vld [vmem:[#allocation5 + $0x2498] sm:$0xff]
        %v1547 = vld [vmem:[#allocation5 + $0x24a0] sm:$0xff]
        %v1548 = vld [vmem:[#allocation5 + $0x24a8] sm:$0xff]
        %v1549 = vld [vmem:[#allocation5 + $0x24b0] sm:$0xff]
        %v1550 = vld [vmem:[#allocation5 + $0x24b8] sm:$0xff]
        %v1551 = vld [vmem:[#allocation5 + $0x24c0] sm:$0xff]
        %v1552 = vld [vmem:[#allocation5 + $0x24c8] sm:$0xff]
        %v1553 = vld [vmem:[#allocation5 + $0x24d0] sm:$0xff]
        %v1554 = vld [vmem:[#allocation5 + $0x24d8] sm:$0xff]
        %v1555 = vld [vmem:[#allocation5 + $0x24e0] sm:$0xff]
        %v1556 = vld [vmem:[#allocation5 + $0x24e8] sm:$0xff]
        %v1557 = vld [vmem:[#allocation5 + $0x24f0] sm:$0xff]
        %v1558 = vld [vmem:[#allocation5 + $0x24f8] sm:$0xff]
        %v1559 = vld [vmem:[#allocation5 + $0x2500] sm:$0xff]
        %v1560 = vld [vmem:[#allocation5 + $0x2508] sm:$0xff]
        %v1561 = vld [vmem:[#allocation5 + $0x2510] sm:$0xff]
        %v1562 = vld [vmem:[#allocation5 + $0x2518] sm:$0xff]
        %v1563 = vld [vmem:[#allocation5 + $0x2520] sm:$0xff]
        %v1564 = vld [vmem:[#allocation5 + $0x2528] sm:$0xff]
        %v1565 = vld [vmem:[#allocation5 + $0x2530] sm:$0xff]
        %v1566 = vld [vmem:[#allocation5 + $0x2538] sm:$0xff]
        %v1567 = vld [vmem:[#allocation5 + $0x2540] sm:$0xff]
        %v1568 = vld [vmem:[#allocation5 + $0x2548] sm:$0xff]
        %v1569 = vld [vmem:[#allocation5 + $0x2550] sm:$0xff]
        %v1570 = vld [vmem:[#allocation5 + $0x2558] sm:$0xff]
        %v1571 = vld [vmem:[#allocation5 + $0x2560] sm:$0xff]
        %v1572 = vld [vmem:[#allocation5 + $0x2568] sm:$0xff]
        %v1573 = vld [vmem:[#allocation5 + $0x2570] sm:$0xff]
        %v1574 = vld [vmem:[#allocation5 + $0x2578] sm:$0xff]
        %v1575 = vld [vmem:[#allocation5 + $0x2580] sm:$0xff]
        %v1576 = vld [vmem:[#allocation5 + $0x2588] sm:$0xff]
        %v1577 = vld [vmem:[#allocation5 + $0x2590] sm:$0xff]
        %v1578 = vld [vmem:[#allocation5 + $0x2598] sm:$0xff]
        %v1579 = vld [vmem:[#allocation5 + $0x25a0] sm:$0xff]
        %v1580 = vld [vmem:[#allocation5 + $0x25a8] sm:$0xff]
        %v1581 = vld [vmem:[#allocation5 + $0x25b0] sm:$0xff]
        %v1582 = vld [vmem:[#allocation5 + $0x25b8] sm:$0xff]
        %v1583 = vld [vmem:[#allocation5 + $0x25c0] sm:$0xff]
        %v1584 = vld [vmem:[#allocation5 + $0x25c8] sm:$0xff]
        %v1585 = vld [vmem:[#allocation5 + $0x25d0] sm:$0xff]
        %v1586 = vld [vmem:[#allocation5 + $0x25d8] sm:$0xff]
        %v1587 = vld [vmem:[#allocation5 + $0x25e0] sm:$0xff]
        %v1588 = vld [vmem:[#allocation5 + $0x25e8] sm:$0xff]
        %v1589 = vld [vmem:[#allocation5 + $0x25f0] sm:$0xff]
        %v1590 = vld [vmem:[#allocation5 + $0x25f8] sm:$0xff]
        %v1591 = vld [vmem:[#allocation5 + $0x2600] sm:$0xff]
        %v1592 = vld [vmem:[#allocation5 + $0x2608] sm:$0xff]
        %v1593 = vld [vmem:[#allocation5 + $0x2610] sm:$0xff]
        %v1594 = vld [vmem:[#allocation5 + $0x2618] sm:$0xff]
        %v1595 = vld [vmem:[#allocation5 + $0x2620] sm:$0xff]
        %v1596 = vld [vmem:[#allocation5 + $0x2628] sm:$0xff]
        %v1597 = vld [vmem:[#allocation5 + $0x2630] sm:$0xff]
        %v1598 = vld [vmem:[#allocation5 + $0x2638] sm:$0xff]
        %v1599 = vld [vmem:[#allocation5 + $0x2640] sm:$0xff]
        %v1600 = vld [vmem:[#allocation5 + $0x2648] sm:$0xff]
        %v1601 = vld [vmem:[#allocation5 + $0x2650] sm:$0xff]
        %v1602 = vld [vmem:[#allocation5 + $0x2658] sm:$0xff]
        %v1603 = vld [vmem:[#allocation5 + $0x2660] sm:$0xff]
        %v1604 = vld [vmem:[#allocation5 + $0x2668] sm:$0xff]
        %v1605 = vld [vmem:[#allocation5 + $0x2670] sm:$0xff]
        %v1606 = vld [vmem:[#allocation5 + $0x2678] sm:$0xff]
        %v1607 = vld [vmem:[#allocation5 + $0x2680] sm:$0xff]
        %v1608 = vld [vmem:[#allocation5 + $0x2688] sm:$0xff]
        %v1609 = vld [vmem:[#allocation5 + $0x2690] sm:$0xff]
        %v1610 = vld [vmem:[#allocation5 + $0x2698] sm:$0xff]
        %v1611 = vld [vmem:[#allocation5 + $0x26a0] sm:$0xff]
        %v1612 = vld [vmem:[#allocation5 + $0x26a8] sm:$0xff]
        %v1613 = vld [vmem:[#allocation5 + $0x26b0] sm:$0xff]
        %v1614 = vld [vmem:[#allocation5 + $0x26b8] sm:$0xff]
        %v1615 = vld [vmem:[#allocation5 + $0x26c0] sm:$0xff]
        %v1616 = vld [vmem:[#allocation5 + $0x26c8] sm:$0xff]
        %v1617 = vld [vmem:[#allocation5 + $0x26d0] sm:$0xff]
        %v1618 = vld [vmem:[#allocation5 + $0x26d8] sm:$0xff]
        %v1619 = vld [vmem:[#allocation5 + $0x26e0] sm:$0xff]
        %v1620 = vld [vmem:[#allocation5 + $0x26e8] sm:$0xff]
        %v1621 = vld [vmem:[#allocation5 + $0x26f0] sm:$0xff]
        %v1622 = vld [vmem:[#allocation5 + $0x26f8] sm:$0xff]
        %v1623 = vld [vmem:[#allocation5 + $0x2700] sm:$0xff]
        %v1624 = vld [vmem:[#allocation5 + $0x2708] sm:$0xff]
        %v1625 = vld [vmem:[#allocation5 + $0x2710] sm:$0xff]
        %v1626 = vld [vmem:[#allocation5 + $0x2718] sm:$0xff]
        %v1627 = vld [vmem:[#allocation5 + $0x2720] sm:$0xff]
        %v1628 = vld [vmem:[#allocation5 + $0x2728] sm:$0xff]
        %v1629 = vld [vmem:[#allocation5 + $0x2730] sm:$0xff]
        %v1630 = vld [vmem:[#allocation5 + $0x2738] sm:$0xff]
        %v1631 = vld [vmem:[#allocation5 + $0x2740] sm:$0xff]
        %v1632 = vld [vmem:[#allocation5 + $0x2748] sm:$0xff]
        %v1633 = vld [vmem:[#allocation5 + $0x2750] sm:$0xff]
        %v1634 = vld [vmem:[#allocation5 + $0x2758] sm:$0xff]
        %v1635 = vld [vmem:[#allocation5 + $0x2760] sm:$0xff]
        %v1636 = vld [vmem:[#allocation5 + $0x2768] sm:$0xff]
        %v1637 = vld [vmem:[#allocation5 + $0x2770] sm:$0xff]
        %v1638 = vld [vmem:[#allocation5 + $0x2778] sm:$0xff]
        %v1639 = vld [vmem:[#allocation5 + $0x2780] sm:$0xff]
        %v1640 = vld [vmem:[#allocation5 + $0x2788] sm:$0xff]
        %v1641 = vld [vmem:[#allocation5 + $0x2790] sm:$0xff]
        %v1642 = vld [vmem:[#allocation5 + $0x2798] sm:$0xff]
        %v1643 = vld [vmem:[#allocation5 + $0x27a0] sm:$0xff]
        %v1644 = vld [vmem:[#allocation5 + $0x27a8] sm:$0xff]
        %v1645 = vld [vmem:[#allocation5 + $0x27b0] sm:$0xff]
        %v1646 = vld [vmem:[#allocation5 + $0x27b8] sm:$0xff]
        %v1647 = vld [vmem:[#allocation5 + $0x27c0] sm:$0xff]
        %v1648 = vld [vmem:[#allocation5 + $0x27c8] sm:$0xff]
        %v1649 = vld [vmem:[#allocation5 + $0x27d0] sm:$0xff]
        %v1650 = vld [vmem:[#allocation5 + $0x27d8] sm:$0xff]
        %v1651 = vld [vmem:[#allocation5 + $0x27e0] sm:$0xff]
        %v1652 = vld [vmem:[#allocation5 + $0x27e8] sm:$0xff]
        %v1653 = vld [vmem:[#allocation5 + $0x27f0] sm:$0xff]
        %v1654 = vld [vmem:[#allocation5 + $0x27f8] sm:$0xff]
        %v1655 = vld [vmem:[#allocation5 + $0x2800] sm:$0xff]
        %v1656 = vld [vmem:[#allocation5 + $0x2808] sm:$0xff]
        %v1657 = vld [vmem:[#allocation5 + $0x2810] sm:$0xff]
        %v1658 = vld [vmem:[#allocation5 + $0x2818] sm:$0xff]
        %v1659 = vld [vmem:[#allocation5 + $0x2820] sm:$0xff]
        %v1660 = vld [vmem:[#allocation5 + $0x2828] sm:$0xff]
        %v1661 = vld [vmem:[#allocation5 + $0x2830] sm:$0xff]
        %v1662 = vld [vmem:[#allocation5 + $0x2838] sm:$0xff]
        %v1663 = vld [vmem:[#allocation5 + $0x2840] sm:$0xff]
        %v1664 = vld [vmem:[#allocation5 + $0x2848] sm:$0xff]
        %v1665 = vld [vmem:[#allocation5 + $0x2850] sm:$0xff]
        %v1666 = vld [vmem:[#allocation5 + $0x2858] sm:$0xff]
        %v1667 = vld [vmem:[#allocation5 + $0x2860] sm:$0xff]
        %v1668 = vld [vmem:[#allocation5 + $0x2868] sm:$0xff]
        %v1669 = vld [vmem:[#allocation5 + $0x2870] sm:$0xff]
        %v1670 = vld [vmem:[#allocation5 + $0x2878] sm:$0xff]
        %v1671 = vld [vmem:[#allocation5 + $0x2880] sm:$0xff]
        %v1672 = vld [vmem:[#allocation5 + $0x2888] sm:$0xff]
        %v1673 = vld [vmem:[#allocation5 + $0x2890] sm:$0xff]
        %v1674 = vld [vmem:[#allocation5 + $0x2898] sm:$0xff]
        %v1675 = vld [vmem:[#allocation5 + $0x28a0] sm:$0xff]
        %v1676 = vld [vmem:[#allocation5 + $0x28a8] sm:$0xff]
        %v1677 = vld [vmem:[#allocation5 + $0x28b0] sm:$0xff]
        %v1678 = vld [vmem:[#allocation5 + $0x28b8] sm:$0xff]
        %v1679 = vld [vmem:[#allocation5 + $0x28c0] sm:$0xff]
        %v1680 = vld [vmem:[#allocation5 + $0x28c8] sm:$0xff]
        %v1681 = vld [vmem:[#allocation5 + $0x28d0] sm:$0xff]
        %v1682 = vld [vmem:[#allocation5 + $0x28d8] sm:$0xff]
        %v1683 = vld [vmem:[#allocation5 + $0x28e0] sm:$0xff]
        %v1684 = vld [vmem:[#allocation5 + $0x28e8] sm:$0xff]
        %v1685 = vld [vmem:[#allocation5 + $0x28f0] sm:$0xff]
        %v1686 = vld [vmem:[#allocation5 + $0x28f8] sm:$0xff]
        %v1687 = vld [vmem:[#allocation5 + $0x2900] sm:$0xff]
        %v1688 = vld [vmem:[#allocation5 + $0x2908] sm:$0xff]
        %v1689 = vld [vmem:[#allocation5 + $0x2910] sm:$0xff]
        %v1690 = vld [vmem:[#allocation5 + $0x2918] sm:$0xff]
        %v1691 = vld [vmem:[#allocation5 + $0x2920] sm:$0xff]
        %v1692 = vld [vmem:[#allocation5 + $0x2928] sm:$0xff]
        %v1693 = vld [vmem:[#allocation5 + $0x2930] sm:$0xff]
        %v1694 = vld [vmem:[#allocation5 + $0x2938] sm:$0xff]
        %v1695 = vld [vmem:[#allocation5 + $0x2940] sm:$0xff]
        %v1696 = vld [vmem:[#allocation5 + $0x2948] sm:$0xff]
        %v1697 = vld [vmem:[#allocation5 + $0x2950] sm:$0xff]
        %v1698 = vld [vmem:[#allocation5 + $0x2958] sm:$0xff]
        %v1699 = vld [vmem:[#allocation5 + $0x2960] sm:$0xff]
        %v1700 = vld [vmem:[#allocation5 + $0x2968] sm:$0xff]
        %v1701 = vld [vmem:[#allocation5 + $0x2970] sm:$0xff]
        %v1702 = vld [vmem:[#allocation5 + $0x2978] sm:$0xff]
        %v1703 = vld [vmem:[#allocation5 + $0x2980] sm:$0xff]
        %v1704 = vld [vmem:[#allocation5 + $0x2988] sm:$0xff]
        %v1705 = vld [vmem:[#allocation5 + $0x2990] sm:$0xff]
        %v1706 = vld [vmem:[#allocation5 + $0x2998] sm:$0xff]
        %v1707 = vld [vmem:[#allocation5 + $0x29a0] sm:$0xff]
        %v1708 = vld [vmem:[#allocation5 + $0x29a8] sm:$0xff]
        %v1709 = vld [vmem:[#allocation5 + $0x29b0] sm:$0xff]
        %v1710 = vld [vmem:[#allocation5 + $0x29b8] sm:$0xff]
        %v1711 = vld [vmem:[#allocation5 + $0x29c0] sm:$0xff]
        %v1712 = vld [vmem:[#allocation5 + $0x29c8] sm:$0xff]
        %v1713 = vld [vmem:[#allocation5 + $0x29d0] sm:$0xff]
        %v1714 = vld [vmem:[#allocation5 + $0x29d8] sm:$0xff]
        %v1715 = vld [vmem:[#allocation5 + $0x29e0] sm:$0xff]
        %v1716 = vld [vmem:[#allocation5 + $0x29e8] sm:$0xff]
        %v1717 = vld [vmem:[#allocation5 + $0x29f0] sm:$0xff]
        %v1718 = vld [vmem:[#allocation5 + $0x29f8] sm:$0xff]
        %v1719 = vld [vmem:[#allocation5 + $0x2a00] sm:$0xff]
        %v1720 = vld [vmem:[#allocation5 + $0x2a08] sm:$0xff]
        %v1721 = vld [vmem:[#allocation5 + $0x2a10] sm:$0xff]
        %v1722 = vld [vmem:[#allocation5 + $0x2a18] sm:$0xff]
        %v1723 = vld [vmem:[#allocation5 + $0x2a20] sm:$0xff]
        %v1724 = vld [vmem:[#allocation5 + $0x2a28] sm:$0xff]
        %v1725 = vld [vmem:[#allocation5 + $0x2a30] sm:$0xff]
        %v1726 = vld [vmem:[#allocation5 + $0x2a38] sm:$0xff]
        %v1727 = vld [vmem:[#allocation5 + $0x2a40] sm:$0xff]
        %v1728 = vld [vmem:[#allocation5 + $0x2a48] sm:$0xff]
        %v1729 = vld [vmem:[#allocation5 + $0x2a50] sm:$0xff]
        %v1730 = vld [vmem:[#allocation5 + $0x2a58] sm:$0xff]
        %v1731 = vld [vmem:[#allocation5 + $0x2a60] sm:$0xff]
        %v1732 = vld [vmem:[#allocation5 + $0x2a68] sm:$0xff]
        %v1733 = vld [vmem:[#allocation5 + $0x2a70] sm:$0xff]
        %v1734 = vld [vmem:[#allocation5 + $0x2a78] sm:$0xff]
        %v1735 = vld [vmem:[#allocation5 + $0x2a80] sm:$0xff]
        %v1736 = vld [vmem:[#allocation5 + $0x2a88] sm:$0xff]
        %v1737 = vld [vmem:[#allocation5 + $0x2a90] sm:$0xff]
        %v1738 = vld [vmem:[#allocation5 + $0x2a98] sm:$0xff]
        %v1739 = vld [vmem:[#allocation5 + $0x2aa0] sm:$0xff]
        %v1740 = vld [vmem:[#allocation5 + $0x2aa8] sm:$0xff]
        %v1741 = vld [vmem:[#allocation5 + $0x2ab0] sm:$0xff]
        %v1742 = vld [vmem:[#allocation5 + $0x2ab8] sm:$0xff]
        %v1743 = vld [vmem:[#allocation5 + $0x2ac0] sm:$0xff]
        %v1744 = vld [vmem:[#allocation5 + $0x2ac8] sm:$0xff]
        %v1745 = vld [vmem:[#allocation5 + $0x2ad0] sm:$0xff]
        %v1746 = vld [vmem:[#allocation5 + $0x2ad8] sm:$0xff]
        %v1747 = vld [vmem:[#allocation5 + $0x2ae0] sm:$0xff]
        %v1748 = vld [vmem:[#allocation5 + $0x2ae8] sm:$0xff]
        %v1749 = vld [vmem:[#allocation5 + $0x2af0] sm:$0xff]
        %v1750 = vld [vmem:[#allocation5 + $0x2af8] sm:$0xff]
        %v1751 = vld [vmem:[#allocation5 + $0x2b00] sm:$0xff]
        %v1752 = vld [vmem:[#allocation5 + $0x2b08] sm:$0xff]
        %v1753 = vld [vmem:[#allocation5 + $0x2b10] sm:$0xff]
        %v1754 = vld [vmem:[#allocation5 + $0x2b18] sm:$0xff]
        %v1755 = vld [vmem:[#allocation5 + $0x2b20] sm:$0xff]
        %v1756 = vld [vmem:[#allocation5 + $0x2b28] sm:$0xff]
        %v1757 = vld [vmem:[#allocation5 + $0x2b30] sm:$0xff]
        %v1758 = vld [vmem:[#allocation5 + $0x2b38] sm:$0xff]
        %v1759 = vld [vmem:[#allocation5 + $0x2b40] sm:$0xff]
        %v1760 = vld [vmem:[#allocation5 + $0x2b48] sm:$0xff]
        %v1761 = vld [vmem:[#allocation5 + $0x2b50] sm:$0xff]
        %v1762 = vld [vmem:[#allocation5 + $0x2b58] sm:$0xff]
        %v1763 = vld [vmem:[#allocation5 + $0x2b60] sm:$0xff]
        %v1764 = vld [vmem:[#allocation5 + $0x2b68] sm:$0xff]
        %v1765 = vld [vmem:[#allocation5 + $0x2b70] sm:$0xff]
        %v1766 = vld [vmem:[#allocation5 + $0x2b78] sm:$0xff]
        %v1767 = vld [vmem:[#allocation5 + $0x2b80] sm:$0xff]
        %v1768 = vld [vmem:[#allocation5 + $0x2b88] sm:$0xff]
        %v1769 = vld [vmem:[#allocation5 + $0x2b90] sm:$0xff]
        %v1770 = vld [vmem:[#allocation5 + $0x2b98] sm:$0xff]
        %v1771 = vld [vmem:[#allocation5 + $0x2ba0] sm:$0xff]
        %v1772 = vld [vmem:[#allocation5 + $0x2ba8] sm:$0xff]
        %v1773 = vld [vmem:[#allocation5 + $0x2bb0] sm:$0xff]
        %v1774 = vld [vmem:[#allocation5 + $0x2bb8] sm:$0xff]
        %v1775 = vld [vmem:[#allocation5 + $0x2bc0] sm:$0xff]
        %v1776 = vld [vmem:[#allocation5 + $0x2bc8] sm:$0xff]
        %v1777 = vld [vmem:[#allocation5 + $0x2bd0] sm:$0xff]
        %v1778 = vld [vmem:[#allocation5 + $0x2bd8] sm:$0xff]
        %v1779 = vld [vmem:[#allocation5 + $0x2be0] sm:$0xff]
        %v1780 = vld [vmem:[#allocation5 + $0x2be8] sm:$0xff]
        %v1781 = vld [vmem:[#allocation5 + $0x2bf0] sm:$0xff]
        %v1782 = vld [vmem:[#allocation5 + $0x2bf8] sm:$0xff]
        %v1783 = vld [vmem:[#allocation5 + $0x2c00] sm:$0xff]
        %v1784 = vld [vmem:[#allocation5 + $0x2c08] sm:$0xff]
        %v1785 = vld [vmem:[#allocation5 + $0x2c10] sm:$0xff]
        %v1786 = vld [vmem:[#allocation5 + $0x2c18] sm:$0xff]
        %v1787 = vld [vmem:[#allocation5 + $0x2c20] sm:$0xff]
        %v1788 = vld [vmem:[#allocation5 + $0x2c28] sm:$0xff]
        %v1789 = vld [vmem:[#allocation5 + $0x2c30] sm:$0xff]
        %v1790 = vld [vmem:[#allocation5 + $0x2c38] sm:$0xff]
        %v1791 = vld [vmem:[#allocation5 + $0x2c40] sm:$0xff]
        %v1792 = vld [vmem:[#allocation5 + $0x2c48] sm:$0xff]
        %v1793 = vld [vmem:[#allocation5 + $0x2c50] sm:$0xff]
        %v1794 = vld [vmem:[#allocation5 + $0x2c58] sm:$0xff]
        %v1795 = vld [vmem:[#allocation5 + $0x2c60] sm:$0xff]
        %v1796 = vld [vmem:[#allocation5 + $0x2c68] sm:$0xff]
        %v1797 = vld [vmem:[#allocation5 + $0x2c70] sm:$0xff]
        %v1798 = vld [vmem:[#allocation5 + $0x2c78] sm:$0xff]
        %v1799 = vld [vmem:[#allocation5 + $0x2c80] sm:$0xff]
        %v1800 = vld [vmem:[#allocation5 + $0x2c88] sm:$0xff]
        %v1801 = vld [vmem:[#allocation5 + $0x2c90] sm:$0xff]
        %v1802 = vld [vmem:[#allocation5 + $0x2c98] sm:$0xff]
        %v1803 = vld [vmem:[#allocation5 + $0x2ca0] sm:$0xff]
        %v1804 = vld [vmem:[#allocation5 + $0x2ca8] sm:$0xff]
        %v1805 = vld [vmem:[#allocation5 + $0x2cb0] sm:$0xff]
        %v1806 = vld [vmem:[#allocation5 + $0x2cb8] sm:$0xff]
        %v1807 = vld [vmem:[#allocation5 + $0x2cc0] sm:$0xff]
        %v1808 = vld [vmem:[#allocation5 + $0x2cc8] sm:$0xff]
        %v1809 = vld [vmem:[#allocation5 + $0x2cd0] sm:$0xff]
        %v1810 = vld [vmem:[#allocation5 + $0x2cd8] sm:$0xff]
        %v1811 = vld [vmem:[#allocation5 + $0x2ce0] sm:$0xff]
        %v1812 = vld [vmem:[#allocation5 + $0x2ce8] sm:$0xff]
        %v1813 = vld [vmem:[#allocation5 + $0x2cf0] sm:$0xff]
        %v1814 = vld [vmem:[#allocation5 + $0x2cf8] sm:$0xff]
        %v1815 = vld [vmem:[#allocation5 + $0x2d00] sm:$0xff]
        %v1816 = vld [vmem:[#allocation5 + $0x2d08] sm:$0xff]
        %v1817 = vld [vmem:[#allocation5 + $0x2d10] sm:$0xff]
        %v1818 = vld [vmem:[#allocation5 + $0x2d18] sm:$0xff]
        %v1819 = vld [vmem:[#allocation5 + $0x2d20] sm:$0xff]
        %v1820 = vld [vmem:[#allocation5 + $0x2d28] sm:$0xff]
        %v1821 = vld [vmem:[#allocation5 + $0x2d30] sm:$0xff]
        %v1822 = vld [vmem:[#allocation5 + $0x2d38] sm:$0xff]
        %v1823 = vld [vmem:[#allocation5 + $0x2d40] sm:$0xff]
        %v1824 = vld [vmem:[#allocation5 + $0x2d48] sm:$0xff]
        %v1825 = vld [vmem:[#allocation5 + $0x2d50] sm:$0xff]
        %v1826 = vld [vmem:[#allocation5 + $0x2d58] sm:$0xff]
        %v1827 = vld [vmem:[#allocation5 + $0x2d60] sm:$0xff]
        %v1828 = vld [vmem:[#allocation5 + $0x2d68] sm:$0xff]
        %v1829 = vld [vmem:[#allocation5 + $0x2d70] sm:$0xff]
        %v1830 = vld [vmem:[#allocation5 + $0x2d78] sm:$0xff]
        %v1831 = vld [vmem:[#allocation5 + $0x2d80] sm:$0xff]
        %v1832 = vld [vmem:[#allocation5 + $0x2d88] sm:$0xff]
        %v1833 = vld [vmem:[#allocation5 + $0x2d90] sm:$0xff]
        %v1834 = vld [vmem:[#allocation5 + $0x2d98] sm:$0xff]
        %v1835 = vld [vmem:[#allocation5 + $0x2da0] sm:$0xff]
        %v1836 = vld [vmem:[#allocation5 + $0x2da8] sm:$0xff]
        %v1837 = vld [vmem:[#allocation5 + $0x2db0] sm:$0xff]
        %v1838 = vld [vmem:[#allocation5 + $0x2db8] sm:$0xff]
        %v1839 = vld [vmem:[#allocation5 + $0x2dc0] sm:$0xff]
        %v1840 = vld [vmem:[#allocation5 + $0x2dc8] sm:$0xff]
        %v1841 = vld [vmem:[#allocation5 + $0x2dd0] sm:$0xff]
        %v1842 = vld [vmem:[#allocation5 + $0x2dd8] sm:$0xff]
        %v1843 = vld [vmem:[#allocation5 + $0x2de0] sm:$0xff]
        %v1844 = vld [vmem:[#allocation5 + $0x2de8] sm:$0xff]
        %v1845 = vld [vmem:[#allocation5 + $0x2df0] sm:$0xff]
        %v1846 = vld [vmem:[#allocation5 + $0x2df8] sm:$0xff]
        %v1847 = vld [vmem:[#allocation5 + $0x2e00] sm:$0xff]
        %v1848 = vld [vmem:[#allocation5 + $0x2e08] sm:$0xff]
        %v1849 = vld [vmem:[#allocation5 + $0x2e10] sm:$0xff]
        %v1850 = vld [vmem:[#allocation5 + $0x2e18] sm:$0xff]
        %v1851 = vld [vmem:[#allocation5 + $0x2e20] sm:$0xff]
        %v1852 = vld [vmem:[#allocation5 + $0x2e28] sm:$0xff]
        %v1853 = vld [vmem:[#allocation5 + $0x2e30] sm:$0xff]
        %v1854 = vld [vmem:[#allocation5 + $0x2e38] sm:$0xff]
        %v1855 = vld [vmem:[#allocation5 + $0x2e40] sm:$0xff]
        %v1856 = vld [vmem:[#allocation5 + $0x2e48] sm:$0xff]
        %v1857 = vld [vmem:[#allocation5 + $0x2e50] sm:$0xff]
        %v1858 = vld [vmem:[#allocation5 + $0x2e58] sm:$0xff]
        %v1859 = vld [vmem:[#allocation5 + $0x2e60] sm:$0xff]
        %v1860 = vld [vmem:[#allocation5 + $0x2e68] sm:$0xff]
        %v1861 = vld [vmem:[#allocation5 + $0x2e70] sm:$0xff]
        %v1862 = vld [vmem:[#allocation5 + $0x2e78] sm:$0xff]
        %v1863 = vld [vmem:[#allocation5 + $0x2e80] sm:$0xff]
        %v1864 = vld [vmem:[#allocation5 + $0x2e88] sm:$0xff]
        %v1865 = vld [vmem:[#allocation5 + $0x2e90] sm:$0xff]
        %v1866 = vld [vmem:[#allocation5 + $0x2e98] sm:$0xff]
        %v1867 = vld [vmem:[#allocation5 + $0x2ea0] sm:$0xff]
        %v1868 = vld [vmem:[#allocation5 + $0x2ea8] sm:$0xff]
        %v1869 = vld [vmem:[#allocation5 + $0x2eb0] sm:$0xff]
        %v1870 = vld [vmem:[#allocation5 + $0x2eb8] sm:$0xff]
        %v1871 = vld [vmem:[#allocation5 + $0x2ec0] sm:$0xff]
        %v1872 = vld [vmem:[#allocation5 + $0x2ec8] sm:$0xff]
        %v1873 = vld [vmem:[#allocation5 + $0x2ed0] sm:$0xff]
        %v1874 = vld [vmem:[#allocation5 + $0x2ed8] sm:$0xff]
        %v1875 = vld [vmem:[#allocation5 + $0x2ee0] sm:$0xff]
        %v1876 = vld [vmem:[#allocation5 + $0x2ee8] sm:$0xff]
        %v1877 = vld [vmem:[#allocation5 + $0x2ef0] sm:$0xff]
        %v1878 = vld [vmem:[#allocation5 + $0x2ef8] sm:$0xff]
        %v1879 = vld [vmem:[#allocation5 + $0x2f00] sm:$0xff]
        %v1880 = vld [vmem:[#allocation5 + $0x2f08] sm:$0xff]
        %v1881 = vld [vmem:[#allocation5 + $0x2f10] sm:$0xff]
        %v1882 = vld [vmem:[#allocation5 + $0x2f18] sm:$0xff]
        %v1883 = vld [vmem:[#allocation5 + $0x2f20] sm:$0xff]
        %v1884 = vld [vmem:[#allocation5 + $0x2f28] sm:$0xff]
        %v1885 = vld [vmem:[#allocation5 + $0x2f30] sm:$0xff]
        %v1886 = vld [vmem:[#allocation5 + $0x2f38] sm:$0xff]
        %v1887 = vld [vmem:[#allocation5 + $0x2f40] sm:$0xff]
        %v1888 = vld [vmem:[#allocation5 + $0x2f48] sm:$0xff]
        %v1889 = vld [vmem:[#allocation5 + $0x2f50] sm:$0xff]
        %v1890 = vld [vmem:[#allocation5 + $0x2f58] sm:$0xff]
        %v1891 = vld [vmem:[#allocation5 + $0x2f60] sm:$0xff]
        %v1892 = vld [vmem:[#allocation5 + $0x2f68] sm:$0xff]
        %v1893 = vld [vmem:[#allocation5 + $0x2f70] sm:$0xff]
        %v1894 = vld [vmem:[#allocation5 + $0x2f78] sm:$0xff]
        %v1895 = vld [vmem:[#allocation5 + $0x2f80] sm:$0xff]
        %v1896 = vld [vmem:[#allocation5 + $0x2f88] sm:$0xff]
        %v1897 = vld [vmem:[#allocation5 + $0x2f90] sm:$0xff]
        %v1898 = vld [vmem:[#allocation5 + $0x2f98] sm:$0xff]
        %v1899 = vld [vmem:[#allocation5 + $0x2fa0] sm:$0xff]
        %v1900 = vld [vmem:[#allocation5 + $0x2fa8] sm:$0xff]
        %v1901 = vld [vmem:[#allocation5 + $0x2fb0] sm:$0xff]
        %v1902 = vld [vmem:[#allocation5 + $0x2fb8] sm:$0xff]
        %v1903 = vld [vmem:[#allocation5 + $0x2fc0] sm:$0xff]
        %v1904 = vld [vmem:[#allocation5 + $0x2fc8] sm:$0xff]
        %v1905 = vld [vmem:[#allocation5 + $0x2fd0] sm:$0xff]
        %v1906 = vld [vmem:[#allocation5 + $0x2fd8] sm:$0xff]
        %v1907 = vld [vmem:[#allocation5 + $0x2fe0] sm:$0xff]
        %v1908 = vld [vmem:[#allocation5 + $0x2fe8] sm:$0xff]
        %v1909 = vld [vmem:[#allocation5 + $0x2ff0] sm:$0xff]
        %v1910 = vld [vmem:[#allocation5 + $0x2ff8] sm:$0xff]
        %v1911 = vld [vmem:[#allocation5 + $0x3000] sm:$0xff]
        %v1912 = vld [vmem:[#allocation5 + $0x3008] sm:$0xff]
        %v1913 = vld [vmem:[#allocation5 + $0x3010] sm:$0xff]
        %v1914 = vld [vmem:[#allocation5 + $0x3018] sm:$0xff]
        %v1915 = vld [vmem:[#allocation5 + $0x3020] sm:$0xff]
        %v1916 = vld [vmem:[#allocation5 + $0x3028] sm:$0xff]
        %v1917 = vld [vmem:[#allocation5 + $0x3030] sm:$0xff]
        %v1918 = vld [vmem:[#allocation5 + $0x3038] sm:$0xff]
        %v1919 = vld [vmem:[#allocation5 + $0x3040] sm:$0xff]
        %v1920 = vld [vmem:[#allocation5 + $0x3048] sm:$0xff]
        %v1921 = vld [vmem:[#allocation5 + $0x3050] sm:$0xff]
        %v1922 = vld [vmem:[#allocation5 + $0x3058] sm:$0xff]
        %v1923 = vld [vmem:[#allocation5 + $0x3060] sm:$0xff]
        %v1924 = vld [vmem:[#allocation5 + $0x3068] sm:$0xff]
        %v1925 = vld [vmem:[#allocation5 + $0x3070] sm:$0xff]
        %v1926 = vld [vmem:[#allocation5 + $0x3078] sm:$0xff]
        %v1927 = vld [vmem:[#allocation5 + $0x3080] sm:$0xff]
        %v1928 = vld [vmem:[#allocation5 + $0x3088] sm:$0xff]
        %v1929 = vld [vmem:[#allocation5 + $0x3090] sm:$0xff]
        %v1930 = vld [vmem:[#allocation5 + $0x3098] sm:$0xff]
        %v1931 = vld [vmem:[#allocation5 + $0x30a0] sm:$0xff]
        %v1932 = vld [vmem:[#allocation5 + $0x30a8] sm:$0xff]
        %v1933 = vld [vmem:[#allocation5 + $0x30b0] sm:$0xff]
        %v1934 = vld [vmem:[#allocation5 + $0x30b8] sm:$0xff]
        %v1935 = vld [vmem:[#allocation5 + $0x30c0] sm:$0xff]
        %v1936 = vld [vmem:[#allocation5 + $0x30c8] sm:$0xff]
        %v1937 = vld [vmem:[#allocation5 + $0x30d0] sm:$0xff]
        %v1938 = vld [vmem:[#allocation5 + $0x30d8] sm:$0xff]
        %v1939 = vld [vmem:[#allocation5 + $0x30e0] sm:$0xff]
        %v1940 = vld [vmem:[#allocation5 + $0x30e8] sm:$0xff]
        %v1941 = vld [vmem:[#allocation5 + $0x30f0] sm:$0xff]
        %v1942 = vld [vmem:[#allocation5 + $0x30f8] sm:$0xff]
        %v1943 = vld [vmem:[#allocation5 + $0x3100] sm:$0xff]
        %v1944 = vld [vmem:[#allocation5 + $0x3108] sm:$0xff]
        %v1945 = vld [vmem:[#allocation5 + $0x3110] sm:$0xff]
        %v1946 = vld [vmem:[#allocation5 + $0x3118] sm:$0xff]
        %v1947 = vld [vmem:[#allocation5 + $0x3120] sm:$0xff]
        %v1948 = vld [vmem:[#allocation5 + $0x3128] sm:$0xff]
        %v1949 = vld [vmem:[#allocation5 + $0x3130] sm:$0xff]
        %v1950 = vld [vmem:[#allocation5 + $0x3138] sm:$0xff]
        %v1951 = vld [vmem:[#allocation5 + $0x3140] sm:$0xff]
        %v1952 = vld [vmem:[#allocation5 + $0x3148] sm:$0xff]
        %v1953 = vld [vmem:[#allocation5 + $0x3150] sm:$0xff]
        %v1954 = vld [vmem:[#allocation5 + $0x3158] sm:$0xff]
        %v1955 = vld [vmem:[#allocation5 + $0x3160] sm:$0xff]
        %v1956 = vld [vmem:[#allocation5 + $0x3168] sm:$0xff]
        %v1957 = vld [vmem:[#allocation5 + $0x3170] sm:$0xff]
        %v1958 = vld [vmem:[#allocation5 + $0x3178] sm:$0xff]
        %v1959 = vld [vmem:[#allocation5 + $0x3180] sm:$0xff]
        %v1960 = vld [vmem:[#allocation5 + $0x3188] sm:$0xff]
        %v1961 = vld [vmem:[#allocation5 + $0x3190] sm:$0xff]
        %v1962 = vld [vmem:[#allocation5 + $0x3198] sm:$0xff]
        %v1963 = vld [vmem:[#allocation5 + $0x31a0] sm:$0xff]
        %v1964 = vld [vmem:[#allocation5 + $0x31a8] sm:$0xff]
        %v1965 = vld [vmem:[#allocation5 + $0x31b0] sm:$0xff]
        %v1966 = vld [vmem:[#allocation5 + $0x31b8] sm:$0xff]
        %v1967 = vld [vmem:[#allocation5 + $0x31c0] sm:$0xff]
        %v1968 = vld [vmem:[#allocation5 + $0x31c8] sm:$0xff]
        %v1969 = vld [vmem:[#allocation5 + $0x31d0] sm:$0xff]
        %v1970 = vld [vmem:[#allocation5 + $0x31d8] sm:$0xff]
        %v1971 = vld [vmem:[#allocation5 + $0x31e0] sm:$0xff]
        %v1972 = vld [vmem:[#allocation5 + $0x31e8] sm:$0xff]
        %v1973 = vld [vmem:[#allocation5 + $0x31f0] sm:$0xff]
        %v1974 = vld [vmem:[#allocation5 + $0x31f8] sm:$0xff]
        %v1975 = vld [vmem:[#allocation5 + $0x3200] sm:$0xff]
        %v1976 = vld [vmem:[#allocation5 + $0x3208] sm:$0xff]
        %v1977 = vld [vmem:[#allocation5 + $0x3210] sm:$0xff]
        %v1978 = vld [vmem:[#allocation5 + $0x3218] sm:$0xff]
        %v1979 = vld [vmem:[#allocation5 + $0x3220] sm:$0xff]
        %v1980 = vld [vmem:[#allocation5 + $0x3228] sm:$0xff]
        %v1981 = vld [vmem:[#allocation5 + $0x3230] sm:$0xff]
        %v1982 = vld [vmem:[#allocation5 + $0x3238] sm:$0xff]
        %v1983 = vld [vmem:[#allocation5 + $0x3240] sm:$0xff]
        %v1984 = vld [vmem:[#allocation5 + $0x3248] sm:$0xff]
        %v1985 = vld [vmem:[#allocation5 + $0x3250] sm:$0xff]
        %v1986 = vld [vmem:[#allocation5 + $0x3258] sm:$0xff]
        %v1987 = vld [vmem:[#allocation5 + $0x3260] sm:$0xff]
        %v1988 = vld [vmem:[#allocation5 + $0x3268] sm:$0xff]
        %v1989 = vld [vmem:[#allocation5 + $0x3270] sm:$0xff]
        %v1990 = vld [vmem:[#allocation5 + $0x3278] sm:$0xff]
        %v1991 = vld [vmem:[#allocation5 + $0x3280] sm:$0xff]
        %v1992 = vld [vmem:[#allocation5 + $0x3288] sm:$0xff]
        %v1993 = vld [vmem:[#allocation5 + $0x3290] sm:$0xff]
        %v1994 = vld [vmem:[#allocation5 + $0x3298] sm:$0xff]
        %v1995 = vld [vmem:[#allocation5 + $0x32a0] sm:$0xff]
        %v1996 = vld [vmem:[#allocation5 + $0x32a8] sm:$0xff]
        %v1997 = vld [vmem:[#allocation5 + $0x32b0] sm:$0xff]
        %v1998 = vld [vmem:[#allocation5 + $0x32b8] sm:$0xff]
        %v1999 = vld [vmem:[#allocation5 + $0x32c0] sm:$0xff]
        %v2000 = vld [vmem:[#allocation5 + $0x32c8] sm:$0xff]
        %v2001 = vld [vmem:[#allocation5 + $0x32d0] sm:$0xff]
        %v2002 = vld [vmem:[#allocation5 + $0x32d8] sm:$0xff]
        %v2003 = vld [vmem:[#allocation5 + $0x32e0] sm:$0xff]
        %v2004 = vld [vmem:[#allocation5 + $0x32e8] sm:$0xff]
        %v2005 = vld [vmem:[#allocation5 + $0x32f0] sm:$0xff]
        %v2006 = vld [vmem:[#allocation5 + $0x32f8] sm:$0xff]
        %v2007 = vld [vmem:[#allocation5 + $0x3300] sm:$0xff]
        %v2008 = vld [vmem:[#allocation5 + $0x3308] sm:$0xff]
        %v2009 = vld [vmem:[#allocation5 + $0x3310] sm:$0xff]
        %v2010 = vld [vmem:[#allocation5 + $0x3318] sm:$0xff]
        %v2011 = vld [vmem:[#allocation5 + $0x3320] sm:$0xff]
        %v2012 = vld [vmem:[#allocation5 + $0x3328] sm:$0xff]
        %v2013 = vld [vmem:[#allocation5 + $0x3330] sm:$0xff]
        %v2014 = vld [vmem:[#allocation5 + $0x3338] sm:$0xff]
        %v2015 = vld [vmem:[#allocation5 + $0x3340] sm:$0xff]
        %v2016 = vld [vmem:[#allocation5 + $0x3348] sm:$0xff]
        %v2017 = vld [vmem:[#allocation5 + $0x3350] sm:$0xff]
        %v2018 = vld [vmem:[#allocation5 + $0x3358] sm:$0xff]
        %v2019 = vld [vmem:[#allocation5 + $0x3360] sm:$0xff]
        %v2020 = vld [vmem:[#allocation5 + $0x3368] sm:$0xff]
        %v2021 = vld [vmem:[#allocation5 + $0x3370] sm:$0xff]
        %v2022 = vld [vmem:[#allocation5 + $0x3378] sm:$0xff]
        %v2023 = vld [vmem:[#allocation5 + $0x3380] sm:$0xff]
        %v2024 = vld [vmem:[#allocation5 + $0x3388] sm:$0xff]
        %v2025 = vld [vmem:[#allocation5 + $0x3390] sm:$0xff]
        %v2026 = vld [vmem:[#allocation5 + $0x3398] sm:$0xff]
        %v2027 = vld [vmem:[#allocation5 + $0x33a0] sm:$0xff]
        %v2028 = vld [vmem:[#allocation5 + $0x33a8] sm:$0xff]
        %v2029 = vld [vmem:[#allocation5 + $0x33b0] sm:$0xff]
        %v2030 = vld [vmem:[#allocation5 + $0x33b8] sm:$0xff]
        %v2031 = vld [vmem:[#allocation5 + $0x33c0] sm:$0xff]
        %v2032 = vld [vmem:[#allocation5 + $0x33c8] sm:$0xff]
        %v2033 = vld [vmem:[#allocation5 + $0x33d0] sm:$0xff]
        %v2034 = vld [vmem:[#allocation5 + $0x33d8] sm:$0xff]
        %v2035 = vld [vmem:[#allocation5 + $0x33e0] sm:$0xff]
        %v2036 = vld [vmem:[#allocation5 + $0x33e8] sm:$0xff]
        %v2037 = vld [vmem:[#allocation5 + $0x33f0] sm:$0xff]
        %v2038 = vld [vmem:[#allocation5 + $0x33f8] sm:$0xff]
        %v2039 = vld [vmem:[#allocation5 + $0x3400] sm:$0xff]
        %v2040 = vld [vmem:[#allocation5 + $0x3408] sm:$0xff]
        %v2041 = vld [vmem:[#allocation5 + $0x3410] sm:$0xff]
        %v2042 = vld [vmem:[#allocation5 + $0x3418] sm:$0xff]
        %v2043 = vld [vmem:[#allocation5 + $0x3420] sm:$0xff]
        %v2044 = vld [vmem:[#allocation5 + $0x3428] sm:$0xff]
        %v2045 = vld [vmem:[#allocation5 + $0x3430] sm:$0xff]
        %v2046 = vld [vmem:[#allocation5 + $0x3438] sm:$0xff]
        %v2047 = vld [vmem:[#allocation5 + $0x3440] sm:$0xff]
        %v2048 = vld [vmem:[#allocation5 + $0x3448] sm:$0xff]
        %v2049 = vld [vmem:[#allocation5 + $0x3450] sm:$0xff]
        %v2050 = vld [vmem:[#allocation5 + $0x3458] sm:$0xff]
        %v2051 = vld [vmem:[#allocation5 + $0x3460] sm:$0xff]
        %v2052 = vld [vmem:[#allocation5 + $0x3468] sm:$0xff]
        %v2053 = vld [vmem:[#allocation5 + $0x3470] sm:$0xff]
        %v2054 = vld [vmem:[#allocation5 + $0x3478] sm:$0xff]
        %v2055 = vld [vmem:[#allocation5 + $0x3480] sm:$0xff]
        %v2056 = vld [vmem:[#allocation5 + $0x3488] sm:$0xff]
        %v2057 = vld [vmem:[#allocation5 + $0x3490] sm:$0xff]
        %v2058 = vld [vmem:[#allocation5 + $0x3498] sm:$0xff]
        %v2059 = vld [vmem:[#allocation5 + $0x34a0] sm:$0xff]
        %v2060 = vld [vmem:[#allocation5 + $0x34a8] sm:$0xff]
        %v2061 = vld [vmem:[#allocation5 + $0x34b0] sm:$0xff]
        %v2062 = vld [vmem:[#allocation5 + $0x34b8] sm:$0xff]
        %v2063 = vld [vmem:[#allocation5 + $0x34c0] sm:$0xff]
        %v2064 = vld [vmem:[#allocation5 + $0x34c8] sm:$0xff]
        %v2065 = vld [vmem:[#allocation5 + $0x34d0] sm:$0xff]
        %v2066 = vld [vmem:[#allocation5 + $0x34d8] sm:$0xff]
        %v2067 = vld [vmem:[#allocation5 + $0x34e0] sm:$0xff]
        %v2068 = vld [vmem:[#allocation5 + $0x34e8] sm:$0xff]
        %v2069 = vld [vmem:[#allocation5 + $0x34f0] sm:$0xff]
        %v2070 = vld [vmem:[#allocation5 + $0x34f8] sm:$0xff]
        %v2071 = vld [vmem:[#allocation5 + $0x3500] sm:$0xff]
        %v2072 = vld [vmem:[#allocation5 + $0x3508] sm:$0xff]
        %v2073 = vld [vmem:[#allocation5 + $0x3510] sm:$0xff]
        %v2074 = vld [vmem:[#allocation5 + $0x3518] sm:$0xff]
        %v2075 = vld [vmem:[#allocation5 + $0x3520] sm:$0xff]
        %v2076 = vld [vmem:[#allocation5 + $0x3528] sm:$0xff]
        %v2077 = vld [vmem:[#allocation5 + $0x3530] sm:$0xff]
        %v2078 = vld [vmem:[#allocation5 + $0x3538] sm:$0xff]
        %v2079 = vld [vmem:[#allocation5 + $0x3540] sm:$0xff]
        %v2080 = vld [vmem:[#allocation5 + $0x3548] sm:$0xff]
        %v2081 = vld [vmem:[#allocation5 + $0x3550] sm:$0xff]
        %v2082 = vld [vmem:[#allocation5 + $0x3558] sm:$0xff]
        %v2083 = vld [vmem:[#allocation5 + $0x3560] sm:$0xff]
        %v2084 = vld [vmem:[#allocation5 + $0x3568] sm:$0xff]
        %v2085 = vld [vmem:[#allocation5 + $0x3570] sm:$0xff]
        %v2086 = vld [vmem:[#allocation5 + $0x3578] sm:$0xff]
        %v2087 = vld [vmem:[#allocation5 + $0x3580] sm:$0xff]
        %v2088 = vld [vmem:[#allocation5 + $0x3588] sm:$0xff]
        %v2089 = vld [vmem:[#allocation5 + $0x3590] sm:$0xff]
        %v2090 = vld [vmem:[#allocation5 + $0x3598] sm:$0xff]
        %v2091 = vld [vmem:[#allocation5 + $0x35a0] sm:$0xff]
        %v2092 = vld [vmem:[#allocation5 + $0x35a8] sm:$0xff]
        %v2093 = vld [vmem:[#allocation5 + $0x35b0] sm:$0xff]
        %v2094 = vld [vmem:[#allocation5 + $0x35b8] sm:$0xff]
        %v2095 = vld [vmem:[#allocation5 + $0x35c0] sm:$0xff]
        %v2096 = vld [vmem:[#allocation5 + $0x35c8] sm:$0xff]
        %v2097 = vld [vmem:[#allocation5 + $0x35d0] sm:$0xff]
        %v2098 = vld [vmem:[#allocation5 + $0x35d8] sm:$0xff]
        %v2099 = vld [vmem:[#allocation5 + $0x35e0] sm:$0xff]
        %v2100 = vld [vmem:[#allocation5 + $0x35e8] sm:$0xff]
        %v2101 = vld [vmem:[#allocation5 + $0x35f0] sm:$0xff]
        %v2102 = vld [vmem:[#allocation5 + $0x35f8] sm:$0xff]
        %v2103 = vld [vmem:[#allocation8] sm:$0xff]
        %v2104 = vld [vmem:[#allocation8 + $0x8] sm:$0xff]
        %v2105 = vld [vmem:[#allocation8 + $0x10] sm:$0x3]
        %v2109 = vlaneseq
        %v2110 = vshrl.u32 %v2109, 7
        %v2111 = vsub.s32 0, %v2110
        %v2112 = vrot.slane %v2103, %v2111
        %v2113 = vlaneseq
        %v2114 = vshrl.u32 %v2113, 7
        %v2115 = vsub.s32 1, %v2114
        %v2116 = vrot.slane %v2103, %v2115
        %v2117 = vlaneseq
        %v2118 = vshrl.u32 %v2117, 7
        %v2119 = vsub.s32 2, %v2118
        %v2120 = vrot.slane %v2103, %v2119
        %v2121 = vlaneseq
        %v2122 = vshrl.u32 %v2121, 7
        %v2123 = vsub.s32 3, %v2122
        %v2124 = vrot.slane %v2103, %v2123
        %v2125 = vlaneseq
        %v2126 = vshrl.u32 %v2125, 7
        %v2127 = vsub.s32 4, %v2126
        %v2128 = vrot.slane %v2103, %v2127
        %v2129 = vlaneseq
        %v2130 = vshrl.u32 %v2129, 7
        %v2131 = vsub.s32 5, %v2130
        %v2132 = vrot.slane %v2103, %v2131
        %v2133 = vlaneseq
        %v2134 = vshrl.u32 %v2133, 7
        %v2135 = vsub.s32 6, %v2134
        %v2136 = vrot.slane %v2103, %v2135
        %v2137 = vlaneseq
        %v2138 = vshrl.u32 %v2137, 7
        %v2139 = vsub.s32 7, %v2138
        %v2140 = vrot.slane %v2103, %v2139
        %v2141 = vlaneseq
        %v2142 = vshrl.u32 %v2141, 7
        %v2143 = vsub.s32 0, %v2142
        %v2144 = vrot.slane %v2104, %v2143
        %v2145 = vlaneseq
        %v2146 = vshrl.u32 %v2145, 7
        %v2147 = vsub.s32 1, %v2146
        %v2148 = vrot.slane %v2104, %v2147
        %v2149 = vlaneseq
        %v2150 = vshrl.u32 %v2149, 7
        %v2151 = vsub.s32 2, %v2150
        %v2152 = vrot.slane %v2104, %v2151
        %v2153 = vlaneseq
        %v2154 = vshrl.u32 %v2153, 7
        %v2155 = vsub.s32 3, %v2154
        %v2156 = vrot.slane %v2104, %v2155
        %v2157 = vlaneseq
        %v2158 = vshrl.u32 %v2157, 7
        %v2159 = vsub.s32 4, %v2158
        %v2160 = vrot.slane %v2104, %v2159
        %v2161 = vlaneseq
        %v2162 = vshrl.u32 %v2161, 7
        %v2163 = vsub.s32 5, %v2162
        %v2164 = vrot.slane %v2104, %v2163
        %v2165 = vlaneseq
        %v2166 = vshrl.u32 %v2165, 7
        %v2167 = vsub.s32 6, %v2166
        %v2168 = vrot.slane %v2104, %v2167
        %v2169 = vlaneseq
        %v2170 = vshrl.u32 %v2169, 7
        %v2171 = vsub.s32 7, %v2170
        %v2172 = vrot.slane %v2104, %v2171
        %v2173 = vlaneseq
        %v2174 = vshrl.u32 %v2173, 7
        %v2175 = vsub.s32 0, %v2174
        %v2176 = vrot.slane %v2105, %v2175
        %v2177 = vlaneseq
        %v2178 = vshrl.u32 %v2177, 7
        %v2179 = vsub.s32 1, %v2178
        %v2180 = vrot.slane %v2105, %v2179
        %v2201 = vcombine.high %v373, %v373
        %v2203 = vunpack.c.l.s4 1983009808
        %v2204 = vunpack.c.0.s8 %v2203
        %v2205 = vlaneseq
        %v2206 = vshrl.u32 %v2205, 7
        %v2207 = vsub.s32 %v2204, %v2206
        %v2208 = vrot.slane %v373, %v2207
        %v2210 = vunpack.c.l.s4 1983009808
        %v2211 = vunpack.c.0.s8 %v2210
        %v2212 = vlaneseq
        %v2213 = vshrl.u32 %v2212, 7
        %v2214 = vsub.s32 %v2211, %v2213
        %v2215 = vrot.slane %v2201, %v2214
        %v2216 = vcombine.high %v2208, %v2208
        %v2217 = vcombine.high %v2215, %v2215
        %v2219 = vunpack.c.l.s4 1983009808
        %v2220 = vunpack.c.0.s8 %v2219
        %v2221 = vlaneseq
        %v2222 = vshrl.u32 %v2221, 7
        %v2223 = vsub.s32 %v2220, %v2222
        %v2224 = vrot.slane %v374, %v2223
        %v2225 = vcombine.high %v2224, %v2224
        %2232 = vmatprep.subr.mxu0 %v376
        %2233 = vmatpush1.msra.mxu0 %v375
        %2234 = vmatprep.subr.mxu0 %v394
        %2235 = vmatpush1.msra.mxu0 %v393
        %2236 = vmatprep.subr.mxu0 %v412
        %2237 = vmatpush1.msra.mxu0 %v411
        %2238 = vmatprep.subr.mxu0 %v430
        %2239 = vmatpush1.msra.mxu0 %v429
        %2240 = vmatprep.subr.mxu0 %v448
        %2241 = vmatpush1.msra.mxu0 %v447
        %2242 = vmatprep.subr.mxu0 %v466
        %2243 = vmatpush1.msra.mxu0 %v465
        %2244 = vmatprep.subr.mxu0 %v484
        %2245 = vmatpush1.msra.mxu0 %v483
        %2246 = vmatprep.subr.mxu0 %v502
        %2247 = vmatpush1.msra.mxu0 %v501
        %2248 = vmatprep.subr.mxu0 %v520
        %2249 = vmatpush1.msra.mxu0 %v519
        %2250 = vmatprep.subr.mxu0 %v538
        %2251 = vmatpush1.msra.mxu0 %v537
        %2252 = vmatprep.subr.mxu0 %v556
        %2253 = vmatpush1.msra.mxu0 %v555
        %2254 = vmatprep.subr.mxu0 %v574
        %2255 = vmatpush1.msra.mxu0 %v573
        %2256 = vmatprep.subr.mxu0 %v592
        %2257 = vmatpush1.msra.mxu0 %v591
        %2258 = vmatprep.subr.mxu0 %v610
        %2259 = vmatpush1.msra.mxu0 %v609
        %2260 = vmatprep.subr.mxu0 %v628
        %2261 = vmatpush1.msra.mxu0 %v627
        %2262 = vmatprep.subr.mxu0 %v646
        %2263 = vmatpush1.msra.mxu0 %v645
        %2264 = vmatprep.subr.mxu0 %v664
        %2265 = vmatpush1.msra.mxu0 %v663
        %2266 = vmatprep.subr.mxu0 %v682
        %2267 = vmatpush1.msra.mxu0 %v681
        %2268 = vmatprep.subr.mxu0 %v700
        %2269 = vmatpush1.msra.mxu0 %v699
        %2270 = vmatprep.subr.mxu0 %v718
        %2271 = vmatpush1.msra.mxu0 %v717
        %2272 = vmatprep.subr.mxu0 %v736
        %2273 = vmatpush1.msra.mxu0 %v735
        %2274 = vmatprep.subr.mxu0 %v754
        %2275 = vmatpush1.msra.mxu0 %v753
        %2276 = vmatprep.subr.mxu0 %v772
        %2277 = vmatpush1.msra.mxu0 %v771
        %2278 = vmatprep.subr.mxu0 %v790
        %2279 = vmatpush1.msra.mxu0 %v789
        %2280 = vmatprep.subr.mxu0 %v808
        %2281 = vmatpush1.msra.mxu0 %v807
        %2282 = vmatprep.subr.mxu0 %v826
        %2283 = vmatpush1.msra.mxu0 %v825
        %2284 = vmatprep.subr.mxu0 %v844
        %2285 = vmatpush1.msra.mxu0 %v843
        %2286 = vmatprep.subr.mxu0 %v862
        %2287 = vmatpush1.msra.mxu0 %v861
        %2288 = vmatprep.subr.mxu0 %v880
        %2289 = vmatpush1.msra.mxu0 %v879
        %2290 = vmatprep.subr.mxu0 %v898
        %2291 = vmatpush1.msra.mxu0 %v897
        %2292 = vmatprep.subr.mxu0 %v916
        %2293 = vmatpush1.msra.mxu0 %v915
        %2294 = vmatprep.subr.mxu0 %v934
        %2295 = vmatpush1.msra.mxu0 %v933
        %2296 = vmatprep.mubr.f32.mxu0 %v2216
        %2297 = vmatmul.mubr.f32.gmra.mrb[0].mxu0 %v2208
        %v2298 = vpop.f32.mrb[0].mxu0
        %v2299 = vadd.f32 %v2112, %v2298
        %v2300 = vpop.f32.mrb[0].mxu0
        %v2301 = vadd.f32 %v2116, %v2300
        %2302 = vdwg.mxu0
        %2303 = vmatprep.subr.mxu0 %v952
        %2304 = vmatpush1.msra.mxu0 %v951
        %2305 = vmatprep.subr.mxu0 %v970
        %2306 = vmatpush1.msra.mxu0 %v969
        %2307 = vmatprep.subr.mxu0 %v988
        %2308 = vmatpush1.msra.mxu0 %v987
        %2309 = vmatprep.subr.mxu0 %v1006
        %2310 = vmatpush1.msra.mxu0 %v1005
        %2311 = vmatprep.subr.mxu0 %v1024
        %2312 = vmatpush1.msra.mxu0 %v1023
        %2313 = vmatprep.subr.mxu0 %v1042
        %2314 = vmatpush1.msra.mxu0 %v1041
        %2315 = vmatprep.subr.mxu0 %v1060
        %2316 = vmatpush1.msra.mxu0 %v1059
        %2317 = vmatprep.subr.mxu0 %v1078
        %2318 = vmatpush1.msra.mxu0 %v1077
        %2319 = vmatprep.subr.mxu0 %v1096
        %2320 = vmatpush1.msra.mxu0 %v1095
        %2321 = vmatprep.subr.mxu0 %v1114
        %2322 = vmatpush1.msra.mxu0 %v1113
        %2323 = vmatprep.subr.mxu0 %v1132
        %2324 = vmatpush1.msra.mxu0 %v1131
        %2325 = vmatprep.subr.mxu0 %v1150
        %2326 = vmatpush1.msra.mxu0 %v1149
        %2327 = vmatprep.subr.mxu0 %v1168
        %2328 = vmatpush1.msra.mxu0 %v1167
        %2329 = vmatprep.subr.mxu0 %v1186
        %2330 = vmatpush1.msra.mxu0 %v1185
        %2331 = vmatprep.subr.mxu0 %v1204
        %2332 = vmatpush1.msra.mxu0 %v1203
        %2333 = vmatprep.subr.mxu0 %v1222
        %2334 = vmatpush1.msra.mxu0 %v1221
        %2335 = vmatprep.subr.mxu0 %v1240
        %2336 = vmatpush1.msra.mxu0 %v1239
        %2337 = vmatprep.subr.mxu0 %v1258
        %2338 = vmatpush1.msra.mxu0 %v1257
        %2339 = vmatprep.subr.mxu0 %v1276
        %2340 = vmatpush1.msra.mxu0 %v1275
        %2341 = vmatprep.subr.mxu0 %v1294
        %2342 = vmatpush1.msra.mxu0 %v1293
        %2343 = vmatprep.subr.mxu0 %v1312
        %2344 = vmatpush1.msra.mxu0 %v1311
        %2345 = vmatprep.subr.mxu0 %v1330
        %2346 = vmatpush1.msra.mxu0 %v1329
        %2347 = vmatprep.subr.mxu0 %v1348
        %2348 = vmatpush1.msra.mxu0 %v1347
        %2349 = vmatprep.subr.mxu0 %v1366
        %2350 = vmatpush1.msra.mxu0 %v1365
        %2351 = vmatprep.subr.mxu0 %v1384
        %2352 = vmatpush1.msra.mxu0 %v1383
        %2353 = vmatprep.subr.mxu0 %v1402
        %2354 = vmatpush1.msra.mxu0 %v1401
        %2355 = vmatprep.subr.mxu0 %v1420
        %2356 = vmatpush1.msra.mxu0 %v1419
        %2357 = vmatprep.subr.mxu0 %v1438
        %2358 = vmatpush1.msra.mxu0 %v1437
        %2359 = vmatprep.subr.mxu0 %v1456
        %2360 = vmatpush1.msra.mxu0 %v1455
        %2361 = vmatprep.subr.mxu0 %v1474
        %2362 = vmatpush1.msra.mxu0 %v1473
        %2363 = vmatprep.subr.mxu0 %v1492
        %2364 = vmatpush1.msra.mxu0 %v1491
        %2365 = vmatprep.subr.mxu0 %v1510
        %2366 = vmatpush1.msra.mxu0 %v1509
        %2367 = vmatprep.mubr.f32.mxu0 %v2217
        %2368 = vmatmul.mubr.f32.gmra.mrb[0].mxu0 %v2215
        %v2369 = vpop.f32.mrb[0].mxu0
        %v2370 = vadd.f32 %v2299, %v2369
        %v2371 = vpop.f32.mrb[0].mxu0
        %v2372 = vadd.f32 %v2301, %v2371
        %2373 = vdwg.mxu0
        %2374 = vmatprep.subr.mxu0 %v1528
        %2375 = vmatpush1.msra.mxu0 %v1527
        %2376 = vmatprep.subr.mxu0 %v1546
        %2377 = vmatpush1.msra.mxu0 %v1545
        %2378 = vmatprep.subr.mxu0 %v1564
        %2379 = vmatpush1.msra.mxu0 %v1563
        %2380 = vmatprep.subr.mxu0 %v1582
        %2381 = vmatpush1.msra.mxu0 %v1581
        %2382 = vmatprep.subr.mxu0 %v1600
        %2383 = vmatpush1.msra.mxu0 %v1599
        %2384 = vmatprep.subr.mxu0 %v1618
        %2385 = vmatpush1.msra.mxu0 %v1617
        %2386 = vmatprep.subr.mxu0 %v1636
        %2387 = vmatpush1.msra.mxu0 %v1635
        %2388 = vmatprep.subr.mxu0 %v1654
        %2389 = vmatpush1.msra.mxu0 %v1653
        %2390 = vmatprep.subr.mxu0 %v1672
        %2391 = vmatpush1.msra.mxu0 %v1671
        %2392 = vmatprep.subr.mxu0 %v1690
        %2393 = vmatpush1.msra.mxu0 %v1689
        %2394 = vmatprep.subr.mxu0 %v1708
        %2395 = vmatpush1.msra.mxu0 %v1707
        %2396 = vmatprep.subr.mxu0 %v1726
        %2397 = vmatpush1.msra.mxu0 %v1725
        %2398 = vmatprep.subr.mxu0 %v1744
        %2399 = vmatpush1.msra.mxu0 %v1743
        %2400 = vmatprep.subr.mxu0 %v1762
        %2401 = vmatpush1.msra.mxu0 %v1761
        %2402 = vmatprep.subr.mxu0 %v1780
        %2403 = vmatpush1.msra.mxu0 %v1779
        %2404 = vmatprep.subr.mxu0 %v1798
        %2405 = vmatpush1.msra.mxu0 %v1797
        %2406 = vmatprep.subr.mxu0 %v1816
        %2407 = vmatpush1.msra.mxu0 %v1815
        %2408 = vmatprep.subr.mxu0 %v1834
        %2409 = vmatpush1.msra.mxu0 %v1833
        %2410 = vmatprep.subr.mxu0 %v1852
        %2411 = vmatpush1.msra.mxu0 %v1851
        %2412 = vmatprep.subr.mxu0 %v1870
        %2413 = vmatpush1.msra.mxu0 %v1869
        %2414 = vmatprep.subr.mxu0 %v1888
        %2415 = vmatpush1.msra.mxu0 %v1887
        %2416 = vmatprep.subr.mxu0 %v1906
        %2417 = vmatpush1.msra.mxu0 %v1905
        %2418 = vmatprep.subr.mxu0 %v1924
        %2419 = vmatpush1.msra.mxu0 %v1923
        %2420 = vmatprep.subr.mxu0 %v1942
        %2421 = vmatpush1.msra.mxu0 %v1941
        %2422 = vmatprep.subr.mxu0 %v1960
        %2423 = vmatpush1.msra.mxu0 %v1959
        %2424 = vmatprep.subr.mxu0 %v1978
        %2425 = vmatpush1.msra.mxu0 %v1977
        %2426 = vmatprep.subr.mxu0 %v1996
        %2427 = vmatpush1.msra.mxu0 %v1995
        %2428 = vmatprep.subr.mxu0 %v2014
        %2429 = vmatpush1.msra.mxu0 %v2013
        %2430 = vmatprep.subr.mxu0 %v2032
        %2431 = vmatpush1.msra.mxu0 %v2031
        %2432 = vmatprep.subr.mxu0 %v2050
        %2433 = vmatpush1.msra.mxu0 %v2049
        %2434 = vmatprep.subr.mxu0 %v2068
        %2435 = vmatpush1.msra.mxu0 %v2067
        %2436 = vmatprep.subr.mxu0 %v2086
        %2437 = vmatpush1.msra.mxu0 %v2085
        %2438 = vmatprep.mubr.f32.mxu0 %v2225
        %2439 = vmatmul.mubr.f32.gmra.mrb[0].mxu0 %v2224
        %v2440 = vpop.f32.mrb[0].mxu0
        %v2441 = vadd.f32 %v2370, %v2440
        %v2442 = vpop.f32.mrb[0].mxu0
        %v2443 = vadd.f32 %v2372, %v2442
        %2444 = vdwg.mxu0
        %2445 = vmatprep.subr.mxu0 %v378
        %2446 = vmatpush1.msra.mxu0 %v377
        %2447 = vmatprep.subr.mxu0 %v396
        %2448 = vmatpush1.msra.mxu0 %v395
        %2449 = vmatprep.subr.mxu0 %v414
        %2450 = vmatpush1.msra.mxu0 %v413
        %2451 = vmatprep.subr.mxu0 %v432
        %2452 = vmatpush1.msra.mxu0 %v431
        %2453 = vmatprep.subr.mxu0 %v450
        %2454 = vmatpush1.msra.mxu0 %v449
        %2455 = vmatprep.subr.mxu0 %v468
        %2456 = vmatpush1.msra.mxu0 %v467
        %2457 = vmatprep.subr.mxu0 %v486
        %2458 = vmatpush1.msra.mxu0 %v485
        %2459 = vmatprep.subr.mxu0 %v504
        %2460 = vmatpush1.msra.mxu0 %v503
        %2461 = vmatprep.subr.mxu0 %v522
        %2462 = vmatpush1.msra.mxu0 %v521
        %2463 = vmatprep.subr.mxu0 %v540
        %2464 = vmatpush1.msra.mxu0 %v539
        %2465 = vmatprep.subr.mxu0 %v558
        %2466 = vmatpush1.msra.mxu0 %v557
        %2467 = vmatprep.subr.mxu0 %v576
        %2468 = vmatpush1.msra.mxu0 %v575
        %2469 = vmatprep.subr.mxu0 %v594
        %2470 = vmatpush1.msra.mxu0 %v593
        %2471 = vmatprep.subr.mxu0 %v612
        %2472 = vmatpush1.msra.mxu0 %v611
        %2473 = vmatprep.subr.mxu0 %v630
        %2474 = vmatpush1.msra.mxu0 %v629
        %2475 = vmatprep.subr.mxu0 %v648
        %2476 = vmatpush1.msra.mxu0 %v647
        %2477 = vmatprep.subr.mxu0 %v666
        %2478 = vmatpush1.msra.mxu0 %v665
        %2479 = vmatprep.subr.mxu0 %v684
        %2480 = vmatpush1.msra.mxu0 %v683
        %2481 = vmatprep.subr.mxu0 %v702
        %2482 = vmatpush1.msra.mxu0 %v701
        %2483 = vmatprep.subr.mxu0 %v720
        %2484 = vmatpush1.msra.mxu0 %v719
        %2485 = vmatprep.subr.mxu0 %v738
        %2486 = vmatpush1.msra.mxu0 %v737
        %2487 = vmatprep.subr.mxu0 %v756
        %2488 = vmatpush1.msra.mxu0 %v755
        %2489 = vmatprep.subr.mxu0 %v774
        %2490 = vmatpush1.msra.mxu0 %v773
        %2491 = vmatprep.subr.mxu0 %v792
        %2492 = vmatpush1.msra.mxu0 %v791
        %2493 = vmatprep.subr.mxu0 %v810
        %2494 = vmatpush1.msra.mxu0 %v809
        %2495 = vmatprep.subr.mxu0 %v828
        %2496 = vmatpush1.msra.mxu0 %v827
        %2497 = vmatprep.subr.mxu0 %v846
        %2498 = vmatpush1.msra.mxu0 %v845
        %2499 = vmatprep.subr.mxu0 %v864
        %2500 = vmatpush1.msra.mxu0 %v863
        %2501 = vmatprep.subr.mxu0 %v882
        %2502 = vmatpush1.msra.mxu0 %v881
        %2503 = vmatprep.subr.mxu0 %v900
        %2504 = vmatpush1.msra.mxu0 %v899
        %2505 = vmatprep.subr.mxu0 %v918
        %2506 = vmatpush1.msra.mxu0 %v917
        %2507 = vmatprep.subr.mxu0 %v936
        %2508 = vmatpush1.msra.mxu0 %v935
        %2509 = vmatprep.mubr.f32.mxu0 %v2216
        %2510 = vmatmul.mubr.f32.gmra.mrb[0].mxu0 %v2208
        %v2511 = vpop.f32.mrb[0].mxu0
        %v2512 = vadd.f32 %v2120, %v2511
        %v2513 = vpop.f32.mrb[0].mxu0
        %v2514 = vadd.f32 %v2124, %v2513
        %2515 = vdwg.mxu0
        %2516 = vmatprep.subr.mxu0 %v954
        %2517 = vmatpush1.msra.mxu0 %v953
        %2518 = vmatprep.subr.mxu0 %v972
        %2519 = vmatpush1.msra.mxu0 %v971
        %2520 = vmatprep.subr.mxu0 %v990
        %2521 = vmatpush1.msra.mxu0 %v989
        %2522 = vmatprep.subr.mxu0 %v1008
        %2523 = vmatpush1.msra.mxu0 %v1007
        %2524 = vmatprep.subr.mxu0 %v1026
        %2525 = vmatpush1.msra.mxu0 %v1025
        %2526 = vmatprep.subr.mxu0 %v1044
        %2527 = vmatpush1.msra.mxu0 %v1043
        %2528 = vmatprep.subr.mxu0 %v1062
        %2529 = vmatpush1.msra.mxu0 %v1061
        %2530 = vmatprep.subr.mxu0 %v1080
        %2531 = vmatpush1.msra.mxu0 %v1079
        %2532 = vmatprep.subr.mxu0 %v1098
        %2533 = vmatpush1.msra.mxu0 %v1097
        %2534 = vmatprep.subr.mxu0 %v1116
        %2535 = vmatpush1.msra.mxu0 %v1115
        %2536 = vmatprep.subr.mxu0 %v1134
        %2537 = vmatpush1.msra.mxu0 %v1133
        %2538 = vmatprep.subr.mxu0 %v1152
        %2539 = vmatpush1.msra.mxu0 %v1151
        %2540 = vmatprep.subr.mxu0 %v1170
        %2541 = vmatpush1.msra.mxu0 %v1169
        %2542 = vmatprep.subr.mxu0 %v1188
        %2543 = vmatpush1.msra.mxu0 %v1187
        %2544 = vmatprep.subr.mxu0 %v1206
        %2545 = vmatpush1.msra.mxu0 %v1205
        %2546 = vmatprep.subr.mxu0 %v1224
        %2547 = vmatpush1.msra.mxu0 %v1223
        %2548 = vmatprep.subr.mxu0 %v1242
        %2549 = vmatpush1.msra.mxu0 %v1241
        %2550 = vmatprep.subr.mxu0 %v1260
        %2551 = vmatpush1.msra.mxu0 %v1259
        %2552 = vmatprep.subr.mxu0 %v1278
        %2553 = vmatpush1.msra.mxu0 %v1277
        %2554 = vmatprep.subr.mxu0 %v1296
        %2555 = vmatpush1.msra.mxu0 %v1295
        %2556 = vmatprep.subr.mxu0 %v1314
        %2557 = vmatpush1.msra.mxu0 %v1313
        %2558 = vmatprep.subr.mxu0 %v1332
        %2559 = vmatpush1.msra.mxu0 %v1331
        %2560 = vmatprep.subr.mxu0 %v1350
        %2561 = vmatpush1.msra.mxu0 %v1349
        %2562 = vmatprep.subr.mxu0 %v1368
        %2563 = vmatpush1.msra.mxu0 %v1367
        %2564 = vmatprep.subr.mxu0 %v1386
        %2565 = vmatpush1.msra.mxu0 %v1385
        %2566 = vmatprep.subr.mxu0 %v1404
        %2567 = vmatpush1.msra.mxu0 %v1403
        %2568 = vmatprep.subr.mxu0 %v1422
        %2569 = vmatpush1.msra.mxu0 %v1421
        %2570 = vmatprep.subr.mxu0 %v1440
        %2571 = vmatpush1.msra.mxu0 %v1439
        %2572 = vmatprep.subr.mxu0 %v1458
        %2573 = vmatpush1.msra.mxu0 %v1457
        %2574 = vmatprep.subr.mxu0 %v1476
        %2575 = vmatpush1.msra.mxu0 %v1475
        %2576 = vmatprep.subr.mxu0 %v1494
        %2577 = vmatpush1.msra.mxu0 %v1493
        %2578 = vmatprep.subr.mxu0 %v1512
        %2579 = vmatpush1.msra.mxu0 %v1511
        %2580 = vmatprep.mubr.f32.mxu0 %v2217
        %2581 = vmatmul.mubr.f32.gmra.mrb[0].mxu0 %v2215
        %v2582 = vpop.f32.mrb[0].mxu0
        %v2583 = vadd.f32 %v2512, %v2582
        %v2584 = vpop.f32.mrb[0].mxu0
        %v2585 = vadd.f32 %v2514, %v2584
        %2586 = vdwg.mxu0
        %2587 = vmatprep.subr.mxu0 %v1530
        %2588 = vmatpush1.msra.mxu0 %v1529
        %2589 = vmatprep.subr.mxu0 %v1548
        %2590 = vmatpush1.msra.mxu0 %v1547
        %2591 = vmatprep.subr.mxu0 %v1566
        %2592 = vmatpush1.msra.mxu0 %v1565
        %2593 = vmatprep.subr.mxu0 %v1584
        %2594 = vmatpush1.msra.mxu0 %v1583
        %2595 = vmatprep.subr.mxu0 %v1602
        %2596 = vmatpush1.msra.mxu0 %v1601
        %2597 = vmatprep.subr.mxu0 %v1620
        %2598 = vmatpush1.msra.mxu0 %v1619
        %2599 = vmatprep.subr.mxu0 %v1638
        %2600 = vmatpush1.msra.mxu0 %v1637
        %2601 = vmatprep.subr.mxu0 %v1656
        %2602 = vmatpush1.msra.mxu0 %v1655
        %2603 = vmatprep.subr.mxu0 %v1674
        %2604 = vmatpush1.msra.mxu0 %v1673
        %2605 = vmatprep.subr.mxu0 %v1692
        %2606 = vmatpush1.msra.mxu0 %v1691
        %2607 = vmatprep.subr.mxu0 %v1710
        %2608 = vmatpush1.msra.mxu0 %v1709
        %2609 = vmatprep.subr.mxu0 %v1728
        %2610 = vmatpush1.msra.mxu0 %v1727
        %2611 = vmatprep.subr.mxu0 %v1746
        %2612 = vmatpush1.msra.mxu0 %v1745
        %2613 = vmatprep.subr.mxu0 %v1764
        %2614 = vmatpush1.msra.mxu0 %v1763
        %2615 = vmatprep.subr.mxu0 %v1782
        %2616 = vmatpush1.msra.mxu0 %v1781
        %2617 = vmatprep.subr.mxu0 %v1800
        %2618 = vmatpush1.msra.mxu0 %v1799
        %2619 = vmatprep.subr.mxu0 %v1818
        %2620 = vmatpush1.msra.mxu0 %v1817
        %2621 = vmatprep.subr.mxu0 %v1836
        %2622 = vmatpush1.msra.mxu0 %v1835
        %2623 = vmatprep.subr.mxu0 %v1854
        %2624 = vmatpush1.msra.mxu0 %v1853
        %2625 = vmatprep.subr.mxu0 %v1872
        %2626 = vmatpush1.msra.mxu0 %v1871
        %2627 = vmatprep.subr.mxu0 %v1890
        %2628 = vmatpush1.msra.mxu0 %v1889
        %2629 = vmatprep.subr.mxu0 %v1908
        %2630 = vmatpush1.msra.mxu0 %v1907
        %2631 = vmatprep.subr.mxu0 %v1926
        %2632 = vmatpush1.msra.mxu0 %v1925
        %2633 = vmatprep.subr.mxu0 %v1944
        %2634 = vmatpush1.msra.mxu0 %v1943
        %2635 = vmatprep.subr.mxu0 %v1962
        %2636 = vmatpush1.msra.mxu0 %v1961
        %2637 = vmatprep.subr.mxu0 %v1980
        %2638 = vmatpush1.msra.mxu0 %v1979
        %2639 = vmatprep.subr.mxu0 %v1998
        %2640 = vmatpush1.msra.mxu0 %v1997
        %2641 = vmatprep.subr.mxu0 %v2016
        %2642 = vmatpush1.msra.mxu0 %v2015
        %2643 = vmatprep.subr.mxu0 %v2034
        %2644 = vmatpush1.msra.mxu0 %v2033
        %2645 = vmatprep.subr.mxu0 %v2052
        %2646 = vmatpush1.msra.mxu0 %v2051
        %2647 = vmatprep.subr.mxu0 %v2070
        %2648 = vmatpush1.msra.mxu0 %v2069
        %2649 = vmatprep.subr.mxu0 %v2088
        %2650 = vmatpush1.msra.mxu0 %v2087
        %2651 = vmatprep.mubr.f32.mxu0 %v2225
        %2652 = vmatmul.mubr.f32.gmra.mrb[0].mxu0 %v2224
        %v2653 = vpop.f32.mrb[0].mxu0
        %v2654 = vadd.f32 %v2583, %v2653
        %v2655 = vpop.f32.mrb[0].mxu0
        %v2656 = vadd.f32 %v2585, %v2655
        %2657 = vdwg.mxu0
        %2658 = vmatprep.subr.mxu0 %v380
        %2659 = vmatpush1.msra.mxu0 %v379
        %2660 = vmatprep.subr.mxu0 %v398
        %2661 = vmatpush1.msra.mxu0 %v397
        %2662 = vmatprep.subr.mxu0 %v416
        %2663 = vmatpush1.msra.mxu0 %v415
        %2664 = vmatprep.subr.mxu0 %v434
        %2665 = vmatpush1.msra.mxu0 %v433
        %2666 = vmatprep.subr.mxu0 %v452
        %2667 = vmatpush1.msra.mxu0 %v451
        %2668 = vmatprep.subr.mxu0 %v470
        %2669 = vmatpush1.msra.mxu0 %v469
        %2670 = vmatprep.subr.mxu0 %v488
        %2671 = vmatpush1.msra.mxu0 %v487
        %2672 = vmatprep.subr.mxu0 %v506
        %2673 = vmatpush1.msra.mxu0 %v505
        %2674 = vmatprep.subr.mxu0 %v524
        %2675 = vmatpush1.msra.mxu0 %v523
        %2676 = vmatprep.subr.mxu0 %v542
        %2677 = vmatpush1.msra.mxu0 %v541
        %2678 = vmatprep.subr.mxu0 %v560
        %2679 = vmatpush1.msra.mxu0 %v559
        %2680 = vmatprep.subr.mxu0 %v578
        %2681 = vmatpush1.msra.mxu0 %v577
        %2682 = vmatprep.subr.mxu0 %v596
        %2683 = vmatpush1.msra.mxu0 %v595
        %2684 = vmatprep.subr.mxu0 %v614
        %2685 = vmatpush1.msra.mxu0 %v613
        %2686 = vmatprep.subr.mxu0 %v632
        %2687 = vmatpush1.msra.mxu0 %v631
        %2688 = vmatprep.subr.mxu0 %v650
        %2689 = vmatpush1.msra.mxu0 %v649
        %2690 = vmatprep.subr.mxu0 %v668
        %2691 = vmatpush1.msra.mxu0 %v667
        %2692 = vmatprep.subr.mxu0 %v686
        %2693 = vmatpush1.msra.mxu0 %v685
        %2694 = vmatprep.subr.mxu0 %v704
        %2695 = vmatpush1.msra.mxu0 %v703
        %2696 = vmatprep.subr.mxu0 %v722
        %2697 = vmatpush1.msra.mxu0 %v721
        %2698 = vmatprep.subr.mxu0 %v740
        %2699 = vmatpush1.msra.mxu0 %v739
        %2700 = vmatprep.subr.mxu0 %v758
        %2701 = vmatpush1.msra.mxu0 %v757
        %2702 = vmatprep.subr.mxu0 %v776
        %2703 = vmatpush1.msra.mxu0 %v775
        %2704 = vmatprep.subr.mxu0 %v794
        %2705 = vmatpush1.msra.mxu0 %v793
        %2706 = vmatprep.subr.mxu0 %v812
        %2707 = vmatpush1.msra.mxu0 %v811
        %2708 = vmatprep.subr.mxu0 %v830
        %2709 = vmatpush1.msra.mxu0 %v829
        %2710 = vmatprep.subr.mxu0 %v848
        %2711 = vmatpush1.msra.mxu0 %v847
        %2712 = vmatprep.subr.mxu0 %v866
        %2713 = vmatpush1.msra.mxu0 %v865
        %2714 = vmatprep.subr.mxu0 %v884
        %2715 = vmatpush1.msra.mxu0 %v883
        %2716 = vmatprep.subr.mxu0 %v902
        %2717 = vmatpush1.msra.mxu0 %v901
        %2718 = vmatprep.subr.mxu0 %v920
        %2719 = vmatpush1.msra.mxu0 %v919
        %2720 = vmatprep.subr.mxu0 %v938
        %2721 = vmatpush1.msra.mxu0 %v937
        %2722 = vmatprep.mubr.f32.mxu0 %v2216
        %2723 = vmatmul.mubr.f32.gmra.mrb[0].mxu0 %v2208
        %v2724 = vpop.f32.mrb[0].mxu0
        %v2725 = vadd.f32 %v2128, %v2724
        %v2726 = vpop.f32.mrb[0].mxu0
        %v2727 = vadd.f32 %v2132, %v2726
        %2728 = vdwg.mxu0
        %2729 = vmatprep.subr.mxu0 %v956
        %2730 = vmatpush1.msra.mxu0 %v955
        %2731 = vmatprep.subr.mxu0 %v974
        %2732 = vmatpush1.msra.mxu0 %v973
        %2733 = vmatprep.subr.mxu0 %v992
        %2734 = vmatpush1.msra.mxu0 %v991
        %2735 = vmatprep.subr.mxu0 %v1010
        %2736 = vmatpush1.msra.mxu0 %v1009
        %2737 = vmatprep.subr.mxu0 %v1028
        %2738 = vmatpush1.msra.mxu0 %v1027
        %2739 = vmatprep.subr.mxu0 %v1046
        %2740 = vmatpush1.msra.mxu0 %v1045
        %2741 = vmatprep.subr.mxu0 %v1064
        %2742 = vmatpush1.msra.mxu0 %v1063
        %2743 = vmatprep.subr.mxu0 %v1082
        %2744 = vmatpush1.msra.mxu0 %v1081
        %2745 = vmatprep.subr.mxu0 %v1100
        %2746 = vmatpush1.msra.mxu0 %v1099
        %2747 = vmatprep.subr.mxu0 %v1118
        %2748 = vmatpush1.msra.mxu0 %v1117
        %2749 = vmatprep.subr.mxu0 %v1136
        %2750 = vmatpush1.msra.mxu0 %v1135
        %2751 = vmatprep.subr.mxu0 %v1154
        %2752 = vmatpush1.msra.mxu0 %v1153
        %2753 = vmatprep.subr.mxu0 %v1172
        %2754 = vmatpush1.msra.mxu0 %v1171
        %2755 = vmatprep.subr.mxu0 %v1190
        %2756 = vmatpush1.msra.mxu0 %v1189
        %2757 = vmatprep.subr.mxu0 %v1208
        %2758 = vmatpush1.msra.mxu0 %v1207
        %2759 = vmatprep.subr.mxu0 %v1226
        %2760 = vmatpush1.msra.mxu0 %v1225
        %2761 = vmatprep.subr.mxu0 %v1244
        %2762 = vmatpush1.msra.mxu0 %v1243
        %2763 = vmatprep.subr.mxu0 %v1262
        %2764 = vmatpush1.msra.mxu0 %v1261
        %2765 = vmatprep.subr.mxu0 %v1280
        %2766 = vmatpush1.msra.mxu0 %v1279
        %2767 = vmatprep.subr.mxu0 %v1298
        %2768 = vmatpush1.msra.mxu0 %v1297
        %2769 = vmatprep.subr.mxu0 %v1316
        %2770 = vmatpush1.msra.mxu0 %v1315
        %2771 = vmatprep.subr.mxu0 %v1334
        %2772 = vmatpush1.msra.mxu0 %v1333
        %2773 = vmatprep.subr.mxu0 %v1352
        %2774 = vmatpush1.msra.mxu0 %v1351
        %2775 = vmatprep.subr.mxu0 %v1370
        %2776 = vmatpush1.msra.mxu0 %v1369
        %2777 = vmatprep.subr.mxu0 %v1388
        %2778 = vmatpush1.msra.mxu0 %v1387
        %2779 = vmatprep.subr.mxu0 %v1406
        %2780 = vmatpush1.msra.mxu0 %v1405
        %2781 = vmatprep.subr.mxu0 %v1424
        %2782 = vmatpush1.msra.mxu0 %v1423
        %2783 = vmatprep.subr.mxu0 %v1442
        %2784 = vmatpush1.msra.mxu0 %v1441
        %2785 = vmatprep.subr.mxu0 %v1460
        %2786 = vmatpush1.msra.mxu0 %v1459
        %2787 = vmatprep.subr.mxu0 %v1478
        %2788 = vmatpush1.msra.mxu0 %v1477
        %2789 = vmatprep.subr.mxu0 %v1496
        %2790 = vmatpush1.msra.mxu0 %v1495
        %2791 = vmatprep.subr.mxu0 %v1514
        %2792 = vmatpush1.msra.mxu0 %v1513
        %2793 = vmatprep.mubr.f32.mxu0 %v2217
        %2794 = vmatmul.mubr.f32.gmra.mrb[0].mxu0 %v2215
        %v2795 = vpop.f32.mrb[0].mxu0
        %v2796 = vadd.f32 %v2725, %v2795
        %v2797 = vpop.f32.mrb[0].mxu0
        %v2798 = vadd.f32 %v2727, %v2797
        %2799 = vdwg.mxu0
        %2800 = vmatprep.subr.mxu0 %v1532
        %2801 = vmatpush1.msra.mxu0 %v1531
        %2802 = vmatprep.subr.mxu0 %v1550
        %2803 = vmatpush1.msra.mxu0 %v1549
        %2804 = vmatprep.subr.mxu0 %v1568
        %2805 = vmatpush1.msra.mxu0 %v1567
        %2806 = vmatprep.subr.mxu0 %v1586
        %2807 = vmatpush1.msra.mxu0 %v1585
        %2808 = vmatprep.subr.mxu0 %v1604
        %2809 = vmatpush1.msra.mxu0 %v1603
        %2810 = vmatprep.subr.mxu0 %v1622
        %2811 = vmatpush1.msra.mxu0 %v1621
        %2812 = vmatprep.subr.mxu0 %v1640
        %2813 = vmatpush1.msra.mxu0 %v1639
        %2814 = vmatprep.subr.mxu0 %v1658
        %2815 = vmatpush1.msra.mxu0 %v1657
        %2816 = vmatprep.subr.mxu0 %v1676
        %2817 = vmatpush1.msra.mxu0 %v1675
        %2818 = vmatprep.subr.mxu0 %v1694
        %2819 = vmatpush1.msra.mxu0 %v1693
        %2820 = vmatprep.subr.mxu0 %v1712
        %2821 = vmatpush1.msra.mxu0 %v1711
        %2822 = vmatprep.subr.mxu0 %v1730
        %2823 = vmatpush1.msra.mxu0 %v1729
        %2824 = vmatprep.subr.mxu0 %v1748
        %2825 = vmatpush1.msra.mxu0 %v1747
        %2826 = vmatprep.subr.mxu0 %v1766
        %2827 = vmatpush1.msra.mxu0 %v1765
        %2828 = vmatprep.subr.mxu0 %v1784
        %2829 = vmatpush1.msra.mxu0 %v1783
        %2830 = vmatprep.subr.mxu0 %v1802
        %2831 = vmatpush1.msra.mxu0 %v1801
        %2832 = vmatprep.subr.mxu0 %v1820
        %2833 = vmatpush1.msra.mxu0 %v1819
        %2834 = vmatprep.subr.mxu0 %v1838
        %2835 = vmatpush1.msra.mxu0 %v1837
        %2836 = vmatprep.subr.mxu0 %v1856
        %2837 = vmatpush1.msra.mxu0 %v1855
        %2838 = vmatprep.subr.mxu0 %v1874
        %2839 = vmatpush1.msra.mxu0 %v1873
        %2840 = vmatprep.subr.mxu0 %v1892
        %2841 = vmatpush1.msra.mxu0 %v1891
        %2842 = vmatprep.subr.mxu0 %v1910
        %2843 = vmatpush1.msra.mxu0 %v1909
        %2844 = vmatprep.subr.mxu0 %v1928
        %2845 = vmatpush1.msra.mxu0 %v1927
        %2846 = vmatprep.subr.mxu0 %v1946
        %2847 = vmatpush1.msra.mxu0 %v1945
        %2848 = vmatprep.subr.mxu0 %v1964
        %2849 = vmatpush1.msra.mxu0 %v1963
        %2850 = vmatprep.subr.mxu0 %v1982
        %2851 = vmatpush1.msra.mxu0 %v1981
        %2852 = vmatprep.subr.mxu0 %v2000
        %2853 = vmatpush1.msra.mxu0 %v1999
        %2854 = vmatprep.subr.mxu0 %v2018
        %2855 = vmatpush1.msra.mxu0 %v2017
        %2856 = vmatprep.subr.mxu0 %v2036
        %2857 = vmatpush1.msra.mxu0 %v2035
        %2858 = vmatprep.subr.mxu0 %v2054
        %2859 = vmatpush1.msra.mxu0 %v2053
        %2860 = vmatprep.subr.mxu0 %v2072
        %2861 = vmatpush1.msra.mxu0 %v2071
        %2862 = vmatprep.subr.mxu0 %v2090
        %2863 = vmatpush1.msra.mxu0 %v2089
        %2864 = vmatprep.mubr.f32.mxu0 %v2225
        %2865 = vmatmul.mubr.f32.gmra.mrb[0].mxu0 %v2224
        %v2866 = vpop.f32.mrb[0].mxu0
        %v2867 = vadd.f32 %v2796, %v2866
        %v2868 = vpop.f32.mrb[0].mxu0
        %v2869 = vadd.f32 %v2798, %v2868
        %2870 = vdwg.mxu0
        %2871 = vmatprep.subr.mxu0 %v382
        %2872 = vmatpush1.msra.mxu0 %v381
        %2873 = vmatprep.subr.mxu0 %v400
        %2874 = vmatpush1.msra.mxu0 %v399
        %2875 = vmatprep.subr.mxu0 %v418
        %2876 = vmatpush1.msra.mxu0 %v417
        %2877 = vmatprep.subr.mxu0 %v436
        %2878 = vmatpush1.msra.mxu0 %v435
        %2879 = vmatprep.subr.mxu0 %v454
        %2880 = vmatpush1.msra.mxu0 %v453
        %2881 = vmatprep.subr.mxu0 %v472
        %2882 = vmatpush1.msra.mxu0 %v471
        %2883 = vmatprep.subr.mxu0 %v490
        %2884 = vmatpush1.msra.mxu0 %v489
        %2885 = vmatprep.subr.mxu0 %v508
        %2886 = vmatpush1.msra.mxu0 %v507
        %2887 = vmatprep.subr.mxu0 %v526
        %2888 = vmatpush1.msra.mxu0 %v525
        %2889 = vmatprep.subr.mxu0 %v544
        %2890 = vmatpush1.msra.mxu0 %v543
        %2891 = vmatprep.subr.mxu0 %v562
        %2892 = vmatpush1.msra.mxu0 %v561
        %2893 = vmatprep.subr.mxu0 %v580
        %2894 = vmatpush1.msra.mxu0 %v579
        %2895 = vmatprep.subr.mxu0 %v598
        %2896 = vmatpush1.msra.mxu0 %v597
        %2897 = vmatprep.subr.mxu0 %v616
        %2898 = vmatpush1.msra.mxu0 %v615
        %2899 = vmatprep.subr.mxu0 %v634
        %2900 = vmatpush1.msra.mxu0 %v633
        %2901 = vmatprep.subr.mxu0 %v652
        %2902 = vmatpush1.msra.mxu0 %v651
        %2903 = vmatprep.subr.mxu0 %v670
        %2904 = vmatpush1.msra.mxu0 %v669
        %2905 = vmatprep.subr.mxu0 %v688
        %2906 = vmatpush1.msra.mxu0 %v687
        %2907 = vmatprep.subr.mxu0 %v706
        %2908 = vmatpush1.msra.mxu0 %v705
        %2909 = vmatprep.subr.mxu0 %v724
        %2910 = vmatpush1.msra.mxu0 %v723
        %2911 = vmatprep.subr.mxu0 %v742
        %2912 = vmatpush1.msra.mxu0 %v741
        %2913 = vmatprep.subr.mxu0 %v760
        %2914 = vmatpush1.msra.mxu0 %v759
        %2915 = vmatprep.subr.mxu0 %v778
        %2916 = vmatpush1.msra.mxu0 %v777
        %2917 = vmatprep.subr.mxu0 %v796
        %2918 = vmatpush1.msra.mxu0 %v795
        %2919 = vmatprep.subr.mxu0 %v814
        %2920 = vmatpush1.msra.mxu0 %v813
        %2921 = vmatprep.subr.mxu0 %v832
        %2922 = vmatpush1.msra.mxu0 %v831
        %2923 = vmatprep.subr.mxu0 %v850
        %2924 = vmatpush1.msra.mxu0 %v849
        %2925 = vmatprep.subr.mxu0 %v868
        %2926 = vmatpush1.msra.mxu0 %v867
        %2927 = vmatprep.subr.mxu0 %v886
        %2928 = vmatpush1.msra.mxu0 %v885
        %2929 = vmatprep.subr.mxu0 %v904
        %2930 = vmatpush1.msra.mxu0 %v903
        %2931 = vmatprep.subr.mxu0 %v922
        %2932 = vmatpush1.msra.mxu0 %v921
        %2933 = vmatprep.subr.mxu0 %v940
        %2934 = vmatpush1.msra.mxu0 %v939
        %2935 = vmatprep.mubr.f32.mxu0 %v2216
        %2936 = vmatmul.mubr.f32.gmra.mrb[0].mxu0 %v2208
        %v2937 = vpop.f32.mrb[0].mxu0
        %v2938 = vadd.f32 %v2136, %v2937
        %v2939 = vpop.f32.mrb[0].mxu0
        %v2940 = vadd.f32 %v2140, %v2939
        %2941 = vdwg.mxu0
        %2942 = vmatprep.subr.mxu0 %v958
        %2943 = vmatpush1.msra.mxu0 %v957
        %2944 = vmatprep.subr.mxu0 %v976
        %2945 = vmatpush1.msra.mxu0 %v975
        %2946 = vmatprep.subr.mxu0 %v994
        %2947 = vmatpush1.msra.mxu0 %v993
        %2948 = vmatprep.subr.mxu0 %v1012
        %2949 = vmatpush1.msra.mxu0 %v1011
        %2950 = vmatprep.subr.mxu0 %v1030
        %2951 = vmatpush1.msra.mxu0 %v1029
        %2952 = vmatprep.subr.mxu0 %v1048
        %2953 = vmatpush1.msra.mxu0 %v1047
        %2954 = vmatprep.subr.mxu0 %v1066
        %2955 = vmatpush1.msra.mxu0 %v1065
        %2956 = vmatprep.subr.mxu0 %v1084
        %2957 = vmatpush1.msra.mxu0 %v1083
        %2958 = vmatprep.subr.mxu0 %v1102
        %2959 = vmatpush1.msra.mxu0 %v1101
        %2960 = vmatprep.subr.mxu0 %v1120
        %2961 = vmatpush1.msra.mxu0 %v1119
        %2962 = vmatprep.subr.mxu0 %v1138
        %2963 = vmatpush1.msra.mxu0 %v1137
        %2964 = vmatprep.subr.mxu0 %v1156
        %2965 = vmatpush1.msra.mxu0 %v1155
        %2966 = vmatprep.subr.mxu0 %v1174
        %2967 = vmatpush1.msra.mxu0 %v1173
        %2968 = vmatprep.subr.mxu0 %v1192
        %2969 = vmatpush1.msra.mxu0 %v1191
        %2970 = vmatprep.subr.mxu0 %v1210
        %2971 = vmatpush1.msra.mxu0 %v1209
        %2972 = vmatprep.subr.mxu0 %v1228
        %2973 = vmatpush1.msra.mxu0 %v1227
        %2974 = vmatprep.subr.mxu0 %v1246
        %2975 = vmatpush1.msra.mxu0 %v1245
        %2976 = vmatprep.subr.mxu0 %v1264
        %2977 = vmatpush1.msra.mxu0 %v1263
        %2978 = vmatprep.subr.mxu0 %v1282
        %2979 = vmatpush1.msra.mxu0 %v1281
        %2980 = vmatprep.subr.mxu0 %v1300
        %2981 = vmatpush1.msra.mxu0 %v1299
        %2982 = vmatprep.subr.mxu0 %v1318
        %2983 = vmatpush1.msra.mxu0 %v1317
        %2984 = vmatprep.subr.mxu0 %v1336
        %2985 = vmatpush1.msra.mxu0 %v1335
        %2986 = vmatprep.subr.mxu0 %v1354
        %2987 = vmatpush1.msra.mxu0 %v1353
        %2988 = vmatprep.subr.mxu0 %v1372
        %2989 = vmatpush1.msra.mxu0 %v1371
        %2990 = vmatprep.subr.mxu0 %v1390
        %2991 = vmatpush1.msra.mxu0 %v1389
        %2992 = vmatprep.subr.mxu0 %v1408
        %2993 = vmatpush1.msra.mxu0 %v1407
        %2994 = vmatprep.subr.mxu0 %v1426
        %2995 = vmatpush1.msra.mxu0 %v1425
        %2996 = vmatprep.subr.mxu0 %v1444
        %2997 = vmatpush1.msra.mxu0 %v1443
        %2998 = vmatprep.subr.mxu0 %v1462
        %2999 = vmatpush1.msra.mxu0 %v1461
        %3000 = vmatprep.subr.mxu0 %v1480
        %3001 = vmatpush1.msra.mxu0 %v1479
        %3002 = vmatprep.subr.mxu0 %v1498
        %3003 = vmatpush1.msra.mxu0 %v1497
        %3004 = vmatprep.subr.mxu0 %v1516
        %3005 = vmatpush1.msra.mxu0 %v1515
        %3006 = vmatprep.mubr.f32.mxu0 %v2217
        %3007 = vmatmul.mubr.f32.gmra.mrb[0].mxu0 %v2215
        %v3008 = vpop.f32.mrb[0].mxu0
        %v3009 = vadd.f32 %v2938, %v3008
        %v3010 = vpop.f32.mrb[0].mxu0
        %v3011 = vadd.f32 %v2940, %v3010
        %3012 = vdwg.mxu0
        %3013 = vmatprep.subr.mxu0 %v1534
        %3014 = vmatpush1.msra.mxu0 %v1533
        %3015 = vmatprep.subr.mxu0 %v1552
        %3016 = vmatpush1.msra.mxu0 %v1551
        %3017 = vmatprep.subr.mxu0 %v1570
        %3018 = vmatpush1.msra.mxu0 %v1569
        %3019 = vmatprep.subr.mxu0 %v1588
        %3020 = vmatpush1.msra.mxu0 %v1587
        %3021 = vmatprep.subr.mxu0 %v1606
        %3022 = vmatpush1.msra.mxu0 %v1605
        %3023 = vmatprep.subr.mxu0 %v1624
        %3024 = vmatpush1.msra.mxu0 %v1623
        %3025 = vmatprep.subr.mxu0 %v1642
        %3026 = vmatpush1.msra.mxu0 %v1641
        %3027 = vmatprep.subr.mxu0 %v1660
        %3028 = vmatpush1.msra.mxu0 %v1659
        %3029 = vmatprep.subr.mxu0 %v1678
        %3030 = vmatpush1.msra.mxu0 %v1677
        %3031 = vmatprep.subr.mxu0 %v1696
        %3032 = vmatpush1.msra.mxu0 %v1695
        %3033 = vmatprep.subr.mxu0 %v1714
        %3034 = vmatpush1.msra.mxu0 %v1713
        %3035 = vmatprep.subr.mxu0 %v1732
        %3036 = vmatpush1.msra.mxu0 %v1731
        %3037 = vmatprep.subr.mxu0 %v1750
        %3038 = vmatpush1.msra.mxu0 %v1749
        %3039 = vmatprep.subr.mxu0 %v1768
        %3040 = vmatpush1.msra.mxu0 %v1767
        %3041 = vmatprep.subr.mxu0 %v1786
        %3042 = vmatpush1.msra.mxu0 %v1785
        %3043 = vmatprep.subr.mxu0 %v1804
        %3044 = vmatpush1.msra.mxu0 %v1803
        %3045 = vmatprep.subr.mxu0 %v1822
        %3046 = vmatpush1.msra.mxu0 %v1821
        %3047 = vmatprep.subr.mxu0 %v1840
        %3048 = vmatpush1.msra.mxu0 %v1839
        %3049 = vmatprep.subr.mxu0 %v1858
        %3050 = vmatpush1.msra.mxu0 %v1857
        %3051 = vmatprep.subr.mxu0 %v1876
        %3052 = vmatpush1.msra.mxu0 %v1875
        %3053 = vmatprep.subr.mxu0 %v1894
        %3054 = vmatpush1.msra.mxu0 %v1893
        %3055 = vmatprep.subr.mxu0 %v1912
        %3056 = vmatpush1.msra.mxu0 %v1911
        %3057 = vmatprep.subr.mxu0 %v1930
        %3058 = vmatpush1.msra.mxu0 %v1929
        %3059 = vmatprep.subr.mxu0 %v1948
        %3060 = vmatpush1.msra.mxu0 %v1947
        %3061 = vmatprep.subr.mxu0 %v1966
        %3062 = vmatpush1.msra.mxu0 %v1965
        %3063 = vmatprep.subr.mxu0 %v1984
        %3064 = vmatpush1.msra.mxu0 %v1983
        %3065 = vmatprep.subr.mxu0 %v2002
        %3066 = vmatpush1.msra.mxu0 %v2001
        %3067 = vmatprep.subr.mxu0 %v2020
        %3068 = vmatpush1.msra.mxu0 %v2019
        %3069 = vmatprep.subr.mxu0 %v2038
        %3070 = vmatpush1.msra.mxu0 %v2037
        %3071 = vmatprep.subr.mxu0 %v2056
        %3072 = vmatpush1.msra.mxu0 %v2055
        %3073 = vmatprep.subr.mxu0 %v2074
        %3074 = vmatpush1.msra.mxu0 %v2073
        %3075 = vmatprep.subr.mxu0 %v2092
        %3076 = vmatpush1.msra.mxu0 %v2091
        %3077 = vmatprep.mubr.f32.mxu0 %v2225
        %3078 = vmatmul.mubr.f32.gmra.mrb[0].mxu0 %v2224
        %v3079 = vpop.f32.mrb[0].mxu0
        %v3080 = vadd.f32 %v3009, %v3079
        %v3081 = vpop.f32.mrb[0].mxu0
        %v3082 = vadd.f32 %v3011, %v3081
        %3083 = vdwg.mxu0
        %3084 = vmatprep.subr.mxu0 %v384
        %3085 = vmatpush1.msra.mxu0 %v383
        %3086 = vmatprep.subr.mxu0 %v402
        %3087 = vmatpush1.msra.mxu0 %v401
        %3088 = vmatprep.subr.mxu0 %v420
        %3089 = vmatpush1.msra.mxu0 %v419
        %3090 = vmatprep.subr.mxu0 %v438
        %3091 = vmatpush1.msra.mxu0 %v437
        %3092 = vmatprep.subr.mxu0 %v456
        %3093 = vmatpush1.msra.mxu0 %v455
        %3094 = vmatprep.subr.mxu0 %v474
        %3095 = vmatpush1.msra.mxu0 %v473
        %3096 = vmatprep.subr.mxu0 %v492
        %3097 = vmatpush1.msra.mxu0 %v491
        %3098 = vmatprep.subr.mxu0 %v510
        %3099 = vmatpush1.msra.mxu0 %v509
        %3100 = vmatprep.subr.mxu0 %v528
        %3101 = vmatpush1.msra.mxu0 %v527
        %3102 = vmatprep.subr.mxu0 %v546
        %3103 = vmatpush1.msra.mxu0 %v545
        %3104 = vmatprep.subr.mxu0 %v564
        %3105 = vmatpush1.msra.mxu0 %v563
        %3106 = vmatprep.subr.mxu0 %v582
        %3107 = vmatpush1.msra.mxu0 %v581
        %3108 = vmatprep.subr.mxu0 %v600
        %3109 = vmatpush1.msra.mxu0 %v599
        %3110 = vmatprep.subr.mxu0 %v618
        %3111 = vmatpush1.msra.mxu0 %v617
        %3112 = vmatprep.subr.mxu0 %v636
        %3113 = vmatpush1.msra.mxu0 %v635
        %3114 = vmatprep.subr.mxu0 %v654
        %3115 = vmatpush1.msra.mxu0 %v653
        %3116 = vmatprep.subr.mxu0 %v672
        %3117 = vmatpush1.msra.mxu0 %v671
        %3118 = vmatprep.subr.mxu0 %v690
        %3119 = vmatpush1.msra.mxu0 %v689
        %3120 = vmatprep.subr.mxu0 %v708
        %3121 = vmatpush1.msra.mxu0 %v707
        %3122 = vmatprep.subr.mxu0 %v726
        %3123 = vmatpush1.msra.mxu0 %v725
        %3124 = vmatprep.subr.mxu0 %v744
        %3125 = vmatpush1.msra.mxu0 %v743
        %3126 = vmatprep.subr.mxu0 %v762
        %3127 = vmatpush1.msra.mxu0 %v761
        %3128 = vmatprep.subr.mxu0 %v780
        %3129 = vmatpush1.msra.mxu0 %v779
        %3130 = vmatprep.subr.mxu0 %v798
        %3131 = vmatpush1.msra.mxu0 %v797
        %3132 = vmatprep.subr.mxu0 %v816
        %3133 = vmatpush1.msra.mxu0 %v815
        %3134 = vmatprep.subr.mxu0 %v834
        %3135 = vmatpush1.msra.mxu0 %v833
        %3136 = vmatprep.subr.mxu0 %v852
        %3137 = vmatpush1.msra.mxu0 %v851
        %3138 = vmatprep.subr.mxu0 %v870
        %3139 = vmatpush1.msra.mxu0 %v869
        %3140 = vmatprep.subr.mxu0 %v888
        %3141 = vmatpush1.msra.mxu0 %v887
        %3142 = vmatprep.subr.mxu0 %v906
        %3143 = vmatpush1.msra.mxu0 %v905
        %3144 = vmatprep.subr.mxu0 %v924
        %3145 = vmatpush1.msra.mxu0 %v923
        %3146 = vmatprep.subr.mxu0 %v942
        %3147 = vmatpush1.msra.mxu0 %v941
        %3148 = vmatprep.mubr.f32.mxu0 %v2216
        %3149 = vmatmul.mubr.f32.gmra.mrb[0].mxu0 %v2208
        %v3150 = vpop.f32.mrb[0].mxu0
        %v3151 = vadd.f32 %v2144, %v3150
        %v3152 = vpop.f32.mrb[0].mxu0
        %v3153 = vadd.f32 %v2148, %v3152
        %3154 = vdwg.mxu0
        %3155 = vmatprep.subr.mxu0 %v960
        %3156 = vmatpush1.msra.mxu0 %v959
        %3157 = vmatprep.subr.mxu0 %v978
        %3158 = vmatpush1.msra.mxu0 %v977
        %3159 = vmatprep.subr.mxu0 %v996
        %3160 = vmatpush1.msra.mxu0 %v995
        %3161 = vmatprep.subr.mxu0 %v1014
        %3162 = vmatpush1.msra.mxu0 %v1013
        %3163 = vmatprep.subr.mxu0 %v1032
        %3164 = vmatpush1.msra.mxu0 %v1031
        %3165 = vmatprep.subr.mxu0 %v1050
        %3166 = vmatpush1.msra.mxu0 %v1049
        %3167 = vmatprep.subr.mxu0 %v1068
        %3168 = vmatpush1.msra.mxu0 %v1067
        %3169 = vmatprep.subr.mxu0 %v1086
        %3170 = vmatpush1.msra.mxu0 %v1085
        %3171 = vmatprep.subr.mxu0 %v1104
        %3172 = vmatpush1.msra.mxu0 %v1103
        %3173 = vmatprep.subr.mxu0 %v1122
        %3174 = vmatpush1.msra.mxu0 %v1121
        %3175 = vmatprep.subr.mxu0 %v1140
        %3176 = vmatpush1.msra.mxu0 %v1139
        %3177 = vmatprep.subr.mxu0 %v1158
        %3178 = vmatpush1.msra.mxu0 %v1157
        %3179 = vmatprep.subr.mxu0 %v1176
        %3180 = vmatpush1.msra.mxu0 %v1175
        %3181 = vmatprep.subr.mxu0 %v1194
        %3182 = vmatpush1.msra.mxu0 %v1193
        %3183 = vmatprep.subr.mxu0 %v1212
        %3184 = vmatpush1.msra.mxu0 %v1211
        %3185 = vmatprep.subr.mxu0 %v1230
        %3186 = vmatpush1.msra.mxu0 %v1229
        %3187 = vmatprep.subr.mxu0 %v1248
        %3188 = vmatpush1.msra.mxu0 %v1247
        %3189 = vmatprep.subr.mxu0 %v1266
        %3190 = vmatpush1.msra.mxu0 %v1265
        %3191 = vmatprep.subr.mxu0 %v1284
        %3192 = vmatpush1.msra.mxu0 %v1283
        %3193 = vmatprep.subr.mxu0 %v1302
        %3194 = vmatpush1.msra.mxu0 %v1301
        %3195 = vmatprep.subr.mxu0 %v1320
        %3196 = vmatpush1.msra.mxu0 %v1319
        %3197 = vmatprep.subr.mxu0 %v1338
        %3198 = vmatpush1.msra.mxu0 %v1337
        %3199 = vmatprep.subr.mxu0 %v1356
        %3200 = vmatpush1.msra.mxu0 %v1355
        %3201 = vmatprep.subr.mxu0 %v1374
        %3202 = vmatpush1.msra.mxu0 %v1373
        %3203 = vmatprep.subr.mxu0 %v1392
        %3204 = vmatpush1.msra.mxu0 %v1391
        %3205 = vmatprep.subr.mxu0 %v1410
        %3206 = vmatpush1.msra.mxu0 %v1409
        %3207 = vmatprep.subr.mxu0 %v1428
        %3208 = vmatpush1.msra.mxu0 %v1427
        %3209 = vmatprep.subr.mxu0 %v1446
        %3210 = vmatpush1.msra.mxu0 %v1445
        %3211 = vmatprep.subr.mxu0 %v1464
        %3212 = vmatpush1.msra.mxu0 %v1463
        %3213 = vmatprep.subr.mxu0 %v1482
        %3214 = vmatpush1.msra.mxu0 %v1481
        %3215 = vmatprep.subr.mxu0 %v1500
        %3216 = vmatpush1.msra.mxu0 %v1499
        %3217 = vmatprep.subr.mxu0 %v1518
        %3218 = vmatpush1.msra.mxu0 %v1517
        %3219 = vmatprep.mubr.f32.mxu0 %v2217
        %3220 = vmatmul.mubr.f32.gmra.mrb[0].mxu0 %v2215
        %v3221 = vpop.f32.mrb[0].mxu0
        %v3222 = vadd.f32 %v3151, %v3221
        %v3223 = vpop.f32.mrb[0].mxu0
        %v3224 = vadd.f32 %v3153, %v3223
        %3225 = vdwg.mxu0
        %3226 = vmatprep.subr.mxu0 %v1536
        %3227 = vmatpush1.msra.mxu0 %v1535
        %3228 = vmatprep.subr.mxu0 %v1554
        %3229 = vmatpush1.msra.mxu0 %v1553
        %3230 = vmatprep.subr.mxu0 %v1572
        %3231 = vmatpush1.msra.mxu0 %v1571
        %3232 = vmatprep.subr.mxu0 %v1590
        %3233 = vmatpush1.msra.mxu0 %v1589
        %3234 = vmatprep.subr.mxu0 %v1608
        %3235 = vmatpush1.msra.mxu0 %v1607
        %3236 = vmatprep.subr.mxu0 %v1626
        %3237 = vmatpush1.msra.mxu0 %v1625
        %3238 = vmatprep.subr.mxu0 %v1644
        %3239 = vmatpush1.msra.mxu0 %v1643
        %3240 = vmatprep.subr.mxu0 %v1662
        %3241 = vmatpush1.msra.mxu0 %v1661
        %3242 = vmatprep.subr.mxu0 %v1680
        %3243 = vmatpush1.msra.mxu0 %v1679
        %3244 = vmatprep.subr.mxu0 %v1698
        %3245 = vmatpush1.msra.mxu0 %v1697
        %3246 = vmatprep.subr.mxu0 %v1716
        %3247 = vmatpush1.msra.mxu0 %v1715
        %3248 = vmatprep.subr.mxu0 %v1734
        %3249 = vmatpush1.msra.mxu0 %v1733
        %3250 = vmatprep.subr.mxu0 %v1752
        %3251 = vmatpush1.msra.mxu0 %v1751
        %3252 = vmatprep.subr.mxu0 %v1770
        %3253 = vmatpush1.msra.mxu0 %v1769
        %3254 = vmatprep.subr.mxu0 %v1788
        %3255 = vmatpush1.msra.mxu0 %v1787
        %3256 = vmatprep.subr.mxu0 %v1806
        %3257 = vmatpush1.msra.mxu0 %v1805
        %3258 = vmatprep.subr.mxu0 %v1824
        %3259 = vmatpush1.msra.mxu0 %v1823
        %3260 = vmatprep.subr.mxu0 %v1842
        %3261 = vmatpush1.msra.mxu0 %v1841
        %3262 = vmatprep.subr.mxu0 %v1860
        %3263 = vmatpush1.msra.mxu0 %v1859
        %3264 = vmatprep.subr.mxu0 %v1878
        %3265 = vmatpush1.msra.mxu0 %v1877
        %3266 = vmatprep.subr.mxu0 %v1896
        %3267 = vmatpush1.msra.mxu0 %v1895
        %3268 = vmatprep.subr.mxu0 %v1914
        %3269 = vmatpush1.msra.mxu0 %v1913
        %3270 = vmatprep.subr.mxu0 %v1932
        %3271 = vmatpush1.msra.mxu0 %v1931
        %3272 = vmatprep.subr.mxu0 %v1950
        %3273 = vmatpush1.msra.mxu0 %v1949
        %3274 = vmatprep.subr.mxu0 %v1968
        %3275 = vmatpush1.msra.mxu0 %v1967
        %3276 = vmatprep.subr.mxu0 %v1986
        %3277 = vmatpush1.msra.mxu0 %v1985
        %3278 = vmatprep.subr.mxu0 %v2004
        %3279 = vmatpush1.msra.mxu0 %v2003
        %3280 = vmatprep.subr.mxu0 %v2022
        %3281 = vmatpush1.msra.mxu0 %v2021
        %3282 = vmatprep.subr.mxu0 %v2040
        %3283 = vmatpush1.msra.mxu0 %v2039
        %3284 = vmatprep.subr.mxu0 %v2058
        %3285 = vmatpush1.msra.mxu0 %v2057
        %3286 = vmatprep.subr.mxu0 %v2076
        %3287 = vmatpush1.msra.mxu0 %v2075
        %3288 = vmatprep.subr.mxu0 %v2094
        %3289 = vmatpush1.msra.mxu0 %v2093
        %3290 = vmatprep.mubr.f32.mxu0 %v2225
        %3291 = vmatmul.mubr.f32.gmra.mrb[0].mxu0 %v2224
        %v3292 = vpop.f32.mrb[0].mxu0
        %v3293 = vadd.f32 %v3222, %v3292
        %v3294 = vpop.f32.mrb[0].mxu0
        %v3295 = vadd.f32 %v3224, %v3294
        %3296 = vdwg.mxu0
        %3297 = vmatprep.subr.mxu0 %v386
        %3298 = vmatpush1.msra.mxu0 %v385
        %3299 = vmatprep.subr.mxu0 %v404
        %3300 = vmatpush1.msra.mxu0 %v403
        %3301 = vmatprep.subr.mxu0 %v422
        %3302 = vmatpush1.msra.mxu0 %v421
        %3303 = vmatprep.subr.mxu0 %v440
        %3304 = vmatpush1.msra.mxu0 %v439
        %3305 = vmatprep.subr.mxu0 %v458
        %3306 = vmatpush1.msra.mxu0 %v457
        %3307 = vmatprep.subr.mxu0 %v476
        %3308 = vmatpush1.msra.mxu0 %v475
        %3309 = vmatprep.subr.mxu0 %v494
        %3310 = vmatpush1.msra.mxu0 %v493
        %3311 = vmatprep.subr.mxu0 %v512
        %3312 = vmatpush1.msra.mxu0 %v511
        %3313 = vmatprep.subr.mxu0 %v530
        %3314 = vmatpush1.msra.mxu0 %v529
        %3315 = vmatprep.subr.mxu0 %v548
        %3316 = vmatpush1.msra.mxu0 %v547
        %3317 = vmatprep.subr.mxu0 %v566
        %3318 = vmatpush1.msra.mxu0 %v565
        %3319 = vmatprep.subr.mxu0 %v584
        %3320 = vmatpush1.msra.mxu0 %v583
        %3321 = vmatprep.subr.mxu0 %v602
        %3322 = vmatpush1.msra.mxu0 %v601
        %3323 = vmatprep.subr.mxu0 %v620
        %3324 = vmatpush1.msra.mxu0 %v619
        %3325 = vmatprep.subr.mxu0 %v638
        %3326 = vmatpush1.msra.mxu0 %v637
        %3327 = vmatprep.subr.mxu0 %v656
        %3328 = vmatpush1.msra.mxu0 %v655
        %3329 = vmatprep.subr.mxu0 %v674
        %3330 = vmatpush1.msra.mxu0 %v673
        %3331 = vmatprep.subr.mxu0 %v692
        %3332 = vmatpush1.msra.mxu0 %v691
        %3333 = vmatprep.subr.mxu0 %v710
        %3334 = vmatpush1.msra.mxu0 %v709
        %3335 = vmatprep.subr.mxu0 %v728
        %3336 = vmatpush1.msra.mxu0 %v727
        %3337 = vmatprep.subr.mxu0 %v746
        %3338 = vmatpush1.msra.mxu0 %v745
        %3339 = vmatprep.subr.mxu0 %v764
        %3340 = vmatpush1.msra.mxu0 %v763
        %3341 = vmatprep.subr.mxu0 %v782
        %3342 = vmatpush1.msra.mxu0 %v781
        %3343 = vmatprep.subr.mxu0 %v800
        %3344 = vmatpush1.msra.mxu0 %v799
        %3345 = vmatprep.subr.mxu0 %v818
        %3346 = vmatpush1.msra.mxu0 %v817
        %3347 = vmatprep.subr.mxu0 %v836
        %3348 = vmatpush1.msra.mxu0 %v835
        %3349 = vmatprep.subr.mxu0 %v854
        %3350 = vmatpush1.msra.mxu0 %v853
        %3351 = vmatprep.subr.mxu0 %v872
        %3352 = vmatpush1.msra.mxu0 %v871
        %3353 = vmatprep.subr.mxu0 %v890
        %3354 = vmatpush1.msra.mxu0 %v889
        %3355 = vmatprep.subr.mxu0 %v908
        %3356 = vmatpush1.msra.mxu0 %v907
        %3357 = vmatprep.subr.mxu0 %v926
        %3358 = vmatpush1.msra.mxu0 %v925
        %3359 = vmatprep.subr.mxu0 %v944
        %3360 = vmatpush1.msra.mxu0 %v943
        %3361 = vmatprep.mubr.f32.mxu0 %v2216
        %3362 = vmatmul.mubr.f32.gmra.mrb[0].mxu0 %v2208
        %v3363 = vpop.f32.mrb[0].mxu0
        %v3364 = vadd.f32 %v2152, %v3363
        %v3365 = vpop.f32.mrb[0].mxu0
        %v3366 = vadd.f32 %v2156, %v3365
        %3367 = vdwg.mxu0
        %3368 = vmatprep.subr.mxu0 %v962
        %3369 = vmatpush1.msra.mxu0 %v961
        %3370 = vmatprep.subr.mxu0 %v980
        %3371 = vmatpush1.msra.mxu0 %v979
        %3372 = vmatprep.subr.mxu0 %v998
        %3373 = vmatpush1.msra.mxu0 %v997
        %3374 = vmatprep.subr.mxu0 %v1016
        %3375 = vmatpush1.msra.mxu0 %v1015
        %3376 = vmatprep.subr.mxu0 %v1034
        %3377 = vmatpush1.msra.mxu0 %v1033
        %3378 = vmatprep.subr.mxu0 %v1052
        %3379 = vmatpush1.msra.mxu0 %v1051
        %3380 = vmatprep.subr.mxu0 %v1070
        %3381 = vmatpush1.msra.mxu0 %v1069
        %3382 = vmatprep.subr.mxu0 %v1088
        %3383 = vmatpush1.msra.mxu0 %v1087
        %3384 = vmatprep.subr.mxu0 %v1106
        %3385 = vmatpush1.msra.mxu0 %v1105
        %3386 = vmatprep.subr.mxu0 %v1124
        %3387 = vmatpush1.msra.mxu0 %v1123
        %3388 = vmatprep.subr.mxu0 %v1142
        %3389 = vmatpush1.msra.mxu0 %v1141
        %3390 = vmatprep.subr.mxu0 %v1160
        %3391 = vmatpush1.msra.mxu0 %v1159
        %3392 = vmatprep.subr.mxu0 %v1178
        %3393 = vmatpush1.msra.mxu0 %v1177
        %3394 = vmatprep.subr.mxu0 %v1196
        %3395 = vmatpush1.msra.mxu0 %v1195
        %3396 = vmatprep.subr.mxu0 %v1214
        %3397 = vmatpush1.msra.mxu0 %v1213
        %3398 = vmatprep.subr.mxu0 %v1232
        %3399 = vmatpush1.msra.mxu0 %v1231
        %3400 = vmatprep.subr.mxu0 %v1250
        %3401 = vmatpush1.msra.mxu0 %v1249
        %3402 = vmatprep.subr.mxu0 %v1268
        %3403 = vmatpush1.msra.mxu0 %v1267
        %3404 = vmatprep.subr.mxu0 %v1286
        %3405 = vmatpush1.msra.mxu0 %v1285
        %3406 = vmatprep.subr.mxu0 %v1304
        %3407 = vmatpush1.msra.mxu0 %v1303
        %3408 = vmatprep.subr.mxu0 %v1322
        %3409 = vmatpush1.msra.mxu0 %v1321
        %3410 = vmatprep.subr.mxu0 %v1340
        %3411 = vmatpush1.msra.mxu0 %v1339
        %3412 = vmatprep.subr.mxu0 %v1358
        %3413 = vmatpush1.msra.mxu0 %v1357
        %3414 = vmatprep.subr.mxu0 %v1376
        %3415 = vmatpush1.msra.mxu0 %v1375
        %3416 = vmatprep.subr.mxu0 %v1394
        %3417 = vmatpush1.msra.mxu0 %v1393
        %3418 = vmatprep.subr.mxu0 %v1412
        %3419 = vmatpush1.msra.mxu0 %v1411
        %3420 = vmatprep.subr.mxu0 %v1430
        %3421 = vmatpush1.msra.mxu0 %v1429
        %3422 = vmatprep.subr.mxu0 %v1448
        %3423 = vmatpush1.msra.mxu0 %v1447
        %3424 = vmatprep.subr.mxu0 %v1466
        %3425 = vmatpush1.msra.mxu0 %v1465
        %3426 = vmatprep.subr.mxu0 %v1484
        %3427 = vmatpush1.msra.mxu0 %v1483
        %3428 = vmatprep.subr.mxu0 %v1502
        %3429 = vmatpush1.msra.mxu0 %v1501
        %3430 = vmatprep.subr.mxu0 %v1520
        %3431 = vmatpush1.msra.mxu0 %v1519
        %3432 = vmatprep.mubr.f32.mxu0 %v2217
        %3433 = vmatmul.mubr.f32.gmra.mrb[0].mxu0 %v2215
        %v3434 = vpop.f32.mrb[0].mxu0
        %v3435 = vadd.f32 %v3364, %v3434
        %v3436 = vpop.f32.mrb[0].mxu0
        %v3437 = vadd.f32 %v3366, %v3436
        %3438 = vdwg.mxu0
        %3439 = vmatprep.subr.mxu0 %v1538
        %3440 = vmatpush1.msra.mxu0 %v1537
        %3441 = vmatprep.subr.mxu0 %v1556
        %3442 = vmatpush1.msra.mxu0 %v1555
        %3443 = vmatprep.subr.mxu0 %v1574
        %3444 = vmatpush1.msra.mxu0 %v1573
        %3445 = vmatprep.subr.mxu0 %v1592
        %3446 = vmatpush1.msra.mxu0 %v1591
        %3447 = vmatprep.subr.mxu0 %v1610
        %3448 = vmatpush1.msra.mxu0 %v1609
        %3449 = vmatprep.subr.mxu0 %v1628
        %3450 = vmatpush1.msra.mxu0 %v1627
        %3451 = vmatprep.subr.mxu0 %v1646
        %3452 = vmatpush1.msra.mxu0 %v1645
        %3453 = vmatprep.subr.mxu0 %v1664
        %3454 = vmatpush1.msra.mxu0 %v1663
        %3455 = vmatprep.subr.mxu0 %v1682
        %3456 = vmatpush1.msra.mxu0 %v1681
        %3457 = vmatprep.subr.mxu0 %v1700
        %3458 = vmatpush1.msra.mxu0 %v1699
        %3459 = vmatprep.subr.mxu0 %v1718
        %3460 = vmatpush1.msra.mxu0 %v1717
        %3461 = vmatprep.subr.mxu0 %v1736
        %3462 = vmatpush1.msra.mxu0 %v1735
        %3463 = vmatprep.subr.mxu0 %v1754
        %3464 = vmatpush1.msra.mxu0 %v1753
        %3465 = vmatprep.subr.mxu0 %v1772
        %3466 = vmatpush1.msra.mxu0 %v1771
        %3467 = vmatprep.subr.mxu0 %v1790
        %3468 = vmatpush1.msra.mxu0 %v1789
        %3469 = vmatprep.subr.mxu0 %v1808
        %3470 = vmatpush1.msra.mxu0 %v1807
        %3471 = vmatprep.subr.mxu0 %v1826
        %3472 = vmatpush1.msra.mxu0 %v1825
        %3473 = vmatprep.subr.mxu0 %v1844
        %3474 = vmatpush1.msra.mxu0 %v1843
        %3475 = vmatprep.subr.mxu0 %v1862
        %3476 = vmatpush1.msra.mxu0 %v1861
        %3477 = vmatprep.subr.mxu0 %v1880
        %3478 = vmatpush1.msra.mxu0 %v1879
        %3479 = vmatprep.subr.mxu0 %v1898
        %3480 = vmatpush1.msra.mxu0 %v1897
        %3481 = vmatprep.subr.mxu0 %v1916
        %3482 = vmatpush1.msra.mxu0 %v1915
        %3483 = vmatprep.subr.mxu0 %v1934
        %3484 = vmatpush1.msra.mxu0 %v1933
        %3485 = vmatprep.subr.mxu0 %v1952
        %3486 = vmatpush1.msra.mxu0 %v1951
        %3487 = vmatprep.subr.mxu0 %v1970
        %3488 = vmatpush1.msra.mxu0 %v1969
        %3489 = vmatprep.subr.mxu0 %v1988
        %3490 = vmatpush1.msra.mxu0 %v1987
        %3491 = vmatprep.subr.mxu0 %v2006
        %3492 = vmatpush1.msra.mxu0 %v2005
        %3493 = vmatprep.subr.mxu0 %v2024
        %3494 = vmatpush1.msra.mxu0 %v2023
        %3495 = vmatprep.subr.mxu0 %v2042
        %3496 = vmatpush1.msra.mxu0 %v2041
        %3497 = vmatprep.subr.mxu0 %v2060
        %3498 = vmatpush1.msra.mxu0 %v2059
        %3499 = vmatprep.subr.mxu0 %v2078
        %3500 = vmatpush1.msra.mxu0 %v2077
        %3501 = vmatprep.subr.mxu0 %v2096
        %3502 = vmatpush1.msra.mxu0 %v2095
        %3503 = vmatprep.mubr.f32.mxu0 %v2225
        %3504 = vmatmul.mubr.f32.gmra.mrb[0].mxu0 %v2224
        %v3505 = vpop.f32.mrb[0].mxu0
        %v3506 = vadd.f32 %v3435, %v3505
        %v3507 = vpop.f32.mrb[0].mxu0
        %v3508 = vadd.f32 %v3437, %v3507
        %3509 = vdwg.mxu0
        %3510 = vmatprep.subr.mxu0 %v388
        %3511 = vmatpush1.msra.mxu0 %v387
        %3512 = vmatprep.subr.mxu0 %v406
        %3513 = vmatpush1.msra.mxu0 %v405
        %3514 = vmatprep.subr.mxu0 %v424
        %3515 = vmatpush1.msra.mxu0 %v423
        %3516 = vmatprep.subr.mxu0 %v442
        %3517 = vmatpush1.msra.mxu0 %v441
        %3518 = vmatprep.subr.mxu0 %v460
        %3519 = vmatpush1.msra.mxu0 %v459
        %3520 = vmatprep.subr.mxu0 %v478
        %3521 = vmatpush1.msra.mxu0 %v477
        %3522 = vmatprep.subr.mxu0 %v496
        %3523 = vmatpush1.msra.mxu0 %v495
        %3524 = vmatprep.subr.mxu0 %v514
        %3525 = vmatpush1.msra.mxu0 %v513
        %3526 = vmatprep.subr.mxu0 %v532
        %3527 = vmatpush1.msra.mxu0 %v531
        %3528 = vmatprep.subr.mxu0 %v550
        %3529 = vmatpush1.msra.mxu0 %v549
        %3530 = vmatprep.subr.mxu0 %v568
        %3531 = vmatpush1.msra.mxu0 %v567
        %3532 = vmatprep.subr.mxu0 %v586
        %3533 = vmatpush1.msra.mxu0 %v585
        %3534 = vmatprep.subr.mxu0 %v604
        %3535 = vmatpush1.msra.mxu0 %v603
        %3536 = vmatprep.subr.mxu0 %v622
        %3537 = vmatpush1.msra.mxu0 %v621
        %3538 = vmatprep.subr.mxu0 %v640
        %3539 = vmatpush1.msra.mxu0 %v639
        %3540 = vmatprep.subr.mxu0 %v658
        %3541 = vmatpush1.msra.mxu0 %v657
        %3542 = vmatprep.subr.mxu0 %v676
        %3543 = vmatpush1.msra.mxu0 %v675
        %3544 = vmatprep.subr.mxu0 %v694
        %3545 = vmatpush1.msra.mxu0 %v693
        %3546 = vmatprep.subr.mxu0 %v712
        %3547 = vmatpush1.msra.mxu0 %v711
        %3548 = vmatprep.subr.mxu0 %v730
        %3549 = vmatpush1.msra.mxu0 %v729
        %3550 = vmatprep.subr.mxu0 %v748
        %3551 = vmatpush1.msra.mxu0 %v747
        %3552 = vmatprep.subr.mxu0 %v766
        %3553 = vmatpush1.msra.mxu0 %v765
        %3554 = vmatprep.subr.mxu0 %v784
        %3555 = vmatpush1.msra.mxu0 %v783
        %3556 = vmatprep.subr.mxu0 %v802
        %3557 = vmatpush1.msra.mxu0 %v801
        %3558 = vmatprep.subr.mxu0 %v820
        %3559 = vmatpush1.msra.mxu0 %v819
        %3560 = vmatprep.subr.mxu0 %v838
        %3561 = vmatpush1.msra.mxu0 %v837
        %3562 = vmatprep.subr.mxu0 %v856
        %3563 = vmatpush1.msra.mxu0 %v855
        %3564 = vmatprep.subr.mxu0 %v874
        %3565 = vmatpush1.msra.mxu0 %v873
        %3566 = vmatprep.subr.mxu0 %v892
        %3567 = vmatpush1.msra.mxu0 %v891
        %3568 = vmatprep.subr.mxu0 %v910
        %3569 = vmatpush1.msra.mxu0 %v909
        %3570 = vmatprep.subr.mxu0 %v928
        %3571 = vmatpush1.msra.mxu0 %v927
        %3572 = vmatprep.subr.mxu0 %v946
        %3573 = vmatpush1.msra.mxu0 %v945
        %3574 = vmatprep.mubr.f32.mxu0 %v2216
        %3575 = vmatmul.mubr.f32.gmra.mrb[0].mxu0 %v2208
        %v3576 = vpop.f32.mrb[0].mxu0
        %v3577 = vadd.f32 %v2160, %v3576
        %v3578 = vpop.f32.mrb[0].mxu0
        %v3579 = vadd.f32 %v2164, %v3578
        %3580 = vdwg.mxu0
        %3581 = vmatprep.subr.mxu0 %v964
        %3582 = vmatpush1.msra.mxu0 %v963
        %3583 = vmatprep.subr.mxu0 %v982
        %3584 = vmatpush1.msra.mxu0 %v981
        %3585 = vmatprep.subr.mxu0 %v1000
        %3586 = vmatpush1.msra.mxu0 %v999
        %3587 = vmatprep.subr.mxu0 %v1018
        %3588 = vmatpush1.msra.mxu0 %v1017
        %3589 = vmatprep.subr.mxu0 %v1036
        %3590 = vmatpush1.msra.mxu0 %v1035
        %3591 = vmatprep.subr.mxu0 %v1054
        %3592 = vmatpush1.msra.mxu0 %v1053
        %3593 = vmatprep.subr.mxu0 %v1072
        %3594 = vmatpush1.msra.mxu0 %v1071
        %3595 = vmatprep.subr.mxu0 %v1090
        %3596 = vmatpush1.msra.mxu0 %v1089
        %3597 = vmatprep.subr.mxu0 %v1108
        %3598 = vmatpush1.msra.mxu0 %v1107
        %3599 = vmatprep.subr.mxu0 %v1126
        %3600 = vmatpush1.msra.mxu0 %v1125
        %3601 = vmatprep.subr.mxu0 %v1144
        %3602 = vmatpush1.msra.mxu0 %v1143
        %3603 = vmatprep.subr.mxu0 %v1162
        %3604 = vmatpush1.msra.mxu0 %v1161
        %3605 = vmatprep.subr.mxu0 %v1180
        %3606 = vmatpush1.msra.mxu0 %v1179
        %3607 = vmatprep.subr.mxu0 %v1198
        %3608 = vmatpush1.msra.mxu0 %v1197
        %3609 = vmatprep.subr.mxu0 %v1216
        %3610 = vmatpush1.msra.mxu0 %v1215
        %3611 = vmatprep.subr.mxu0 %v1234
        %3612 = vmatpush1.msra.mxu0 %v1233
        %3613 = vmatprep.subr.mxu0 %v1252
        %3614 = vmatpush1.msra.mxu0 %v1251
        %3615 = vmatprep.subr.mxu0 %v1270
        %3616 = vmatpush1.msra.mxu0 %v1269
        %3617 = vmatprep.subr.mxu0 %v1288
        %3618 = vmatpush1.msra.mxu0 %v1287
        %3619 = vmatprep.subr.mxu0 %v1306
        %3620 = vmatpush1.msra.mxu0 %v1305
        %3621 = vmatprep.subr.mxu0 %v1324
        %3622 = vmatpush1.msra.mxu0 %v1323
        %3623 = vmatprep.subr.mxu0 %v1342
        %3624 = vmatpush1.msra.mxu0 %v1341
        %3625 = vmatprep.subr.mxu0 %v1360
        %3626 = vmatpush1.msra.mxu0 %v1359
        %3627 = vmatprep.subr.mxu0 %v1378
        %3628 = vmatpush1.msra.mxu0 %v1377
        %3629 = vmatprep.subr.mxu0 %v1396
        %3630 = vmatpush1.msra.mxu0 %v1395
        %3631 = vmatprep.subr.mxu0 %v1414
        %3632 = vmatpush1.msra.mxu0 %v1413
        %3633 = vmatprep.subr.mxu0 %v1432
        %3634 = vmatpush1.msra.mxu0 %v1431
        %3635 = vmatprep.subr.mxu0 %v1450
        %3636 = vmatpush1.msra.mxu0 %v1449
        %3637 = vmatprep.subr.mxu0 %v1468
        %3638 = vmatpush1.msra.mxu0 %v1467
        %3639 = vmatprep.subr.mxu0 %v1486
        %3640 = vmatpush1.msra.mxu0 %v1485
        %3641 = vmatprep.subr.mxu0 %v1504
        %3642 = vmatpush1.msra.mxu0 %v1503
        %3643 = vmatprep.subr.mxu0 %v1522
        %3644 = vmatpush1.msra.mxu0 %v1521
        %3645 = vmatprep.mubr.f32.mxu0 %v2217
        %3646 = vmatmul.mubr.f32.gmra.mrb[0].mxu0 %v2215
        %v3647 = vpop.f32.mrb[0].mxu0
        %v3648 = vadd.f32 %v3577, %v3647
        %v3649 = vpop.f32.mrb[0].mxu0
        %v3650 = vadd.f32 %v3579, %v3649
        %3651 = vdwg.mxu0
        %3652 = vmatprep.subr.mxu0 %v1540
        %3653 = vmatpush1.msra.mxu0 %v1539
        %3654 = vmatprep.subr.mxu0 %v1558
        %3655 = vmatpush1.msra.mxu0 %v1557
        %3656 = vmatprep.subr.mxu0 %v1576
        %3657 = vmatpush1.msra.mxu0 %v1575
        %3658 = vmatprep.subr.mxu0 %v1594
        %3659 = vmatpush1.msra.mxu0 %v1593
        %3660 = vmatprep.subr.mxu0 %v1612
        %3661 = vmatpush1.msra.mxu0 %v1611
        %3662 = vmatprep.subr.mxu0 %v1630
        %3663 = vmatpush1.msra.mxu0 %v1629
        %3664 = vmatprep.subr.mxu0 %v1648
        %3665 = vmatpush1.msra.mxu0 %v1647
        %3666 = vmatprep.subr.mxu0 %v1666
        %3667 = vmatpush1.msra.mxu0 %v1665
        %3668 = vmatprep.subr.mxu0 %v1684
        %3669 = vmatpush1.msra.mxu0 %v1683
        %3670 = vmatprep.subr.mxu0 %v1702
        %3671 = vmatpush1.msra.mxu0 %v1701
        %3672 = vmatprep.subr.mxu0 %v1720
        %3673 = vmatpush1.msra.mxu0 %v1719
        %3674 = vmatprep.subr.mxu0 %v1738
        %3675 = vmatpush1.msra.mxu0 %v1737
        %3676 = vmatprep.subr.mxu0 %v1756
        %3677 = vmatpush1.msra.mxu0 %v1755
        %3678 = vmatprep.subr.mxu0 %v1774
        %3679 = vmatpush1.msra.mxu0 %v1773
        %3680 = vmatprep.subr.mxu0 %v1792
        %3681 = vmatpush1.msra.mxu0 %v1791
        %3682 = vmatprep.subr.mxu0 %v1810
        %3683 = vmatpush1.msra.mxu0 %v1809
        %3684 = vmatprep.subr.mxu0 %v1828
        %3685 = vmatpush1.msra.mxu0 %v1827
        %3686 = vmatprep.subr.mxu0 %v1846
        %3687 = vmatpush1.msra.mxu0 %v1845
        %3688 = vmatprep.subr.mxu0 %v1864
        %3689 = vmatpush1.msra.mxu0 %v1863
        %3690 = vmatprep.subr.mxu0 %v1882
        %3691 = vmatpush1.msra.mxu0 %v1881
        %3692 = vmatprep.subr.mxu0 %v1900
        %3693 = vmatpush1.msra.mxu0 %v1899
        %3694 = vmatprep.subr.mxu0 %v1918
        %3695 = vmatpush1.msra.mxu0 %v1917
        %3696 = vmatprep.subr.mxu0 %v1936
        %3697 = vmatpush1.msra.mxu0 %v1935
        %3698 = vmatprep.subr.mxu0 %v1954
        %3699 = vmatpush1.msra.mxu0 %v1953
        %3700 = vmatprep.subr.mxu0 %v1972
        %3701 = vmatpush1.msra.mxu0 %v1971
        %3702 = vmatprep.subr.mxu0 %v1990
        %3703 = vmatpush1.msra.mxu0 %v1989
        %3704 = vmatprep.subr.mxu0 %v2008
        %3705 = vmatpush1.msra.mxu0 %v2007
        %3706 = vmatprep.subr.mxu0 %v2026
        %3707 = vmatpush1.msra.mxu0 %v2025
        %3708 = vmatprep.subr.mxu0 %v2044
        %3709 = vmatpush1.msra.mxu0 %v2043
        %3710 = vmatprep.subr.mxu0 %v2062
        %3711 = vmatpush1.msra.mxu0 %v2061
        %3712 = vmatprep.subr.mxu0 %v2080
        %3713 = vmatpush1.msra.mxu0 %v2079
        %3714 = vmatprep.subr.mxu0 %v2098
        %3715 = vmatpush1.msra.mxu0 %v2097
        %3716 = vmatprep.mubr.f32.mxu0 %v2225
        %3717 = vmatmul.mubr.f32.gmra.mrb[0].mxu0 %v2224
        %v3718 = vpop.f32.mrb[0].mxu0
        %v3719 = vadd.f32 %v3648, %v3718
        %v3720 = vpop.f32.mrb[0].mxu0
        %v3721 = vadd.f32 %v3650, %v3720
        %3722 = vdwg.mxu0
        %3723 = vmatprep.subr.mxu0 %v390
        %3724 = vmatpush1.msra.mxu0 %v389
        %3725 = vmatprep.subr.mxu0 %v408
        %3726 = vmatpush1.msra.mxu0 %v407
        %3727 = vmatprep.subr.mxu0 %v426
        %3728 = vmatpush1.msra.mxu0 %v425
        %3729 = vmatprep.subr.mxu0 %v444
        %3730 = vmatpush1.msra.mxu0 %v443
        %3731 = vmatprep.subr.mxu0 %v462
        %3732 = vmatpush1.msra.mxu0 %v461
        %3733 = vmatprep.subr.mxu0 %v480
        %3734 = vmatpush1.msra.mxu0 %v479
        %3735 = vmatprep.subr.mxu0 %v498
        %3736 = vmatpush1.msra.mxu0 %v497
        %3737 = vmatprep.subr.mxu0 %v516
        %3738 = vmatpush1.msra.mxu0 %v515
        %3739 = vmatprep.subr.mxu0 %v534
        %3740 = vmatpush1.msra.mxu0 %v533
        %3741 = vmatprep.subr.mxu0 %v552
        %3742 = vmatpush1.msra.mxu0 %v551
        %3743 = vmatprep.subr.mxu0 %v570
        %3744 = vmatpush1.msra.mxu0 %v569
        %3745 = vmatprep.subr.mxu0 %v588
        %3746 = vmatpush1.msra.mxu0 %v587
        %3747 = vmatprep.subr.mxu0 %v606
        %3748 = vmatpush1.msra.mxu0 %v605
        %3749 = vmatprep.subr.mxu0 %v624
        %3750 = vmatpush1.msra.mxu0 %v623
        %3751 = vmatprep.subr.mxu0 %v642
        %3752 = vmatpush1.msra.mxu0 %v641
        %3753 = vmatprep.subr.mxu0 %v660
        %3754 = vmatpush1.msra.mxu0 %v659
        %3755 = vmatprep.subr.mxu0 %v678
        %3756 = vmatpush1.msra.mxu0 %v677
        %3757 = vmatprep.subr.mxu0 %v696
        %3758 = vmatpush1.msra.mxu0 %v695
        %3759 = vmatprep.subr.mxu0 %v714
        %3760 = vmatpush1.msra.mxu0 %v713
        %3761 = vmatprep.subr.mxu0 %v732
        %3762 = vmatpush1.msra.mxu0 %v731
        %3763 = vmatprep.subr.mxu0 %v750
        %3764 = vmatpush1.msra.mxu0 %v749
        %3765 = vmatprep.subr.mxu0 %v768
        %3766 = vmatpush1.msra.mxu0 %v767
        %3767 = vmatprep.subr.mxu0 %v786
        %3768 = vmatpush1.msra.mxu0 %v785
        %3769 = vmatprep.subr.mxu0 %v804
        %3770 = vmatpush1.msra.mxu0 %v803
        %3771 = vmatprep.subr.mxu0 %v822
        %3772 = vmatpush1.msra.mxu0 %v821
        %3773 = vmatprep.subr.mxu0 %v840
        %3774 = vmatpush1.msra.mxu0 %v839
        %3775 = vmatprep.subr.mxu0 %v858
        %3776 = vmatpush1.msra.mxu0 %v857
        %3777 = vmatprep.subr.mxu0 %v876
        %3778 = vmatpush1.msra.mxu0 %v875
        %3779 = vmatprep.subr.mxu0 %v894
        %3780 = vmatpush1.msra.mxu0 %v893
        %3781 = vmatprep.subr.mxu0 %v912
        %3782 = vmatpush1.msra.mxu0 %v911
        %3783 = vmatprep.subr.mxu0 %v930
        %3784 = vmatpush1.msra.mxu0 %v929
        %3785 = vmatprep.subr.mxu0 %v948
        %3786 = vmatpush1.msra.mxu0 %v947
        %3787 = vmatprep.mubr.f32.mxu0 %v2216
        %3788 = vmatmul.mubr.f32.gmra.mrb[0].mxu0 %v2208
        %v3789 = vpop.f32.mrb[0].mxu0
        %v3790 = vadd.f32 %v2168, %v3789
        %v3791 = vpop.f32.mrb[0].mxu0
        %v3792 = vadd.f32 %v2172, %v3791
        %3793 = vdwg.mxu0
        %3794 = vmatprep.subr.mxu0 %v966
        %3795 = vmatpush1.msra.mxu0 %v965
        %3796 = vmatprep.subr.mxu0 %v984
        %3797 = vmatpush1.msra.mxu0 %v983
        %3798 = vmatprep.subr.mxu0 %v1002
        %3799 = vmatpush1.msra.mxu0 %v1001
        %3800 = vmatprep.subr.mxu0 %v1020
        %3801 = vmatpush1.msra.mxu0 %v1019
        %3802 = vmatprep.subr.mxu0 %v1038
        %3803 = vmatpush1.msra.mxu0 %v1037
        %3804 = vmatprep.subr.mxu0 %v1056
        %3805 = vmatpush1.msra.mxu0 %v1055
        %3806 = vmatprep.subr.mxu0 %v1074
        %3807 = vmatpush1.msra.mxu0 %v1073
        %3808 = vmatprep.subr.mxu0 %v1092
        %3809 = vmatpush1.msra.mxu0 %v1091
        %3810 = vmatprep.subr.mxu0 %v1110
        %3811 = vmatpush1.msra.mxu0 %v1109
        %3812 = vmatprep.subr.mxu0 %v1128
        %3813 = vmatpush1.msra.mxu0 %v1127
        %3814 = vmatprep.subr.mxu0 %v1146
        %3815 = vmatpush1.msra.mxu0 %v1145
        %3816 = vmatprep.subr.mxu0 %v1164
        %3817 = vmatpush1.msra.mxu0 %v1163
        %3818 = vmatprep.subr.mxu0 %v1182
        %3819 = vmatpush1.msra.mxu0 %v1181
        %3820 = vmatprep.subr.mxu0 %v1200
        %3821 = vmatpush1.msra.mxu0 %v1199
        %3822 = vmatprep.subr.mxu0 %v1218
        %3823 = vmatpush1.msra.mxu0 %v1217
        %3824 = vmatprep.subr.mxu0 %v1236
        %3825 = vmatpush1.msra.mxu0 %v1235
        %3826 = vmatprep.subr.mxu0 %v1254
        %3827 = vmatpush1.msra.mxu0 %v1253
        %3828 = vmatprep.subr.mxu0 %v1272
        %3829 = vmatpush1.msra.mxu0 %v1271
        %3830 = vmatprep.subr.mxu0 %v1290
        %3831 = vmatpush1.msra.mxu0 %v1289
        %3832 = vmatprep.subr.mxu0 %v1308
        %3833 = vmatpush1.msra.mxu0 %v1307
        %3834 = vmatprep.subr.mxu0 %v1326
        %3835 = vmatpush1.msra.mxu0 %v1325
        %3836 = vmatprep.subr.mxu0 %v1344
        %3837 = vmatpush1.msra.mxu0 %v1343
        %3838 = vmatprep.subr.mxu0 %v1362
        %3839 = vmatpush1.msra.mxu0 %v1361
        %3840 = vmatprep.subr.mxu0 %v1380
        %3841 = vmatpush1.msra.mxu0 %v1379
        %3842 = vmatprep.subr.mxu0 %v1398
        %3843 = vmatpush1.msra.mxu0 %v1397
        %3844 = vmatprep.subr.mxu0 %v1416
        %3845 = vmatpush1.msra.mxu0 %v1415
        %3846 = vmatprep.subr.mxu0 %v1434
        %3847 = vmatpush1.msra.mxu0 %v1433
        %3848 = vmatprep.subr.mxu0 %v1452
        %3849 = vmatpush1.msra.mxu0 %v1451
        %3850 = vmatprep.subr.mxu0 %v1470
        %3851 = vmatpush1.msra.mxu0 %v1469
        %3852 = vmatprep.subr.mxu0 %v1488
        %3853 = vmatpush1.msra.mxu0 %v1487
        %3854 = vmatprep.subr.mxu0 %v1506
        %3855 = vmatpush1.msra.mxu0 %v1505
        %3856 = vmatprep.subr.mxu0 %v1524
        %3857 = vmatpush1.msra.mxu0 %v1523
        %3858 = vmatprep.mubr.f32.mxu0 %v2217
        %3859 = vmatmul.mubr.f32.gmra.mrb[0].mxu0 %v2215
        %v3860 = vpop.f32.mrb[0].mxu0
        %v3861 = vadd.f32 %v3790, %v3860
        %v3862 = vpop.f32.mrb[0].mxu0
        %v3863 = vadd.f32 %v3792, %v3862
        %3864 = vdwg.mxu0
        %3865 = vmatprep.subr.mxu0 %v1542
        %3866 = vmatpush1.msra.mxu0 %v1541
        %3867 = vmatprep.subr.mxu0 %v1560
        %3868 = vmatpush1.msra.mxu0 %v1559
        %3869 = vmatprep.subr.mxu0 %v1578
        %3870 = vmatpush1.msra.mxu0 %v1577
        %3871 = vmatprep.subr.mxu0 %v1596
        %3872 = vmatpush1.msra.mxu0 %v1595
        %3873 = vmatprep.subr.mxu0 %v1614
        %3874 = vmatpush1.msra.mxu0 %v1613
        %3875 = vmatprep.subr.mxu0 %v1632
        %3876 = vmatpush1.msra.mxu0 %v1631
        %3877 = vmatprep.subr.mxu0 %v1650
        %3878 = vmatpush1.msra.mxu0 %v1649
        %3879 = vmatprep.subr.mxu0 %v1668
        %3880 = vmatpush1.msra.mxu0 %v1667
        %3881 = vmatprep.subr.mxu0 %v1686
        %3882 = vmatpush1.msra.mxu0 %v1685
        %3883 = vmatprep.subr.mxu0 %v1704
        %3884 = vmatpush1.msra.mxu0 %v1703
        %3885 = vmatprep.subr.mxu0 %v1722
        %3886 = vmatpush1.msra.mxu0 %v1721
        %3887 = vmatprep.subr.mxu0 %v1740
        %3888 = vmatpush1.msra.mxu0 %v1739
        %3889 = vmatprep.subr.mxu0 %v1758
        %3890 = vmatpush1.msra.mxu0 %v1757
        %3891 = vmatprep.subr.mxu0 %v1776
        %3892 = vmatpush1.msra.mxu0 %v1775
        %3893 = vmatprep.subr.mxu0 %v1794
        %3894 = vmatpush1.msra.mxu0 %v1793
        %3895 = vmatprep.subr.mxu0 %v1812
        %3896 = vmatpush1.msra.mxu0 %v1811
        %3897 = vmatprep.subr.mxu0 %v1830
        %3898 = vmatpush1.msra.mxu0 %v1829
        %3899 = vmatprep.subr.mxu0 %v1848
        %3900 = vmatpush1.msra.mxu0 %v1847
        %3901 = vmatprep.subr.mxu0 %v1866
        %3902 = vmatpush1.msra.mxu0 %v1865
        %3903 = vmatprep.subr.mxu0 %v1884
        %3904 = vmatpush1.msra.mxu0 %v1883
        %3905 = vmatprep.subr.mxu0 %v1902
        %3906 = vmatpush1.msra.mxu0 %v1901
        %3907 = vmatprep.subr.mxu0 %v1920
        %3908 = vmatpush1.msra.mxu0 %v1919
        %3909 = vmatprep.subr.mxu0 %v1938
        %3910 = vmatpush1.msra.mxu0 %v1937
        %3911 = vmatprep.subr.mxu0 %v1956
        %3912 = vmatpush1.msra.mxu0 %v1955
        %3913 = vmatprep.subr.mxu0 %v1974
        %3914 = vmatpush1.msra.mxu0 %v1973
        %3915 = vmatprep.subr.mxu0 %v1992
        %3916 = vmatpush1.msra.mxu0 %v1991
        %3917 = vmatprep.subr.mxu0 %v2010
        %3918 = vmatpush1.msra.mxu0 %v2009
        %3919 = vmatprep.subr.mxu0 %v2028
        %3920 = vmatpush1.msra.mxu0 %v2027
        %3921 = vmatprep.subr.mxu0 %v2046
        %3922 = vmatpush1.msra.mxu0 %v2045
        %3923 = vmatprep.subr.mxu0 %v2064
        %3924 = vmatpush1.msra.mxu0 %v2063
        %3925 = vmatprep.subr.mxu0 %v2082
        %3926 = vmatpush1.msra.mxu0 %v2081
        %3927 = vmatprep.subr.mxu0 %v2100
        %3928 = vmatpush1.msra.mxu0 %v2099
        %3929 = vmatprep.mubr.f32.mxu0 %v2225
        %3930 = vmatmul.mubr.f32.gmra.mrb[0].mxu0 %v2224
        %v3931 = vpop.f32.mrb[0].mxu0
        %v3932 = vadd.f32 %v3861, %v3931
        %v3933 = vpop.f32.mrb[0].mxu0
        %v3934 = vadd.f32 %v3863, %v3933
        %3935 = vdwg.mxu0
        %3936 = vmatprep.subr.mxu0 %v392
        %3937 = vmatpush1.msra.mxu0 %v391
        %3938 = vmatprep.subr.mxu0 %v410
        %3939 = vmatpush1.msra.mxu0 %v409
        %3940 = vmatprep.subr.mxu0 %v428
        %3941 = vmatpush1.msra.mxu0 %v427
        %3942 = vmatprep.subr.mxu0 %v446
        %3943 = vmatpush1.msra.mxu0 %v445
        %3944 = vmatprep.subr.mxu0 %v464
        %3945 = vmatpush1.msra.mxu0 %v463
        %3946 = vmatprep.subr.mxu0 %v482
        %3947 = vmatpush1.msra.mxu0 %v481
        %3948 = vmatprep.subr.mxu0 %v500
        %3949 = vmatpush1.msra.mxu0 %v499
        %3950 = vmatprep.subr.mxu0 %v518
        %3951 = vmatpush1.msra.mxu0 %v517
        %3952 = vmatprep.subr.mxu0 %v536
        %3953 = vmatpush1.msra.mxu0 %v535
        %3954 = vmatprep.subr.mxu0 %v554
        %3955 = vmatpush1.msra.mxu0 %v553
        %3956 = vmatprep.subr.mxu0 %v572
        %3957 = vmatpush1.msra.mxu0 %v571
        %3958 = vmatprep.subr.mxu0 %v590
        %3959 = vmatpush1.msra.mxu0 %v589
        %3960 = vmatprep.subr.mxu0 %v608
        %3961 = vmatpush1.msra.mxu0 %v607
        %3962 = vmatprep.subr.mxu0 %v626
        %3963 = vmatpush1.msra.mxu0 %v625
        %3964 = vmatprep.subr.mxu0 %v644
        %3965 = vmatpush1.msra.mxu0 %v643
        %3966 = vmatprep.subr.mxu0 %v662
        %3967 = vmatpush1.msra.mxu0 %v661
        %3968 = vmatprep.subr.mxu0 %v680
        %3969 = vmatpush1.msra.mxu0 %v679
        %3970 = vmatprep.subr.mxu0 %v698
        %3971 = vmatpush1.msra.mxu0 %v697
        %3972 = vmatprep.subr.mxu0 %v716
        %3973 = vmatpush1.msra.mxu0 %v715
        %3974 = vmatprep.subr.mxu0 %v734
        %3975 = vmatpush1.msra.mxu0 %v733
        %3976 = vmatprep.subr.mxu0 %v752
        %3977 = vmatpush1.msra.mxu0 %v751
        %3978 = vmatprep.subr.mxu0 %v770
        %3979 = vmatpush1.msra.mxu0 %v769
        %3980 = vmatprep.subr.mxu0 %v788
        %3981 = vmatpush1.msra.mxu0 %v787
        %3982 = vmatprep.subr.mxu0 %v806
        %3983 = vmatpush1.msra.mxu0 %v805
        %3984 = vmatprep.subr.mxu0 %v824
        %3985 = vmatpush1.msra.mxu0 %v823
        %3986 = vmatprep.subr.mxu0 %v842
        %3987 = vmatpush1.msra.mxu0 %v841
        %3988 = vmatprep.subr.mxu0 %v860
        %3989 = vmatpush1.msra.mxu0 %v859
        %3990 = vmatprep.subr.mxu0 %v878
        %3991 = vmatpush1.msra.mxu0 %v877
        %3992 = vmatprep.subr.mxu0 %v896
        %3993 = vmatpush1.msra.mxu0 %v895
        %3994 = vmatprep.subr.mxu0 %v914
        %3995 = vmatpush1.msra.mxu0 %v913
        %3996 = vmatprep.subr.mxu0 %v932
        %3997 = vmatpush1.msra.mxu0 %v931
        %3998 = vmatprep.subr.mxu0 %v950
        %3999 = vmatpush1.msra.mxu0 %v949
        %4000 = vmatprep.mubr.f32.mxu0 %v2216
        %4001 = vmatmul.mubr.f32.gmra.mrb[0].mxu0 %v2208
        %v4002 = vpop.f32.mrb[0].mxu0
        %v4003 = vadd.f32 %v2176, %v4002
        %v4004 = vpop.f32.mrb[0].mxu0
        %v4005 = vadd.f32 %v2180, %v4004
        %4006 = vdwg.mxu0
        %4007 = vmatprep.subr.mxu0 %v968
        %4008 = vmatpush1.msra.mxu0 %v967
        %4009 = vmatprep.subr.mxu0 %v986
        %4010 = vmatpush1.msra.mxu0 %v985
        %4011 = vmatprep.subr.mxu0 %v1004
        %4012 = vmatpush1.msra.mxu0 %v1003
        %4013 = vmatprep.subr.mxu0 %v1022
        %4014 = vmatpush1.msra.mxu0 %v1021
        %4015 = vmatprep.subr.mxu0 %v1040
        %4016 = vmatpush1.msra.mxu0 %v1039
        %4017 = vmatprep.subr.mxu0 %v1058
        %4018 = vmatpush1.msra.mxu0 %v1057
        %4019 = vmatprep.subr.mxu0 %v1076
        %4020 = vmatpush1.msra.mxu0 %v1075
        %4021 = vmatprep.subr.mxu0 %v1094
        %4022 = vmatpush1.msra.mxu0 %v1093
        %4023 = vmatprep.subr.mxu0 %v1112
        %4024 = vmatpush1.msra.mxu0 %v1111
        %4025 = vmatprep.subr.mxu0 %v1130
        %4026 = vmatpush1.msra.mxu0 %v1129
        %4027 = vmatprep.subr.mxu0 %v1148
        %4028 = vmatpush1.msra.mxu0 %v1147
        %4029 = vmatprep.subr.mxu0 %v1166
        %4030 = vmatpush1.msra.mxu0 %v1165
        %4031 = vmatprep.subr.mxu0 %v1184
        %4032 = vmatpush1.msra.mxu0 %v1183
        %4033 = vmatprep.subr.mxu0 %v1202
        %4034 = vmatpush1.msra.mxu0 %v1201
        %4035 = vmatprep.subr.mxu0 %v1220
        %4036 = vmatpush1.msra.mxu0 %v1219
        %4037 = vmatprep.subr.mxu0 %v1238
        %4038 = vmatpush1.msra.mxu0 %v1237
        %4039 = vmatprep.subr.mxu0 %v1256
        %4040 = vmatpush1.msra.mxu0 %v1255
        %4041 = vmatprep.subr.mxu0 %v1274
        %4042 = vmatpush1.msra.mxu0 %v1273
        %4043 = vmatprep.subr.mxu0 %v1292
        %4044 = vmatpush1.msra.mxu0 %v1291
        %4045 = vmatprep.subr.mxu0 %v1310
        %4046 = vmatpush1.msra.mxu0 %v1309
        %4047 = vmatprep.subr.mxu0 %v1328
        %4048 = vmatpush1.msra.mxu0 %v1327
        %4049 = vmatprep.subr.mxu0 %v1346
        %4050 = vmatpush1.msra.mxu0 %v1345
        %4051 = vmatprep.subr.mxu0 %v1364
        %4052 = vmatpush1.msra.mxu0 %v1363
        %4053 = vmatprep.subr.mxu0 %v1382
        %4054 = vmatpush1.msra.mxu0 %v1381
        %4055 = vmatprep.subr.mxu0 %v1400
        %4056 = vmatpush1.msra.mxu0 %v1399
        %4057 = vmatprep.subr.mxu0 %v1418
        %4058 = vmatpush1.msra.mxu0 %v1417
        %4059 = vmatprep.subr.mxu0 %v1436
        %4060 = vmatpush1.msra.mxu0 %v1435
        %4061 = vmatprep.subr.mxu0 %v1454
        %4062 = vmatpush1.msra.mxu0 %v1453
        %4063 = vmatprep.subr.mxu0 %v1472
        %4064 = vmatpush1.msra.mxu0 %v1471
        %4065 = vmatprep.subr.mxu0 %v1490
        %4066 = vmatpush1.msra.mxu0 %v1489
        %4067 = vmatprep.subr.mxu0 %v1508
        %4068 = vmatpush1.msra.mxu0 %v1507
        %4069 = vmatprep.subr.mxu0 %v1526
        %4070 = vmatpush1.msra.mxu0 %v1525
        %4071 = vmatprep.mubr.f32.mxu0 %v2217
        %4072 = vmatmul.mubr.f32.gmra.mrb[0].mxu0 %v2215
        %v4073 = vpop.f32.mrb[0].mxu0
        %v4074 = vadd.f32 %v4003, %v4073
        %v4075 = vpop.f32.mrb[0].mxu0
        %v4076 = vadd.f32 %v4005, %v4075
        %4077 = vdwg.mxu0
        %4078 = vmatprep.subr.mxu0 %v1544
        %4079 = vmatpush1.msra.mxu0 %v1543
        %4080 = vmatprep.subr.mxu0 %v1562
        %4081 = vmatpush1.msra.mxu0 %v1561
        %4082 = vmatprep.subr.mxu0 %v1580
        %4083 = vmatpush1.msra.mxu0 %v1579
        %4084 = vmatprep.subr.mxu0 %v1598
        %4085 = vmatpush1.msra.mxu0 %v1597
        %4086 = vmatprep.subr.mxu0 %v1616
        %4087 = vmatpush1.msra.mxu0 %v1615
        %4088 = vmatprep.subr.mxu0 %v1634
        %4089 = vmatpush1.msra.mxu0 %v1633
        %4090 = vmatprep.subr.mxu0 %v1652
        %4091 = vmatpush1.msra.mxu0 %v1651
        %4092 = vmatprep.subr.mxu0 %v1670
        %4093 = vmatpush1.msra.mxu0 %v1669
        %4094 = vmatprep.subr.mxu0 %v1688
        %4095 = vmatpush1.msra.mxu0 %v1687
        %4096 = vmatprep.subr.mxu0 %v1706
        %4097 = vmatpush1.msra.mxu0 %v1705
        %4098 = vmatprep.subr.mxu0 %v1724
        %4099 = vmatpush1.msra.mxu0 %v1723
        %4100 = vmatprep.subr.mxu0 %v1742
        %4101 = vmatpush1.msra.mxu0 %v1741
        %4102 = vmatprep.subr.mxu0 %v1760
        %4103 = vmatpush1.msra.mxu0 %v1759
        %4104 = vmatprep.subr.mxu0 %v1778
        %4105 = vmatpush1.msra.mxu0 %v1777
        %4106 = vmatprep.subr.mxu0 %v1796
        %4107 = vmatpush1.msra.mxu0 %v1795
        %4108 = vmatprep.subr.mxu0 %v1814
        %4109 = vmatpush1.msra.mxu0 %v1813
        %4110 = vmatprep.subr.mxu0 %v1832
        %4111 = vmatpush1.msra.mxu0 %v1831
        %4112 = vmatprep.subr.mxu0 %v1850
        %4113 = vmatpush1.msra.mxu0 %v1849
        %4114 = vmatprep.subr.mxu0 %v1868
        %4115 = vmatpush1.msra.mxu0 %v1867
        %4116 = vmatprep.subr.mxu0 %v1886
        %4117 = vmatpush1.msra.mxu0 %v1885
        %4118 = vmatprep.subr.mxu0 %v1904
        %4119 = vmatpush1.msra.mxu0 %v1903
        %4120 = vmatprep.subr.mxu0 %v1922
        %4121 = vmatpush1.msra.mxu0 %v1921
        %4122 = vmatprep.subr.mxu0 %v1940
        %4123 = vmatpush1.msra.mxu0 %v1939
        %4124 = vmatprep.subr.mxu0 %v1958
        %4125 = vmatpush1.msra.mxu0 %v1957
        %4126 = vmatprep.subr.mxu0 %v1976
        %4127 = vmatpush1.msra.mxu0 %v1975
        %4128 = vmatprep.subr.mxu0 %v1994
        %4129 = vmatpush1.msra.mxu0 %v1993
        %4130 = vmatprep.subr.mxu0 %v2012
        %4131 = vmatpush1.msra.mxu0 %v2011
        %4132 = vmatprep.subr.mxu0 %v2030
        %4133 = vmatpush1.msra.mxu0 %v2029
        %4134 = vmatprep.subr.mxu0 %v2048
        %4135 = vmatpush1.msra.mxu0 %v2047
        %4136 = vmatprep.subr.mxu0 %v2066
        %4137 = vmatpush1.msra.mxu0 %v2065
        %4138 = vmatprep.subr.mxu0 %v2084
        %4139 = vmatpush1.msra.mxu0 %v2083
        %4140 = vmatprep.subr.mxu0 %v2102
        %4141 = vmatpush1.msra.mxu0 %v2101
        %4142 = vmatprep.mubr.f32.mxu0 %v2225
        %4143 = vmatmul.mubr.f32.gmra.mrb[0].mxu0 %v2224
        %v4144 = vpop.f32.mrb[0].mxu0
        %v4145 = vadd.f32 %v4074, %v4144
        %v4146 = vpop.f32.mrb[0].mxu0
        %v4147 = vadd.f32 %v4076, %v4146
        %4148 = vdwg.mxu0
        %v4149 = vld [vmem:[#allocation7] sm:$0xff]
        %v4150 = vld [vmem:[#allocation7 + $0x8] sm:$0xff]
        %v4151 = vld [vmem:[#allocation7 + $0x10] sm:$0xff]
        %v4152 = vld [vmem:[#allocation7 + $0x18] sm:$0xff]
        %v4153 = vld [vmem:[#allocation7 + $0x20] sm:$0xff]
        %v4154 = vld [vmem:[#allocation7 + $0x28] sm:$0xff]
        %v4155 = vld [vmem:[#allocation7 + $0x30] sm:$0xff]
        %v4156 = vld [vmem:[#allocation7 + $0x38] sm:$0xff]
        %v4157 = vld [vmem:[#allocation7 + $0x40] sm:$0xff]
        %v4158 = vld [vmem:[#allocation7 + $0x48] sm:$0xff]
        %v4159 = vld [vmem:[#allocation7 + $0x50] sm:$0xff]
        %v4160 = vld [vmem:[#allocation7 + $0x58] sm:$0xff]
        %v4161 = vld [vmem:[#allocation7 + $0x60] sm:$0xff]
        %v4162 = vld [vmem:[#allocation7 + $0x68] sm:$0xff]
        %v4163 = vld [vmem:[#allocation7 + $0x70] sm:$0xff]
        %v4164 = vld [vmem:[#allocation7 + $0x78] sm:$0xff]
        %v4165 = vld [vmem:[#allocation7 + $0x80] sm:$0xff]
        %v4166 = vld [vmem:[#allocation7 + $0x88] sm:$0xff]
        %v4167 = vld [vmem:[#allocation7 + $0x90] sm:$0xff]
        %v4168 = vld [vmem:[#allocation7 + $0x98] sm:$0xff]
        %v4169 = vld [vmem:[#allocation7 + $0xa0] sm:$0xff]
        %v4170 = vld [vmem:[#allocation7 + $0xa8] sm:$0xff]
        %v4171 = vld [vmem:[#allocation7 + $0xb0] sm:$0xff]
        %v4172 = vld [vmem:[#allocation7 + $0xb8] sm:$0xff]
        %v4173 = vld [vmem:[#allocation7 + $0xc0] sm:$0xff]
        %v4174 = vld [vmem:[#allocation7 + $0xc8] sm:$0xff]
        %v4175 = vld [vmem:[#allocation7 + $0xd0] sm:$0xff]
        %v4176 = vld [vmem:[#allocation7 + $0xd8] sm:$0xff]
        %v4177 = vld [vmem:[#allocation7 + $0xe0] sm:$0xff]
        %v4178 = vld [vmem:[#allocation7 + $0xe8] sm:$0xff]
        %v4179 = vld [vmem:[#allocation7 + $0xf0] sm:$0xff]
        %v4180 = vld [vmem:[#allocation7 + $0xf8] sm:$0xff]
        %v4181 = vld [vmem:[#allocation7 + $0x100] sm:$0xff]
        %v4182 = vld [vmem:[#allocation7 + $0x108] sm:$0xff]
        %v4183 = vld [vmem:[#allocation7 + $0x110] sm:$0xff]
        %v4184 = vld [vmem:[#allocation7 + $0x118] sm:$0xff]
        %v4185 = vld [vmem:[#allocation7 + $0x120] sm:$0xff]
        %v4186 = vld [vmem:[#allocation7 + $0x128] sm:$0xff]
        %v4187 = vld [vmem:[#allocation7 + $0x130] sm:$0xff]
        %v4188 = vld [vmem:[#allocation7 + $0x138] sm:$0xff]
        %v4189 = vld [vmem:[#allocation7 + $0x140] sm:$0xff]
        %v4190 = vld [vmem:[#allocation7 + $0x148] sm:$0xff]
        %v4191 = vld [vmem:[#allocation7 + $0x150] sm:$0xff]
        %v4192 = vld [vmem:[#allocation7 + $0x158] sm:$0xff]
        %v4193 = vld [vmem:[#allocation7 + $0x160] sm:$0xff]
        %v4194 = vld [vmem:[#allocation7 + $0x168] sm:$0xff]
        %v4195 = vld [vmem:[#allocation7 + $0x170] sm:$0xff]
        %v4196 = vld [vmem:[#allocation7 + $0x178] sm:$0xff]
        %v4197 = vld [vmem:[#allocation7 + $0x180] sm:$0xff]
        %v4198 = vld [vmem:[#allocation7 + $0x188] sm:$0xff]
        %v4199 = vld [vmem:[#allocation7 + $0x190] sm:$0xff]
        %v4200 = vld [vmem:[#allocation7 + $0x198] sm:$0xff]
        %v4201 = vld [vmem:[#allocation7 + $0x1a0] sm:$0xff]
        %v4202 = vld [vmem:[#allocation7 + $0x1a8] sm:$0xff]
        %v4203 = vld [vmem:[#allocation7 + $0x1b0] sm:$0xff]
        %v4204 = vld [vmem:[#allocation7 + $0x1b8] sm:$0xff]
        %v4205 = vld [vmem:[#allocation7 + $0x1c0] sm:$0xff]
        %v4206 = vld [vmem:[#allocation7 + $0x1c8] sm:$0xff]
        %v4207 = vld [vmem:[#allocation7 + $0x1d0] sm:$0xff]
        %v4208 = vld [vmem:[#allocation7 + $0x1d8] sm:$0xff]
        %v4209 = vld [vmem:[#allocation7 + $0x1e0] sm:$0xff]
        %v4210 = vld [vmem:[#allocation7 + $0x1e8] sm:$0xff]
        %v4211 = vld [vmem:[#allocation7 + $0x1f0] sm:$0xff]
        %v4212 = vld [vmem:[#allocation7 + $0x1f8] sm:$0xff]
        %v4213 = vld [vmem:[#allocation7 + $0x200] sm:$0xff]
        %v4214 = vld [vmem:[#allocation7 + $0x208] sm:$0xff]
        %v4215 = vld [vmem:[#allocation7 + $0x210] sm:$0xff]
        %v4216 = vld [vmem:[#allocation7 + $0x218] sm:$0xff]
        %v4217 = vld [vmem:[#allocation7 + $0x220] sm:$0xff]
        %v4218 = vld [vmem:[#allocation7 + $0x228] sm:$0xff]
        %v4219 = vld [vmem:[#allocation7 + $0x230] sm:$0xff]
        %v4220 = vld [vmem:[#allocation7 + $0x238] sm:$0xff]
        %v4221 = vld [vmem:[#allocation7 + $0x240] sm:$0xff]
        %v4222 = vld [vmem:[#allocation7 + $0x248] sm:$0xff]
        %v4223 = vld [vmem:[#allocation7 + $0x250] sm:$0xff]
        %v4224 = vld [vmem:[#allocation7 + $0x258] sm:$0xff]
        %v4225 = vld [vmem:[#allocation7 + $0x260] sm:$0xff]
        %v4226 = vld [vmem:[#allocation7 + $0x268] sm:$0xff]
        %v4227 = vld [vmem:[#allocation7 + $0x270] sm:$0xff]
        %v4228 = vld [vmem:[#allocation7 + $0x278] sm:$0xff]
        %v4229 = vld [vmem:[#allocation7 + $0x280] sm:$0xff]
        %v4230 = vld [vmem:[#allocation7 + $0x288] sm:$0xff]
        %v4231 = vld [vmem:[#allocation7 + $0x290] sm:$0xff]
        %v4232 = vld [vmem:[#allocation7 + $0x298] sm:$0xff]
        %v4233 = vld [vmem:[#allocation7 + $0x2a0] sm:$0xff]
        %v4234 = vld [vmem:[#allocation7 + $0x2a8] sm:$0xff]
        %v4235 = vld [vmem:[#allocation7 + $0x2b0] sm:$0xff]
        %v4236 = vld [vmem:[#allocation7 + $0x2b8] sm:$0xff]
        %v4237 = vld [vmem:[#allocation7 + $0x2c0] sm:$0xff]
        %v4238 = vld [vmem:[#allocation7 + $0x2c8] sm:$0xff]
        %v4239 = vld [vmem:[#allocation7 + $0x2d0] sm:$0xff]
        %v4240 = vld [vmem:[#allocation7 + $0x2d8] sm:$0xff]
        %v4241 = vld [vmem:[#allocation7 + $0x2e0] sm:$0xff]
        %v4242 = vld [vmem:[#allocation7 + $0x2e8] sm:$0xff]
        %v4243 = vld [vmem:[#allocation7 + $0x2f0] sm:$0xff]
        %v4244 = vld [vmem:[#allocation7 + $0x2f8] sm:$0xff]
        %v4245 = vld [vmem:[#allocation7 + $0x300] sm:$0xff]
        %v4246 = vld [vmem:[#allocation7 + $0x308] sm:$0xff]
        %v4247 = vld [vmem:[#allocation7 + $0x310] sm:$0xff]
        %v4248 = vld [vmem:[#allocation7 + $0x318] sm:$0xff]
        %v4249 = vld [vmem:[#allocation7 + $0x320] sm:$0xff]
        %v4250 = vld [vmem:[#allocation7 + $0x328] sm:$0xff]
        %v4251 = vld [vmem:[#allocation7 + $0x330] sm:$0xff]
        %v4252 = vld [vmem:[#allocation7 + $0x338] sm:$0xff]
        %v4253 = vld [vmem:[#allocation7 + $0x340] sm:$0xff]
        %v4254 = vld [vmem:[#allocation7 + $0x348] sm:$0xff]
        %v4255 = vld [vmem:[#allocation7 + $0x350] sm:$0xff]
        %v4256 = vld [vmem:[#allocation7 + $0x358] sm:$0xff]
        %v4257 = vld [vmem:[#allocation7 + $0x360] sm:$0xff]
        %v4258 = vld [vmem:[#allocation7 + $0x368] sm:$0xff]
        %v4259 = vld [vmem:[#allocation7 + $0x370] sm:$0xff]
        %v4260 = vld [vmem:[#allocation7 + $0x378] sm:$0xff]
        %v4261 = vld [vmem:[#allocation7 + $0x380] sm:$0xff]
        %v4262 = vld [vmem:[#allocation7 + $0x388] sm:$0xff]
        %v4263 = vld [vmem:[#allocation7 + $0x390] sm:$0xff]
        %v4264 = vld [vmem:[#allocation7 + $0x398] sm:$0xff]
        %v4265 = vld [vmem:[#allocation7 + $0x3a0] sm:$0xff]
        %v4266 = vld [vmem:[#allocation7 + $0x3a8] sm:$0xff]
        %v4267 = vld [vmem:[#allocation7 + $0x3b0] sm:$0xff]
        %v4268 = vld [vmem:[#allocation7 + $0x3b8] sm:$0xff]
        %v4269 = vld [vmem:[#allocation7 + $0x3c0] sm:$0xff]
        %v4270 = vld [vmem:[#allocation7 + $0x3c8] sm:$0xff]
        %v4271 = vld [vmem:[#allocation7 + $0x3d0] sm:$0xff]
        %v4272 = vld [vmem:[#allocation7 + $0x3d8] sm:$0xff]
        %v4273 = vld [vmem:[#allocation7 + $0x3e0] sm:$0xff]
        %v4274 = vld [vmem:[#allocation7 + $0x3e8] sm:$0xff]
        %v4275 = vld [vmem:[#allocation7 + $0x3f0] sm:$0xff]
        %v4276 = vld [vmem:[#allocation7 + $0x3f8] sm:$0xff]
        %v4277 = vld [vmem:[#allocation7 + $0x400] sm:$0xff]
        %v4278 = vld [vmem:[#allocation7 + $0x408] sm:$0xff]
        %v4279 = vld [vmem:[#allocation7 + $0x410] sm:$0xff]
        %v4280 = vld [vmem:[#allocation7 + $0x418] sm:$0xff]
        %v4281 = vld [vmem:[#allocation7 + $0x420] sm:$0xff]
        %v4282 = vld [vmem:[#allocation7 + $0x428] sm:$0xff]
        %v4283 = vld [vmem:[#allocation7 + $0x430] sm:$0xff]
        %v4284 = vld [vmem:[#allocation7 + $0x438] sm:$0xff]
        %v4285 = vld [vmem:[#allocation7 + $0x440] sm:$0xff]
        %v4286 = vld [vmem:[#allocation7 + $0x448] sm:$0xff]
        %v4287 = vld [vmem:[#allocation7 + $0x450] sm:$0xff]
        %v4288 = vld [vmem:[#allocation7 + $0x458] sm:$0xff]
        %v4289 = vld [vmem:[#allocation7 + $0x460] sm:$0xff]
        %v4290 = vld [vmem:[#allocation7 + $0x468] sm:$0xff]
        %v4291 = vld [vmem:[#allocation7 + $0x470] sm:$0xff]
        %v4292 = vld [vmem:[#allocation7 + $0x478] sm:$0xff]
        %v4293 = vld [vmem:[#allocation7 + $0x480] sm:$0xff]
        %v4294 = vld [vmem:[#allocation7 + $0x488] sm:$0xff]
        %v4295 = vld [vmem:[#allocation7 + $0x490] sm:$0xff]
        %v4296 = vld [vmem:[#allocation7 + $0x498] sm:$0xff]
        %v4297 = vld [vmem:[#allocation7 + $0x4a0] sm:$0xff]
        %v4298 = vld [vmem:[#allocation7 + $0x4a8] sm:$0xff]
        %v4299 = vld [vmem:[#allocation7 + $0x4b0] sm:$0xff]
        %v4300 = vld [vmem:[#allocation7 + $0x4b8] sm:$0xff]
        %v4301 = vld [vmem:[#allocation7 + $0x4c0] sm:$0xff]
        %v4302 = vld [vmem:[#allocation7 + $0x4c8] sm:$0xff]
        %v4303 = vld [vmem:[#allocation7 + $0x4d0] sm:$0xff]
        %v4304 = vld [vmem:[#allocation7 + $0x4d8] sm:$0xff]
        %v4305 = vld [vmem:[#allocation7 + $0x4e0] sm:$0xff]
        %v4306 = vld [vmem:[#allocation7 + $0x4e8] sm:$0xff]
        %v4307 = vld [vmem:[#allocation7 + $0x4f0] sm:$0xff]
        %v4308 = vld [vmem:[#allocation7 + $0x4f8] sm:$0xff]
        %v4309 = vld [vmem:[#allocation7 + $0x500] sm:$0xff]
        %v4310 = vld [vmem:[#allocation7 + $0x508] sm:$0xff]
        %v4311 = vld [vmem:[#allocation7 + $0x510] sm:$0xff]
        %v4312 = vld [vmem:[#allocation7 + $0x518] sm:$0xff]
        %v4313 = vld [vmem:[#allocation7 + $0x520] sm:$0xff]
        %v4314 = vld [vmem:[#allocation7 + $0x528] sm:$0xff]
        %v4315 = vld [vmem:[#allocation7 + $0x530] sm:$0xff]
        %v4316 = vld [vmem:[#allocation7 + $0x538] sm:$0xff]
        %v4317 = vld [vmem:[#allocation7 + $0x540] sm:$0xff]
        %v4318 = vld [vmem:[#allocation7 + $0x548] sm:$0xff]
        %v4319 = vld [vmem:[#allocation7 + $0x550] sm:$0xff]
        %v4320 = vld [vmem:[#allocation7 + $0x558] sm:$0xff]
        %v4321 = vld [vmem:[#allocation7 + $0x560] sm:$0xff]
        %v4322 = vld [vmem:[#allocation7 + $0x568] sm:$0xff]
        %v4323 = vld [vmem:[#allocation7 + $0x570] sm:$0xff]
        %v4324 = vld [vmem:[#allocation7 + $0x578] sm:$0xff]
        %v4325 = vld [vmem:[#allocation7 + $0x580] sm:$0xff]
        %v4326 = vld [vmem:[#allocation7 + $0x588] sm:$0xff]
        %v4327 = vld [vmem:[#allocation7 + $0x590] sm:$0xff]
        %v4328 = vld [vmem:[#allocation7 + $0x598] sm:$0xff]
        %v4329 = vld [vmem:[#allocation7 + $0x5a0] sm:$0xff]
        %v4330 = vld [vmem:[#allocation7 + $0x5a8] sm:$0xff]
        %v4331 = vld [vmem:[#allocation7 + $0x5b0] sm:$0xff]
        %v4332 = vld [vmem:[#allocation7 + $0x5b8] sm:$0xff]
        %v4333 = vld [vmem:[#allocation7 + $0x5c0] sm:$0xff]
        %v4334 = vld [vmem:[#allocation7 + $0x5c8] sm:$0xff]
        %v4335 = vld [vmem:[#allocation7 + $0x5d0] sm:$0xff]
        %v4336 = vld [vmem:[#allocation7 + $0x5d8] sm:$0xff]
        %v4337 = vld [vmem:[#allocation7 + $0x5e0] sm:$0xff]
        %v4338 = vld [vmem:[#allocation7 + $0x5e8] sm:$0xff]
        %v4339 = vld [vmem:[#allocation7 + $0x5f0] sm:$0xff]
        %v4340 = vld [vmem:[#allocation7 + $0x5f8] sm:$0xff]
        %v4341 = vld [vmem:[#allocation7 + $0x600] sm:$0xff]
        %v4342 = vld [vmem:[#allocation7 + $0x608] sm:$0xff]
        %v4343 = vld [vmem:[#allocation7 + $0x610] sm:$0xff]
        %v4344 = vld [vmem:[#allocation7 + $0x618] sm:$0xff]
        %v4345 = vld [vmem:[#allocation7 + $0x620] sm:$0xff]
        %v4346 = vld [vmem:[#allocation7 + $0x628] sm:$0xff]
        %v4347 = vld [vmem:[#allocation7 + $0x630] sm:$0xff]
        %v4348 = vld [vmem:[#allocation7 + $0x638] sm:$0xff]
        %v4349 = vld [vmem:[#allocation7 + $0x640] sm:$0xff]
        %v4350 = vld [vmem:[#allocation7 + $0x648] sm:$0xff]
        %v4351 = vld [vmem:[#allocation7 + $0x650] sm:$0xff]
        %v4352 = vld [vmem:[#allocation7 + $0x658] sm:$0xff]
        %v4353 = vld [vmem:[#allocation7 + $0x660] sm:$0xff]
        %v4354 = vld [vmem:[#allocation7 + $0x668] sm:$0xff]
        %v4355 = vld [vmem:[#allocation7 + $0x670] sm:$0xff]
        %v4356 = vld [vmem:[#allocation7 + $0x678] sm:$0xff]
        %v4357 = vld [vmem:[#allocation7 + $0x680] sm:$0xff]
        %v4358 = vld [vmem:[#allocation7 + $0x688] sm:$0xff]
        %v4359 = vld [vmem:[#allocation7 + $0x690] sm:$0xff]
        %v4360 = vld [vmem:[#allocation7 + $0x698] sm:$0xff]
        %v4361 = vld [vmem:[#allocation7 + $0x6a0] sm:$0xff]
        %v4362 = vld [vmem:[#allocation7 + $0x6a8] sm:$0xff]
        %v4363 = vld [vmem:[#allocation7 + $0x6b0] sm:$0xff]
        %v4364 = vld [vmem:[#allocation7 + $0x6b8] sm:$0xff]
        %v4365 = vld [vmem:[#allocation7 + $0x6c0] sm:$0xff]
        %v4366 = vld [vmem:[#allocation7 + $0x6c8] sm:$0xff]
        %v4367 = vld [vmem:[#allocation7 + $0x6d0] sm:$0xff]
        %v4368 = vld [vmem:[#allocation7 + $0x6d8] sm:$0xff]
        %v4369 = vld [vmem:[#allocation7 + $0x6e0] sm:$0xff]
        %v4370 = vld [vmem:[#allocation7 + $0x6e8] sm:$0xff]
        %v4371 = vld [vmem:[#allocation7 + $0x6f0] sm:$0xff]
        %v4372 = vld [vmem:[#allocation7 + $0x6f8] sm:$0xff]
        %v4373 = vld [vmem:[#allocation7 + $0x700] sm:$0xff]
        %v4374 = vld [vmem:[#allocation7 + $0x708] sm:$0xff]
        %v4375 = vld [vmem:[#allocation7 + $0x710] sm:$0xff]
        %v4376 = vld [vmem:[#allocation7 + $0x718] sm:$0xff]
        %v4377 = vld [vmem:[#allocation7 + $0x720] sm:$0xff]
        %v4378 = vld [vmem:[#allocation7 + $0x728] sm:$0xff]
        %v4379 = vld [vmem:[#allocation7 + $0x730] sm:$0xff]
        %v4380 = vld [vmem:[#allocation7 + $0x738] sm:$0xff]
        %v4381 = vld [vmem:[#allocation7 + $0x740] sm:$0xff]
        %v4382 = vld [vmem:[#allocation7 + $0x748] sm:$0xff]
        %v4383 = vld [vmem:[#allocation7 + $0x750] sm:$0xff]
        %v4384 = vld [vmem:[#allocation7 + $0x758] sm:$0xff]
        %v4385 = vld [vmem:[#allocation7 + $0x760] sm:$0xff]
        %v4386 = vld [vmem:[#allocation7 + $0x768] sm:$0xff]
        %v4387 = vld [vmem:[#allocation7 + $0x770] sm:$0xff]
        %v4388 = vld [vmem:[#allocation7 + $0x778] sm:$0xff]
        %v4389 = vld [vmem:[#allocation7 + $0x780] sm:$0xff]
        %v4390 = vld [vmem:[#allocation7 + $0x788] sm:$0xff]
        %v4391 = vld [vmem:[#allocation7 + $0x790] sm:$0xff]
        %v4392 = vld [vmem:[#allocation7 + $0x798] sm:$0xff]
        %v4393 = vld [vmem:[#allocation7 + $0x7a0] sm:$0xff]
        %v4394 = vld [vmem:[#allocation7 + $0x7a8] sm:$0xff]
        %v4395 = vld [vmem:[#allocation7 + $0x7b0] sm:$0xff]
        %v4396 = vld [vmem:[#allocation7 + $0x7b8] sm:$0xff]
        %v4397 = vld [vmem:[#allocation7 + $0x7c0] sm:$0xff]
        %v4398 = vld [vmem:[#allocation7 + $0x7c8] sm:$0xff]
        %v4399 = vld [vmem:[#allocation7 + $0x7d0] sm:$0xff]
        %v4400 = vld [vmem:[#allocation7 + $0x7d8] sm:$0xff]
        %v4401 = vld [vmem:[#allocation7 + $0x7e0] sm:$0xff]
        %v4402 = vld [vmem:[#allocation7 + $0x7e8] sm:$0xff]
        %v4403 = vld [vmem:[#allocation7 + $0x7f0] sm:$0xff]
        %v4404 = vld [vmem:[#allocation7 + $0x7f8] sm:$0xff]
        %v4405 = vld [vmem:[#allocation7 + $0x800] sm:$0xff]
        %v4406 = vld [vmem:[#allocation7 + $0x808] sm:$0xff]
        %v4407 = vld [vmem:[#allocation7 + $0x810] sm:$0xff]
        %v4408 = vld [vmem:[#allocation7 + $0x818] sm:$0xff]
        %v4409 = vld [vmem:[#allocation7 + $0x820] sm:$0xff]
        %v4410 = vld [vmem:[#allocation7 + $0x828] sm:$0xff]
        %v4411 = vld [vmem:[#allocation7 + $0x830] sm:$0xff]
        %v4412 = vld [vmem:[#allocation7 + $0x838] sm:$0xff]
        %v4413 = vld [vmem:[#allocation7 + $0x840] sm:$0xff]
        %v4414 = vld [vmem:[#allocation7 + $0x848] sm:$0xff]
        %v4415 = vld [vmem:[#allocation7 + $0x850] sm:$0xff]
        %v4416 = vld [vmem:[#allocation7 + $0x858] sm:$0xff]
        %v4417 = vld [vmem:[#allocation7 + $0x860] sm:$0xff]
        %v4418 = vld [vmem:[#allocation7 + $0x868] sm:$0xff]
        %v4419 = vld [vmem:[#allocation7 + $0x870] sm:$0xff]
        %v4420 = vld [vmem:[#allocation7 + $0x878] sm:$0xff]
        %v4421 = vld [vmem:[#allocation7 + $0x880] sm:$0xff]
        %v4422 = vld [vmem:[#allocation7 + $0x888] sm:$0xff]
        %v4423 = vld [vmem:[#allocation7 + $0x890] sm:$0xff]
        %v4424 = vld [vmem:[#allocation7 + $0x898] sm:$0xff]
        %v4425 = vld [vmem:[#allocation7 + $0x8a0] sm:$0xff]
        %v4426 = vld [vmem:[#allocation7 + $0x8a8] sm:$0xff]
        %v4427 = vld [vmem:[#allocation7 + $0x8b0] sm:$0xff]
        %v4428 = vld [vmem:[#allocation7 + $0x8b8] sm:$0xff]
        %v4429 = vld [vmem:[#allocation7 + $0x8c0] sm:$0xff]
        %v4430 = vld [vmem:[#allocation7 + $0x8c8] sm:$0xff]
        %v4431 = vld [vmem:[#allocation7 + $0x8d0] sm:$0xff]
        %v4432 = vld [vmem:[#allocation7 + $0x8d8] sm:$0xff]
        %v4433 = vld [vmem:[#allocation7 + $0x8e0] sm:$0xff]
        %v4434 = vld [vmem:[#allocation7 + $0x8e8] sm:$0xff]
        %v4435 = vld [vmem:[#allocation7 + $0x8f0] sm:$0xff]
        %v4436 = vld [vmem:[#allocation7 + $0x8f8] sm:$0xff]
        %v4437 = vld [vmem:[#allocation7 + $0x900] sm:$0xff]
        %v4438 = vld [vmem:[#allocation7 + $0x908] sm:$0xff]
        %v4439 = vld [vmem:[#allocation7 + $0x910] sm:$0xff]
        %v4440 = vld [vmem:[#allocation7 + $0x918] sm:$0xff]
        %v4441 = vld [vmem:[#allocation7 + $0x920] sm:$0xff]
        %v4442 = vld [vmem:[#allocation7 + $0x928] sm:$0xff]
        %v4443 = vld [vmem:[#allocation7 + $0x930] sm:$0xff]
        %v4444 = vld [vmem:[#allocation7 + $0x938] sm:$0xff]
        %v4445 = vld [vmem:[#allocation7 + $0x940] sm:$0xff]
        %v4446 = vld [vmem:[#allocation7 + $0x948] sm:$0xff]
        %v4447 = vld [vmem:[#allocation7 + $0x950] sm:$0xff]
        %v4448 = vld [vmem:[#allocation7 + $0x958] sm:$0xff]
        %v4449 = vld [vmem:[#allocation7 + $0x960] sm:$0xff]
        %v4450 = vld [vmem:[#allocation7 + $0x968] sm:$0xff]
        %v4451 = vld [vmem:[#allocation7 + $0x970] sm:$0xff]
        %v4452 = vld [vmem:[#allocation7 + $0x978] sm:$0xff]
        %v4453 = vld [vmem:[#allocation7 + $0x980] sm:$0xff]
        %v4454 = vld [vmem:[#allocation7 + $0x988] sm:$0xff]
        %v4455 = vld [vmem:[#allocation7 + $0x990] sm:$0xff]
        %v4456 = vld [vmem:[#allocation7 + $0x998] sm:$0xff]
        %v4457 = vld [vmem:[#allocation7 + $0x9a0] sm:$0xff]
        %v4458 = vld [vmem:[#allocation7 + $0x9a8] sm:$0xff]
        %v4459 = vld [vmem:[#allocation7 + $0x9b0] sm:$0xff]
        %v4460 = vld [vmem:[#allocation7 + $0x9b8] sm:$0xff]
        %v4461 = vld [vmem:[#allocation7 + $0x9c0] sm:$0xff]
        %v4462 = vld [vmem:[#allocation7 + $0x9c8] sm:$0xff]
        %v4463 = vld [vmem:[#allocation7 + $0x9d0] sm:$0xff]
        %v4464 = vld [vmem:[#allocation7 + $0x9d8] sm:$0xff]
        %v4465 = vld [vmem:[#allocation7 + $0x9e0] sm:$0xff]
        %v4466 = vld [vmem:[#allocation7 + $0x9e8] sm:$0xff]
        %v4467 = vld [vmem:[#allocation7 + $0x9f0] sm:$0xff]
        %v4468 = vld [vmem:[#allocation7 + $0x9f8] sm:$0xff]
        %v4469 = vld [vmem:[#allocation7 + $0xa00] sm:$0xff]
        %v4470 = vld [vmem:[#allocation7 + $0xa08] sm:$0xff]
        %v4471 = vld [vmem:[#allocation7 + $0xa10] sm:$0xff]
        %v4472 = vld [vmem:[#allocation7 + $0xa18] sm:$0xff]
        %v4473 = vld [vmem:[#allocation7 + $0xa20] sm:$0xff]
        %v4474 = vld [vmem:[#allocation7 + $0xa28] sm:$0xff]
        %v4475 = vld [vmem:[#allocation7 + $0xa30] sm:$0xff]
        %v4476 = vld [vmem:[#allocation7 + $0xa38] sm:$0xff]
        %v4477 = vld [vmem:[#allocation7 + $0xa40] sm:$0xff]
        %v4478 = vld [vmem:[#allocation7 + $0xa48] sm:$0xff]
        %v4479 = vld [vmem:[#allocation7 + $0xa50] sm:$0xff]
        %v4480 = vld [vmem:[#allocation7 + $0xa58] sm:$0xff]
        %v4481 = vld [vmem:[#allocation7 + $0xa60] sm:$0xff]
        %v4482 = vld [vmem:[#allocation7 + $0xa68] sm:$0xff]
        %v4483 = vld [vmem:[#allocation7 + $0xa70] sm:$0xff]
        %v4484 = vld [vmem:[#allocation7 + $0xa78] sm:$0xff]
        %v4485 = vld [vmem:[#allocation7 + $0xa80] sm:$0xff]
        %v4486 = vld [vmem:[#allocation7 + $0xa88] sm:$0xff]
        %v4487 = vld [vmem:[#allocation7 + $0xa90] sm:$0xff]
        %v4488 = vld [vmem:[#allocation7 + $0xa98] sm:$0xff]
        %v4489 = vld [vmem:[#allocation7 + $0xaa0] sm:$0xff]
        %v4490 = vld [vmem:[#allocation7 + $0xaa8] sm:$0xff]
        %v4491 = vld [vmem:[#allocation7 + $0xab0] sm:$0xff]
        %v4492 = vld [vmem:[#allocation7 + $0xab8] sm:$0xff]
        %v4493 = vld [vmem:[#allocation7 + $0xac0] sm:$0xff]
        %v4494 = vld [vmem:[#allocation7 + $0xac8] sm:$0xff]
        %v4495 = vld [vmem:[#allocation7 + $0xad0] sm:$0xff]
        %v4496 = vld [vmem:[#allocation7 + $0xad8] sm:$0xff]
        %v4497 = vld [vmem:[#allocation7 + $0xae0] sm:$0xff]
        %v4498 = vld [vmem:[#allocation7 + $0xae8] sm:$0xff]
        %v4499 = vld [vmem:[#allocation7 + $0xaf0] sm:$0xff]
        %v4500 = vld [vmem:[#allocation7 + $0xaf8] sm:$0xff]
        %v4501 = vld [vmem:[#allocation7 + $0xb00] sm:$0xff]
        %v4502 = vld [vmem:[#allocation7 + $0xb08] sm:$0xff]
        %v4503 = vld [vmem:[#allocation7 + $0xb10] sm:$0xff]
        %v4504 = vld [vmem:[#allocation7 + $0xb18] sm:$0xff]
        %v4505 = vld [vmem:[#allocation7 + $0xb20] sm:$0xff]
        %v4506 = vld [vmem:[#allocation7 + $0xb28] sm:$0xff]
        %v4507 = vld [vmem:[#allocation7 + $0xb30] sm:$0xff]
        %v4508 = vld [vmem:[#allocation7 + $0xb38] sm:$0xff]
        %v4509 = vld [vmem:[#allocation7 + $0xb40] sm:$0xff]
        %v4510 = vld [vmem:[#allocation7 + $0xb48] sm:$0xff]
        %v4511 = vld [vmem:[#allocation7 + $0xb50] sm:$0xff]
        %v4512 = vld [vmem:[#allocation7 + $0xb58] sm:$0xff]
        %v4513 = vld [vmem:[#allocation7 + $0xb60] sm:$0xff]
        %v4514 = vld [vmem:[#allocation7 + $0xb68] sm:$0xff]
        %v4515 = vld [vmem:[#allocation7 + $0xb70] sm:$0xff]
        %v4516 = vld [vmem:[#allocation7 + $0xb78] sm:$0xff]
        %v4517 = vld [vmem:[#allocation7 + $0xb80] sm:$0xff]
        %v4518 = vld [vmem:[#allocation7 + $0xb88] sm:$0xff]
        %v4519 = vld [vmem:[#allocation7 + $0xb90] sm:$0xff]
        %v4520 = vld [vmem:[#allocation7 + $0xb98] sm:$0xff]
        %v4521 = vld [vmem:[#allocation7 + $0xba0] sm:$0xff]
        %v4522 = vld [vmem:[#allocation7 + $0xba8] sm:$0xff]
        %v4523 = vld [vmem:[#allocation7 + $0xbb0] sm:$0xff]
        %v4524 = vld [vmem:[#allocation7 + $0xbb8] sm:$0xff]
        %v4525 = vld [vmem:[#allocation7 + $0xbc0] sm:$0xff]
        %v4526 = vld [vmem:[#allocation7 + $0xbc8] sm:$0xff]
        %v4527 = vld [vmem:[#allocation7 + $0xbd0] sm:$0xff]
        %v4528 = vld [vmem:[#allocation7 + $0xbd8] sm:$0xff]
        %v4529 = vld [vmem:[#allocation7 + $0xbe0] sm:$0xff]
        %v4530 = vld [vmem:[#allocation7 + $0xbe8] sm:$0xff]
        %v4531 = vld [vmem:[#allocation7 + $0xbf0] sm:$0xff]
        %v4532 = vld [vmem:[#allocation7 + $0xbf8] sm:$0xff]
        %v4533 = vld [vmem:[#allocation7 + $0xc00] sm:$0xff]
        %v4534 = vld [vmem:[#allocation7 + $0xc08] sm:$0xff]
        %v4535 = vld [vmem:[#allocation7 + $0xc10] sm:$0xff]
        %v4536 = vld [vmem:[#allocation7 + $0xc18] sm:$0xff]
        %v4537 = vld [vmem:[#allocation7 + $0xc20] sm:$0xff]
        %v4538 = vld [vmem:[#allocation7 + $0xc28] sm:$0xff]
        %v4539 = vld [vmem:[#allocation7 + $0xc30] sm:$0xff]
        %v4540 = vld [vmem:[#allocation7 + $0xc38] sm:$0xff]
        %v4541 = vld [vmem:[#allocation7 + $0xc40] sm:$0xff]
        %v4542 = vld [vmem:[#allocation7 + $0xc48] sm:$0xff]
        %v4543 = vld [vmem:[#allocation7 + $0xc50] sm:$0xff]
        %v4544 = vld [vmem:[#allocation7 + $0xc58] sm:$0xff]
        %v4545 = vld [vmem:[#allocation7 + $0xc60] sm:$0xff]
        %v4546 = vld [vmem:[#allocation7 + $0xc68] sm:$0xff]
        %v4547 = vld [vmem:[#allocation7 + $0xc70] sm:$0xff]
        %v4548 = vld [vmem:[#allocation7 + $0xc78] sm:$0xff]
        %v4549 = vld [vmem:[#allocation7 + $0xc80] sm:$0xff]
        %v4550 = vld [vmem:[#allocation7 + $0xc88] sm:$0xff]
        %v4551 = vld [vmem:[#allocation7 + $0xc90] sm:$0xff]
        %v4552 = vld [vmem:[#allocation7 + $0xc98] sm:$0xff]
        %v4553 = vld [vmem:[#allocation7 + $0xca0] sm:$0xff]
        %v4554 = vld [vmem:[#allocation7 + $0xca8] sm:$0xff]
        %v4555 = vld [vmem:[#allocation7 + $0xcb0] sm:$0xff]
        %v4556 = vld [vmem:[#allocation7 + $0xcb8] sm:$0xff]
        %v4557 = vld [vmem:[#allocation7 + $0xcc0] sm:$0xff]
        %v4558 = vld [vmem:[#allocation7 + $0xcc8] sm:$0xff]
        %v4559 = vld [vmem:[#allocation7 + $0xcd0] sm:$0xff]
        %v4560 = vld [vmem:[#allocation7 + $0xcd8] sm:$0xff]
        %v4561 = vld [vmem:[#allocation7 + $0xce0] sm:$0xff]
        %v4562 = vld [vmem:[#allocation7 + $0xce8] sm:$0xff]
        %v4563 = vld [vmem:[#allocation7 + $0xcf0] sm:$0xff]
        %v4564 = vld [vmem:[#allocation7 + $0xcf8] sm:$0xff]
        %v4565 = vld [vmem:[#allocation7 + $0xd00] sm:$0xff]
        %v4566 = vld [vmem:[#allocation7 + $0xd08] sm:$0xff]
        %v4567 = vld [vmem:[#allocation7 + $0xd10] sm:$0xff]
        %v4568 = vld [vmem:[#allocation7 + $0xd18] sm:$0xff]
        %v4569 = vld [vmem:[#allocation7 + $0xd20] sm:$0xff]
        %v4570 = vld [vmem:[#allocation7 + $0xd28] sm:$0xff]
        %v4571 = vld [vmem:[#allocation7 + $0xd30] sm:$0xff]
        %v4572 = vld [vmem:[#allocation7 + $0xd38] sm:$0xff]
        %v4573 = vld [vmem:[#allocation7 + $0xd40] sm:$0xff]
        %v4574 = vld [vmem:[#allocation7 + $0xd48] sm:$0xff]
        %v4575 = vld [vmem:[#allocation7 + $0xd50] sm:$0xff]
        %v4576 = vld [vmem:[#allocation7 + $0xd58] sm:$0xff]
        %v4577 = vld [vmem:[#allocation7 + $0xd60] sm:$0xff]
        %v4578 = vld [vmem:[#allocation7 + $0xd68] sm:$0xff]
        %v4579 = vld [vmem:[#allocation7 + $0xd70] sm:$0xff]
        %v4580 = vld [vmem:[#allocation7 + $0xd78] sm:$0xff]
        %v4581 = vld [vmem:[#allocation7 + $0xd80] sm:$0xff]
        %v4582 = vld [vmem:[#allocation7 + $0xd88] sm:$0xff]
        %v4583 = vld [vmem:[#allocation7 + $0xd90] sm:$0xff]
        %v4584 = vld [vmem:[#allocation7 + $0xd98] sm:$0xff]
        %v4585 = vld [vmem:[#allocation7 + $0xda0] sm:$0xff]
        %v4586 = vld [vmem:[#allocation7 + $0xda8] sm:$0xff]
        %v4587 = vld [vmem:[#allocation7 + $0xdb0] sm:$0xff]
        %v4588 = vld [vmem:[#allocation7 + $0xdb8] sm:$0xff]
        %v4589 = vld [vmem:[#allocation7 + $0xdc0] sm:$0xff]
        %v4590 = vld [vmem:[#allocation7 + $0xdc8] sm:$0xff]
        %v4591 = vld [vmem:[#allocation7 + $0xdd0] sm:$0xff]
        %v4592 = vld [vmem:[#allocation7 + $0xdd8] sm:$0xff]
        %v4593 = vld [vmem:[#allocation7 + $0xde0] sm:$0xff]
        %v4594 = vld [vmem:[#allocation7 + $0xde8] sm:$0xff]
        %v4595 = vld [vmem:[#allocation7 + $0xdf0] sm:$0xff]
        %v4596 = vld [vmem:[#allocation7 + $0xdf8] sm:$0xff]
        %v4597 = vld [vmem:[#allocation7 + $0xe00] sm:$0xff]
        %v4598 = vld [vmem:[#allocation7 + $0xe08] sm:$0xff]
        %v4599 = vld [vmem:[#allocation7 + $0xe10] sm:$0xff]
        %v4600 = vld [vmem:[#allocation7 + $0xe18] sm:$0xff]
        %v4601 = vld [vmem:[#allocation7 + $0xe20] sm:$0xff]
        %v4602 = vld [vmem:[#allocation7 + $0xe28] sm:$0xff]
        %v4603 = vld [vmem:[#allocation7 + $0xe30] sm:$0xff]
        %v4604 = vld [vmem:[#allocation7 + $0xe38] sm:$0xff]
        %v4605 = vld [vmem:[#allocation7 + $0xe40] sm:$0xff]
        %v4606 = vld [vmem:[#allocation7 + $0xe48] sm:$0xff]
        %v4607 = vld [vmem:[#allocation7 + $0xe50] sm:$0xff]
        %v4608 = vld [vmem:[#allocation7 + $0xe58] sm:$0xff]
        %v4609 = vld [vmem:[#allocation7 + $0xe60] sm:$0xff]
        %v4610 = vld [vmem:[#allocation7 + $0xe68] sm:$0xff]
        %v4611 = vld [vmem:[#allocation7 + $0xe70] sm:$0xff]
        %v4612 = vld [vmem:[#allocation7 + $0xe78] sm:$0xff]
        %v4613 = vld [vmem:[#allocation7 + $0xe80] sm:$0xff]
        %v4614 = vld [vmem:[#allocation7 + $0xe88] sm:$0xff]
        %v4615 = vld [vmem:[#allocation7 + $0xe90] sm:$0xff]
        %v4616 = vld [vmem:[#allocation7 + $0xe98] sm:$0xff]
        %v4617 = vld [vmem:[#allocation7 + $0xea0] sm:$0xff]
        %v4618 = vld [vmem:[#allocation7 + $0xea8] sm:$0xff]
        %v4619 = vld [vmem:[#allocation7 + $0xeb0] sm:$0xff]
        %v4620 = vld [vmem:[#allocation7 + $0xeb8] sm:$0xff]
        %v4621 = vld [vmem:[#allocation7 + $0xec0] sm:$0xff]
        %v4622 = vld [vmem:[#allocation7 + $0xec8] sm:$0xff]
        %v4623 = vld [vmem:[#allocation7 + $0xed0] sm:$0xff]
        %v4624 = vld [vmem:[#allocation7 + $0xed8] sm:$0xff]
        %v4625 = vld [vmem:[#allocation7 + $0xee0] sm:$0xff]
        %v4626 = vld [vmem:[#allocation7 + $0xee8] sm:$0xff]
        %v4627 = vld [vmem:[#allocation7 + $0xef0] sm:$0xff]
        %v4628 = vld [vmem:[#allocation7 + $0xef8] sm:$0xff]
        %v4629 = vld [vmem:[#allocation7 + $0xf00] sm:$0xff]
        %v4630 = vld [vmem:[#allocation7 + $0xf08] sm:$0xff]
        %v4631 = vld [vmem:[#allocation7 + $0xf10] sm:$0xff]
        %v4632 = vld [vmem:[#allocation7 + $0xf18] sm:$0xff]
        %v4633 = vld [vmem:[#allocation7 + $0xf20] sm:$0xff]
        %v4634 = vld [vmem:[#allocation7 + $0xf28] sm:$0xff]
        %v4635 = vld [vmem:[#allocation7 + $0xf30] sm:$0xff]
        %v4636 = vld [vmem:[#allocation7 + $0xf38] sm:$0xff]
        %v4637 = vld [vmem:[#allocation7 + $0xf40] sm:$0xff]
        %v4638 = vld [vmem:[#allocation7 + $0xf48] sm:$0xff]
        %v4639 = vld [vmem:[#allocation7 + $0xf50] sm:$0xff]
        %v4640 = vld [vmem:[#allocation7 + $0xf58] sm:$0xff]
        %v4641 = vld [vmem:[#allocation7 + $0xf60] sm:$0xff]
        %v4642 = vld [vmem:[#allocation7 + $0xf68] sm:$0xff]
        %v4643 = vld [vmem:[#allocation7 + $0xf70] sm:$0xff]
        %v4644 = vld [vmem:[#allocation7 + $0xf78] sm:$0xff]
        %v4645 = vld [vmem:[#allocation7 + $0xf80] sm:$0xff]
        %v4646 = vld [vmem:[#allocation7 + $0xf88] sm:$0xff]
        %v4647 = vld [vmem:[#allocation7 + $0xf90] sm:$0xff]
        %v4648 = vld [vmem:[#allocation7 + $0xf98] sm:$0xff]
        %v4649 = vld [vmem:[#allocation7 + $0xfa0] sm:$0xff]
        %v4650 = vld [vmem:[#allocation7 + $0xfa8] sm:$0xff]
        %v4651 = vld [vmem:[#allocation7 + $0xfb0] sm:$0xff]
        %v4652 = vld [vmem:[#allocation7 + $0xfb8] sm:$0xff]
        %v4653 = vld [vmem:[#allocation7 + $0xfc0] sm:$0xff]
        %v4654 = vld [vmem:[#allocation7 + $0xfc8] sm:$0xff]
        %v4655 = vld [vmem:[#allocation7 + $0xfd0] sm:$0xff]
        %v4656 = vld [vmem:[#allocation7 + $0xfd8] sm:$0xff]
        %v4657 = vld [vmem:[#allocation7 + $0xfe0] sm:$0xff]
        %v4658 = vld [vmem:[#allocation7 + $0xfe8] sm:$0xff]
        %v4659 = vld [vmem:[#allocation7 + $0xff0] sm:$0xff]
        %v4660 = vld [vmem:[#allocation7 + $0xff8] sm:$0xff]
        %v4661 = vld [vmem:[#allocation7 + $0x1000] sm:$0xff]
        %v4662 = vld [vmem:[#allocation7 + $0x1008] sm:$0xff]
        %v4663 = vld [vmem:[#allocation7 + $0x1010] sm:$0xff]
        %v4664 = vld [vmem:[#allocation7 + $0x1018] sm:$0xff]
        %v4665 = vld [vmem:[#allocation7 + $0x1020] sm:$0xff]
        %v4666 = vld [vmem:[#allocation7 + $0x1028] sm:$0xff]
        %v4667 = vld [vmem:[#allocation7 + $0x1030] sm:$0xff]
        %v4668 = vld [vmem:[#allocation7 + $0x1038] sm:$0xff]
        %v4669 = vld [vmem:[#allocation7 + $0x1040] sm:$0xff]
        %v4670 = vld [vmem:[#allocation7 + $0x1048] sm:$0xff]
        %v4671 = vld [vmem:[#allocation7 + $0x1050] sm:$0xff]
        %v4672 = vld [vmem:[#allocation7 + $0x1058] sm:$0xff]
        %v4673 = vld [vmem:[#allocation7 + $0x1060] sm:$0xff]
        %v4674 = vld [vmem:[#allocation7 + $0x1068] sm:$0xff]
        %v4675 = vld [vmem:[#allocation7 + $0x1070] sm:$0xff]
        %v4676 = vld [vmem:[#allocation7 + $0x1078] sm:$0xff]
        %v4677 = vld [vmem:[#allocation7 + $0x1080] sm:$0xff]
        %v4678 = vld [vmem:[#allocation7 + $0x1088] sm:$0xff]
        %v4679 = vld [vmem:[#allocation7 + $0x1090] sm:$0xff]
        %v4680 = vld [vmem:[#allocation7 + $0x1098] sm:$0xff]
        %v4681 = vld [vmem:[#allocation7 + $0x10a0] sm:$0xff]
        %v4682 = vld [vmem:[#allocation7 + $0x10a8] sm:$0xff]
        %v4683 = vld [vmem:[#allocation7 + $0x10b0] sm:$0xff]
        %v4684 = vld [vmem:[#allocation7 + $0x10b8] sm:$0xff]
        %v4685 = vld [vmem:[#allocation7 + $0x10c0] sm:$0xff]
        %v4686 = vld [vmem:[#allocation7 + $0x10c8] sm:$0xff]
        %v4687 = vld [vmem:[#allocation7 + $0x10d0] sm:$0xff]
        %v4688 = vld [vmem:[#allocation7 + $0x10d8] sm:$0xff]
        %v4689 = vld [vmem:[#allocation7 + $0x10e0] sm:$0xff]
        %v4690 = vld [vmem:[#allocation7 + $0x10e8] sm:$0xff]
        %v4691 = vld [vmem:[#allocation7 + $0x10f0] sm:$0xff]
        %v4692 = vld [vmem:[#allocation7 + $0x10f8] sm:$0xff]
        %v4693 = vld [vmem:[#allocation7 + $0x1100] sm:$0xff]
        %v4694 = vld [vmem:[#allocation7 + $0x1108] sm:$0xff]
        %v4695 = vld [vmem:[#allocation7 + $0x1110] sm:$0xff]
        %v4696 = vld [vmem:[#allocation7 + $0x1118] sm:$0xff]
        %v4697 = vld [vmem:[#allocation7 + $0x1120] sm:$0xff]
        %v4698 = vld [vmem:[#allocation7 + $0x1128] sm:$0xff]
        %v4699 = vld [vmem:[#allocation7 + $0x1130] sm:$0xff]
        %v4700 = vld [vmem:[#allocation7 + $0x1138] sm:$0xff]
        %v4701 = vld [vmem:[#allocation7 + $0x1140] sm:$0xff]
        %v4702 = vld [vmem:[#allocation7 + $0x1148] sm:$0xff]
        %v4703 = vld [vmem:[#allocation7 + $0x1150] sm:$0xff]
        %v4704 = vld [vmem:[#allocation7 + $0x1158] sm:$0xff]
        %v4705 = vld [vmem:[#allocation7 + $0x1160] sm:$0xff]
        %v4706 = vld [vmem:[#allocation7 + $0x1168] sm:$0xff]
        %v4707 = vld [vmem:[#allocation7 + $0x1170] sm:$0xff]
        %v4708 = vld [vmem:[#allocation7 + $0x1178] sm:$0xff]
        %v4709 = vld [vmem:[#allocation7 + $0x1180] sm:$0xff]
        %v4710 = vld [vmem:[#allocation7 + $0x1188] sm:$0xff]
        %v4711 = vld [vmem:[#allocation7 + $0x1190] sm:$0xff]
        %v4712 = vld [vmem:[#allocation7 + $0x1198] sm:$0xff]
        %v4713 = vld [vmem:[#allocation7 + $0x11a0] sm:$0xff]
        %v4714 = vld [vmem:[#allocation7 + $0x11a8] sm:$0xff]
        %v4715 = vld [vmem:[#allocation7 + $0x11b0] sm:$0xff]
        %v4716 = vld [vmem:[#allocation7 + $0x11b8] sm:$0xff]
        %v4717 = vld [vmem:[#allocation7 + $0x11c0] sm:$0xff]
        %v4718 = vld [vmem:[#allocation7 + $0x11c8] sm:$0xff]
        %v4719 = vld [vmem:[#allocation7 + $0x11d0] sm:$0xff]
        %v4720 = vld [vmem:[#allocation7 + $0x11d8] sm:$0xff]
        %v4721 = vld [vmem:[#allocation7 + $0x11e0] sm:$0xff]
        %v4722 = vld [vmem:[#allocation7 + $0x11e8] sm:$0xff]
        %v4723 = vld [vmem:[#allocation7 + $0x11f0] sm:$0xff]
        %v4724 = vld [vmem:[#allocation7 + $0x11f8] sm:$0xff]
        %v4725 = vld [vmem:[#allocation7 + $0x1200] sm:$0xff]
        %v4726 = vld [vmem:[#allocation7 + $0x1208] sm:$0xff]
        %v4727 = vld [vmem:[#allocation7 + $0x1210] sm:$0xff]
        %v4728 = vld [vmem:[#allocation7 + $0x1218] sm:$0xff]
        %v4729 = vld [vmem:[#allocation7 + $0x1220] sm:$0xff]
        %v4730 = vld [vmem:[#allocation7 + $0x1228] sm:$0xff]
        %v4731 = vld [vmem:[#allocation7 + $0x1230] sm:$0xff]
        %v4732 = vld [vmem:[#allocation7 + $0x1238] sm:$0xff]
        %v4733 = vld [vmem:[#allocation7 + $0x1240] sm:$0xff]
        %v4734 = vld [vmem:[#allocation7 + $0x1248] sm:$0xff]
        %v4735 = vld [vmem:[#allocation7 + $0x1250] sm:$0xff]
        %v4736 = vld [vmem:[#allocation7 + $0x1258] sm:$0xff]
        %v4737 = vld [vmem:[#allocation7 + $0x1260] sm:$0xff]
        %v4738 = vld [vmem:[#allocation7 + $0x1268] sm:$0xff]
        %v4739 = vld [vmem:[#allocation7 + $0x1270] sm:$0xff]
        %v4740 = vld [vmem:[#allocation7 + $0x1278] sm:$0xff]
        %v4741 = vld [vmem:[#allocation7 + $0x1280] sm:$0xff]
        %v4742 = vld [vmem:[#allocation7 + $0x1288] sm:$0xff]
        %v4743 = vld [vmem:[#allocation7 + $0x1290] sm:$0xff]
        %v4744 = vld [vmem:[#allocation7 + $0x1298] sm:$0xff]
        %v4745 = vld [vmem:[#allocation7 + $0x12a0] sm:$0xff]
        %v4746 = vld [vmem:[#allocation7 + $0x12a8] sm:$0xff]
        %v4747 = vld [vmem:[#allocation7 + $0x12b0] sm:$0xff]
        %v4748 = vld [vmem:[#allocation7 + $0x12b8] sm:$0xff]
        %v4749 = vld [vmem:[#allocation7 + $0x12c0] sm:$0xff]
        %v4750 = vld [vmem:[#allocation7 + $0x12c8] sm:$0xff]
        %v4751 = vld [vmem:[#allocation7 + $0x12d0] sm:$0xff]
        %v4752 = vld [vmem:[#allocation7 + $0x12d8] sm:$0xff]
        %v4753 = vld [vmem:[#allocation7 + $0x12e0] sm:$0xff]
        %v4754 = vld [vmem:[#allocation7 + $0x12e8] sm:$0xff]
        %v4755 = vld [vmem:[#allocation7 + $0x12f0] sm:$0xff]
        %v4756 = vld [vmem:[#allocation7 + $0x12f8] sm:$0xff]
        %v4757 = vld [vmem:[#allocation7 + $0x1300] sm:$0xff]
        %v4758 = vld [vmem:[#allocation7 + $0x1308] sm:$0xff]
        %v4759 = vld [vmem:[#allocation7 + $0x1310] sm:$0xff]
        %v4760 = vld [vmem:[#allocation7 + $0x1318] sm:$0xff]
        %v4761 = vld [vmem:[#allocation7 + $0x1320] sm:$0xff]
        %v4762 = vld [vmem:[#allocation7 + $0x1328] sm:$0xff]
        %v4763 = vld [vmem:[#allocation7 + $0x1330] sm:$0xff]
        %v4764 = vld [vmem:[#allocation7 + $0x1338] sm:$0xff]
        %v4765 = vld [vmem:[#allocation7 + $0x1340] sm:$0xff]
        %v4766 = vld [vmem:[#allocation7 + $0x1348] sm:$0xff]
        %v4767 = vld [vmem:[#allocation7 + $0x1350] sm:$0xff]
        %v4768 = vld [vmem:[#allocation7 + $0x1358] sm:$0xff]
        %v4769 = vld [vmem:[#allocation7 + $0x1360] sm:$0xff]
        %v4770 = vld [vmem:[#allocation7 + $0x1368] sm:$0xff]
        %v4771 = vld [vmem:[#allocation7 + $0x1370] sm:$0xff]
        %v4772 = vld [vmem:[#allocation7 + $0x1378] sm:$0xff]
        %v4773 = vld [vmem:[#allocation7 + $0x1380] sm:$0xff]
        %v4774 = vld [vmem:[#allocation7 + $0x1388] sm:$0xff]
        %v4775 = vld [vmem:[#allocation7 + $0x1390] sm:$0xff]
        %v4776 = vld [vmem:[#allocation7 + $0x1398] sm:$0xff]
        %v4777 = vld [vmem:[#allocation7 + $0x13a0] sm:$0xff]
        %v4778 = vld [vmem:[#allocation7 + $0x13a8] sm:$0xff]
        %v4779 = vld [vmem:[#allocation7 + $0x13b0] sm:$0xff]
        %v4780 = vld [vmem:[#allocation7 + $0x13b8] sm:$0xff]
        %v4781 = vld [vmem:[#allocation7 + $0x13c0] sm:$0xff]
        %v4782 = vld [vmem:[#allocation7 + $0x13c8] sm:$0xff]
        %v4783 = vld [vmem:[#allocation7 + $0x13d0] sm:$0xff]
        %v4784 = vld [vmem:[#allocation7 + $0x13d8] sm:$0xff]
        %v4785 = vld [vmem:[#allocation7 + $0x13e0] sm:$0xff]
        %v4786 = vld [vmem:[#allocation7 + $0x13e8] sm:$0xff]
        %v4787 = vld [vmem:[#allocation7 + $0x13f0] sm:$0xff]
        %v4788 = vld [vmem:[#allocation7 + $0x13f8] sm:$0xff]
        %v4789 = vld [vmem:[#allocation7 + $0x1400] sm:$0xff]
        %v4790 = vld [vmem:[#allocation7 + $0x1408] sm:$0xff]
        %v4791 = vld [vmem:[#allocation7 + $0x1410] sm:$0xff]
        %v4792 = vld [vmem:[#allocation7 + $0x1418] sm:$0xff]
        %v4793 = vld [vmem:[#allocation7 + $0x1420] sm:$0xff]
        %v4794 = vld [vmem:[#allocation7 + $0x1428] sm:$0xff]
        %v4795 = vld [vmem:[#allocation7 + $0x1430] sm:$0xff]
        %v4796 = vld [vmem:[#allocation7 + $0x1438] sm:$0xff]
        %v4797 = vld [vmem:[#allocation7 + $0x1440] sm:$0xff]
        %v4798 = vld [vmem:[#allocation7 + $0x1448] sm:$0xff]
        %v4799 = vld [vmem:[#allocation7 + $0x1450] sm:$0xff]
        %v4800 = vld [vmem:[#allocation7 + $0x1458] sm:$0xff]
        %v4801 = vld [vmem:[#allocation7 + $0x1460] sm:$0xff]
        %v4802 = vld [vmem:[#allocation7 + $0x1468] sm:$0xff]
        %v4803 = vld [vmem:[#allocation7 + $0x1470] sm:$0xff]
        %v4804 = vld [vmem:[#allocation7 + $0x1478] sm:$0xff]
        %v4805 = vld [vmem:[#allocation7 + $0x1480] sm:$0xff]
        %v4806 = vld [vmem:[#allocation7 + $0x1488] sm:$0xff]
        %v4807 = vld [vmem:[#allocation7 + $0x1490] sm:$0xff]
        %v4808 = vld [vmem:[#allocation7 + $0x1498] sm:$0xff]
        %v4809 = vld [vmem:[#allocation7 + $0x14a0] sm:$0xff]
        %v4810 = vld [vmem:[#allocation7 + $0x14a8] sm:$0xff]
        %v4811 = vld [vmem:[#allocation7 + $0x14b0] sm:$0xff]
        %v4812 = vld [vmem:[#allocation7 + $0x14b8] sm:$0xff]
        %v4813 = vld [vmem:[#allocation7 + $0x14c0] sm:$0xff]
        %v4814 = vld [vmem:[#allocation7 + $0x14c8] sm:$0xff]
        %v4815 = vld [vmem:[#allocation7 + $0x14d0] sm:$0xff]
        %v4816 = vld [vmem:[#allocation7 + $0x14d8] sm:$0xff]
        %v4817 = vld [vmem:[#allocation7 + $0x14e0] sm:$0xff]
        %v4818 = vld [vmem:[#allocation7 + $0x14e8] sm:$0xff]
        %v4819 = vld [vmem:[#allocation7 + $0x14f0] sm:$0xff]
        %v4820 = vld [vmem:[#allocation7 + $0x14f8] sm:$0xff]
        %v4821 = vld [vmem:[#allocation7 + $0x1500] sm:$0xff]
        %v4822 = vld [vmem:[#allocation7 + $0x1508] sm:$0xff]
        %v4823 = vld [vmem:[#allocation7 + $0x1510] sm:$0xff]
        %v4824 = vld [vmem:[#allocation7 + $0x1518] sm:$0xff]
        %v4825 = vld [vmem:[#allocation7 + $0x1520] sm:$0xff]
        %v4826 = vld [vmem:[#allocation7 + $0x1528] sm:$0xff]
        %v4827 = vld [vmem:[#allocation7 + $0x1530] sm:$0xff]
        %v4828 = vld [vmem:[#allocation7 + $0x1538] sm:$0xff]
        %v4829 = vld [vmem:[#allocation7 + $0x1540] sm:$0xff]
        %v4830 = vld [vmem:[#allocation7 + $0x1548] sm:$0xff]
        %v4831 = vld [vmem:[#allocation7 + $0x1550] sm:$0xff]
        %v4832 = vld [vmem:[#allocation7 + $0x1558] sm:$0xff]
        %v4833 = vld [vmem:[#allocation7 + $0x1560] sm:$0xff]
        %v4834 = vld [vmem:[#allocation7 + $0x1568] sm:$0xff]
        %v4835 = vld [vmem:[#allocation7 + $0x1570] sm:$0xff]
        %v4836 = vld [vmem:[#allocation7 + $0x1578] sm:$0xff]
        %v4837 = vld [vmem:[#allocation7 + $0x1580] sm:$0xff]
        %v4838 = vld [vmem:[#allocation7 + $0x1588] sm:$0xff]
        %v4839 = vld [vmem:[#allocation7 + $0x1590] sm:$0xff]
        %v4840 = vld [vmem:[#allocation7 + $0x1598] sm:$0xff]
        %v4841 = vld [vmem:[#allocation7 + $0x15a0] sm:$0xff]
        %v4842 = vld [vmem:[#allocation7 + $0x15a8] sm:$0xff]
        %v4843 = vld [vmem:[#allocation7 + $0x15b0] sm:$0xff]
        %v4844 = vld [vmem:[#allocation7 + $0x15b8] sm:$0xff]
        %v4845 = vld [vmem:[#allocation7 + $0x15c0] sm:$0xff]
        %v4846 = vld [vmem:[#allocation7 + $0x15c8] sm:$0xff]
        %v4847 = vld [vmem:[#allocation7 + $0x15d0] sm:$0xff]
        %v4848 = vld [vmem:[#allocation7 + $0x15d8] sm:$0xff]
        %v4849 = vld [vmem:[#allocation7 + $0x15e0] sm:$0xff]
        %v4850 = vld [vmem:[#allocation7 + $0x15e8] sm:$0xff]
        %v4851 = vld [vmem:[#allocation7 + $0x15f0] sm:$0xff]
        %v4852 = vld [vmem:[#allocation7 + $0x15f8] sm:$0xff]
        %v4853 = vld [vmem:[#allocation7 + $0x1600] sm:$0xff]
        %v4854 = vld [vmem:[#allocation7 + $0x1608] sm:$0xff]
        %v4855 = vld [vmem:[#allocation7 + $0x1610] sm:$0xff]
        %v4856 = vld [vmem:[#allocation7 + $0x1618] sm:$0xff]
        %v4857 = vld [vmem:[#allocation7 + $0x1620] sm:$0xff]
        %v4858 = vld [vmem:[#allocation7 + $0x1628] sm:$0xff]
        %v4859 = vld [vmem:[#allocation7 + $0x1630] sm:$0xff]
        %v4860 = vld [vmem:[#allocation7 + $0x1638] sm:$0xff]
        %v4861 = vld [vmem:[#allocation7 + $0x1640] sm:$0xff]
        %v4862 = vld [vmem:[#allocation7 + $0x1648] sm:$0xff]
        %v4863 = vld [vmem:[#allocation7 + $0x1650] sm:$0xff]
        %v4864 = vld [vmem:[#allocation7 + $0x1658] sm:$0xff]
        %v4865 = vld [vmem:[#allocation7 + $0x1660] sm:$0xff]
        %v4866 = vld [vmem:[#allocation7 + $0x1668] sm:$0xff]
        %v4867 = vld [vmem:[#allocation7 + $0x1670] sm:$0xff]
        %v4868 = vld [vmem:[#allocation7 + $0x1678] sm:$0xff]
        %v4869 = vld [vmem:[#allocation7 + $0x1680] sm:$0xff]
        %v4870 = vld [vmem:[#allocation7 + $0x1688] sm:$0xff]
        %v4871 = vld [vmem:[#allocation7 + $0x1690] sm:$0xff]
        %v4872 = vld [vmem:[#allocation7 + $0x1698] sm:$0xff]
        %v4873 = vld [vmem:[#allocation7 + $0x16a0] sm:$0xff]
        %v4874 = vld [vmem:[#allocation7 + $0x16a8] sm:$0xff]
        %v4875 = vld [vmem:[#allocation7 + $0x16b0] sm:$0xff]
        %v4876 = vld [vmem:[#allocation7 + $0x16b8] sm:$0xff]
        %v4877 = vld [vmem:[#allocation7 + $0x16c0] sm:$0xff]
        %v4878 = vld [vmem:[#allocation7 + $0x16c8] sm:$0xff]
        %v4879 = vld [vmem:[#allocation7 + $0x16d0] sm:$0xff]
        %v4880 = vld [vmem:[#allocation7 + $0x16d8] sm:$0xff]
        %v4881 = vld [vmem:[#allocation7 + $0x16e0] sm:$0xff]
        %v4882 = vld [vmem:[#allocation7 + $0x16e8] sm:$0xff]
        %v4883 = vld [vmem:[#allocation7 + $0x16f0] sm:$0xff]
        %v4884 = vld [vmem:[#allocation7 + $0x16f8] sm:$0xff]
        %v4885 = vld [vmem:[#allocation7 + $0x1700] sm:$0xff]
        %v4886 = vld [vmem:[#allocation7 + $0x1708] sm:$0xff]
        %v4887 = vld [vmem:[#allocation7 + $0x1710] sm:$0xff]
        %v4888 = vld [vmem:[#allocation7 + $0x1718] sm:$0xff]
        %v4889 = vld [vmem:[#allocation7 + $0x1720] sm:$0xff]
        %v4890 = vld [vmem:[#allocation7 + $0x1728] sm:$0xff]
        %v4891 = vld [vmem:[#allocation7 + $0x1730] sm:$0xff]
        %v4892 = vld [vmem:[#allocation7 + $0x1738] sm:$0xff]
        %v4893 = vld [vmem:[#allocation7 + $0x1740] sm:$0xff]
        %v4894 = vld [vmem:[#allocation7 + $0x1748] sm:$0xff]
        %v4895 = vld [vmem:[#allocation7 + $0x1750] sm:$0xff]
        %v4896 = vld [vmem:[#allocation7 + $0x1758] sm:$0xff]
        %v4897 = vld [vmem:[#allocation7 + $0x1760] sm:$0xff]
        %v4898 = vld [vmem:[#allocation7 + $0x1768] sm:$0xff]
        %v4899 = vld [vmem:[#allocation7 + $0x1770] sm:$0xff]
        %v4900 = vld [vmem:[#allocation7 + $0x1778] sm:$0xff]
        %v4901 = vld [vmem:[#allocation7 + $0x1780] sm:$0xff]
        %v4902 = vld [vmem:[#allocation7 + $0x1788] sm:$0xff]
        %v4903 = vld [vmem:[#allocation7 + $0x1790] sm:$0xff]
        %v4904 = vld [vmem:[#allocation7 + $0x1798] sm:$0xff]
        %v4905 = vld [vmem:[#allocation7 + $0x17a0] sm:$0xff]
        %v4906 = vld [vmem:[#allocation7 + $0x17a8] sm:$0xff]
        %v4907 = vld [vmem:[#allocation7 + $0x17b0] sm:$0xff]
        %v4908 = vld [vmem:[#allocation7 + $0x17b8] sm:$0xff]
        %v4909 = vld [vmem:[#allocation7 + $0x17c0] sm:$0xff]
        %v4910 = vld [vmem:[#allocation7 + $0x17c8] sm:$0xff]
        %v4911 = vld [vmem:[#allocation7 + $0x17d0] sm:$0xff]
        %v4912 = vld [vmem:[#allocation7 + $0x17d8] sm:$0xff]
        %v4913 = vld [vmem:[#allocation7 + $0x17e0] sm:$0xff]
        %v4914 = vld [vmem:[#allocation7 + $0x17e8] sm:$0xff]
        %v4915 = vld [vmem:[#allocation7 + $0x17f0] sm:$0xff]
        %v4916 = vld [vmem:[#allocation7 + $0x17f8] sm:$0xff]
        %v4917 = vld [vmem:[#allocation7 + $0x1800] sm:$0xff]
        %v4918 = vld [vmem:[#allocation7 + $0x1808] sm:$0xff]
        %v4919 = vld [vmem:[#allocation7 + $0x1810] sm:$0xff]
        %v4920 = vld [vmem:[#allocation7 + $0x1818] sm:$0xff]
        %v4921 = vld [vmem:[#allocation7 + $0x1820] sm:$0xff]
        %v4922 = vld [vmem:[#allocation7 + $0x1828] sm:$0xff]
        %v4923 = vld [vmem:[#allocation7 + $0x1830] sm:$0xff]
        %v4924 = vld [vmem:[#allocation7 + $0x1838] sm:$0xff]
        %v4925 = vld [vmem:[#allocation7 + $0x1840] sm:$0xff]
        %v4926 = vld [vmem:[#allocation7 + $0x1848] sm:$0xff]
        %v4927 = vld [vmem:[#allocation7 + $0x1850] sm:$0xff]
        %v4928 = vld [vmem:[#allocation7 + $0x1858] sm:$0xff]
        %v4929 = vld [vmem:[#allocation7 + $0x1860] sm:$0xff]
        %v4930 = vld [vmem:[#allocation7 + $0x1868] sm:$0xff]
        %v4931 = vld [vmem:[#allocation7 + $0x1870] sm:$0xff]
        %v4932 = vld [vmem:[#allocation7 + $0x1878] sm:$0xff]
        %v4933 = vld [vmem:[#allocation7 + $0x1880] sm:$0xff]
        %v4934 = vld [vmem:[#allocation7 + $0x1888] sm:$0xff]
        %v4935 = vld [vmem:[#allocation7 + $0x1890] sm:$0xff]
        %v4936 = vld [vmem:[#allocation7 + $0x1898] sm:$0xff]
        %v4937 = vld [vmem:[#allocation7 + $0x18a0] sm:$0xff]
        %v4938 = vld [vmem:[#allocation7 + $0x18a8] sm:$0xff]
        %v4939 = vld [vmem:[#allocation7 + $0x18b0] sm:$0xff]
        %v4940 = vld [vmem:[#allocation7 + $0x18b8] sm:$0xff]
        %v4941 = vld [vmem:[#allocation7 + $0x18c0] sm:$0xff]
        %v4942 = vld [vmem:[#allocation7 + $0x18c8] sm:$0xff]
        %v4943 = vld [vmem:[#allocation7 + $0x18d0] sm:$0xff]
        %v4944 = vld [vmem:[#allocation7 + $0x18d8] sm:$0xff]
        %v4945 = vld [vmem:[#allocation7 + $0x18e0] sm:$0xff]
        %v4946 = vld [vmem:[#allocation7 + $0x18e8] sm:$0xff]
        %v4947 = vld [vmem:[#allocation7 + $0x18f0] sm:$0xff]
        %v4948 = vld [vmem:[#allocation7 + $0x18f8] sm:$0xff]
        %v4949 = vld [vmem:[#allocation7 + $0x1900] sm:$0xff]
        %v4950 = vld [vmem:[#allocation7 + $0x1908] sm:$0xff]
        %v4951 = vld [vmem:[#allocation7 + $0x1910] sm:$0xff]
        %v4952 = vld [vmem:[#allocation7 + $0x1918] sm:$0xff]
        %v4953 = vld [vmem:[#allocation7 + $0x1920] sm:$0xff]
        %v4954 = vld [vmem:[#allocation7 + $0x1928] sm:$0xff]
        %v4955 = vld [vmem:[#allocation7 + $0x1930] sm:$0xff]
        %v4956 = vld [vmem:[#allocation7 + $0x1938] sm:$0xff]
        %v4957 = vld [vmem:[#allocation7 + $0x1940] sm:$0xff]
        %v4958 = vld [vmem:[#allocation7 + $0x1948] sm:$0xff]
        %v4959 = vld [vmem:[#allocation7 + $0x1950] sm:$0xff]
        %v4960 = vld [vmem:[#allocation7 + $0x1958] sm:$0xff]
        %v4961 = vld [vmem:[#allocation7 + $0x1960] sm:$0xff]
        %v4962 = vld [vmem:[#allocation7 + $0x1968] sm:$0xff]
        %v4963 = vld [vmem:[#allocation7 + $0x1970] sm:$0xff]
        %v4964 = vld [vmem:[#allocation7 + $0x1978] sm:$0xff]
        %v4965 = vld [vmem:[#allocation7 + $0x1980] sm:$0xff]
        %v4966 = vld [vmem:[#allocation7 + $0x1988] sm:$0xff]
        %v4967 = vld [vmem:[#allocation7 + $0x1990] sm:$0xff]
        %v4968 = vld [vmem:[#allocation7 + $0x1998] sm:$0xff]
        %v4969 = vld [vmem:[#allocation7 + $0x19a0] sm:$0xff]
        %v4970 = vld [vmem:[#allocation7 + $0x19a8] sm:$0xff]
        %v4971 = vld [vmem:[#allocation7 + $0x19b0] sm:$0xff]
        %v4972 = vld [vmem:[#allocation7 + $0x19b8] sm:$0xff]
        %v4973 = vld [vmem:[#allocation7 + $0x19c0] sm:$0xff]
        %v4974 = vld [vmem:[#allocation7 + $0x19c8] sm:$0xff]
        %v4975 = vld [vmem:[#allocation7 + $0x19d0] sm:$0xff]
        %v4976 = vld [vmem:[#allocation7 + $0x19d8] sm:$0xff]
        %v4977 = vld [vmem:[#allocation7 + $0x19e0] sm:$0xff]
        %v4978 = vld [vmem:[#allocation7 + $0x19e8] sm:$0xff]
        %v4979 = vld [vmem:[#allocation7 + $0x19f0] sm:$0xff]
        %v4980 = vld [vmem:[#allocation7 + $0x19f8] sm:$0xff]
        %v4981 = vld [vmem:[#allocation7 + $0x1a00] sm:$0xff]
        %v4982 = vld [vmem:[#allocation7 + $0x1a08] sm:$0xff]
        %v4983 = vld [vmem:[#allocation7 + $0x1a10] sm:$0xff]
        %v4984 = vld [vmem:[#allocation7 + $0x1a18] sm:$0xff]
        %v4985 = vld [vmem:[#allocation7 + $0x1a20] sm:$0xff]
        %v4986 = vld [vmem:[#allocation7 + $0x1a28] sm:$0xff]
        %v4987 = vld [vmem:[#allocation7 + $0x1a30] sm:$0xff]
        %v4988 = vld [vmem:[#allocation7 + $0x1a38] sm:$0xff]
        %v4989 = vld [vmem:[#allocation7 + $0x1a40] sm:$0xff]
        %v4990 = vld [vmem:[#allocation7 + $0x1a48] sm:$0xff]
        %v4991 = vld [vmem:[#allocation7 + $0x1a50] sm:$0xff]
        %v4992 = vld [vmem:[#allocation7 + $0x1a58] sm:$0xff]
        %v4993 = vld [vmem:[#allocation7 + $0x1a60] sm:$0xff]
        %v4994 = vld [vmem:[#allocation7 + $0x1a68] sm:$0xff]
        %v4995 = vld [vmem:[#allocation7 + $0x1a70] sm:$0xff]
        %v4996 = vld [vmem:[#allocation7 + $0x1a78] sm:$0xff]
        %v4997 = vld [vmem:[#allocation7 + $0x1a80] sm:$0xff]
        %v4998 = vld [vmem:[#allocation7 + $0x1a88] sm:$0xff]
        %v4999 = vld [vmem:[#allocation7 + $0x1a90] sm:$0xff]
        %v5000 = vld [vmem:[#allocation7 + $0x1a98] sm:$0xff]
        %v5001 = vld [vmem:[#allocation7 + $0x1aa0] sm:$0xff]
        %v5002 = vld [vmem:[#allocation7 + $0x1aa8] sm:$0xff]
        %v5003 = vld [vmem:[#allocation7 + $0x1ab0] sm:$0xff]
        %v5004 = vld [vmem:[#allocation7 + $0x1ab8] sm:$0xff]
        %v5005 = vld [vmem:[#allocation7 + $0x1ac0] sm:$0xff]
        %v5006 = vld [vmem:[#allocation7 + $0x1ac8] sm:$0xff]
        %v5007 = vld [vmem:[#allocation7 + $0x1ad0] sm:$0xff]
        %v5008 = vld [vmem:[#allocation7 + $0x1ad8] sm:$0xff]
        %v5009 = vld [vmem:[#allocation7 + $0x1ae0] sm:$0xff]
        %v5010 = vld [vmem:[#allocation7 + $0x1ae8] sm:$0xff]
        %v5011 = vld [vmem:[#allocation7 + $0x1af0] sm:$0xff]
        %v5012 = vld [vmem:[#allocation7 + $0x1af8] sm:$0xff]
        %v5013 = vld [vmem:[#allocation7 + $0x1b00] sm:$0xff]
        %v5014 = vld [vmem:[#allocation7 + $0x1b08] sm:$0xff]
        %v5015 = vld [vmem:[#allocation7 + $0x1b10] sm:$0xff]
        %v5016 = vld [vmem:[#allocation7 + $0x1b18] sm:$0xff]
        %v5017 = vld [vmem:[#allocation7 + $0x1b20] sm:$0xff]
        %v5018 = vld [vmem:[#allocation7 + $0x1b28] sm:$0xff]
        %v5019 = vld [vmem:[#allocation7 + $0x1b30] sm:$0xff]
        %v5020 = vld [vmem:[#allocation7 + $0x1b38] sm:$0xff]
        %v5021 = vld [vmem:[#allocation7 + $0x1b40] sm:$0xff]
        %v5022 = vld [vmem:[#allocation7 + $0x1b48] sm:$0xff]
        %v5023 = vld [vmem:[#allocation7 + $0x1b50] sm:$0xff]
        %v5024 = vld [vmem:[#allocation7 + $0x1b58] sm:$0xff]
        %v5025 = vld [vmem:[#allocation7 + $0x1b60] sm:$0xff]
        %v5026 = vld [vmem:[#allocation7 + $0x1b68] sm:$0xff]
        %v5027 = vld [vmem:[#allocation7 + $0x1b70] sm:$0xff]
        %v5028 = vld [vmem:[#allocation7 + $0x1b78] sm:$0xff]
        %v5029 = vld [vmem:[#allocation7 + $0x1b80] sm:$0xff]
        %v5030 = vld [vmem:[#allocation7 + $0x1b88] sm:$0xff]
        %v5031 = vld [vmem:[#allocation7 + $0x1b90] sm:$0xff]
        %v5032 = vld [vmem:[#allocation7 + $0x1b98] sm:$0xff]
        %v5033 = vld [vmem:[#allocation7 + $0x1ba0] sm:$0xff]
        %v5034 = vld [vmem:[#allocation7 + $0x1ba8] sm:$0xff]
        %v5035 = vld [vmem:[#allocation7 + $0x1bb0] sm:$0xff]
        %v5036 = vld [vmem:[#allocation7 + $0x1bb8] sm:$0xff]
        %v5037 = vld [vmem:[#allocation7 + $0x1bc0] sm:$0xff]
        %v5038 = vld [vmem:[#allocation7 + $0x1bc8] sm:$0xff]
        %v5039 = vld [vmem:[#allocation7 + $0x1bd0] sm:$0xff]
        %v5040 = vld [vmem:[#allocation7 + $0x1bd8] sm:$0xff]
        %v5041 = vld [vmem:[#allocation7 + $0x1be0] sm:$0xff]
        %v5042 = vld [vmem:[#allocation7 + $0x1be8] sm:$0xff]
        %v5043 = vld [vmem:[#allocation7 + $0x1bf0] sm:$0xff]
        %v5044 = vld [vmem:[#allocation7 + $0x1bf8] sm:$0xff]
        %v5045 = vld [vmem:[#allocation7 + $0x1c00] sm:$0xff]
        %v5046 = vld [vmem:[#allocation7 + $0x1c08] sm:$0xff]
        %v5047 = vld [vmem:[#allocation7 + $0x1c10] sm:$0xff]
        %v5048 = vld [vmem:[#allocation7 + $0x1c18] sm:$0xff]
        %v5049 = vld [vmem:[#allocation7 + $0x1c20] sm:$0xff]
        %v5050 = vld [vmem:[#allocation7 + $0x1c28] sm:$0xff]
        %v5051 = vld [vmem:[#allocation7 + $0x1c30] sm:$0xff]
        %v5052 = vld [vmem:[#allocation7 + $0x1c38] sm:$0xff]
        %v5053 = vld [vmem:[#allocation7 + $0x1c40] sm:$0xff]
        %v5054 = vld [vmem:[#allocation7 + $0x1c48] sm:$0xff]
        %v5055 = vld [vmem:[#allocation7 + $0x1c50] sm:$0xff]
        %v5056 = vld [vmem:[#allocation7 + $0x1c58] sm:$0xff]
        %v5057 = vld [vmem:[#allocation7 + $0x1c60] sm:$0xff]
        %v5058 = vld [vmem:[#allocation7 + $0x1c68] sm:$0xff]
        %v5059 = vld [vmem:[#allocation7 + $0x1c70] sm:$0xff]
        %v5060 = vld [vmem:[#allocation7 + $0x1c78] sm:$0xff]
        %v5061 = vld [vmem:[#allocation7 + $0x1c80] sm:$0xff]
        %v5062 = vld [vmem:[#allocation7 + $0x1c88] sm:$0xff]
        %v5063 = vld [vmem:[#allocation7 + $0x1c90] sm:$0xff]
        %v5064 = vld [vmem:[#allocation7 + $0x1c98] sm:$0xff]
        %v5065 = vld [vmem:[#allocation7 + $0x1ca0] sm:$0xff]
        %v5066 = vld [vmem:[#allocation7 + $0x1ca8] sm:$0xff]
        %v5067 = vld [vmem:[#allocation7 + $0x1cb0] sm:$0xff]
        %v5068 = vld [vmem:[#allocation7 + $0x1cb8] sm:$0xff]
        %v5069 = vld [vmem:[#allocation7 + $0x1cc0] sm:$0xff]
        %v5070 = vld [vmem:[#allocation7 + $0x1cc8] sm:$0xff]
        %v5071 = vld [vmem:[#allocation7 + $0x1cd0] sm:$0xff]
        %v5072 = vld [vmem:[#allocation7 + $0x1cd8] sm:$0xff]
        %v5073 = vld [vmem:[#allocation7 + $0x1ce0] sm:$0xff]
        %v5074 = vld [vmem:[#allocation7 + $0x1ce8] sm:$0xff]
        %v5075 = vld [vmem:[#allocation7 + $0x1cf0] sm:$0xff]
        %v5076 = vld [vmem:[#allocation7 + $0x1cf8] sm:$0xff]
        %v5077 = vld [vmem:[#allocation7 + $0x1d00] sm:$0xff]
        %v5078 = vld [vmem:[#allocation7 + $0x1d08] sm:$0xff]
        %v5079 = vld [vmem:[#allocation7 + $0x1d10] sm:$0xff]
        %v5080 = vld [vmem:[#allocation7 + $0x1d18] sm:$0xff]
        %v5081 = vld [vmem:[#allocation7 + $0x1d20] sm:$0xff]
        %v5082 = vld [vmem:[#allocation7 + $0x1d28] sm:$0xff]
        %v5083 = vld [vmem:[#allocation7 + $0x1d30] sm:$0xff]
        %v5084 = vld [vmem:[#allocation7 + $0x1d38] sm:$0xff]
        %v5085 = vld [vmem:[#allocation7 + $0x1d40] sm:$0xff]
        %v5086 = vld [vmem:[#allocation7 + $0x1d48] sm:$0xff]
        %v5087 = vld [vmem:[#allocation7 + $0x1d50] sm:$0xff]
        %v5088 = vld [vmem:[#allocation7 + $0x1d58] sm:$0xff]
        %v5089 = vld [vmem:[#allocation7 + $0x1d60] sm:$0xff]
        %v5090 = vld [vmem:[#allocation7 + $0x1d68] sm:$0xff]
        %v5091 = vld [vmem:[#allocation7 + $0x1d70] sm:$0xff]
        %v5092 = vld [vmem:[#allocation7 + $0x1d78] sm:$0xff]
        %v5093 = vld [vmem:[#allocation7 + $0x1d80] sm:$0xff]
        %v5094 = vld [vmem:[#allocation7 + $0x1d88] sm:$0xff]
        %v5095 = vld [vmem:[#allocation7 + $0x1d90] sm:$0xff]
        %v5096 = vld [vmem:[#allocation7 + $0x1d98] sm:$0xff]
        %v5097 = vld [vmem:[#allocation7 + $0x1da0] sm:$0xff]
        %v5098 = vld [vmem:[#allocation7 + $0x1da8] sm:$0xff]
        %v5099 = vld [vmem:[#allocation7 + $0x1db0] sm:$0xff]
        %v5100 = vld [vmem:[#allocation7 + $0x1db8] sm:$0xff]
        %v5101 = vld [vmem:[#allocation7 + $0x1dc0] sm:$0xff]
        %v5102 = vld [vmem:[#allocation7 + $0x1dc8] sm:$0xff]
        %v5103 = vld [vmem:[#allocation7 + $0x1dd0] sm:$0xff]
        %v5104 = vld [vmem:[#allocation7 + $0x1dd8] sm:$0xff]
        %v5105 = vld [vmem:[#allocation7 + $0x1de0] sm:$0xff]
        %v5106 = vld [vmem:[#allocation7 + $0x1de8] sm:$0xff]
        %v5107 = vld [vmem:[#allocation7 + $0x1df0] sm:$0xff]
        %v5108 = vld [vmem:[#allocation7 + $0x1df8] sm:$0xff]
        %v5109 = vld [vmem:[#allocation7 + $0x1e00] sm:$0xff]
        %v5110 = vld [vmem:[#allocation7 + $0x1e08] sm:$0xff]
        %v5111 = vld [vmem:[#allocation7 + $0x1e10] sm:$0xff]
        %v5112 = vld [vmem:[#allocation7 + $0x1e18] sm:$0xff]
        %v5113 = vld [vmem:[#allocation7 + $0x1e20] sm:$0xff]
        %v5114 = vld [vmem:[#allocation7 + $0x1e28] sm:$0xff]
        %v5115 = vld [vmem:[#allocation7 + $0x1e30] sm:$0xff]
        %v5116 = vld [vmem:[#allocation7 + $0x1e38] sm:$0xff]
        %v5117 = vld [vmem:[#allocation7 + $0x1e40] sm:$0xff]
        %v5118 = vld [vmem:[#allocation7 + $0x1e48] sm:$0xff]
        %v5119 = vld [vmem:[#allocation7 + $0x1e50] sm:$0xff]
        %v5120 = vld [vmem:[#allocation7 + $0x1e58] sm:$0xff]
        %v5121 = vld [vmem:[#allocation7 + $0x1e60] sm:$0xff]
        %v5122 = vld [vmem:[#allocation7 + $0x1e68] sm:$0xff]
        %v5123 = vld [vmem:[#allocation7 + $0x1e70] sm:$0xff]
        %v5124 = vld [vmem:[#allocation7 + $0x1e78] sm:$0xff]
        %v5125 = vld [vmem:[#allocation7 + $0x1e80] sm:$0xff]
        %v5126 = vld [vmem:[#allocation7 + $0x1e88] sm:$0xff]
        %v5127 = vld [vmem:[#allocation7 + $0x1e90] sm:$0xff]
        %v5128 = vld [vmem:[#allocation7 + $0x1e98] sm:$0xff]
        %v5129 = vld [vmem:[#allocation7 + $0x1ea0] sm:$0xff]
        %v5130 = vld [vmem:[#allocation7 + $0x1ea8] sm:$0xff]
        %v5131 = vld [vmem:[#allocation7 + $0x1eb0] sm:$0xff]
        %v5132 = vld [vmem:[#allocation7 + $0x1eb8] sm:$0xff]
        %v5133 = vld [vmem:[#allocation7 + $0x1ec0] sm:$0xff]
        %v5134 = vld [vmem:[#allocation7 + $0x1ec8] sm:$0xff]
        %v5135 = vld [vmem:[#allocation7 + $0x1ed0] sm:$0xff]
        %v5136 = vld [vmem:[#allocation7 + $0x1ed8] sm:$0xff]
        %v5137 = vld [vmem:[#allocation7 + $0x1ee0] sm:$0xff]
        %v5138 = vld [vmem:[#allocation7 + $0x1ee8] sm:$0xff]
        %v5139 = vld [vmem:[#allocation7 + $0x1ef0] sm:$0xff]
        %v5140 = vld [vmem:[#allocation7 + $0x1ef8] sm:$0xff]
        %v5141 = vld [vmem:[#allocation7 + $0x1f00] sm:$0xff]
        %v5142 = vld [vmem:[#allocation7 + $0x1f08] sm:$0xff]
        %v5143 = vld [vmem:[#allocation7 + $0x1f10] sm:$0xff]
        %v5144 = vld [vmem:[#allocation7 + $0x1f18] sm:$0xff]
        %v5145 = vld [vmem:[#allocation7 + $0x1f20] sm:$0xff]
        %v5146 = vld [vmem:[#allocation7 + $0x1f28] sm:$0xff]
        %v5147 = vld [vmem:[#allocation7 + $0x1f30] sm:$0xff]
        %v5148 = vld [vmem:[#allocation7 + $0x1f38] sm:$0xff]
        %v5149 = vld [vmem:[#allocation7 + $0x1f40] sm:$0xff]
        %v5150 = vld [vmem:[#allocation7 + $0x1f48] sm:$0xff]
        %v5151 = vld [vmem:[#allocation7 + $0x1f50] sm:$0xff]
        %v5152 = vld [vmem:[#allocation7 + $0x1f58] sm:$0xff]
        %v5153 = vld [vmem:[#allocation7 + $0x1f60] sm:$0xff]
        %v5154 = vld [vmem:[#allocation7 + $0x1f68] sm:$0xff]
        %v5155 = vld [vmem:[#allocation7 + $0x1f70] sm:$0xff]
        %v5156 = vld [vmem:[#allocation7 + $0x1f78] sm:$0xff]
        %v5157 = vld [vmem:[#allocation7 + $0x1f80] sm:$0xff]
        %v5158 = vld [vmem:[#allocation7 + $0x1f88] sm:$0xff]
        %v5159 = vld [vmem:[#allocation7 + $0x1f90] sm:$0xff]
        %v5160 = vld [vmem:[#allocation7 + $0x1f98] sm:$0xff]
        %v5161 = vld [vmem:[#allocation7 + $0x1fa0] sm:$0xff]
        %v5162 = vld [vmem:[#allocation7 + $0x1fa8] sm:$0xff]
        %v5163 = vld [vmem:[#allocation7 + $0x1fb0] sm:$0xff]
        %v5164 = vld [vmem:[#allocation7 + $0x1fb8] sm:$0xff]
        %v5165 = vld [vmem:[#allocation7 + $0x1fc0] sm:$0xff]
        %v5166 = vld [vmem:[#allocation7 + $0x1fc8] sm:$0xff]
        %v5167 = vld [vmem:[#allocation7 + $0x1fd0] sm:$0xff]
        %v5168 = vld [vmem:[#allocation7 + $0x1fd8] sm:$0xff]
        %v5169 = vld [vmem:[#allocation7 + $0x1fe0] sm:$0xff]
        %v5170 = vld [vmem:[#allocation7 + $0x1fe8] sm:$0xff]
        %v5171 = vld [vmem:[#allocation7 + $0x1ff0] sm:$0xff]
        %v5172 = vld [vmem:[#allocation7 + $0x1ff8] sm:$0xff]
        %v5173 = vld [vmem:[#allocation7 + $0x2000] sm:$0xff]
        %v5174 = vld [vmem:[#allocation7 + $0x2008] sm:$0xff]
        %v5175 = vld [vmem:[#allocation7 + $0x2010] sm:$0xff]
        %v5176 = vld [vmem:[#allocation7 + $0x2018] sm:$0xff]
        %v5177 = vld [vmem:[#allocation7 + $0x2020] sm:$0xff]
        %v5178 = vld [vmem:[#allocation7 + $0x2028] sm:$0xff]
        %v5179 = vld [vmem:[#allocation7 + $0x2030] sm:$0xff]
        %v5180 = vld [vmem:[#allocation7 + $0x2038] sm:$0xff]
        %v5181 = vld [vmem:[#allocation7 + $0x2040] sm:$0xff]
        %v5182 = vld [vmem:[#allocation7 + $0x2048] sm:$0xff]
        %v5183 = vld [vmem:[#allocation7 + $0x2050] sm:$0xff]
        %v5184 = vld [vmem:[#allocation7 + $0x2058] sm:$0xff]
        %v5185 = vld [vmem:[#allocation7 + $0x2060] sm:$0xff]
        %v5186 = vld [vmem:[#allocation7 + $0x2068] sm:$0xff]
        %v5187 = vld [vmem:[#allocation7 + $0x2070] sm:$0xff]
        %v5188 = vld [vmem:[#allocation7 + $0x2078] sm:$0xff]
        %v5189 = vld [vmem:[#allocation7 + $0x2080] sm:$0xff]
        %v5190 = vld [vmem:[#allocation7 + $0x2088] sm:$0xff]
        %v5191 = vld [vmem:[#allocation7 + $0x2090] sm:$0xff]
        %v5192 = vld [vmem:[#allocation7 + $0x2098] sm:$0xff]
        %v5193 = vld [vmem:[#allocation7 + $0x20a0] sm:$0xff]
        %v5194 = vld [vmem:[#allocation7 + $0x20a8] sm:$0xff]
        %v5195 = vld [vmem:[#allocation7 + $0x20b0] sm:$0xff]
        %v5196 = vld [vmem:[#allocation7 + $0x20b8] sm:$0xff]
        %v5197 = vld [vmem:[#allocation7 + $0x20c0] sm:$0xff]
        %v5198 = vld [vmem:[#allocation7 + $0x20c8] sm:$0xff]
        %v5199 = vld [vmem:[#allocation7 + $0x20d0] sm:$0xff]
        %v5200 = vld [vmem:[#allocation7 + $0x20d8] sm:$0xff]
        %v5201 = vld [vmem:[#allocation7 + $0x20e0] sm:$0xff]
        %v5202 = vld [vmem:[#allocation7 + $0x20e8] sm:$0xff]
        %v5203 = vld [vmem:[#allocation7 + $0x20f0] sm:$0xff]
        %v5204 = vld [vmem:[#allocation7 + $0x20f8] sm:$0xff]
        %v5205 = vld [vmem:[#allocation7 + $0x2100] sm:$0xff]
        %v5206 = vld [vmem:[#allocation7 + $0x2108] sm:$0xff]
        %v5207 = vld [vmem:[#allocation7 + $0x2110] sm:$0xff]
        %v5208 = vld [vmem:[#allocation7 + $0x2118] sm:$0xff]
        %v5209 = vld [vmem:[#allocation7 + $0x2120] sm:$0xff]
        %v5210 = vld [vmem:[#allocation7 + $0x2128] sm:$0xff]
        %v5211 = vld [vmem:[#allocation7 + $0x2130] sm:$0xff]
        %v5212 = vld [vmem:[#allocation7 + $0x2138] sm:$0xff]
        %v5213 = vld [vmem:[#allocation7 + $0x2140] sm:$0xff]
        %v5214 = vld [vmem:[#allocation7 + $0x2148] sm:$0xff]
        %v5215 = vld [vmem:[#allocation7 + $0x2150] sm:$0xff]
        %v5216 = vld [vmem:[#allocation7 + $0x2158] sm:$0xff]
        %v5217 = vld [vmem:[#allocation7 + $0x2160] sm:$0xff]
        %v5218 = vld [vmem:[#allocation7 + $0x2168] sm:$0xff]
        %v5219 = vld [vmem:[#allocation7 + $0x2170] sm:$0xff]
        %v5220 = vld [vmem:[#allocation7 + $0x2178] sm:$0xff]
        %v5221 = vld [vmem:[#allocation7 + $0x2180] sm:$0xff]
        %v5222 = vld [vmem:[#allocation7 + $0x2188] sm:$0xff]
        %v5223 = vld [vmem:[#allocation7 + $0x2190] sm:$0xff]
        %v5224 = vld [vmem:[#allocation7 + $0x2198] sm:$0xff]
        %v5225 = vld [vmem:[#allocation7 + $0x21a0] sm:$0xff]
        %v5226 = vld [vmem:[#allocation7 + $0x21a8] sm:$0xff]
        %v5227 = vld [vmem:[#allocation7 + $0x21b0] sm:$0xff]
        %v5228 = vld [vmem:[#allocation7 + $0x21b8] sm:$0xff]
        %v5229 = vld [vmem:[#allocation7 + $0x21c0] sm:$0xff]
        %v5230 = vld [vmem:[#allocation7 + $0x21c8] sm:$0xff]
        %v5231 = vld [vmem:[#allocation7 + $0x21d0] sm:$0xff]
        %v5232 = vld [vmem:[#allocation7 + $0x21d8] sm:$0xff]
        %v5233 = vld [vmem:[#allocation7 + $0x21e0] sm:$0xff]
        %v5234 = vld [vmem:[#allocation7 + $0x21e8] sm:$0xff]
        %v5235 = vld [vmem:[#allocation7 + $0x21f0] sm:$0xff]
        %v5236 = vld [vmem:[#allocation7 + $0x21f8] sm:$0xff]
        %v5237 = vld [vmem:[#allocation7 + $0x2200] sm:$0xff]
        %v5238 = vld [vmem:[#allocation7 + $0x2208] sm:$0xff]
        %v5239 = vld [vmem:[#allocation7 + $0x2210] sm:$0xff]
        %v5240 = vld [vmem:[#allocation7 + $0x2218] sm:$0xff]
        %v5241 = vld [vmem:[#allocation7 + $0x2220] sm:$0xff]
        %v5242 = vld [vmem:[#allocation7 + $0x2228] sm:$0xff]
        %v5243 = vld [vmem:[#allocation7 + $0x2230] sm:$0xff]
        %v5244 = vld [vmem:[#allocation7 + $0x2238] sm:$0xff]
        %v5245 = vld [vmem:[#allocation7 + $0x2240] sm:$0xff]
        %v5246 = vld [vmem:[#allocation7 + $0x2248] sm:$0xff]
        %v5247 = vld [vmem:[#allocation7 + $0x2250] sm:$0xff]
        %v5248 = vld [vmem:[#allocation7 + $0x2258] sm:$0xff]
        %v5249 = vld [vmem:[#allocation7 + $0x2260] sm:$0xff]
        %v5250 = vld [vmem:[#allocation7 + $0x2268] sm:$0xff]
        %v5251 = vld [vmem:[#allocation7 + $0x2270] sm:$0xff]
        %v5252 = vld [vmem:[#allocation7 + $0x2278] sm:$0xff]
        %v5253 = vld [vmem:[#allocation7 + $0x2280] sm:$0xff]
        %v5254 = vld [vmem:[#allocation7 + $0x2288] sm:$0xff]
        %v5255 = vld [vmem:[#allocation7 + $0x2290] sm:$0xff]
        %v5256 = vld [vmem:[#allocation7 + $0x2298] sm:$0xff]
        %v5257 = vld [vmem:[#allocation7 + $0x22a0] sm:$0xff]
        %v5258 = vld [vmem:[#allocation7 + $0x22a8] sm:$0xff]
        %v5259 = vld [vmem:[#allocation7 + $0x22b0] sm:$0xff]
        %v5260 = vld [vmem:[#allocation7 + $0x22b8] sm:$0xff]
        %v5261 = vld [vmem:[#allocation7 + $0x22c0] sm:$0xff]
        %v5262 = vld [vmem:[#allocation7 + $0x22c8] sm:$0xff]
        %v5263 = vld [vmem:[#allocation7 + $0x22d0] sm:$0xff]
        %v5264 = vld [vmem:[#allocation7 + $0x22d8] sm:$0xff]
        %v5265 = vld [vmem:[#allocation7 + $0x22e0] sm:$0xff]
        %v5266 = vld [vmem:[#allocation7 + $0x22e8] sm:$0xff]
        %v5267 = vld [vmem:[#allocation7 + $0x22f0] sm:$0xff]
        %v5268 = vld [vmem:[#allocation7 + $0x22f8] sm:$0xff]
        %v5269 = vld [vmem:[#allocation7 + $0x2300] sm:$0xff]
        %v5270 = vld [vmem:[#allocation7 + $0x2308] sm:$0xff]
        %v5271 = vld [vmem:[#allocation7 + $0x2310] sm:$0xff]
        %v5272 = vld [vmem:[#allocation7 + $0x2318] sm:$0xff]
        %v5273 = vld [vmem:[#allocation7 + $0x2320] sm:$0xff]
        %v5274 = vld [vmem:[#allocation7 + $0x2328] sm:$0xff]
        %v5275 = vld [vmem:[#allocation7 + $0x2330] sm:$0xff]
        %v5276 = vld [vmem:[#allocation7 + $0x2338] sm:$0xff]
        %v5277 = vld [vmem:[#allocation7 + $0x2340] sm:$0xff]
        %v5278 = vld [vmem:[#allocation7 + $0x2348] sm:$0xff]
        %v5279 = vld [vmem:[#allocation7 + $0x2350] sm:$0xff]
        %v5280 = vld [vmem:[#allocation7 + $0x2358] sm:$0xff]
        %v5281 = vld [vmem:[#allocation7 + $0x2360] sm:$0xff]
        %v5282 = vld [vmem:[#allocation7 + $0x2368] sm:$0xff]
        %v5283 = vld [vmem:[#allocation7 + $0x2370] sm:$0xff]
        %v5284 = vld [vmem:[#allocation7 + $0x2378] sm:$0xff]
        %v5285 = vld [vmem:[#allocation7 + $0x2380] sm:$0xff]
        %v5286 = vld [vmem:[#allocation7 + $0x2388] sm:$0xff]
        %v5287 = vld [vmem:[#allocation7 + $0x2390] sm:$0xff]
        %v5288 = vld [vmem:[#allocation7 + $0x2398] sm:$0xff]
        %v5289 = vld [vmem:[#allocation7 + $0x23a0] sm:$0xff]
        %v5290 = vld [vmem:[#allocation7 + $0x23a8] sm:$0xff]
        %v5291 = vld [vmem:[#allocation7 + $0x23b0] sm:$0xff]
        %v5292 = vld [vmem:[#allocation7 + $0x23b8] sm:$0xff]
        %v5293 = vld [vmem:[#allocation7 + $0x23c0] sm:$0xff]
        %v5294 = vld [vmem:[#allocation7 + $0x23c8] sm:$0xff]
        %v5295 = vld [vmem:[#allocation7 + $0x23d0] sm:$0xff]
        %v5296 = vld [vmem:[#allocation7 + $0x23d8] sm:$0xff]
        %v5297 = vld [vmem:[#allocation7 + $0x23e0] sm:$0xff]
        %v5298 = vld [vmem:[#allocation7 + $0x23e8] sm:$0xff]
        %v5299 = vld [vmem:[#allocation7 + $0x23f0] sm:$0xff]
        %v5300 = vld [vmem:[#allocation7 + $0x23f8] sm:$0xff]
        %v5301 = vld [vmem:[#allocation7 + $0x2400] sm:$0xff]
        %v5302 = vld [vmem:[#allocation7 + $0x2408] sm:$0xff]
        %v5303 = vld [vmem:[#allocation7 + $0x2410] sm:$0xff]
        %v5304 = vld [vmem:[#allocation7 + $0x2418] sm:$0xff]
        %v5305 = vld [vmem:[#allocation7 + $0x2420] sm:$0xff]
        %v5306 = vld [vmem:[#allocation7 + $0x2428] sm:$0xff]
        %v5307 = vld [vmem:[#allocation7 + $0x2430] sm:$0xff]
        %v5308 = vld [vmem:[#allocation7 + $0x2438] sm:$0xff]
        %v5309 = vld [vmem:[#allocation7 + $0x2440] sm:$0xff]
        %v5310 = vld [vmem:[#allocation7 + $0x2448] sm:$0xff]
        %v5311 = vld [vmem:[#allocation7 + $0x2450] sm:$0xff]
        %v5312 = vld [vmem:[#allocation7 + $0x2458] sm:$0xff]
        %v5313 = vld [vmem:[#allocation7 + $0x2460] sm:$0xff]
        %v5314 = vld [vmem:[#allocation7 + $0x2468] sm:$0xff]
        %v5315 = vld [vmem:[#allocation7 + $0x2470] sm:$0xff]
        %v5316 = vld [vmem:[#allocation7 + $0x2478] sm:$0xff]
        %v5317 = vld [vmem:[#allocation7 + $0x2480] sm:$0xff]
        %v5318 = vld [vmem:[#allocation7 + $0x2488] sm:$0xff]
        %v5319 = vld [vmem:[#allocation7 + $0x2490] sm:$0xff]
        %v5320 = vld [vmem:[#allocation7 + $0x2498] sm:$0xff]
        %v5321 = vld [vmem:[#allocation7 + $0x24a0] sm:$0xff]
        %v5322 = vld [vmem:[#allocation7 + $0x24a8] sm:$0xff]
        %v5323 = vld [vmem:[#allocation7 + $0x24b0] sm:$0xff]
        %v5324 = vld [vmem:[#allocation7 + $0x24b8] sm:$0xff]
        %v5325 = vld [vmem:[#allocation7 + $0x24c0] sm:$0xff]
        %v5326 = vld [vmem:[#allocation7 + $0x24c8] sm:$0xff]
        %v5327 = vld [vmem:[#allocation7 + $0x24d0] sm:$0xff]
        %v5328 = vld [vmem:[#allocation7 + $0x24d8] sm:$0xff]
        %v5329 = vld [vmem:[#allocation7 + $0x24e0] sm:$0xff]
        %v5330 = vld [vmem:[#allocation7 + $0x24e8] sm:$0xff]
        %v5331 = vld [vmem:[#allocation7 + $0x24f0] sm:$0xff]
        %v5332 = vld [vmem:[#allocation7 + $0x24f8] sm:$0xff]
        %v5333 = vld [vmem:[#allocation7 + $0x2500] sm:$0xff]
        %v5334 = vld [vmem:[#allocation7 + $0x2508] sm:$0xff]
        %v5335 = vld [vmem:[#allocation7 + $0x2510] sm:$0xff]
        %v5336 = vld [vmem:[#allocation7 + $0x2518] sm:$0xff]
        %v5337 = vld [vmem:[#allocation7 + $0x2520] sm:$0xff]
        %v5338 = vld [vmem:[#allocation7 + $0x2528] sm:$0xff]
        %v5339 = vld [vmem:[#allocation7 + $0x2530] sm:$0xff]
        %v5340 = vld [vmem:[#allocation7 + $0x2538] sm:$0xff]
        %v5341 = vld [vmem:[#allocation7 + $0x2540] sm:$0xff]
        %v5342 = vld [vmem:[#allocation7 + $0x2548] sm:$0xff]
        %v5343 = vld [vmem:[#allocation7 + $0x2550] sm:$0xff]
        %v5344 = vld [vmem:[#allocation7 + $0x2558] sm:$0xff]
        %v5345 = vld [vmem:[#allocation7 + $0x2560] sm:$0xff]
        %v5346 = vld [vmem:[#allocation7 + $0x2568] sm:$0xff]
        %v5347 = vld [vmem:[#allocation7 + $0x2570] sm:$0xff]
        %v5348 = vld [vmem:[#allocation7 + $0x2578] sm:$0xff]
        %v5349 = vld [vmem:[#allocation7 + $0x2580] sm:$0xff]
        %v5350 = vld [vmem:[#allocation7 + $0x2588] sm:$0xff]
        %v5351 = vld [vmem:[#allocation7 + $0x2590] sm:$0xff]
        %v5352 = vld [vmem:[#allocation7 + $0x2598] sm:$0xff]
        %v5353 = vld [vmem:[#allocation7 + $0x25a0] sm:$0xff]
        %v5354 = vld [vmem:[#allocation7 + $0x25a8] sm:$0xff]
        %v5355 = vld [vmem:[#allocation7 + $0x25b0] sm:$0xff]
        %v5356 = vld [vmem:[#allocation7 + $0x25b8] sm:$0xff]
        %v5357 = vld [vmem:[#allocation7 + $0x25c0] sm:$0xff]
        %v5358 = vld [vmem:[#allocation7 + $0x25c8] sm:$0xff]
        %v5359 = vld [vmem:[#allocation7 + $0x25d0] sm:$0xff]
        %v5360 = vld [vmem:[#allocation7 + $0x25d8] sm:$0xff]
        %v5361 = vld [vmem:[#allocation7 + $0x25e0] sm:$0xff]
        %v5362 = vld [vmem:[#allocation7 + $0x25e8] sm:$0xff]
        %v5363 = vld [vmem:[#allocation7 + $0x25f0] sm:$0xff]
        %v5364 = vld [vmem:[#allocation7 + $0x25f8] sm:$0xff]
        %v5365 = vld [vmem:[#allocation7 + $0x2600] sm:$0xff]
        %v5366 = vld [vmem:[#allocation7 + $0x2608] sm:$0xff]
        %v5367 = vld [vmem:[#allocation7 + $0x2610] sm:$0xff]
        %v5368 = vld [vmem:[#allocation7 + $0x2618] sm:$0xff]
        %v5369 = vld [vmem:[#allocation7 + $0x2620] sm:$0xff]
        %v5370 = vld [vmem:[#allocation7 + $0x2628] sm:$0xff]
        %v5371 = vld [vmem:[#allocation7 + $0x2630] sm:$0xff]
        %v5372 = vld [vmem:[#allocation7 + $0x2638] sm:$0xff]
        %v5373 = vld [vmem:[#allocation7 + $0x2640] sm:$0xff]
        %v5374 = vld [vmem:[#allocation7 + $0x2648] sm:$0xff]
        %v5375 = vld [vmem:[#allocation7 + $0x2650] sm:$0xff]
        %v5376 = vld [vmem:[#allocation7 + $0x2658] sm:$0xff]
        %v5377 = vld [vmem:[#allocation7 + $0x2660] sm:$0xff]
        %v5378 = vld [vmem:[#allocation7 + $0x2668] sm:$0xff]
        %v5379 = vld [vmem:[#allocation7 + $0x2670] sm:$0xff]
        %v5380 = vld [vmem:[#allocation7 + $0x2678] sm:$0xff]
        %v5381 = vld [vmem:[#allocation7 + $0x2680] sm:$0xff]
        %v5382 = vld [vmem:[#allocation7 + $0x2688] sm:$0xff]
        %v5383 = vld [vmem:[#allocation7 + $0x2690] sm:$0xff]
        %v5384 = vld [vmem:[#allocation7 + $0x2698] sm:$0xff]
        %v5385 = vld [vmem:[#allocation7 + $0x26a0] sm:$0xff]
        %v5386 = vld [vmem:[#allocation7 + $0x26a8] sm:$0xff]
        %v5387 = vld [vmem:[#allocation7 + $0x26b0] sm:$0xff]
        %v5388 = vld [vmem:[#allocation7 + $0x26b8] sm:$0xff]
        %v5389 = vld [vmem:[#allocation7 + $0x26c0] sm:$0xff]
        %v5390 = vld [vmem:[#allocation7 + $0x26c8] sm:$0xff]
        %v5391 = vld [vmem:[#allocation7 + $0x26d0] sm:$0xff]
        %v5392 = vld [vmem:[#allocation7 + $0x26d8] sm:$0xff]
        %v5393 = vld [vmem:[#allocation7 + $0x26e0] sm:$0xff]
        %v5394 = vld [vmem:[#allocation7 + $0x26e8] sm:$0xff]
        %v5395 = vld [vmem:[#allocation7 + $0x26f0] sm:$0xff]
        %v5396 = vld [vmem:[#allocation7 + $0x26f8] sm:$0xff]
        %v5397 = vld [vmem:[#allocation7 + $0x2700] sm:$0xff]
        %v5398 = vld [vmem:[#allocation7 + $0x2708] sm:$0xff]
        %v5399 = vld [vmem:[#allocation7 + $0x2710] sm:$0xff]
        %v5400 = vld [vmem:[#allocation7 + $0x2718] sm:$0xff]
        %v5401 = vld [vmem:[#allocation7 + $0x2720] sm:$0xff]
        %v5402 = vld [vmem:[#allocation7 + $0x2728] sm:$0xff]
        %v5403 = vld [vmem:[#allocation7 + $0x2730] sm:$0xff]
        %v5404 = vld [vmem:[#allocation7 + $0x2738] sm:$0xff]
        %v5405 = vld [vmem:[#allocation7 + $0x2740] sm:$0xff]
        %v5406 = vld [vmem:[#allocation7 + $0x2748] sm:$0xff]
        %v5407 = vld [vmem:[#allocation7 + $0x2750] sm:$0xff]
        %v5408 = vld [vmem:[#allocation7 + $0x2758] sm:$0xff]
        %v5409 = vld [vmem:[#allocation7 + $0x2760] sm:$0xff]
        %v5410 = vld [vmem:[#allocation7 + $0x2768] sm:$0xff]
        %v5411 = vld [vmem:[#allocation7 + $0x2770] sm:$0xff]
        %v5412 = vld [vmem:[#allocation7 + $0x2778] sm:$0xff]
        %v5413 = vld [vmem:[#allocation7 + $0x2780] sm:$0xff]
        %v5414 = vld [vmem:[#allocation7 + $0x2788] sm:$0xff]
        %v5415 = vld [vmem:[#allocation7 + $0x2790] sm:$0xff]
        %v5416 = vld [vmem:[#allocation7 + $0x2798] sm:$0xff]
        %v5417 = vld [vmem:[#allocation7 + $0x27a0] sm:$0xff]
        %v5418 = vld [vmem:[#allocation7 + $0x27a8] sm:$0xff]
        %v5419 = vld [vmem:[#allocation7 + $0x27b0] sm:$0xff]
        %v5420 = vld [vmem:[#allocation7 + $0x27b8] sm:$0xff]
        %v5421 = vld [vmem:[#allocation7 + $0x27c0] sm:$0xff]
        %v5422 = vld [vmem:[#allocation7 + $0x27c8] sm:$0xff]
        %v5423 = vld [vmem:[#allocation7 + $0x27d0] sm:$0xff]
        %v5424 = vld [vmem:[#allocation7 + $0x27d8] sm:$0xff]
        %v5425 = vld [vmem:[#allocation7 + $0x27e0] sm:$0xff]
        %v5426 = vld [vmem:[#allocation7 + $0x27e8] sm:$0xff]
        %v5427 = vld [vmem:[#allocation7 + $0x27f0] sm:$0xff]
        %v5428 = vld [vmem:[#allocation7 + $0x27f8] sm:$0xff]
        %v5429 = vld [vmem:[#allocation7 + $0x2800] sm:$0xff]
        %v5430 = vld [vmem:[#allocation7 + $0x2808] sm:$0xff]
        %v5431 = vld [vmem:[#allocation7 + $0x2810] sm:$0xff]
        %v5432 = vld [vmem:[#allocation7 + $0x2818] sm:$0xff]
        %v5433 = vld [vmem:[#allocation7 + $0x2820] sm:$0xff]
        %v5434 = vld [vmem:[#allocation7 + $0x2828] sm:$0xff]
        %v5435 = vld [vmem:[#allocation7 + $0x2830] sm:$0xff]
        %v5436 = vld [vmem:[#allocation7 + $0x2838] sm:$0xff]
        %v5437 = vld [vmem:[#allocation7 + $0x2840] sm:$0xff]
        %v5438 = vld [vmem:[#allocation7 + $0x2848] sm:$0xff]
        %v5439 = vld [vmem:[#allocation7 + $0x2850] sm:$0xff]
        %v5440 = vld [vmem:[#allocation7 + $0x2858] sm:$0xff]
        %v5441 = vld [vmem:[#allocation7 + $0x2860] sm:$0xff]
        %v5442 = vld [vmem:[#allocation7 + $0x2868] sm:$0xff]
        %v5443 = vld [vmem:[#allocation7 + $0x2870] sm:$0xff]
        %v5444 = vld [vmem:[#allocation7 + $0x2878] sm:$0xff]
        %v5445 = vld [vmem:[#allocation7 + $0x2880] sm:$0xff]
        %v5446 = vld [vmem:[#allocation7 + $0x2888] sm:$0xff]
        %v5447 = vld [vmem:[#allocation7 + $0x2890] sm:$0xff]
        %v5448 = vld [vmem:[#allocation7 + $0x2898] sm:$0xff]
        %v5449 = vld [vmem:[#allocation7 + $0x28a0] sm:$0xff]
        %v5450 = vld [vmem:[#allocation7 + $0x28a8] sm:$0xff]
        %v5451 = vld [vmem:[#allocation7 + $0x28b0] sm:$0xff]
        %v5452 = vld [vmem:[#allocation7 + $0x28b8] sm:$0xff]
        %v5453 = vld [vmem:[#allocation7 + $0x28c0] sm:$0xff]
        %v5454 = vld [vmem:[#allocation7 + $0x28c8] sm:$0xff]
        %v5455 = vld [vmem:[#allocation7 + $0x28d0] sm:$0xff]
        %v5456 = vld [vmem:[#allocation7 + $0x28d8] sm:$0xff]
        %v5457 = vld [vmem:[#allocation7 + $0x28e0] sm:$0xff]
        %v5458 = vld [vmem:[#allocation7 + $0x28e8] sm:$0xff]
        %v5459 = vld [vmem:[#allocation7 + $0x28f0] sm:$0xff]
        %v5460 = vld [vmem:[#allocation7 + $0x28f8] sm:$0xff]
        %v5461 = vld [vmem:[#allocation7 + $0x2900] sm:$0xff]
        %v5462 = vld [vmem:[#allocation7 + $0x2908] sm:$0xff]
        %v5463 = vld [vmem:[#allocation7 + $0x2910] sm:$0xff]
        %v5464 = vld [vmem:[#allocation7 + $0x2918] sm:$0xff]
        %v5465 = vld [vmem:[#allocation7 + $0x2920] sm:$0xff]
        %v5466 = vld [vmem:[#allocation7 + $0x2928] sm:$0xff]
        %v5467 = vld [vmem:[#allocation7 + $0x2930] sm:$0xff]
        %v5468 = vld [vmem:[#allocation7 + $0x2938] sm:$0xff]
        %v5469 = vld [vmem:[#allocation7 + $0x2940] sm:$0xff]
        %v5470 = vld [vmem:[#allocation7 + $0x2948] sm:$0xff]
        %v5471 = vld [vmem:[#allocation7 + $0x2950] sm:$0xff]
        %v5472 = vld [vmem:[#allocation7 + $0x2958] sm:$0xff]
        %v5473 = vld [vmem:[#allocation7 + $0x2960] sm:$0xff]
        %v5474 = vld [vmem:[#allocation7 + $0x2968] sm:$0xff]
        %v5475 = vld [vmem:[#allocation7 + $0x2970] sm:$0xff]
        %v5476 = vld [vmem:[#allocation7 + $0x2978] sm:$0xff]
        %v5477 = vld [vmem:[#allocation7 + $0x2980] sm:$0xff]
        %v5478 = vld [vmem:[#allocation7 + $0x2988] sm:$0xff]
        %v5479 = vld [vmem:[#allocation7 + $0x2990] sm:$0xff]
        %v5480 = vld [vmem:[#allocation7 + $0x2998] sm:$0xff]
        %v5481 = vld [vmem:[#allocation7 + $0x29a0] sm:$0xff]
        %v5482 = vld [vmem:[#allocation7 + $0x29a8] sm:$0xff]
        %v5483 = vld [vmem:[#allocation7 + $0x29b0] sm:$0xff]
        %v5484 = vld [vmem:[#allocation7 + $0x29b8] sm:$0xff]
        %v5485 = vld [vmem:[#allocation7 + $0x29c0] sm:$0xff]
        %v5486 = vld [vmem:[#allocation7 + $0x29c8] sm:$0xff]
        %v5487 = vld [vmem:[#allocation7 + $0x29d0] sm:$0xff]
        %v5488 = vld [vmem:[#allocation7 + $0x29d8] sm:$0xff]
        %v5489 = vld [vmem:[#allocation7 + $0x29e0] sm:$0xff]
        %v5490 = vld [vmem:[#allocation7 + $0x29e8] sm:$0xff]
        %v5491 = vld [vmem:[#allocation7 + $0x29f0] sm:$0xff]
        %v5492 = vld [vmem:[#allocation7 + $0x29f8] sm:$0xff]
        %v5493 = vld [vmem:[#allocation7 + $0x2a00] sm:$0xff]
        %v5494 = vld [vmem:[#allocation7 + $0x2a08] sm:$0xff]
        %v5495 = vld [vmem:[#allocation7 + $0x2a10] sm:$0xff]
        %v5496 = vld [vmem:[#allocation7 + $0x2a18] sm:$0xff]
        %v5497 = vld [vmem:[#allocation7 + $0x2a20] sm:$0xff]
        %v5498 = vld [vmem:[#allocation7 + $0x2a28] sm:$0xff]
        %v5499 = vld [vmem:[#allocation7 + $0x2a30] sm:$0xff]
        %v5500 = vld [vmem:[#allocation7 + $0x2a38] sm:$0xff]
        %v5501 = vld [vmem:[#allocation7 + $0x2a40] sm:$0xff]
        %v5502 = vld [vmem:[#allocation7 + $0x2a48] sm:$0xff]
        %v5503 = vld [vmem:[#allocation7 + $0x2a50] sm:$0xff]
        %v5504 = vld [vmem:[#allocation7 + $0x2a58] sm:$0xff]
        %v5505 = vld [vmem:[#allocation7 + $0x2a60] sm:$0xff]
        %v5506 = vld [vmem:[#allocation7 + $0x2a68] sm:$0xff]
        %v5507 = vld [vmem:[#allocation7 + $0x2a70] sm:$0xff]
        %v5508 = vld [vmem:[#allocation7 + $0x2a78] sm:$0xff]
        %v5509 = vld [vmem:[#allocation7 + $0x2a80] sm:$0xff]
        %v5510 = vld [vmem:[#allocation7 + $0x2a88] sm:$0xff]
        %v5511 = vld [vmem:[#allocation7 + $0x2a90] sm:$0xff]
        %v5512 = vld [vmem:[#allocation7 + $0x2a98] sm:$0xff]
        %v5513 = vld [vmem:[#allocation7 + $0x2aa0] sm:$0xff]
        %v5514 = vld [vmem:[#allocation7 + $0x2aa8] sm:$0xff]
        %v5515 = vld [vmem:[#allocation7 + $0x2ab0] sm:$0xff]
        %v5516 = vld [vmem:[#allocation7 + $0x2ab8] sm:$0xff]
        %v5517 = vld [vmem:[#allocation7 + $0x2ac0] sm:$0xff]
        %v5518 = vld [vmem:[#allocation7 + $0x2ac8] sm:$0xff]
        %v5519 = vld [vmem:[#allocation7 + $0x2ad0] sm:$0xff]
        %v5520 = vld [vmem:[#allocation7 + $0x2ad8] sm:$0xff]
        %v5521 = vld [vmem:[#allocation7 + $0x2ae0] sm:$0xff]
        %v5522 = vld [vmem:[#allocation7 + $0x2ae8] sm:$0xff]
        %v5523 = vld [vmem:[#allocation7 + $0x2af0] sm:$0xff]
        %v5524 = vld [vmem:[#allocation7 + $0x2af8] sm:$0xff]
        %v5525 = vld [vmem:[#allocation7 + $0x2b00] sm:$0xff]
        %v5526 = vld [vmem:[#allocation7 + $0x2b08] sm:$0xff]
        %v5527 = vld [vmem:[#allocation7 + $0x2b10] sm:$0xff]
        %v5528 = vld [vmem:[#allocation7 + $0x2b18] sm:$0xff]
        %v5529 = vld [vmem:[#allocation7 + $0x2b20] sm:$0xff]
        %v5530 = vld [vmem:[#allocation7 + $0x2b28] sm:$0xff]
        %v5531 = vld [vmem:[#allocation7 + $0x2b30] sm:$0xff]
        %v5532 = vld [vmem:[#allocation7 + $0x2b38] sm:$0xff]
        %v5533 = vld [vmem:[#allocation7 + $0x2b40] sm:$0xff]
        %v5534 = vld [vmem:[#allocation7 + $0x2b48] sm:$0xff]
        %v5535 = vld [vmem:[#allocation7 + $0x2b50] sm:$0xff]
        %v5536 = vld [vmem:[#allocation7 + $0x2b58] sm:$0xff]
        %v5537 = vld [vmem:[#allocation7 + $0x2b60] sm:$0xff]
        %v5538 = vld [vmem:[#allocation7 + $0x2b68] sm:$0xff]
        %v5539 = vld [vmem:[#allocation7 + $0x2b70] sm:$0xff]
        %v5540 = vld [vmem:[#allocation7 + $0x2b78] sm:$0xff]
        %v5541 = vld [vmem:[#allocation7 + $0x2b80] sm:$0xff]
        %v5542 = vld [vmem:[#allocation7 + $0x2b88] sm:$0xff]
        %v5543 = vld [vmem:[#allocation7 + $0x2b90] sm:$0xff]
        %v5544 = vld [vmem:[#allocation7 + $0x2b98] sm:$0xff]
        %v5545 = vld [vmem:[#allocation7 + $0x2ba0] sm:$0xff]
        %v5546 = vld [vmem:[#allocation7 + $0x2ba8] sm:$0xff]
        %v5547 = vld [vmem:[#allocation7 + $0x2bb0] sm:$0xff]
        %v5548 = vld [vmem:[#allocation7 + $0x2bb8] sm:$0xff]
        %v5549 = vld [vmem:[#allocation7 + $0x2bc0] sm:$0xff]
        %v5550 = vld [vmem:[#allocation7 + $0x2bc8] sm:$0xff]
        %v5551 = vld [vmem:[#allocation7 + $0x2bd0] sm:$0xff]
        %v5552 = vld [vmem:[#allocation7 + $0x2bd8] sm:$0xff]
        %v5553 = vld [vmem:[#allocation7 + $0x2be0] sm:$0xff]
        %v5554 = vld [vmem:[#allocation7 + $0x2be8] sm:$0xff]
        %v5555 = vld [vmem:[#allocation7 + $0x2bf0] sm:$0xff]
        %v5556 = vld [vmem:[#allocation7 + $0x2bf8] sm:$0xff]
        %v5557 = vld [vmem:[#allocation7 + $0x2c00] sm:$0xff]
        %v5558 = vld [vmem:[#allocation7 + $0x2c08] sm:$0xff]
        %v5559 = vld [vmem:[#allocation7 + $0x2c10] sm:$0xff]
        %v5560 = vld [vmem:[#allocation7 + $0x2c18] sm:$0xff]
        %v5561 = vld [vmem:[#allocation7 + $0x2c20] sm:$0xff]
        %v5562 = vld [vmem:[#allocation7 + $0x2c28] sm:$0xff]
        %v5563 = vld [vmem:[#allocation7 + $0x2c30] sm:$0xff]
        %v5564 = vld [vmem:[#allocation7 + $0x2c38] sm:$0xff]
        %v5565 = vld [vmem:[#allocation7 + $0x2c40] sm:$0xff]
        %v5566 = vld [vmem:[#allocation7 + $0x2c48] sm:$0xff]
        %v5567 = vld [vmem:[#allocation7 + $0x2c50] sm:$0xff]
        %v5568 = vld [vmem:[#allocation7 + $0x2c58] sm:$0xff]
        %v5569 = vld [vmem:[#allocation7 + $0x2c60] sm:$0xff]
        %v5570 = vld [vmem:[#allocation7 + $0x2c68] sm:$0xff]
        %v5571 = vld [vmem:[#allocation7 + $0x2c70] sm:$0xff]
        %v5572 = vld [vmem:[#allocation7 + $0x2c78] sm:$0xff]
        %v5573 = vld [vmem:[#allocation7 + $0x2c80] sm:$0xff]
        %v5574 = vld [vmem:[#allocation7 + $0x2c88] sm:$0xff]
        %v5575 = vld [vmem:[#allocation7 + $0x2c90] sm:$0xff]
        %v5576 = vld [vmem:[#allocation7 + $0x2c98] sm:$0xff]
        %v5577 = vld [vmem:[#allocation7 + $0x2ca0] sm:$0xff]
        %v5578 = vld [vmem:[#allocation7 + $0x2ca8] sm:$0xff]
        %v5579 = vld [vmem:[#allocation7 + $0x2cb0] sm:$0xff]
        %v5580 = vld [vmem:[#allocation7 + $0x2cb8] sm:$0xff]
        %v5581 = vld [vmem:[#allocation7 + $0x2cc0] sm:$0xff]
        %v5582 = vld [vmem:[#allocation7 + $0x2cc8] sm:$0xff]
        %v5583 = vld [vmem:[#allocation7 + $0x2cd0] sm:$0xff]
        %v5584 = vld [vmem:[#allocation7 + $0x2cd8] sm:$0xff]
        %v5585 = vld [vmem:[#allocation7 + $0x2ce0] sm:$0xff]
        %v5586 = vld [vmem:[#allocation7 + $0x2ce8] sm:$0xff]
        %v5587 = vld [vmem:[#allocation7 + $0x2cf0] sm:$0xff]
        %v5588 = vld [vmem:[#allocation7 + $0x2cf8] sm:$0xff]
        %v5589 = vld [vmem:[#allocation7 + $0x2d00] sm:$0xff]
        %v5590 = vld [vmem:[#allocation7 + $0x2d08] sm:$0xff]
        %v5591 = vld [vmem:[#allocation7 + $0x2d10] sm:$0xff]
        %v5592 = vld [vmem:[#allocation7 + $0x2d18] sm:$0xff]
        %v5593 = vld [vmem:[#allocation7 + $0x2d20] sm:$0xff]
        %v5594 = vld [vmem:[#allocation7 + $0x2d28] sm:$0xff]
        %v5595 = vld [vmem:[#allocation7 + $0x2d30] sm:$0xff]
        %v5596 = vld [vmem:[#allocation7 + $0x2d38] sm:$0xff]
        %v5597 = vld [vmem:[#allocation7 + $0x2d40] sm:$0xff]
        %v5598 = vld [vmem:[#allocation7 + $0x2d48] sm:$0xff]
        %v5599 = vld [vmem:[#allocation7 + $0x2d50] sm:$0xff]
        %v5600 = vld [vmem:[#allocation7 + $0x2d58] sm:$0xff]
        %v5601 = vld [vmem:[#allocation7 + $0x2d60] sm:$0xff]
        %v5602 = vld [vmem:[#allocation7 + $0x2d68] sm:$0xff]
        %v5603 = vld [vmem:[#allocation7 + $0x2d70] sm:$0xff]
        %v5604 = vld [vmem:[#allocation7 + $0x2d78] sm:$0xff]
        %v5605 = vld [vmem:[#allocation7 + $0x2d80] sm:$0xff]
        %v5606 = vld [vmem:[#allocation7 + $0x2d88] sm:$0xff]
        %v5607 = vld [vmem:[#allocation7 + $0x2d90] sm:$0xff]
        %v5608 = vld [vmem:[#allocation7 + $0x2d98] sm:$0xff]
        %v5609 = vld [vmem:[#allocation7 + $0x2da0] sm:$0xff]
        %v5610 = vld [vmem:[#allocation7 + $0x2da8] sm:$0xff]
        %v5611 = vld [vmem:[#allocation7 + $0x2db0] sm:$0xff]
        %v5612 = vld [vmem:[#allocation7 + $0x2db8] sm:$0xff]
        %v5613 = vld [vmem:[#allocation7 + $0x2dc0] sm:$0xff]
        %v5614 = vld [vmem:[#allocation7 + $0x2dc8] sm:$0xff]
        %v5615 = vld [vmem:[#allocation7 + $0x2dd0] sm:$0xff]
        %v5616 = vld [vmem:[#allocation7 + $0x2dd8] sm:$0xff]
        %v5617 = vld [vmem:[#allocation7 + $0x2de0] sm:$0xff]
        %v5618 = vld [vmem:[#allocation7 + $0x2de8] sm:$0xff]
        %v5619 = vld [vmem:[#allocation7 + $0x2df0] sm:$0xff]
        %v5620 = vld [vmem:[#allocation7 + $0x2df8] sm:$0xff]
        %v5621 = vld [vmem:[#allocation7 + $0x2e00] sm:$0xff]
        %v5622 = vld [vmem:[#allocation7 + $0x2e08] sm:$0xff]
        %v5623 = vld [vmem:[#allocation7 + $0x2e10] sm:$0xff]
        %v5624 = vld [vmem:[#allocation7 + $0x2e18] sm:$0xff]
        %v5625 = vld [vmem:[#allocation7 + $0x2e20] sm:$0xff]
        %v5626 = vld [vmem:[#allocation7 + $0x2e28] sm:$0xff]
        %v5627 = vld [vmem:[#allocation7 + $0x2e30] sm:$0xff]
        %v5628 = vld [vmem:[#allocation7 + $0x2e38] sm:$0xff]
        %v5629 = vld [vmem:[#allocation7 + $0x2e40] sm:$0xff]
        %v5630 = vld [vmem:[#allocation7 + $0x2e48] sm:$0xff]
        %v5631 = vld [vmem:[#allocation7 + $0x2e50] sm:$0xff]
        %v5632 = vld [vmem:[#allocation7 + $0x2e58] sm:$0xff]
        %v5633 = vld [vmem:[#allocation7 + $0x2e60] sm:$0xff]
        %v5634 = vld [vmem:[#allocation7 + $0x2e68] sm:$0xff]
        %v5635 = vld [vmem:[#allocation7 + $0x2e70] sm:$0xff]
        %v5636 = vld [vmem:[#allocation7 + $0x2e78] sm:$0xff]
        %v5637 = vld [vmem:[#allocation7 + $0x2e80] sm:$0xff]
        %v5638 = vld [vmem:[#allocation7 + $0x2e88] sm:$0xff]
        %v5639 = vld [vmem:[#allocation7 + $0x2e90] sm:$0xff]
        %v5640 = vld [vmem:[#allocation7 + $0x2e98] sm:$0xff]
        %v5641 = vld [vmem:[#allocation7 + $0x2ea0] sm:$0xff]
        %v5642 = vld [vmem:[#allocation7 + $0x2ea8] sm:$0xff]
        %v5643 = vld [vmem:[#allocation7 + $0x2eb0] sm:$0xff]
        %v5644 = vld [vmem:[#allocation7 + $0x2eb8] sm:$0xff]
        %v5645 = vld [vmem:[#allocation7 + $0x2ec0] sm:$0xff]
        %v5646 = vld [vmem:[#allocation7 + $0x2ec8] sm:$0xff]
        %v5647 = vld [vmem:[#allocation7 + $0x2ed0] sm:$0xff]
        %v5648 = vld [vmem:[#allocation7 + $0x2ed8] sm:$0xff]
        %v5649 = vld [vmem:[#allocation7 + $0x2ee0] sm:$0xff]
        %v5650 = vld [vmem:[#allocation7 + $0x2ee8] sm:$0xff]
        %v5651 = vld [vmem:[#allocation7 + $0x2ef0] sm:$0xff]
        %v5652 = vld [vmem:[#allocation7 + $0x2ef8] sm:$0xff]
        %v5653 = vld [vmem:[#allocation7 + $0x2f00] sm:$0xff]
        %v5654 = vld [vmem:[#allocation7 + $0x2f08] sm:$0xff]
        %v5655 = vld [vmem:[#allocation7 + $0x2f10] sm:$0xff]
        %v5656 = vld [vmem:[#allocation7 + $0x2f18] sm:$0xff]
        %v5657 = vld [vmem:[#allocation7 + $0x2f20] sm:$0xff]
        %v5658 = vld [vmem:[#allocation7 + $0x2f28] sm:$0xff]
        %v5659 = vld [vmem:[#allocation7 + $0x2f30] sm:$0xff]
        %v5660 = vld [vmem:[#allocation7 + $0x2f38] sm:$0xff]
        %v5661 = vld [vmem:[#allocation7 + $0x2f40] sm:$0xff]
        %v5662 = vld [vmem:[#allocation7 + $0x2f48] sm:$0xff]
        %v5663 = vld [vmem:[#allocation7 + $0x2f50] sm:$0xff]
        %v5664 = vld [vmem:[#allocation7 + $0x2f58] sm:$0xff]
        %v5665 = vld [vmem:[#allocation7 + $0x2f60] sm:$0xff]
        %v5666 = vld [vmem:[#allocation7 + $0x2f68] sm:$0xff]
        %v5667 = vld [vmem:[#allocation7 + $0x2f70] sm:$0xff]
        %v5668 = vld [vmem:[#allocation7 + $0x2f78] sm:$0xff]
        %v5669 = vld [vmem:[#allocation7 + $0x2f80] sm:$0xff]
        %v5670 = vld [vmem:[#allocation7 + $0x2f88] sm:$0xff]
        %v5671 = vld [vmem:[#allocation7 + $0x2f90] sm:$0xff]
        %v5672 = vld [vmem:[#allocation7 + $0x2f98] sm:$0xff]
        %v5673 = vld [vmem:[#allocation7 + $0x2fa0] sm:$0xff]
        %v5674 = vld [vmem:[#allocation7 + $0x2fa8] sm:$0xff]
        %v5675 = vld [vmem:[#allocation7 + $0x2fb0] sm:$0xff]
        %v5676 = vld [vmem:[#allocation7 + $0x2fb8] sm:$0xff]
        %v5677 = vld [vmem:[#allocation7 + $0x2fc0] sm:$0xff]
        %v5678 = vld [vmem:[#allocation7 + $0x2fc8] sm:$0xff]
        %v5679 = vld [vmem:[#allocation7 + $0x2fd0] sm:$0xff]
        %v5680 = vld [vmem:[#allocation7 + $0x2fd8] sm:$0xff]
        %v5681 = vld [vmem:[#allocation7 + $0x2fe0] sm:$0xff]
        %v5682 = vld [vmem:[#allocation7 + $0x2fe8] sm:$0xff]
        %v5683 = vld [vmem:[#allocation7 + $0x2ff0] sm:$0xff]
        %v5684 = vld [vmem:[#allocation7 + $0x2ff8] sm:$0xff]
        %v5685 = vld [vmem:[#allocation7 + $0x3000] sm:$0xff]
        %v5686 = vld [vmem:[#allocation7 + $0x3008] sm:$0xff]
        %v5687 = vld [vmem:[#allocation7 + $0x3010] sm:$0xff]
        %v5688 = vld [vmem:[#allocation7 + $0x3018] sm:$0xff]
        %v5689 = vld [vmem:[#allocation7 + $0x3020] sm:$0xff]
        %v5690 = vld [vmem:[#allocation7 + $0x3028] sm:$0xff]
        %v5691 = vld [vmem:[#allocation7 + $0x3030] sm:$0xff]
        %v5692 = vld [vmem:[#allocation7 + $0x3038] sm:$0xff]
        %v5693 = vld [vmem:[#allocation7 + $0x3040] sm:$0xff]
        %v5694 = vld [vmem:[#allocation7 + $0x3048] sm:$0xff]
        %v5695 = vld [vmem:[#allocation7 + $0x3050] sm:$0xff]
        %v5696 = vld [vmem:[#allocation7 + $0x3058] sm:$0xff]
        %v5697 = vld [vmem:[#allocation7 + $0x3060] sm:$0xff]
        %v5698 = vld [vmem:[#allocation7 + $0x3068] sm:$0xff]
        %v5699 = vld [vmem:[#allocation7 + $0x3070] sm:$0xff]
        %v5700 = vld [vmem:[#allocation7 + $0x3078] sm:$0xff]
        %v5701 = vld [vmem:[#allocation7 + $0x3080] sm:$0xff]
        %v5702 = vld [vmem:[#allocation7 + $0x3088] sm:$0xff]
        %v5703 = vld [vmem:[#allocation7 + $0x3090] sm:$0xff]
        %v5704 = vld [vmem:[#allocation7 + $0x3098] sm:$0xff]
        %v5705 = vld [vmem:[#allocation7 + $0x30a0] sm:$0xff]
        %v5706 = vld [vmem:[#allocation7 + $0x30a8] sm:$0xff]
        %v5707 = vld [vmem:[#allocation7 + $0x30b0] sm:$0xff]
        %v5708 = vld [vmem:[#allocation7 + $0x30b8] sm:$0xff]
        %v5709 = vld [vmem:[#allocation7 + $0x30c0] sm:$0xff]
        %v5710 = vld [vmem:[#allocation7 + $0x30c8] sm:$0xff]
        %v5711 = vld [vmem:[#allocation7 + $0x30d0] sm:$0xff]
        %v5712 = vld [vmem:[#allocation7 + $0x30d8] sm:$0xff]
        %v5713 = vld [vmem:[#allocation7 + $0x30e0] sm:$0xff]
        %v5714 = vld [vmem:[#allocation7 + $0x30e8] sm:$0xff]
        %v5715 = vld [vmem:[#allocation7 + $0x30f0] sm:$0xff]
        %v5716 = vld [vmem:[#allocation7 + $0x30f8] sm:$0xff]
        %v5717 = vld [vmem:[#allocation7 + $0x3100] sm:$0xff]
        %v5718 = vld [vmem:[#allocation7 + $0x3108] sm:$0xff]
        %v5719 = vld [vmem:[#allocation7 + $0x3110] sm:$0xff]
        %v5720 = vld [vmem:[#allocation7 + $0x3118] sm:$0xff]
        %v5721 = vld [vmem:[#allocation7 + $0x3120] sm:$0xff]
        %v5722 = vld [vmem:[#allocation7 + $0x3128] sm:$0xff]
        %v5723 = vld [vmem:[#allocation7 + $0x3130] sm:$0xff]
        %v5724 = vld [vmem:[#allocation7 + $0x3138] sm:$0xff]
        %v5725 = vld [vmem:[#allocation7 + $0x3140] sm:$0xff]
        %v5726 = vld [vmem:[#allocation7 + $0x3148] sm:$0xff]
        %v5727 = vld [vmem:[#allocation7 + $0x3150] sm:$0xff]
        %v5728 = vld [vmem:[#allocation7 + $0x3158] sm:$0xff]
        %v5729 = vld [vmem:[#allocation7 + $0x3160] sm:$0xff]
        %v5730 = vld [vmem:[#allocation7 + $0x3168] sm:$0xff]
        %v5731 = vld [vmem:[#allocation7 + $0x3170] sm:$0xff]
        %v5732 = vld [vmem:[#allocation7 + $0x3178] sm:$0xff]
        %v5733 = vld [vmem:[#allocation7 + $0x3180] sm:$0xff]
        %v5734 = vld [vmem:[#allocation7 + $0x3188] sm:$0xff]
        %v5735 = vld [vmem:[#allocation7 + $0x3190] sm:$0xff]
        %v5736 = vld [vmem:[#allocation7 + $0x3198] sm:$0xff]
        %v5737 = vld [vmem:[#allocation7 + $0x31a0] sm:$0xff]
        %v5738 = vld [vmem:[#allocation7 + $0x31a8] sm:$0xff]
        %v5739 = vld [vmem:[#allocation7 + $0x31b0] sm:$0xff]
        %v5740 = vld [vmem:[#allocation7 + $0x31b8] sm:$0xff]
        %v5741 = vld [vmem:[#allocation7 + $0x31c0] sm:$0xff]
        %v5742 = vld [vmem:[#allocation7 + $0x31c8] sm:$0xff]
        %v5743 = vld [vmem:[#allocation7 + $0x31d0] sm:$0xff]
        %v5744 = vld [vmem:[#allocation7 + $0x31d8] sm:$0xff]
        %v5745 = vld [vmem:[#allocation7 + $0x31e0] sm:$0xff]
        %v5746 = vld [vmem:[#allocation7 + $0x31e8] sm:$0xff]
        %v5747 = vld [vmem:[#allocation7 + $0x31f0] sm:$0xff]
        %v5748 = vld [vmem:[#allocation7 + $0x31f8] sm:$0xff]
        %v5749 = vld [vmem:[#allocation7 + $0x3200] sm:$0xff]
        %v5750 = vld [vmem:[#allocation7 + $0x3208] sm:$0xff]
        %v5751 = vld [vmem:[#allocation7 + $0x3210] sm:$0xff]
        %v5752 = vld [vmem:[#allocation7 + $0x3218] sm:$0xff]
        %v5753 = vld [vmem:[#allocation7 + $0x3220] sm:$0xff]
        %v5754 = vld [vmem:[#allocation7 + $0x3228] sm:$0xff]
        %v5755 = vld [vmem:[#allocation7 + $0x3230] sm:$0xff]
        %v5756 = vld [vmem:[#allocation7 + $0x3238] sm:$0xff]
        %v5757 = vld [vmem:[#allocation7 + $0x3240] sm:$0xff]
        %v5758 = vld [vmem:[#allocation7 + $0x3248] sm:$0xff]
        %v5759 = vld [vmem:[#allocation7 + $0x3250] sm:$0xff]
        %v5760 = vld [vmem:[#allocation7 + $0x3258] sm:$0xff]
        %v5761 = vld [vmem:[#allocation7 + $0x3260] sm:$0xff]
        %v5762 = vld [vmem:[#allocation7 + $0x3268] sm:$0xff]
        %v5763 = vld [vmem:[#allocation7 + $0x3270] sm:$0xff]
        %v5764 = vld [vmem:[#allocation7 + $0x3278] sm:$0xff]
        %v5765 = vld [vmem:[#allocation7 + $0x3280] sm:$0xff]
        %v5766 = vld [vmem:[#allocation7 + $0x3288] sm:$0xff]
        %v5767 = vld [vmem:[#allocation7 + $0x3290] sm:$0xff]
        %v5768 = vld [vmem:[#allocation7 + $0x3298] sm:$0xff]
        %v5769 = vld [vmem:[#allocation7 + $0x32a0] sm:$0xff]
        %v5770 = vld [vmem:[#allocation7 + $0x32a8] sm:$0xff]
        %v5771 = vld [vmem:[#allocation7 + $0x32b0] sm:$0xff]
        %v5772 = vld [vmem:[#allocation7 + $0x32b8] sm:$0xff]
        %v5773 = vld [vmem:[#allocation7 + $0x32c0] sm:$0xff]
        %v5774 = vld [vmem:[#allocation7 + $0x32c8] sm:$0xff]
        %v5775 = vld [vmem:[#allocation7 + $0x32d0] sm:$0xff]
        %v5776 = vld [vmem:[#allocation7 + $0x32d8] sm:$0xff]
        %v5777 = vld [vmem:[#allocation7 + $0x32e0] sm:$0xff]
        %v5778 = vld [vmem:[#allocation7 + $0x32e8] sm:$0xff]
        %v5779 = vld [vmem:[#allocation7 + $0x32f0] sm:$0xff]
        %v5780 = vld [vmem:[#allocation7 + $0x32f8] sm:$0xff]
        %v5781 = vld [vmem:[#allocation7 + $0x3300] sm:$0xff]
        %v5782 = vld [vmem:[#allocation7 + $0x3308] sm:$0xff]
        %v5783 = vld [vmem:[#allocation7 + $0x3310] sm:$0xff]
        %v5784 = vld [vmem:[#allocation7 + $0x3318] sm:$0xff]
        %v5785 = vld [vmem:[#allocation7 + $0x3320] sm:$0xff]
        %v5786 = vld [vmem:[#allocation7 + $0x3328] sm:$0xff]
        %v5787 = vld [vmem:[#allocation7 + $0x3330] sm:$0xff]
        %v5788 = vld [vmem:[#allocation7 + $0x3338] sm:$0xff]
        %v5789 = vld [vmem:[#allocation7 + $0x3340] sm:$0xff]
        %v5790 = vld [vmem:[#allocation7 + $0x3348] sm:$0xff]
        %v5791 = vld [vmem:[#allocation7 + $0x3350] sm:$0xff]
        %v5792 = vld [vmem:[#allocation7 + $0x3358] sm:$0xff]
        %v5793 = vld [vmem:[#allocation7 + $0x3360] sm:$0xff]
        %v5794 = vld [vmem:[#allocation7 + $0x3368] sm:$0xff]
        %v5795 = vld [vmem:[#allocation7 + $0x3370] sm:$0xff]
        %v5796 = vld [vmem:[#allocation7 + $0x3378] sm:$0xff]
        %v5797 = vld [vmem:[#allocation7 + $0x3380] sm:$0xff]
        %v5798 = vld [vmem:[#allocation7 + $0x3388] sm:$0xff]
        %v5799 = vld [vmem:[#allocation7 + $0x3390] sm:$0xff]
        %v5800 = vld [vmem:[#allocation7 + $0x3398] sm:$0xff]
        %v5801 = vld [vmem:[#allocation7 + $0x33a0] sm:$0xff]
        %v5802 = vld [vmem:[#allocation7 + $0x33a8] sm:$0xff]
        %v5803 = vld [vmem:[#allocation7 + $0x33b0] sm:$0xff]
        %v5804 = vld [vmem:[#allocation7 + $0x33b8] sm:$0xff]
        %v5805 = vld [vmem:[#allocation7 + $0x33c0] sm:$0xff]
        %v5806 = vld [vmem:[#allocation7 + $0x33c8] sm:$0xff]
        %v5807 = vld [vmem:[#allocation7 + $0x33d0] sm:$0xff]
        %v5808 = vld [vmem:[#allocation7 + $0x33d8] sm:$0xff]
        %v5809 = vld [vmem:[#allocation7 + $0x33e0] sm:$0xff]
        %v5810 = vld [vmem:[#allocation7 + $0x33e8] sm:$0xff]
        %v5811 = vld [vmem:[#allocation7 + $0x33f0] sm:$0xff]
        %v5812 = vld [vmem:[#allocation7 + $0x33f8] sm:$0xff]
        %v5813 = vld [vmem:[#allocation7 + $0x3400] sm:$0xff]
        %v5814 = vld [vmem:[#allocation7 + $0x3408] sm:$0xff]
        %v5815 = vld [vmem:[#allocation7 + $0x3410] sm:$0xff]
        %v5816 = vld [vmem:[#allocation7 + $0x3418] sm:$0xff]
        %v5817 = vld [vmem:[#allocation7 + $0x3420] sm:$0xff]
        %v5818 = vld [vmem:[#allocation7 + $0x3428] sm:$0xff]
        %v5819 = vld [vmem:[#allocation7 + $0x3430] sm:$0xff]
        %v5820 = vld [vmem:[#allocation7 + $0x3438] sm:$0xff]
        %v5821 = vld [vmem:[#allocation7 + $0x3440] sm:$0xff]
        %v5822 = vld [vmem:[#allocation7 + $0x3448] sm:$0xff]
        %v5823 = vld [vmem:[#allocation7 + $0x3450] sm:$0xff]
        %v5824 = vld [vmem:[#allocation7 + $0x3458] sm:$0xff]
        %v5825 = vld [vmem:[#allocation7 + $0x3460] sm:$0xff]
        %v5826 = vld [vmem:[#allocation7 + $0x3468] sm:$0xff]
        %v5827 = vld [vmem:[#allocation7 + $0x3470] sm:$0xff]
        %v5828 = vld [vmem:[#allocation7 + $0x3478] sm:$0xff]
        %v5829 = vld [vmem:[#allocation7 + $0x3480] sm:$0xff]
        %v5830 = vld [vmem:[#allocation7 + $0x3488] sm:$0xff]
        %v5831 = vld [vmem:[#allocation7 + $0x3490] sm:$0xff]
        %v5832 = vld [vmem:[#allocation7 + $0x3498] sm:$0xff]
        %v5833 = vld [vmem:[#allocation7 + $0x34a0] sm:$0xff]
        %v5834 = vld [vmem:[#allocation7 + $0x34a8] sm:$0xff]
        %v5835 = vld [vmem:[#allocation7 + $0x34b0] sm:$0xff]
        %v5836 = vld [vmem:[#allocation7 + $0x34b8] sm:$0xff]
        %v5837 = vld [vmem:[#allocation7 + $0x34c0] sm:$0xff]
        %v5838 = vld [vmem:[#allocation7 + $0x34c8] sm:$0xff]
        %v5839 = vld [vmem:[#allocation7 + $0x34d0] sm:$0xff]
        %v5840 = vld [vmem:[#allocation7 + $0x34d8] sm:$0xff]
        %v5841 = vld [vmem:[#allocation7 + $0x34e0] sm:$0xff]
        %v5842 = vld [vmem:[#allocation7 + $0x34e8] sm:$0xff]
        %v5843 = vld [vmem:[#allocation7 + $0x34f0] sm:$0xff]
        %v5844 = vld [vmem:[#allocation7 + $0x34f8] sm:$0xff]
        %v5845 = vld [vmem:[#allocation7 + $0x3500] sm:$0xff]
        %v5846 = vld [vmem:[#allocation7 + $0x3508] sm:$0xff]
        %v5847 = vld [vmem:[#allocation7 + $0x3510] sm:$0xff]
        %v5848 = vld [vmem:[#allocation7 + $0x3518] sm:$0xff]
        %v5849 = vld [vmem:[#allocation7 + $0x3520] sm:$0xff]
        %v5850 = vld [vmem:[#allocation7 + $0x3528] sm:$0xff]
        %v5851 = vld [vmem:[#allocation7 + $0x3530] sm:$0xff]
        %v5852 = vld [vmem:[#allocation7 + $0x3538] sm:$0xff]
        %v5853 = vld [vmem:[#allocation7 + $0x3540] sm:$0xff]
        %v5854 = vld [vmem:[#allocation7 + $0x3548] sm:$0xff]
        %v5855 = vld [vmem:[#allocation7 + $0x3550] sm:$0xff]
        %v5856 = vld [vmem:[#allocation7 + $0x3558] sm:$0xff]
        %v5857 = vld [vmem:[#allocation7 + $0x3560] sm:$0xff]
        %v5858 = vld [vmem:[#allocation7 + $0x3568] sm:$0xff]
        %v5859 = vld [vmem:[#allocation7 + $0x3570] sm:$0xff]
        %v5860 = vld [vmem:[#allocation7 + $0x3578] sm:$0xff]
        %v5861 = vld [vmem:[#allocation7 + $0x3580] sm:$0xff]
        %v5862 = vld [vmem:[#allocation7 + $0x3588] sm:$0xff]
        %v5863 = vld [vmem:[#allocation7 + $0x3590] sm:$0xff]
        %v5864 = vld [vmem:[#allocation7 + $0x3598] sm:$0xff]
        %v5865 = vld [vmem:[#allocation7 + $0x35a0] sm:$0xff]
        %v5866 = vld [vmem:[#allocation7 + $0x35a8] sm:$0xff]
        %v5867 = vld [vmem:[#allocation7 + $0x35b0] sm:$0xff]
        %v5868 = vld [vmem:[#allocation7 + $0x35b8] sm:$0xff]
        %v5869 = vld [vmem:[#allocation7 + $0x35c0] sm:$0xff]
        %v5870 = vld [vmem:[#allocation7 + $0x35c8] sm:$0xff]
        %v5871 = vld [vmem:[#allocation7 + $0x35d0] sm:$0xff]
        %v5872 = vld [vmem:[#allocation7 + $0x35d8] sm:$0xff]
        %v5873 = vld [vmem:[#allocation7 + $0x35e0] sm:$0xff]
        %v5874 = vld [vmem:[#allocation7 + $0x35e8] sm:$0xff]
        %v5875 = vld [vmem:[#allocation7 + $0x35f0] sm:$0xff]
        %v5876 = vld [vmem:[#allocation7 + $0x35f8] sm:$0xff]
        %v5877 = vld [vmem:[#allocation10] sm:$0xff]
        %v5878 = vld [vmem:[#allocation10 + $0x8] sm:$0xff]
        %v5879 = vld [vmem:[#allocation10 + $0x10] sm:$0x3]
        %v5883 = vlaneseq
        %v5884 = vshrl.u32 %v5883, 7
        %v5885 = vsub.s32 0, %v5884
        %v5886 = vrot.slane %v5877, %v5885
        %v5887 = vlaneseq
        %v5888 = vshrl.u32 %v5887, 7
        %v5889 = vsub.s32 1, %v5888
        %v5890 = vrot.slane %v5877, %v5889
        %v5891 = vlaneseq
        %v5892 = vshrl.u32 %v5891, 7
        %v5893 = vsub.s32 2, %v5892
        %v5894 = vrot.slane %v5877, %v5893
        %v5895 = vlaneseq
        %v5896 = vshrl.u32 %v5895, 7
        %v5897 = vsub.s32 3, %v5896
        %v5898 = vrot.slane %v5877, %v5897
        %v5899 = vlaneseq
        %v5900 = vshrl.u32 %v5899, 7
        %v5901 = vsub.s32 4, %v5900
        %v5902 = vrot.slane %v5877, %v5901
        %v5903 = vlaneseq
        %v5904 = vshrl.u32 %v5903, 7
        %v5905 = vsub.s32 5, %v5904
        %v5906 = vrot.slane %v5877, %v5905
        %v5907 = vlaneseq
        %v5908 = vshrl.u32 %v5907, 7
        %v5909 = vsub.s32 6, %v5908
        %v5910 = vrot.slane %v5877, %v5909
        %v5911 = vlaneseq
        %v5912 = vshrl.u32 %v5911, 7
        %v5913 = vsub.s32 7, %v5912
        %v5914 = vrot.slane %v5877, %v5913
        %v5915 = vlaneseq
        %v5916 = vshrl.u32 %v5915, 7
        %v5917 = vsub.s32 0, %v5916
        %v5918 = vrot.slane %v5878, %v5917
        %v5919 = vlaneseq
        %v5920 = vshrl.u32 %v5919, 7
        %v5921 = vsub.s32 1, %v5920
        %v5922 = vrot.slane %v5878, %v5921
        %v5923 = vlaneseq
        %v5924 = vshrl.u32 %v5923, 7
        %v5925 = vsub.s32 2, %v5924
        %v5926 = vrot.slane %v5878, %v5925
        %v5927 = vlaneseq
        %v5928 = vshrl.u32 %v5927, 7
        %v5929 = vsub.s32 3, %v5928
        %v5930 = vrot.slane %v5878, %v5929
        %v5931 = vlaneseq
        %v5932 = vshrl.u32 %v5931, 7
        %v5933 = vsub.s32 4, %v5932
        %v5934 = vrot.slane %v5878, %v5933
        %v5935 = vlaneseq
        %v5936 = vshrl.u32 %v5935, 7
        %v5937 = vsub.s32 5, %v5936
        %v5938 = vrot.slane %v5878, %v5937
        %v5939 = vlaneseq
        %v5940 = vshrl.u32 %v5939, 7
        %v5941 = vsub.s32 6, %v5940
        %v5942 = vrot.slane %v5878, %v5941
        %v5943 = vlaneseq
        %v5944 = vshrl.u32 %v5943, 7
        %v5945 = vsub.s32 7, %v5944
        %v5946 = vrot.slane %v5878, %v5945
        %v5947 = vlaneseq
        %v5948 = vshrl.u32 %v5947, 7
        %v5949 = vsub.s32 0, %v5948
        %v5950 = vrot.slane %v5879, %v5949
        %v5951 = vlaneseq
        %v5952 = vshrl.u32 %v5951, 7
        %v5953 = vsub.s32 1, %v5952
        %v5954 = vrot.slane %v5879, %v5953
        %v5975 = vcombine.high %v371, %v371
        %v5977 = vunpack.c.l.s4 1983009808
        %v5978 = vunpack.c.0.s8 %v5977
        %v5979 = vlaneseq
        %v5980 = vshrl.u32 %v5979, 7
        %v5981 = vsub.s32 %v5978, %v5980
        %v5982 = vrot.slane %v371, %v5981
        %v5984 = vunpack.c.l.s4 1983009808
        %v5985 = vunpack.c.0.s8 %v5984
        %v5986 = vlaneseq
        %v5987 = vshrl.u32 %v5986, 7
        %v5988 = vsub.s32 %v5985, %v5987
        %v5989 = vrot.slane %v5975, %v5988
        %v5990 = vcombine.high %v5982, %v5982
        %v5991 = vcombine.high %v5989, %v5989
        %v5993 = vunpack.c.l.s4 1983009808
        %v5994 = vunpack.c.0.s8 %v5993
        %v5995 = vlaneseq
        %v5996 = vshrl.u32 %v5995, 7
        %v5997 = vsub.s32 %v5994, %v5996
        %v5998 = vrot.slane %v372, %v5997
        %v5999 = vcombine.high %v5998, %v5998
        %6006 = vmatprep.subr.mxu0 %v4150
        %6007 = vmatpush1.msra.mxu0 %v4149
        %6008 = vmatprep.subr.mxu0 %v4168
        %6009 = vmatpush1.msra.mxu0 %v4167
        %6010 = vmatprep.subr.mxu0 %v4186
        %6011 = vmatpush1.msra.mxu0 %v4185
        %6012 = vmatprep.subr.mxu0 %v4204
        %6013 = vmatpush1.msra.mxu0 %v4203
        %6014 = vmatprep.subr.mxu0 %v4222
        %6015 = vmatpush1.msra.mxu0 %v4221
        %6016 = vmatprep.subr.mxu0 %v4240
        %6017 = vmatpush1.msra.mxu0 %v4239
        %6018 = vmatprep.subr.mxu0 %v4258
        %6019 = vmatpush1.msra.mxu0 %v4257
        %6020 = vmatprep.subr.mxu0 %v4276
        %6021 = vmatpush1.msra.mxu0 %v4275
        %6022 = vmatprep.subr.mxu0 %v4294
        %6023 = vmatpush1.msra.mxu0 %v4293
        %6024 = vmatprep.subr.mxu0 %v4312
        %6025 = vmatpush1.msra.mxu0 %v4311
        %6026 = vmatprep.subr.mxu0 %v4330
        %6027 = vmatpush1.msra.mxu0 %v4329
        %6028 = vmatprep.subr.mxu0 %v4348
        %6029 = vmatpush1.msra.mxu0 %v4347
        %6030 = vmatprep.subr.mxu0 %v4366
        %6031 = vmatpush1.msra.mxu0 %v4365
        %6032 = vmatprep.subr.mxu0 %v4384
        %6033 = vmatpush1.msra.mxu0 %v4383
        %6034 = vmatprep.subr.mxu0 %v4402
        %6035 = vmatpush1.msra.mxu0 %v4401
        %6036 = vmatprep.subr.mxu0 %v4420
        %6037 = vmatpush1.msra.mxu0 %v4419
        %6038 = vmatprep.subr.mxu0 %v4438
        %6039 = vmatpush1.msra.mxu0 %v4437
        %6040 = vmatprep.subr.mxu0 %v4456
        %6041 = vmatpush1.msra.mxu0 %v4455
        %6042 = vmatprep.subr.mxu0 %v4474
        %6043 = vmatpush1.msra.mxu0 %v4473
        %6044 = vmatprep.subr.mxu0 %v4492
        %6045 = vmatpush1.msra.mxu0 %v4491
        %6046 = vmatprep.subr.mxu0 %v4510
        %6047 = vmatpush1.msra.mxu0 %v4509
        %6048 = vmatprep.subr.mxu0 %v4528
        %6049 = vmatpush1.msra.mxu0 %v4527
        %6050 = vmatprep.subr.mxu0 %v4546
        %6051 = vmatpush1.msra.mxu0 %v4545
        %6052 = vmatprep.subr.mxu0 %v4564
        %6053 = vmatpush1.msra.mxu0 %v4563
        %6054 = vmatprep.subr.mxu0 %v4582
        %6055 = vmatpush1.msra.mxu0 %v4581
        %6056 = vmatprep.subr.mxu0 %v4600
        %6057 = vmatpush1.msra.mxu0 %v4599
        %6058 = vmatprep.subr.mxu0 %v4618
        %6059 = vmatpush1.msra.mxu0 %v4617
        %6060 = vmatprep.subr.mxu0 %v4636
        %6061 = vmatpush1.msra.mxu0 %v4635
        %6062 = vmatprep.subr.mxu0 %v4654
        %6063 = vmatpush1.msra.mxu0 %v4653
        %6064 = vmatprep.subr.mxu0 %v4672
        %6065 = vmatpush1.msra.mxu0 %v4671
        %6066 = vmatprep.subr.mxu0 %v4690
        %6067 = vmatpush1.msra.mxu0 %v4689
        %6068 = vmatprep.subr.mxu0 %v4708
        %6069 = vmatpush1.msra.mxu0 %v4707
        %6070 = vmatprep.mubr.f32.mxu0 %v5990
        %6071 = vmatmul.mubr.f32.gmra.mrb[0].mxu0 %v5982
        %v6072 = vpop.f32.mrb[0].mxu0
        %v6073 = vadd.f32 %v5886, %v6072
        %v6074 = vpop.f32.mrb[0].mxu0
        %v6075 = vadd.f32 %v5890, %v6074
        %6076 = vdwg.mxu0
        %6077 = vmatprep.subr.mxu0 %v4726
        %6078 = vmatpush1.msra.mxu0 %v4725
        %6079 = vmatprep.subr.mxu0 %v4744
        %6080 = vmatpush1.msra.mxu0 %v4743
        %6081 = vmatprep.subr.mxu0 %v4762
        %6082 = vmatpush1.msra.mxu0 %v4761
        %6083 = vmatprep.subr.mxu0 %v4780
        %6084 = vmatpush1.msra.mxu0 %v4779
        %6085 = vmatprep.subr.mxu0 %v4798
        %6086 = vmatpush1.msra.mxu0 %v4797
        %6087 = vmatprep.subr.mxu0 %v4816
        %6088 = vmatpush1.msra.mxu0 %v4815
        %6089 = vmatprep.subr.mxu0 %v4834
        %6090 = vmatpush1.msra.mxu0 %v4833
        %6091 = vmatprep.subr.mxu0 %v4852
        %6092 = vmatpush1.msra.mxu0 %v4851
        %6093 = vmatprep.subr.mxu0 %v4870
        %6094 = vmatpush1.msra.mxu0 %v4869
        %6095 = vmatprep.subr.mxu0 %v4888
        %6096 = vmatpush1.msra.mxu0 %v4887
        %6097 = vmatprep.subr.mxu0 %v4906
        %6098 = vmatpush1.msra.mxu0 %v4905
        %6099 = vmatprep.subr.mxu0 %v4924
        %6100 = vmatpush1.msra.mxu0 %v4923
        %6101 = vmatprep.subr.mxu0 %v4942
        %6102 = vmatpush1.msra.mxu0 %v4941
        %6103 = vmatprep.subr.mxu0 %v4960
        %6104 = vmatpush1.msra.mxu0 %v4959
        %6105 = vmatprep.subr.mxu0 %v4978
        %6106 = vmatpush1.msra.mxu0 %v4977
        %6107 = vmatprep.subr.mxu0 %v4996
        %6108 = vmatpush1.msra.mxu0 %v4995
        %6109 = vmatprep.subr.mxu0 %v5014
        %6110 = vmatpush1.msra.mxu0 %v5013
        %6111 = vmatprep.subr.mxu0 %v5032
        %6112 = vmatpush1.msra.mxu0 %v5031
        %6113 = vmatprep.subr.mxu0 %v5050
        %6114 = vmatpush1.msra.mxu0 %v5049
        %6115 = vmatprep.subr.mxu0 %v5068
        %6116 = vmatpush1.msra.mxu0 %v5067
        %6117 = vmatprep.subr.mxu0 %v5086
        %6118 = vmatpush1.msra.mxu0 %v5085
        %6119 = vmatprep.subr.mxu0 %v5104
        %6120 = vmatpush1.msra.mxu0 %v5103
        %6121 = vmatprep.subr.mxu0 %v5122
        %6122 = vmatpush1.msra.mxu0 %v5121
        %6123 = vmatprep.subr.mxu0 %v5140
        %6124 = vmatpush1.msra.mxu0 %v5139
        %6125 = vmatprep.subr.mxu0 %v5158
        %6126 = vmatpush1.msra.mxu0 %v5157
        %6127 = vmatprep.subr.mxu0 %v5176
        %6128 = vmatpush1.msra.mxu0 %v5175
        %6129 = vmatprep.subr.mxu0 %v5194
        %6130 = vmatpush1.msra.mxu0 %v5193
        %6131 = vmatprep.subr.mxu0 %v5212
        %6132 = vmatpush1.msra.mxu0 %v5211
        %6133 = vmatprep.subr.mxu0 %v5230
        %6134 = vmatpush1.msra.mxu0 %v5229
        %6135 = vmatprep.subr.mxu0 %v5248
        %6136 = vmatpush1.msra.mxu0 %v5247
        %6137 = vmatprep.subr.mxu0 %v5266
        %6138 = vmatpush1.msra.mxu0 %v5265
        %6139 = vmatprep.subr.mxu0 %v5284
        %6140 = vmatpush1.msra.mxu0 %v5283
        %6141 = vmatprep.mubr.f32.mxu0 %v5991
        %6142 = vmatmul.mubr.f32.gmra.mrb[0].mxu0 %v5989
        %v6143 = vpop.f32.mrb[0].mxu0
        %v6144 = vadd.f32 %v6073, %v6143
        %v6145 = vpop.f32.mrb[0].mxu0
        %v6146 = vadd.f32 %v6075, %v6145
        %6147 = vdwg.mxu0
        %6148 = vmatprep.subr.mxu0 %v5302
        %6149 = vmatpush1.msra.mxu0 %v5301
        %6150 = vmatprep.subr.mxu0 %v5320
        %6151 = vmatpush1.msra.mxu0 %v5319
        %6152 = vmatprep.subr.mxu0 %v5338
        %6153 = vmatpush1.msra.mxu0 %v5337
        %6154 = vmatprep.subr.mxu0 %v5356
        %6155 = vmatpush1.msra.mxu0 %v5355
        %6156 = vmatprep.subr.mxu0 %v5374
        %6157 = vmatpush1.msra.mxu0 %v5373
        %6158 = vmatprep.subr.mxu0 %v5392
        %6159 = vmatpush1.msra.mxu0 %v5391
        %6160 = vmatprep.subr.mxu0 %v5410
        %6161 = vmatpush1.msra.mxu0 %v5409
        %6162 = vmatprep.subr.mxu0 %v5428
        %6163 = vmatpush1.msra.mxu0 %v5427
        %6164 = vmatprep.subr.mxu0 %v5446
        %6165 = vmatpush1.msra.mxu0 %v5445
        %6166 = vmatprep.subr.mxu0 %v5464
        %6167 = vmatpush1.msra.mxu0 %v5463
        %6168 = vmatprep.subr.mxu0 %v5482
        %6169 = vmatpush1.msra.mxu0 %v5481
        %6170 = vmatprep.subr.mxu0 %v5500
        %6171 = vmatpush1.msra.mxu0 %v5499
        %6172 = vmatprep.subr.mxu0 %v5518
        %6173 = vmatpush1.msra.mxu0 %v5517
        %6174 = vmatprep.subr.mxu0 %v5536
        %6175 = vmatpush1.msra.mxu0 %v5535
        %6176 = vmatprep.subr.mxu0 %v5554
        %6177 = vmatpush1.msra.mxu0 %v5553
        %6178 = vmatprep.subr.mxu0 %v5572
        %6179 = vmatpush1.msra.mxu0 %v5571
        %6180 = vmatprep.subr.mxu0 %v5590
        %6181 = vmatpush1.msra.mxu0 %v5589
        %6182 = vmatprep.subr.mxu0 %v5608
        %6183 = vmatpush1.msra.mxu0 %v5607
        %6184 = vmatprep.subr.mxu0 %v5626
        %6185 = vmatpush1.msra.mxu0 %v5625
        %6186 = vmatprep.subr.mxu0 %v5644
        %6187 = vmatpush1.msra.mxu0 %v5643
        %6188 = vmatprep.subr.mxu0 %v5662
        %6189 = vmatpush1.msra.mxu0 %v5661
        %6190 = vmatprep.subr.mxu0 %v5680
        %6191 = vmatpush1.msra.mxu0 %v5679
        %6192 = vmatprep.subr.mxu0 %v5698
        %6193 = vmatpush1.msra.mxu0 %v5697
        %6194 = vmatprep.subr.mxu0 %v5716
        %6195 = vmatpush1.msra.mxu0 %v5715
        %6196 = vmatprep.subr.mxu0 %v5734
        %6197 = vmatpush1.msra.mxu0 %v5733
        %6198 = vmatprep.subr.mxu0 %v5752
        %6199 = vmatpush1.msra.mxu0 %v5751
        %6200 = vmatprep.subr.mxu0 %v5770
        %6201 = vmatpush1.msra.mxu0 %v5769
        %6202 = vmatprep.subr.mxu0 %v5788
        %6203 = vmatpush1.msra.mxu0 %v5787
        %6204 = vmatprep.subr.mxu0 %v5806
        %6205 = vmatpush1.msra.mxu0 %v5805
        %6206 = vmatprep.subr.mxu0 %v5824
        %6207 = vmatpush1.msra.mxu0 %v5823
        %6208 = vmatprep.subr.mxu0 %v5842
        %6209 = vmatpush1.msra.mxu0 %v5841
        %6210 = vmatprep.subr.mxu0 %v5860
        %6211 = vmatpush1.msra.mxu0 %v5859
        %6212 = vmatprep.mubr.f32.mxu0 %v5999
        %6213 = vmatmul.mubr.f32.gmra.mrb[0].mxu0 %v5998
        %v6214 = vpop.f32.mrb[0].mxu0
        %v6215 = vadd.f32 %v6144, %v6214
        %v6216 = vpop.f32.mrb[0].mxu0
        %v6217 = vadd.f32 %v6146, %v6216
        %6218 = vdwg.mxu0
        %6219 = vmatprep.subr.mxu0 %v4152
        %6220 = vmatpush1.msra.mxu0 %v4151
        %6221 = vmatprep.subr.mxu0 %v4170
        %6222 = vmatpush1.msra.mxu0 %v4169
        %6223 = vmatprep.subr.mxu0 %v4188
        %6224 = vmatpush1.msra.mxu0 %v4187
        %6225 = vmatprep.subr.mxu0 %v4206
        %6226 = vmatpush1.msra.mxu0 %v4205
        %6227 = vmatprep.subr.mxu0 %v4224
        %6228 = vmatpush1.msra.mxu0 %v4223
        %6229 = vmatprep.subr.mxu0 %v4242
        %6230 = vmatpush1.msra.mxu0 %v4241
        %6231 = vmatprep.subr.mxu0 %v4260
        %6232 = vmatpush1.msra.mxu0 %v4259
        %6233 = vmatprep.subr.mxu0 %v4278
        %6234 = vmatpush1.msra.mxu0 %v4277
        %6235 = vmatprep.subr.mxu0 %v4296
        %6236 = vmatpush1.msra.mxu0 %v4295
        %6237 = vmatprep.subr.mxu0 %v4314
        %6238 = vmatpush1.msra.mxu0 %v4313
        %6239 = vmatprep.subr.mxu0 %v4332
        %6240 = vmatpush1.msra.mxu0 %v4331
        %6241 = vmatprep.subr.mxu0 %v4350
        %6242 = vmatpush1.msra.mxu0 %v4349
        %6243 = vmatprep.subr.mxu0 %v4368
        %6244 = vmatpush1.msra.mxu0 %v4367
        %6245 = vmatprep.subr.mxu0 %v4386
        %6246 = vmatpush1.msra.mxu0 %v4385
        %6247 = vmatprep.subr.mxu0 %v4404
        %6248 = vmatpush1.msra.mxu0 %v4403
        %6249 = vmatprep.subr.mxu0 %v4422
        %6250 = vmatpush1.msra.mxu0 %v4421
        %6251 = vmatprep.subr.mxu0 %v4440
        %6252 = vmatpush1.msra.mxu0 %v4439
        %6253 = vmatprep.subr.mxu0 %v4458
        %6254 = vmatpush1.msra.mxu0 %v4457
        %6255 = vmatprep.subr.mxu0 %v4476
        %6256 = vmatpush1.msra.mxu0 %v4475
        %6257 = vmatprep.subr.mxu0 %v4494
        %6258 = vmatpush1.msra.mxu0 %v4493
        %6259 = vmatprep.subr.mxu0 %v4512
        %6260 = vmatpush1.msra.mxu0 %v4511
        %6261 = vmatprep.subr.mxu0 %v4530
        %6262 = vmatpush1.msra.mxu0 %v4529
        %6263 = vmatprep.subr.mxu0 %v4548
        %6264 = vmatpush1.msra.mxu0 %v4547
        %6265 = vmatprep.subr.mxu0 %v4566
        %6266 = vmatpush1.msra.mxu0 %v4565
        %6267 = vmatprep.subr.mxu0 %v4584
        %6268 = vmatpush1.msra.mxu0 %v4583
        %6269 = vmatprep.subr.mxu0 %v4602
        %6270 = vmatpush1.msra.mxu0 %v4601
        %6271 = vmatprep.subr.mxu0 %v4620
        %6272 = vmatpush1.msra.mxu0 %v4619
        %6273 = vmatprep.subr.mxu0 %v4638
        %6274 = vmatpush1.msra.mxu0 %v4637
        %6275 = vmatprep.subr.mxu0 %v4656
        %6276 = vmatpush1.msra.mxu0 %v4655
        %6277 = vmatprep.subr.mxu0 %v4674
        %6278 = vmatpush1.msra.mxu0 %v4673
        %6279 = vmatprep.subr.mxu0 %v4692
        %6280 = vmatpush1.msra.mxu0 %v4691
        %6281 = vmatprep.subr.mxu0 %v4710
        %6282 = vmatpush1.msra.mxu0 %v4709
        %6283 = vmatprep.mubr.f32.mxu0 %v5990
        %6284 = vmatmul.mubr.f32.gmra.mrb[0].mxu0 %v5982
        %v6285 = vpop.f32.mrb[0].mxu0
        %v6286 = vadd.f32 %v5894, %v6285
        %v6287 = vpop.f32.mrb[0].mxu0
        %v6288 = vadd.f32 %v5898, %v6287
        %6289 = vdwg.mxu0
        %6290 = vmatprep.subr.mxu0 %v4728
        %6291 = vmatpush1.msra.mxu0 %v4727
        %6292 = vmatprep.subr.mxu0 %v4746
        %6293 = vmatpush1.msra.mxu0 %v4745
        %6294 = vmatprep.subr.mxu0 %v4764
        %6295 = vmatpush1.msra.mxu0 %v4763
        %6296 = vmatprep.subr.mxu0 %v4782
        %6297 = vmatpush1.msra.mxu0 %v4781
        %6298 = vmatprep.subr.mxu0 %v4800
        %6299 = vmatpush1.msra.mxu0 %v4799
        %6300 = vmatprep.subr.mxu0 %v4818
        %6301 = vmatpush1.msra.mxu0 %v4817
        %6302 = vmatprep.subr.mxu0 %v4836
        %6303 = vmatpush1.msra.mxu0 %v4835
        %6304 = vmatprep.subr.mxu0 %v4854
        %6305 = vmatpush1.msra.mxu0 %v4853
        %6306 = vmatprep.subr.mxu0 %v4872
        %6307 = vmatpush1.msra.mxu0 %v4871
        %6308 = vmatprep.subr.mxu0 %v4890
        %6309 = vmatpush1.msra.mxu0 %v4889
        %6310 = vmatprep.subr.mxu0 %v4908
        %6311 = vmatpush1.msra.mxu0 %v4907
        %6312 = vmatprep.subr.mxu0 %v4926
        %6313 = vmatpush1.msra.mxu0 %v4925
        %6314 = vmatprep.subr.mxu0 %v4944
        %6315 = vmatpush1.msra.mxu0 %v4943
        %6316 = vmatprep.subr.mxu0 %v4962
        %6317 = vmatpush1.msra.mxu0 %v4961
        %6318 = vmatprep.subr.mxu0 %v4980
        %6319 = vmatpush1.msra.mxu0 %v4979
        %6320 = vmatprep.subr.mxu0 %v4998
        %6321 = vmatpush1.msra.mxu0 %v4997
        %6322 = vmatprep.subr.mxu0 %v5016
        %6323 = vmatpush1.msra.mxu0 %v5015
        %6324 = vmatprep.subr.mxu0 %v5034
        %6325 = vmatpush1.msra.mxu0 %v5033
        %6326 = vmatprep.subr.mxu0 %v5052
        %6327 = vmatpush1.msra.mxu0 %v5051
        %6328 = vmatprep.subr.mxu0 %v5070
        %6329 = vmatpush1.msra.mxu0 %v5069
        %6330 = vmatprep.subr.mxu0 %v5088
        %6331 = vmatpush1.msra.mxu0 %v5087
        %6332 = vmatprep.subr.mxu0 %v5106
        %6333 = vmatpush1.msra.mxu0 %v5105
        %6334 = vmatprep.subr.mxu0 %v5124
        %6335 = vmatpush1.msra.mxu0 %v5123
        %6336 = vmatprep.subr.mxu0 %v5142
        %6337 = vmatpush1.msra.mxu0 %v5141
        %6338 = vmatprep.subr.mxu0 %v5160
        %6339 = vmatpush1.msra.mxu0 %v5159
        %6340 = vmatprep.subr.mxu0 %v5178
        %6341 = vmatpush1.msra.mxu0 %v5177
        %6342 = vmatprep.subr.mxu0 %v5196
        %6343 = vmatpush1.msra.mxu0 %v5195
        %6344 = vmatprep.subr.mxu0 %v5214
        %6345 = vmatpush1.msra.mxu0 %v5213
        %6346 = vmatprep.subr.mxu0 %v5232
        %6347 = vmatpush1.msra.mxu0 %v5231
        %6348 = vmatprep.subr.mxu0 %v5250
        %6349 = vmatpush1.msra.mxu0 %v5249
        %6350 = vmatprep.subr.mxu0 %v5268
        %6351 = vmatpush1.msra.mxu0 %v5267
        %6352 = vmatprep.subr.mxu0 %v5286
        %6353 = vmatpush1.msra.mxu0 %v5285
        %6354 = vmatprep.mubr.f32.mxu0 %v5991
        %6355 = vmatmul.mubr.f32.gmra.mrb[0].mxu0 %v5989
        %v6356 = vpop.f32.mrb[0].mxu0
        %v6357 = vadd.f32 %v6286, %v6356
        %v6358 = vpop.f32.mrb[0].mxu0
        %v6359 = vadd.f32 %v6288, %v6358
        %6360 = vdwg.mxu0
        %6361 = vmatprep.subr.mxu0 %v5304
        %6362 = vmatpush1.msra.mxu0 %v5303
        %6363 = vmatprep.subr.mxu0 %v5322
        %6364 = vmatpush1.msra.mxu0 %v5321
        %6365 = vmatprep.subr.mxu0 %v5340
        %6366 = vmatpush1.msra.mxu0 %v5339
        %6367 = vmatprep.subr.mxu0 %v5358
        %6368 = vmatpush1.msra.mxu0 %v5357
        %6369 = vmatprep.subr.mxu0 %v5376
        %6370 = vmatpush1.msra.mxu0 %v5375
        %6371 = vmatprep.subr.mxu0 %v5394
        %6372 = vmatpush1.msra.mxu0 %v5393
        %6373 = vmatprep.subr.mxu0 %v5412
        %6374 = vmatpush1.msra.mxu0 %v5411
        %6375 = vmatprep.subr.mxu0 %v5430
        %6376 = vmatpush1.msra.mxu0 %v5429
        %6377 = vmatprep.subr.mxu0 %v5448
        %6378 = vmatpush1.msra.mxu0 %v5447
        %6379 = vmatprep.subr.mxu0 %v5466
        %6380 = vmatpush1.msra.mxu0 %v5465
        %6381 = vmatprep.subr.mxu0 %v5484
        %6382 = vmatpush1.msra.mxu0 %v5483
        %6383 = vmatprep.subr.mxu0 %v5502
        %6384 = vmatpush1.msra.mxu0 %v5501
        %6385 = vmatprep.subr.mxu0 %v5520
        %6386 = vmatpush1.msra.mxu0 %v5519
        %6387 = vmatprep.subr.mxu0 %v5538
        %6388 = vmatpush1.msra.mxu0 %v5537
        %6389 = vmatprep.subr.mxu0 %v5556
        %6390 = vmatpush1.msra.mxu0 %v5555
        %6391 = vmatprep.subr.mxu0 %v5574
        %6392 = vmatpush1.msra.mxu0 %v5573
        %6393 = vmatprep.subr.mxu0 %v5592
        %6394 = vmatpush1.msra.mxu0 %v5591
        %6395 = vmatprep.subr.mxu0 %v5610
        %6396 = vmatpush1.msra.mxu0 %v5609
        %6397 = vmatprep.subr.mxu0 %v5628
        %6398 = vmatpush1.msra.mxu0 %v5627
        %6399 = vmatprep.subr.mxu0 %v5646
        %6400 = vmatpush1.msra.mxu0 %v5645
        %6401 = vmatprep.subr.mxu0 %v5664
        %6402 = vmatpush1.msra.mxu0 %v5663
        %6403 = vmatprep.subr.mxu0 %v5682
        %6404 = vmatpush1.msra.mxu0 %v5681
        %6405 = vmatprep.subr.mxu0 %v5700
        %6406 = vmatpush1.msra.mxu0 %v5699
        %6407 = vmatprep.subr.mxu0 %v5718
        %6408 = vmatpush1.msra.mxu0 %v5717
        %6409 = vmatprep.subr.mxu0 %v5736
        %6410 = vmatpush1.msra.mxu0 %v5735
        %6411 = vmatprep.subr.mxu0 %v5754
        %6412 = vmatpush1.msra.mxu0 %v5753
        %6413 = vmatprep.subr.mxu0 %v5772
        %6414 = vmatpush1.msra.mxu0 %v5771
        %6415 = vmatprep.subr.mxu0 %v5790
        %6416 = vmatpush1.msra.mxu0 %v5789
        %6417 = vmatprep.subr.mxu0 %v5808
        %6418 = vmatpush1.msra.mxu0 %v5807
        %6419 = vmatprep.subr.mxu0 %v5826
        %6420 = vmatpush1.msra.mxu0 %v5825
        %6421 = vmatprep.subr.mxu0 %v5844
        %6422 = vmatpush1.msra.mxu0 %v5843
        %6423 = vmatprep.subr.mxu0 %v5862
        %6424 = vmatpush1.msra.mxu0 %v5861
        %6425 = vmatprep.mubr.f32.mxu0 %v5999
        %6426 = vmatmul.mubr.f32.gmra.mrb[0].mxu0 %v5998
        %v6427 = vpop.f32.mrb[0].mxu0
        %v6428 = vadd.f32 %v6357, %v6427
        %v6429 = vpop.f32.mrb[0].mxu0
        %v6430 = vadd.f32 %v6359, %v6429
        %6431 = vdwg.mxu0
        %6432 = vmatprep.subr.mxu0 %v4154
        %6433 = vmatpush1.msra.mxu0 %v4153
        %6434 = vmatprep.subr.mxu0 %v4172
        %6435 = vmatpush1.msra.mxu0 %v4171
        %6436 = vmatprep.subr.mxu0 %v4190
        %6437 = vmatpush1.msra.mxu0 %v4189
        %6438 = vmatprep.subr.mxu0 %v4208
        %6439 = vmatpush1.msra.mxu0 %v4207
        %6440 = vmatprep.subr.mxu0 %v4226
        %6441 = vmatpush1.msra.mxu0 %v4225
        %6442 = vmatprep.subr.mxu0 %v4244
        %6443 = vmatpush1.msra.mxu0 %v4243
        %6444 = vmatprep.subr.mxu0 %v4262
        %6445 = vmatpush1.msra.mxu0 %v4261
        %6446 = vmatprep.subr.mxu0 %v4280
        %6447 = vmatpush1.msra.mxu0 %v4279
        %6448 = vmatprep.subr.mxu0 %v4298
        %6449 = vmatpush1.msra.mxu0 %v4297
        %6450 = vmatprep.subr.mxu0 %v4316
        %6451 = vmatpush1.msra.mxu0 %v4315
        %6452 = vmatprep.subr.mxu0 %v4334
        %6453 = vmatpush1.msra.mxu0 %v4333
        %6454 = vmatprep.subr.mxu0 %v4352
        %6455 = vmatpush1.msra.mxu0 %v4351
        %6456 = vmatprep.subr.mxu0 %v4370
        %6457 = vmatpush1.msra.mxu0 %v4369
        %6458 = vmatprep.subr.mxu0 %v4388
        %6459 = vmatpush1.msra.mxu0 %v4387
        %6460 = vmatprep.subr.mxu0 %v4406
        %6461 = vmatpush1.msra.mxu0 %v4405
        %6462 = vmatprep.subr.mxu0 %v4424
        %6463 = vmatpush1.msra.mxu0 %v4423
        %6464 = vmatprep.subr.mxu0 %v4442
        %6465 = vmatpush1.msra.mxu0 %v4441
        %6466 = vmatprep.subr.mxu0 %v4460
        %6467 = vmatpush1.msra.mxu0 %v4459
        %6468 = vmatprep.subr.mxu0 %v4478
        %6469 = vmatpush1.msra.mxu0 %v4477
        %6470 = vmatprep.subr.mxu0 %v4496
        %6471 = vmatpush1.msra.mxu0 %v4495
        %6472 = vmatprep.subr.mxu0 %v4514
        %6473 = vmatpush1.msra.mxu0 %v4513
        %6474 = vmatprep.subr.mxu0 %v4532
        %6475 = vmatpush1.msra.mxu0 %v4531
        %6476 = vmatprep.subr.mxu0 %v4550
        %6477 = vmatpush1.msra.mxu0 %v4549
        %6478 = vmatprep.subr.mxu0 %v4568
        %6479 = vmatpush1.msra.mxu0 %v4567
        %6480 = vmatprep.subr.mxu0 %v4586
        %6481 = vmatpush1.msra.mxu0 %v4585
        %6482 = vmatprep.subr.mxu0 %v4604
        %6483 = vmatpush1.msra.mxu0 %v4603
        %6484 = vmatprep.subr.mxu0 %v4622
        %6485 = vmatpush1.msra.mxu0 %v4621
        %6486 = vmatprep.subr.mxu0 %v4640
        %6487 = vmatpush1.msra.mxu0 %v4639
        %6488 = vmatprep.subr.mxu0 %v4658
        %6489 = vmatpush1.msra.mxu0 %v4657
        %6490 = vmatprep.subr.mxu0 %v4676
        %6491 = vmatpush1.msra.mxu0 %v4675
        %6492 = vmatprep.subr.mxu0 %v4694
        %6493 = vmatpush1.msra.mxu0 %v4693
        %6494 = vmatprep.subr.mxu0 %v4712
        %6495 = vmatpush1.msra.mxu0 %v4711
        %6496 = vmatprep.mubr.f32.mxu0 %v5990
        %6497 = vmatmul.mubr.f32.gmra.mrb[0].mxu0 %v5982
        %v6498 = vpop.f32.mrb[0].mxu0
        %v6499 = vadd.f32 %v5902, %v6498
        %v6500 = vpop.f32.mrb[0].mxu0
        %v6501 = vadd.f32 %v5906, %v6500
        %6502 = vdwg.mxu0
        %6503 = vmatprep.subr.mxu0 %v4730
        %6504 = vmatpush1.msra.mxu0 %v4729
        %6505 = vmatprep.subr.mxu0 %v4748
        %6506 = vmatpush1.msra.mxu0 %v4747
        %6507 = vmatprep.subr.mxu0 %v4766
        %6508 = vmatpush1.msra.mxu0 %v4765
        %6509 = vmatprep.subr.mxu0 %v4784
        %6510 = vmatpush1.msra.mxu0 %v4783
        %6511 = vmatprep.subr.mxu0 %v4802
        %6512 = vmatpush1.msra.mxu0 %v4801
        %6513 = vmatprep.subr.mxu0 %v4820
        %6514 = vmatpush1.msra.mxu0 %v4819
        %6515 = vmatprep.subr.mxu0 %v4838
        %6516 = vmatpush1.msra.mxu0 %v4837
        %6517 = vmatprep.subr.mxu0 %v4856
        %6518 = vmatpush1.msra.mxu0 %v4855
        %6519 = vmatprep.subr.mxu0 %v4874
        %6520 = vmatpush1.msra.mxu0 %v4873
        %6521 = vmatprep.subr.mxu0 %v4892
        %6522 = vmatpush1.msra.mxu0 %v4891
        %6523 = vmatprep.subr.mxu0 %v4910
        %6524 = vmatpush1.msra.mxu0 %v4909
        %6525 = vmatprep.subr.mxu0 %v4928
        %6526 = vmatpush1.msra.mxu0 %v4927
        %6527 = vmatprep.subr.mxu0 %v4946
        %6528 = vmatpush1.msra.mxu0 %v4945
        %6529 = vmatprep.subr.mxu0 %v4964
        %6530 = vmatpush1.msra.mxu0 %v4963
        %6531 = vmatprep.subr.mxu0 %v4982
        %6532 = vmatpush1.msra.mxu0 %v4981
        %6533 = vmatprep.subr.mxu0 %v5000
        %6534 = vmatpush1.msra.mxu0 %v4999
        %6535 = vmatprep.subr.mxu0 %v5018
        %6536 = vmatpush1.msra.mxu0 %v5017
        %6537 = vmatprep.subr.mxu0 %v5036
        %6538 = vmatpush1.msra.mxu0 %v5035
        %6539 = vmatprep.subr.mxu0 %v5054
        %6540 = vmatpush1.msra.mxu0 %v5053
        %6541 = vmatprep.subr.mxu0 %v5072
        %6542 = vmatpush1.msra.mxu0 %v5071
        %6543 = vmatprep.subr.mxu0 %v5090
        %6544 = vmatpush1.msra.mxu0 %v5089
        %6545 = vmatprep.subr.mxu0 %v5108
        %6546 = vmatpush1.msra.mxu0 %v5107
        %6547 = vmatprep.subr.mxu0 %v5126
        %6548 = vmatpush1.msra.mxu0 %v5125
        %6549 = vmatprep.subr.mxu0 %v5144
        %6550 = vmatpush1.msra.mxu0 %v5143
        %6551 = vmatprep.subr.mxu0 %v5162
        %6552 = vmatpush1.msra.mxu0 %v5161
        %6553 = vmatprep.subr.mxu0 %v5180
        %6554 = vmatpush1.msra.mxu0 %v5179
        %6555 = vmatprep.subr.mxu0 %v5198
        %6556 = vmatpush1.msra.mxu0 %v5197
        %6557 = vmatprep.subr.mxu0 %v5216
        %6558 = vmatpush1.msra.mxu0 %v5215
        %6559 = vmatprep.subr.mxu0 %v5234
        %6560 = vmatpush1.msra.mxu0 %v5233
        %6561 = vmatprep.subr.mxu0 %v5252
        %6562 = vmatpush1.msra.mxu0 %v5251
        %6563 = vmatprep.subr.mxu0 %v5270
        %6564 = vmatpush1.msra.mxu0 %v5269
        %6565 = vmatprep.subr.mxu0 %v5288
        %6566 = vmatpush1.msra.mxu0 %v5287
        %6567 = vmatprep.mubr.f32.mxu0 %v5991
        %6568 = vmatmul.mubr.f32.gmra.mrb[0].mxu0 %v5989
        %v6569 = vpop.f32.mrb[0].mxu0
        %v6570 = vadd.f32 %v6499, %v6569
        %v6571 = vpop.f32.mrb[0].mxu0
        %v6572 = vadd.f32 %v6501, %v6571
        %6573 = vdwg.mxu0
        %6574 = vmatprep.subr.mxu0 %v5306
        %6575 = vmatpush1.msra.mxu0 %v5305
        %6576 = vmatprep.subr.mxu0 %v5324
        %6577 = vmatpush1.msra.mxu0 %v5323
        %6578 = vmatprep.subr.mxu0 %v5342
        %6579 = vmatpush1.msra.mxu0 %v5341
        %6580 = vmatprep.subr.mxu0 %v5360
        %6581 = vmatpush1.msra.mxu0 %v5359
        %6582 = vmatprep.subr.mxu0 %v5378
        %6583 = vmatpush1.msra.mxu0 %v5377
        %6584 = vmatprep.subr.mxu0 %v5396
        %6585 = vmatpush1.msra.mxu0 %v5395
        %6586 = vmatprep.subr.mxu0 %v5414
        %6587 = vmatpush1.msra.mxu0 %v5413
        %6588 = vmatprep.subr.mxu0 %v5432
        %6589 = vmatpush1.msra.mxu0 %v5431
        %6590 = vmatprep.subr.mxu0 %v5450
        %6591 = vmatpush1.msra.mxu0 %v5449
        %6592 = vmatprep.subr.mxu0 %v5468
        %6593 = vmatpush1.msra.mxu0 %v5467
        %6594 = vmatprep.subr.mxu0 %v5486
        %6595 = vmatpush1.msra.mxu0 %v5485
        %6596 = vmatprep.subr.mxu0 %v5504
        %6597 = vmatpush1.msra.mxu0 %v5503
        %6598 = vmatprep.subr.mxu0 %v5522
        %6599 = vmatpush1.msra.mxu0 %v5521
        %6600 = vmatprep.subr.mxu0 %v5540
        %6601 = vmatpush1.msra.mxu0 %v5539
        %6602 = vmatprep.subr.mxu0 %v5558
        %6603 = vmatpush1.msra.mxu0 %v5557
        %6604 = vmatprep.subr.mxu0 %v5576
        %6605 = vmatpush1.msra.mxu0 %v5575
        %6606 = vmatprep.subr.mxu0 %v5594
        %6607 = vmatpush1.msra.mxu0 %v5593
        %6608 = vmatprep.subr.mxu0 %v5612
        %6609 = vmatpush1.msra.mxu0 %v5611
        %6610 = vmatprep.subr.mxu0 %v5630
        %6611 = vmatpush1.msra.mxu0 %v5629
        %6612 = vmatprep.subr.mxu0 %v5648
        %6613 = vmatpush1.msra.mxu0 %v5647
        %6614 = vmatprep.subr.mxu0 %v5666
        %6615 = vmatpush1.msra.mxu0 %v5665
        %6616 = vmatprep.subr.mxu0 %v5684
        %6617 = vmatpush1.msra.mxu0 %v5683
        %6618 = vmatprep.subr.mxu0 %v5702
        %6619 = vmatpush1.msra.mxu0 %v5701
        %6620 = vmatprep.subr.mxu0 %v5720
        %6621 = vmatpush1.msra.mxu0 %v5719
        %6622 = vmatprep.subr.mxu0 %v5738
        %6623 = vmatpush1.msra.mxu0 %v5737
        %6624 = vmatprep.subr.mxu0 %v5756
        %6625 = vmatpush1.msra.mxu0 %v5755
        %6626 = vmatprep.subr.mxu0 %v5774
        %6627 = vmatpush1.msra.mxu0 %v5773
        %6628 = vmatprep.subr.mxu0 %v5792
        %6629 = vmatpush1.msra.mxu0 %v5791
        %6630 = vmatprep.subr.mxu0 %v5810
        %6631 = vmatpush1.msra.mxu0 %v5809
        %6632 = vmatprep.subr.mxu0 %v5828
        %6633 = vmatpush1.msra.mxu0 %v5827
        %6634 = vmatprep.subr.mxu0 %v5846
        %6635 = vmatpush1.msra.mxu0 %v5845
        %6636 = vmatprep.subr.mxu0 %v5864
        %6637 = vmatpush1.msra.mxu0 %v5863
        %6638 = vmatprep.mubr.f32.mxu0 %v5999
        %6639 = vmatmul.mubr.f32.gmra.mrb[0].mxu0 %v5998
        %v6640 = vpop.f32.mrb[0].mxu0
        %v6641 = vadd.f32 %v6570, %v6640
        %v6642 = vpop.f32.mrb[0].mxu0
        %v6643 = vadd.f32 %v6572, %v6642
        %6644 = vdwg.mxu0
        %6645 = vmatprep.subr.mxu0 %v4156
        %6646 = vmatpush1.msra.mxu0 %v4155
        %6647 = vmatprep.subr.mxu0 %v4174
        %6648 = vmatpush1.msra.mxu0 %v4173
        %6649 = vmatprep.subr.mxu0 %v4192
        %6650 = vmatpush1.msra.mxu0 %v4191
        %6651 = vmatprep.subr.mxu0 %v4210
        %6652 = vmatpush1.msra.mxu0 %v4209
        %6653 = vmatprep.subr.mxu0 %v4228
        %6654 = vmatpush1.msra.mxu0 %v4227
        %6655 = vmatprep.subr.mxu0 %v4246
        %6656 = vmatpush1.msra.mxu0 %v4245
        %6657 = vmatprep.subr.mxu0 %v4264
        %6658 = vmatpush1.msra.mxu0 %v4263
        %6659 = vmatprep.subr.mxu0 %v4282
        %6660 = vmatpush1.msra.mxu0 %v4281
        %6661 = vmatprep.subr.mxu0 %v4300
        %6662 = vmatpush1.msra.mxu0 %v4299
        %6663 = vmatprep.subr.mxu0 %v4318
        %6664 = vmatpush1.msra.mxu0 %v4317
        %6665 = vmatprep.subr.mxu0 %v4336
        %6666 = vmatpush1.msra.mxu0 %v4335
        %6667 = vmatprep.subr.mxu0 %v4354
        %6668 = vmatpush1.msra.mxu0 %v4353
        %6669 = vmatprep.subr.mxu0 %v4372
        %6670 = vmatpush1.msra.mxu0 %v4371
        %6671 = vmatprep.subr.mxu0 %v4390
        %6672 = vmatpush1.msra.mxu0 %v4389
        %6673 = vmatprep.subr.mxu0 %v4408
        %6674 = vmatpush1.msra.mxu0 %v4407
        %6675 = vmatprep.subr.mxu0 %v4426
        %6676 = vmatpush1.msra.mxu0 %v4425
        %6677 = vmatprep.subr.mxu0 %v4444
        %6678 = vmatpush1.msra.mxu0 %v4443
        %6679 = vmatprep.subr.mxu0 %v4462
        %6680 = vmatpush1.msra.mxu0 %v4461
        %6681 = vmatprep.subr.mxu0 %v4480
        %6682 = vmatpush1.msra.mxu0 %v4479
        %6683 = vmatprep.subr.mxu0 %v4498
        %6684 = vmatpush1.msra.mxu0 %v4497
        %6685 = vmatprep.subr.mxu0 %v4516
        %6686 = vmatpush1.msra.mxu0 %v4515
        %6687 = vmatprep.subr.mxu0 %v4534
        %6688 = vmatpush1.msra.mxu0 %v4533
        %6689 = vmatprep.subr.mxu0 %v4552
        %6690 = vmatpush1.msra.mxu0 %v4551
        %6691 = vmatprep.subr.mxu0 %v4570
        %6692 = vmatpush1.msra.mxu0 %v4569
        %6693 = vmatprep.subr.mxu0 %v4588
        %6694 = vmatpush1.msra.mxu0 %v4587
        %6695 = vmatprep.subr.mxu0 %v4606
        %6696 = vmatpush1.msra.mxu0 %v4605
        %6697 = vmatprep.subr.mxu0 %v4624
        %6698 = vmatpush1.msra.mxu0 %v4623
        %6699 = vmatprep.subr.mxu0 %v4642
        %6700 = vmatpush1.msra.mxu0 %v4641
        %6701 = vmatprep.subr.mxu0 %v4660
        %6702 = vmatpush1.msra.mxu0 %v4659
        %6703 = vmatprep.subr.mxu0 %v4678
        %6704 = vmatpush1.msra.mxu0 %v4677
        %6705 = vmatprep.subr.mxu0 %v4696
        %6706 = vmatpush1.msra.mxu0 %v4695
        %6707 = vmatprep.subr.mxu0 %v4714
        %6708 = vmatpush1.msra.mxu0 %v4713
        %6709 = vmatprep.mubr.f32.mxu0 %v5990
        %6710 = vmatmul.mubr.f32.gmra.mrb[0].mxu0 %v5982
        %v6711 = vpop.f32.mrb[0].mxu0
        %v6712 = vadd.f32 %v5910, %v6711
        %v6713 = vpop.f32.mrb[0].mxu0
        %v6714 = vadd.f32 %v5914, %v6713
        %6715 = vdwg.mxu0
        %6716 = vmatprep.subr.mxu0 %v4732
        %6717 = vmatpush1.msra.mxu0 %v4731
        %6718 = vmatprep.subr.mxu0 %v4750
        %6719 = vmatpush1.msra.mxu0 %v4749
        %6720 = vmatprep.subr.mxu0 %v4768
        %6721 = vmatpush1.msra.mxu0 %v4767
        %6722 = vmatprep.subr.mxu0 %v4786
        %6723 = vmatpush1.msra.mxu0 %v4785
        %6724 = vmatprep.subr.mxu0 %v4804
        %6725 = vmatpush1.msra.mxu0 %v4803
        %6726 = vmatprep.subr.mxu0 %v4822
        %6727 = vmatpush1.msra.mxu0 %v4821
        %6728 = vmatprep.subr.mxu0 %v4840
        %6729 = vmatpush1.msra.mxu0 %v4839
        %6730 = vmatprep.subr.mxu0 %v4858
        %6731 = vmatpush1.msra.mxu0 %v4857
        %6732 = vmatprep.subr.mxu0 %v4876
        %6733 = vmatpush1.msra.mxu0 %v4875
        %6734 = vmatprep.subr.mxu0 %v4894
        %6735 = vmatpush1.msra.mxu0 %v4893
        %6736 = vmatprep.subr.mxu0 %v4912
        %6737 = vmatpush1.msra.mxu0 %v4911
        %6738 = vmatprep.subr.mxu0 %v4930
        %6739 = vmatpush1.msra.mxu0 %v4929
        %6740 = vmatprep.subr.mxu0 %v4948
        %6741 = vmatpush1.msra.mxu0 %v4947
        %6742 = vmatprep.subr.mxu0 %v4966
        %6743 = vmatpush1.msra.mxu0 %v4965
        %6744 = vmatprep.subr.mxu0 %v4984
        %6745 = vmatpush1.msra.mxu0 %v4983
        %6746 = vmatprep.subr.mxu0 %v5002
        %6747 = vmatpush1.msra.mxu0 %v5001
        %6748 = vmatprep.subr.mxu0 %v5020
        %6749 = vmatpush1.msra.mxu0 %v5019
        %6750 = vmatprep.subr.mxu0 %v5038
        %6751 = vmatpush1.msra.mxu0 %v5037
        %6752 = vmatprep.subr.mxu0 %v5056
        %6753 = vmatpush1.msra.mxu0 %v5055
        %6754 = vmatprep.subr.mxu0 %v5074
        %6755 = vmatpush1.msra.mxu0 %v5073
        %6756 = vmatprep.subr.mxu0 %v5092
        %6757 = vmatpush1.msra.mxu0 %v5091
        %6758 = vmatprep.subr.mxu0 %v5110
        %6759 = vmatpush1.msra.mxu0 %v5109
        %6760 = vmatprep.subr.mxu0 %v5128
        %6761 = vmatpush1.msra.mxu0 %v5127
        %6762 = vmatprep.subr.mxu0 %v5146
        %6763 = vmatpush1.msra.mxu0 %v5145
        %6764 = vmatprep.subr.mxu0 %v5164
        %6765 = vmatpush1.msra.mxu0 %v5163
        %6766 = vmatprep.subr.mxu0 %v5182
        %6767 = vmatpush1.msra.mxu0 %v5181
        %6768 = vmatprep.subr.mxu0 %v5200
        %6769 = vmatpush1.msra.mxu0 %v5199
        %6770 = vmatprep.subr.mxu0 %v5218
        %6771 = vmatpush1.msra.mxu0 %v5217
        %6772 = vmatprep.subr.mxu0 %v5236
        %6773 = vmatpush1.msra.mxu0 %v5235
        %6774 = vmatprep.subr.mxu0 %v5254
        %6775 = vmatpush1.msra.mxu0 %v5253
        %6776 = vmatprep.subr.mxu0 %v5272
        %6777 = vmatpush1.msra.mxu0 %v5271
        %6778 = vmatprep.subr.mxu0 %v5290
        %6779 = vmatpush1.msra.mxu0 %v5289
        %6780 = vmatprep.mubr.f32.mxu0 %v5991
        %6781 = vmatmul.mubr.f32.gmra.mrb[0].mxu0 %v5989
        %v6782 = vpop.f32.mrb[0].mxu0
        %v6783 = vadd.f32 %v6712, %v6782
        %v6784 = vpop.f32.mrb[0].mxu0
        %v6785 = vadd.f32 %v6714, %v6784
        %6786 = vdwg.mxu0
        %6787 = vmatprep.subr.mxu0 %v5308
        %6788 = vmatpush1.msra.mxu0 %v5307
        %6789 = vmatprep.subr.mxu0 %v5326
        %6790 = vmatpush1.msra.mxu0 %v5325
        %6791 = vmatprep.subr.mxu0 %v5344
        %6792 = vmatpush1.msra.mxu0 %v5343
        %6793 = vmatprep.subr.mxu0 %v5362
        %6794 = vmatpush1.msra.mxu0 %v5361
        %6795 = vmatprep.subr.mxu0 %v5380
        %6796 = vmatpush1.msra.mxu0 %v5379
        %6797 = vmatprep.subr.mxu0 %v5398
        %6798 = vmatpush1.msra.mxu0 %v5397
        %6799 = vmatprep.subr.mxu0 %v5416
        %6800 = vmatpush1.msra.mxu0 %v5415
        %6801 = vmatprep.subr.mxu0 %v5434
        %6802 = vmatpush1.msra.mxu0 %v5433
        %6803 = vmatprep.subr.mxu0 %v5452
        %6804 = vmatpush1.msra.mxu0 %v5451
        %6805 = vmatprep.subr.mxu0 %v5470
        %6806 = vmatpush1.msra.mxu0 %v5469
        %6807 = vmatprep.subr.mxu0 %v5488
        %6808 = vmatpush1.msra.mxu0 %v5487
        %6809 = vmatprep.subr.mxu0 %v5506
        %6810 = vmatpush1.msra.mxu0 %v5505
        %6811 = vmatprep.subr.mxu0 %v5524
        %6812 = vmatpush1.msra.mxu0 %v5523
        %6813 = vmatprep.subr.mxu0 %v5542
        %6814 = vmatpush1.msra.mxu0 %v5541
        %6815 = vmatprep.subr.mxu0 %v5560
        %6816 = vmatpush1.msra.mxu0 %v5559
        %6817 = vmatprep.subr.mxu0 %v5578
        %6818 = vmatpush1.msra.mxu0 %v5577
        %6819 = vmatprep.subr.mxu0 %v5596
        %6820 = vmatpush1.msra.mxu0 %v5595
        %6821 = vmatprep.subr.mxu0 %v5614
        %6822 = vmatpush1.msra.mxu0 %v5613
        %6823 = vmatprep.subr.mxu0 %v5632
        %6824 = vmatpush1.msra.mxu0 %v5631
        %6825 = vmatprep.subr.mxu0 %v5650
        %6826 = vmatpush1.msra.mxu0 %v5649
        %6827 = vmatprep.subr.mxu0 %v5668
        %6828 = vmatpush1.msra.mxu0 %v5667
        %6829 = vmatprep.subr.mxu0 %v5686
        %6830 = vmatpush1.msra.mxu0 %v5685
        %6831 = vmatprep.subr.mxu0 %v5704
        %6832 = vmatpush1.msra.mxu0 %v5703
        %6833 = vmatprep.subr.mxu0 %v5722
        %6834 = vmatpush1.msra.mxu0 %v5721
        %6835 = vmatprep.subr.mxu0 %v5740
        %6836 = vmatpush1.msra.mxu0 %v5739
        %6837 = vmatprep.subr.mxu0 %v5758
        %6838 = vmatpush1.msra.mxu0 %v5757
        %6839 = vmatprep.subr.mxu0 %v5776
        %6840 = vmatpush1.msra.mxu0 %v5775
        %6841 = vmatprep.subr.mxu0 %v5794
        %6842 = vmatpush1.msra.mxu0 %v5793
        %6843 = vmatprep.subr.mxu0 %v5812
        %6844 = vmatpush1.msra.mxu0 %v5811
        %6845 = vmatprep.subr.mxu0 %v5830
        %6846 = vmatpush1.msra.mxu0 %v5829
        %6847 = vmatprep.subr.mxu0 %v5848
        %6848 = vmatpush1.msra.mxu0 %v5847
        %6849 = vmatprep.subr.mxu0 %v5866
        %6850 = vmatpush1.msra.mxu0 %v5865
        %6851 = vmatprep.mubr.f32.mxu0 %v5999
        %6852 = vmatmul.mubr.f32.gmra.mrb[0].mxu0 %v5998
        %v6853 = vpop.f32.mrb[0].mxu0
        %v6854 = vadd.f32 %v6783, %v6853
        %v6855 = vpop.f32.mrb[0].mxu0
        %v6856 = vadd.f32 %v6785, %v6855
        %6857 = vdwg.mxu0
        %6858 = vmatprep.subr.mxu0 %v4158
        %6859 = vmatpush1.msra.mxu0 %v4157
        %6860 = vmatprep.subr.mxu0 %v4176
        %6861 = vmatpush1.msra.mxu0 %v4175
        %6862 = vmatprep.subr.mxu0 %v4194
        %6863 = vmatpush1.msra.mxu0 %v4193
        %6864 = vmatprep.subr.mxu0 %v4212
        %6865 = vmatpush1.msra.mxu0 %v4211
        %6866 = vmatprep.subr.mxu0 %v4230
        %6867 = vmatpush1.msra.mxu0 %v4229
        %6868 = vmatprep.subr.mxu0 %v4248
        %6869 = vmatpush1.msra.mxu0 %v4247
        %6870 = vmatprep.subr.mxu0 %v4266
        %6871 = vmatpush1.msra.mxu0 %v4265
        %6872 = vmatprep.subr.mxu0 %v4284
        %6873 = vmatpush1.msra.mxu0 %v4283
        %6874 = vmatprep.subr.mxu0 %v4302
        %6875 = vmatpush1.msra.mxu0 %v4301
        %6876 = vmatprep.subr.mxu0 %v4320
        %6877 = vmatpush1.msra.mxu0 %v4319
        %6878 = vmatprep.subr.mxu0 %v4338
        %6879 = vmatpush1.msra.mxu0 %v4337
        %6880 = vmatprep.subr.mxu0 %v4356
        %6881 = vmatpush1.msra.mxu0 %v4355
        %6882 = vmatprep.subr.mxu0 %v4374
        %6883 = vmatpush1.msra.mxu0 %v4373
        %6884 = vmatprep.subr.mxu0 %v4392
        %6885 = vmatpush1.msra.mxu0 %v4391
        %6886 = vmatprep.subr.mxu0 %v4410
        %6887 = vmatpush1.msra.mxu0 %v4409
        %6888 = vmatprep.subr.mxu0 %v4428
        %6889 = vmatpush1.msra.mxu0 %v4427
        %6890 = vmatprep.subr.mxu0 %v4446
        %6891 = vmatpush1.msra.mxu0 %v4445
        %6892 = vmatprep.subr.mxu0 %v4464
        %6893 = vmatpush1.msra.mxu0 %v4463
        %6894 = vmatprep.subr.mxu0 %v4482
        %6895 = vmatpush1.msra.mxu0 %v4481
        %6896 = vmatprep.subr.mxu0 %v4500
        %6897 = vmatpush1.msra.mxu0 %v4499
        %6898 = vmatprep.subr.mxu0 %v4518
        %6899 = vmatpush1.msra.mxu0 %v4517
        %6900 = vmatprep.subr.mxu0 %v4536
        %6901 = vmatpush1.msra.mxu0 %v4535
        %6902 = vmatprep.subr.mxu0 %v4554
        %6903 = vmatpush1.msra.mxu0 %v4553
        %6904 = vmatprep.subr.mxu0 %v4572
        %6905 = vmatpush1.msra.mxu0 %v4571
        %6906 = vmatprep.subr.mxu0 %v4590
        %6907 = vmatpush1.msra.mxu0 %v4589
        %6908 = vmatprep.subr.mxu0 %v4608
        %6909 = vmatpush1.msra.mxu0 %v4607
        %6910 = vmatprep.subr.mxu0 %v4626
        %6911 = vmatpush1.msra.mxu0 %v4625
        %6912 = vmatprep.subr.mxu0 %v4644
        %6913 = vmatpush1.msra.mxu0 %v4643
        %6914 = vmatprep.subr.mxu0 %v4662
        %6915 = vmatpush1.msra.mxu0 %v4661
        %6916 = vmatprep.subr.mxu0 %v4680
        %6917 = vmatpush1.msra.mxu0 %v4679
        %6918 = vmatprep.subr.mxu0 %v4698
        %6919 = vmatpush1.msra.mxu0 %v4697
        %6920 = vmatprep.subr.mxu0 %v4716
        %6921 = vmatpush1.msra.mxu0 %v4715
        %6922 = vmatprep.mubr.f32.mxu0 %v5990
        %6923 = vmatmul.mubr.f32.gmra.mrb[0].mxu0 %v5982
        %v6924 = vpop.f32.mrb[0].mxu0
        %v6925 = vadd.f32 %v5918, %v6924
        %v6926 = vpop.f32.mrb[0].mxu0
        %v6927 = vadd.f32 %v5922, %v6926
        %6928 = vdwg.mxu0
        %6929 = vmatprep.subr.mxu0 %v4734
        %6930 = vmatpush1.msra.mxu0 %v4733
        %6931 = vmatprep.subr.mxu0 %v4752
        %6932 = vmatpush1.msra.mxu0 %v4751
        %6933 = vmatprep.subr.mxu0 %v4770
        %6934 = vmatpush1.msra.mxu0 %v4769
        %6935 = vmatprep.subr.mxu0 %v4788
        %6936 = vmatpush1.msra.mxu0 %v4787
        %6937 = vmatprep.subr.mxu0 %v4806
        %6938 = vmatpush1.msra.mxu0 %v4805
        %6939 = vmatprep.subr.mxu0 %v4824
        %6940 = vmatpush1.msra.mxu0 %v4823
        %6941 = vmatprep.subr.mxu0 %v4842
        %6942 = vmatpush1.msra.mxu0 %v4841
        %6943 = vmatprep.subr.mxu0 %v4860
        %6944 = vmatpush1.msra.mxu0 %v4859
        %6945 = vmatprep.subr.mxu0 %v4878
        %6946 = vmatpush1.msra.mxu0 %v4877
        %6947 = vmatprep.subr.mxu0 %v4896
        %6948 = vmatpush1.msra.mxu0 %v4895
        %6949 = vmatprep.subr.mxu0 %v4914
        %6950 = vmatpush1.msra.mxu0 %v4913
        %6951 = vmatprep.subr.mxu0 %v4932
        %6952 = vmatpush1.msra.mxu0 %v4931
        %6953 = vmatprep.subr.mxu0 %v4950
        %6954 = vmatpush1.msra.mxu0 %v4949
        %6955 = vmatprep.subr.mxu0 %v4968
        %6956 = vmatpush1.msra.mxu0 %v4967
        %6957 = vmatprep.subr.mxu0 %v4986
        %6958 = vmatpush1.msra.mxu0 %v4985
        %6959 = vmatprep.subr.mxu0 %v5004
        %6960 = vmatpush1.msra.mxu0 %v5003
        %6961 = vmatprep.subr.mxu0 %v5022
        %6962 = vmatpush1.msra.mxu0 %v5021
        %6963 = vmatprep.subr.mxu0 %v5040
        %6964 = vmatpush1.msra.mxu0 %v5039
        %6965 = vmatprep.subr.mxu0 %v5058
        %6966 = vmatpush1.msra.mxu0 %v5057
        %6967 = vmatprep.subr.mxu0 %v5076
        %6968 = vmatpush1.msra.mxu0 %v5075
        %6969 = vmatprep.subr.mxu0 %v5094
        %6970 = vmatpush1.msra.mxu0 %v5093
        %6971 = vmatprep.subr.mxu0 %v5112
        %6972 = vmatpush1.msra.mxu0 %v5111
        %6973 = vmatprep.subr.mxu0 %v5130
        %6974 = vmatpush1.msra.mxu0 %v5129
        %6975 = vmatprep.subr.mxu0 %v5148
        %6976 = vmatpush1.msra.mxu0 %v5147
        %6977 = vmatprep.subr.mxu0 %v5166
        %6978 = vmatpush1.msra.mxu0 %v5165
        %6979 = vmatprep.subr.mxu0 %v5184
        %6980 = vmatpush1.msra.mxu0 %v5183
        %6981 = vmatprep.subr.mxu0 %v5202
        %6982 = vmatpush1.msra.mxu0 %v5201
        %6983 = vmatprep.subr.mxu0 %v5220
        %6984 = vmatpush1.msra.mxu0 %v5219
        %6985 = vmatprep.subr.mxu0 %v5238
        %6986 = vmatpush1.msra.mxu0 %v5237
        %6987 = vmatprep.subr.mxu0 %v5256
        %6988 = vmatpush1.msra.mxu0 %v5255
        %6989 = vmatprep.subr.mxu0 %v5274
        %6990 = vmatpush1.msra.mxu0 %v5273
        %6991 = vmatprep.subr.mxu0 %v5292
        %6992 = vmatpush1.msra.mxu0 %v5291
        %6993 = vmatprep.mubr.f32.mxu0 %v5991
        %6994 = vmatmul.mubr.f32.gmra.mrb[0].mxu0 %v5989
        %v6995 = vpop.f32.mrb[0].mxu0
        %v6996 = vadd.f32 %v6925, %v6995
        %v6997 = vpop.f32.mrb[0].mxu0
        %v6998 = vadd.f32 %v6927, %v6997
        %6999 = vdwg.mxu0
        %7000 = vmatprep.subr.mxu0 %v5310
        %7001 = vmatpush1.msra.mxu0 %v5309
        %7002 = vmatprep.subr.mxu0 %v5328
        %7003 = vmatpush1.msra.mxu0 %v5327
        %7004 = vmatprep.subr.mxu0 %v5346
        %7005 = vmatpush1.msra.mxu0 %v5345
        %7006 = vmatprep.subr.mxu0 %v5364
        %7007 = vmatpush1.msra.mxu0 %v5363
        %7008 = vmatprep.subr.mxu0 %v5382
        %7009 = vmatpush1.msra.mxu0 %v5381
        %7010 = vmatprep.subr.mxu0 %v5400
        %7011 = vmatpush1.msra.mxu0 %v5399
        %7012 = vmatprep.subr.mxu0 %v5418
        %7013 = vmatpush1.msra.mxu0 %v5417
        %7014 = vmatprep.subr.mxu0 %v5436
        %7015 = vmatpush1.msra.mxu0 %v5435
        %7016 = vmatprep.subr.mxu0 %v5454
        %7017 = vmatpush1.msra.mxu0 %v5453
        %7018 = vmatprep.subr.mxu0 %v5472
        %7019 = vmatpush1.msra.mxu0 %v5471
        %7020 = vmatprep.subr.mxu0 %v5490
        %7021 = vmatpush1.msra.mxu0 %v5489
        %7022 = vmatprep.subr.mxu0 %v5508
        %7023 = vmatpush1.msra.mxu0 %v5507
        %7024 = vmatprep.subr.mxu0 %v5526
        %7025 = vmatpush1.msra.mxu0 %v5525
        %7026 = vmatprep.subr.mxu0 %v5544
        %7027 = vmatpush1.msra.mxu0 %v5543
        %7028 = vmatprep.subr.mxu0 %v5562
        %7029 = vmatpush1.msra.mxu0 %v5561
        %7030 = vmatprep.subr.mxu0 %v5580
        %7031 = vmatpush1.msra.mxu0 %v5579
        %7032 = vmatprep.subr.mxu0 %v5598
        %7033 = vmatpush1.msra.mxu0 %v5597
        %7034 = vmatprep.subr.mxu0 %v5616
        %7035 = vmatpush1.msra.mxu0 %v5615
        %7036 = vmatprep.subr.mxu0 %v5634
        %7037 = vmatpush1.msra.mxu0 %v5633
        %7038 = vmatprep.subr.mxu0 %v5652
        %7039 = vmatpush1.msra.mxu0 %v5651
        %7040 = vmatprep.subr.mxu0 %v5670
        %7041 = vmatpush1.msra.mxu0 %v5669
        %7042 = vmatprep.subr.mxu0 %v5688
        %7043 = vmatpush1.msra.mxu0 %v5687
        %7044 = vmatprep.subr.mxu0 %v5706
        %7045 = vmatpush1.msra.mxu0 %v5705
        %7046 = vmatprep.subr.mxu0 %v5724
        %7047 = vmatpush1.msra.mxu0 %v5723
        %7048 = vmatprep.subr.mxu0 %v5742
        %7049 = vmatpush1.msra.mxu0 %v5741
        %7050 = vmatprep.subr.mxu0 %v5760
        %7051 = vmatpush1.msra.mxu0 %v5759
        %7052 = vmatprep.subr.mxu0 %v5778
        %7053 = vmatpush1.msra.mxu0 %v5777
        %7054 = vmatprep.subr.mxu0 %v5796
        %7055 = vmatpush1.msra.mxu0 %v5795
        %7056 = vmatprep.subr.mxu0 %v5814
        %7057 = vmatpush1.msra.mxu0 %v5813
        %7058 = vmatprep.subr.mxu0 %v5832
        %7059 = vmatpush1.msra.mxu0 %v5831
        %7060 = vmatprep.subr.mxu0 %v5850
        %7061 = vmatpush1.msra.mxu0 %v5849
        %7062 = vmatprep.subr.mxu0 %v5868
        %7063 = vmatpush1.msra.mxu0 %v5867
        %7064 = vmatprep.mubr.f32.mxu0 %v5999
        %7065 = vmatmul.mubr.f32.gmra.mrb[0].mxu0 %v5998
        %v7066 = vpop.f32.mrb[0].mxu0
        %v7067 = vadd.f32 %v6996, %v7066
        %v7068 = vpop.f32.mrb[0].mxu0
        %v7069 = vadd.f32 %v6998, %v7068
        %7070 = vdwg.mxu0
        %7071 = vmatprep.subr.mxu0 %v4160
        %7072 = vmatpush1.msra.mxu0 %v4159
        %7073 = vmatprep.subr.mxu0 %v4178
        %7074 = vmatpush1.msra.mxu0 %v4177
        %7075 = vmatprep.subr.mxu0 %v4196
        %7076 = vmatpush1.msra.mxu0 %v4195
        %7077 = vmatprep.subr.mxu0 %v4214
        %7078 = vmatpush1.msra.mxu0 %v4213
        %7079 = vmatprep.subr.mxu0 %v4232
        %7080 = vmatpush1.msra.mxu0 %v4231
        %7081 = vmatprep.subr.mxu0 %v4250
        %7082 = vmatpush1.msra.mxu0 %v4249
        %7083 = vmatprep.subr.mxu0 %v4268
        %7084 = vmatpush1.msra.mxu0 %v4267
        %7085 = vmatprep.subr.mxu0 %v4286
        %7086 = vmatpush1.msra.mxu0 %v4285
        %7087 = vmatprep.subr.mxu0 %v4304
        %7088 = vmatpush1.msra.mxu0 %v4303
        %7089 = vmatprep.subr.mxu0 %v4322
        %7090 = vmatpush1.msra.mxu0 %v4321
        %7091 = vmatprep.subr.mxu0 %v4340
        %7092 = vmatpush1.msra.mxu0 %v4339
        %7093 = vmatprep.subr.mxu0 %v4358
        %7094 = vmatpush1.msra.mxu0 %v4357
        %7095 = vmatprep.subr.mxu0 %v4376
        %7096 = vmatpush1.msra.mxu0 %v4375
        %7097 = vmatprep.subr.mxu0 %v4394
        %7098 = vmatpush1.msra.mxu0 %v4393
        %7099 = vmatprep.subr.mxu0 %v4412
        %7100 = vmatpush1.msra.mxu0 %v4411
        %7101 = vmatprep.subr.mxu0 %v4430
        %7102 = vmatpush1.msra.mxu0 %v4429
        %7103 = vmatprep.subr.mxu0 %v4448
        %7104 = vmatpush1.msra.mxu0 %v4447
        %7105 = vmatprep.subr.mxu0 %v4466
        %7106 = vmatpush1.msra.mxu0 %v4465
        %7107 = vmatprep.subr.mxu0 %v4484
        %7108 = vmatpush1.msra.mxu0 %v4483
        %7109 = vmatprep.subr.mxu0 %v4502
        %7110 = vmatpush1.msra.mxu0 %v4501
        %7111 = vmatprep.subr.mxu0 %v4520
        %7112 = vmatpush1.msra.mxu0 %v4519
        %7113 = vmatprep.subr.mxu0 %v4538
        %7114 = vmatpush1.msra.mxu0 %v4537
        %7115 = vmatprep.subr.mxu0 %v4556
        %7116 = vmatpush1.msra.mxu0 %v4555
        %7117 = vmatprep.subr.mxu0 %v4574
        %7118 = vmatpush1.msra.mxu0 %v4573
        %7119 = vmatprep.subr.mxu0 %v4592
        %7120 = vmatpush1.msra.mxu0 %v4591
        %7121 = vmatprep.subr.mxu0 %v4610
        %7122 = vmatpush1.msra.mxu0 %v4609
        %7123 = vmatprep.subr.mxu0 %v4628
        %7124 = vmatpush1.msra.mxu0 %v4627
        %7125 = vmatprep.subr.mxu0 %v4646
        %7126 = vmatpush1.msra.mxu0 %v4645
        %7127 = vmatprep.subr.mxu0 %v4664
        %7128 = vmatpush1.msra.mxu0 %v4663
        %7129 = vmatprep.subr.mxu0 %v4682
        %7130 = vmatpush1.msra.mxu0 %v4681
        %7131 = vmatprep.subr.mxu0 %v4700
        %7132 = vmatpush1.msra.mxu0 %v4699
        %7133 = vmatprep.subr.mxu0 %v4718
        %7134 = vmatpush1.msra.mxu0 %v4717
        %7135 = vmatprep.mubr.f32.mxu0 %v5990
        %7136 = vmatmul.mubr.f32.gmra.mrb[0].mxu0 %v5982
        %v7137 = vpop.f32.mrb[0].mxu0
        %v7138 = vadd.f32 %v5926, %v7137
        %v7139 = vpop.f32.mrb[0].mxu0
        %v7140 = vadd.f32 %v5930, %v7139
        %7141 = vdwg.mxu0
        %7142 = vmatprep.subr.mxu0 %v4736
        %7143 = vmatpush1.msra.mxu0 %v4735
        %7144 = vmatprep.subr.mxu0 %v4754
        %7145 = vmatpush1.msra.mxu0 %v4753
        %7146 = vmatprep.subr.mxu0 %v4772
        %7147 = vmatpush1.msra.mxu0 %v4771
        %7148 = vmatprep.subr.mxu0 %v4790
        %7149 = vmatpush1.msra.mxu0 %v4789
        %7150 = vmatprep.subr.mxu0 %v4808
        %7151 = vmatpush1.msra.mxu0 %v4807
        %7152 = vmatprep.subr.mxu0 %v4826
        %7153 = vmatpush1.msra.mxu0 %v4825
        %7154 = vmatprep.subr.mxu0 %v4844
        %7155 = vmatpush1.msra.mxu0 %v4843
        %7156 = vmatprep.subr.mxu0 %v4862
        %7157 = vmatpush1.msra.mxu0 %v4861
        %7158 = vmatprep.subr.mxu0 %v4880
        %7159 = vmatpush1.msra.mxu0 %v4879
        %7160 = vmatprep.subr.mxu0 %v4898
        %7161 = vmatpush1.msra.mxu0 %v4897
        %7162 = vmatprep.subr.mxu0 %v4916
        %7163 = vmatpush1.msra.mxu0 %v4915
        %7164 = vmatprep.subr.mxu0 %v4934
        %7165 = vmatpush1.msra.mxu0 %v4933
        %7166 = vmatprep.subr.mxu0 %v4952
        %7167 = vmatpush1.msra.mxu0 %v4951
        %7168 = vmatprep.subr.mxu0 %v4970
        %7169 = vmatpush1.msra.mxu0 %v4969
        %7170 = vmatprep.subr.mxu0 %v4988
        %7171 = vmatpush1.msra.mxu0 %v4987
        %7172 = vmatprep.subr.mxu0 %v5006
        %7173 = vmatpush1.msra.mxu0 %v5005
        %7174 = vmatprep.subr.mxu0 %v5024
        %7175 = vmatpush1.msra.mxu0 %v5023
        %7176 = vmatprep.subr.mxu0 %v5042
        %7177 = vmatpush1.msra.mxu0 %v5041
        %7178 = vmatprep.subr.mxu0 %v5060
        %7179 = vmatpush1.msra.mxu0 %v5059
        %7180 = vmatprep.subr.mxu0 %v5078
        %7181 = vmatpush1.msra.mxu0 %v5077
        %7182 = vmatprep.subr.mxu0 %v5096
        %7183 = vmatpush1.msra.mxu0 %v5095
        %7184 = vmatprep.subr.mxu0 %v5114
        %7185 = vmatpush1.msra.mxu0 %v5113
        %7186 = vmatprep.subr.mxu0 %v5132
        %7187 = vmatpush1.msra.mxu0 %v5131
        %7188 = vmatprep.subr.mxu0 %v5150
        %7189 = vmatpush1.msra.mxu0 %v5149
        %7190 = vmatprep.subr.mxu0 %v5168
        %7191 = vmatpush1.msra.mxu0 %v5167
        %7192 = vmatprep.subr.mxu0 %v5186
        %7193 = vmatpush1.msra.mxu0 %v5185
        %7194 = vmatprep.subr.mxu0 %v5204
        %7195 = vmatpush1.msra.mxu0 %v5203
        %7196 = vmatprep.subr.mxu0 %v5222
        %7197 = vmatpush1.msra.mxu0 %v5221
        %7198 = vmatprep.subr.mxu0 %v5240
        %7199 = vmatpush1.msra.mxu0 %v5239
        %7200 = vmatprep.subr.mxu0 %v5258
        %7201 = vmatpush1.msra.mxu0 %v5257
        %7202 = vmatprep.subr.mxu0 %v5276
        %7203 = vmatpush1.msra.mxu0 %v5275
        %7204 = vmatprep.subr.mxu0 %v5294
        %7205 = vmatpush1.msra.mxu0 %v5293
        %7206 = vmatprep.mubr.f32.mxu0 %v5991
        %7207 = vmatmul.mubr.f32.gmra.mrb[0].mxu0 %v5989
        %v7208 = vpop.f32.mrb[0].mxu0
        %v7209 = vadd.f32 %v7138, %v7208
        %v7210 = vpop.f32.mrb[0].mxu0
        %v7211 = vadd.f32 %v7140, %v7210
        %7212 = vdwg.mxu0
        %7213 = vmatprep.subr.mxu0 %v5312
        %7214 = vmatpush1.msra.mxu0 %v5311
        %7215 = vmatprep.subr.mxu0 %v5330
        %7216 = vmatpush1.msra.mxu0 %v5329
        %7217 = vmatprep.subr.mxu0 %v5348
        %7218 = vmatpush1.msra.mxu0 %v5347
        %7219 = vmatprep.subr.mxu0 %v5366
        %7220 = vmatpush1.msra.mxu0 %v5365
        %7221 = vmatprep.subr.mxu0 %v5384
        %7222 = vmatpush1.msra.mxu0 %v5383
        %7223 = vmatprep.subr.mxu0 %v5402
        %7224 = vmatpush1.msra.mxu0 %v5401
        %7225 = vmatprep.subr.mxu0 %v5420
        %7226 = vmatpush1.msra.mxu0 %v5419
        %7227 = vmatprep.subr.mxu0 %v5438
        %7228 = vmatpush1.msra.mxu0 %v5437
        %7229 = vmatprep.subr.mxu0 %v5456
        %7230 = vmatpush1.msra.mxu0 %v5455
        %7231 = vmatprep.subr.mxu0 %v5474
        %7232 = vmatpush1.msra.mxu0 %v5473
        %7233 = vmatprep.subr.mxu0 %v5492
        %7234 = vmatpush1.msra.mxu0 %v5491
        %7235 = vmatprep.subr.mxu0 %v5510
        %7236 = vmatpush1.msra.mxu0 %v5509
        %7237 = vmatprep.subr.mxu0 %v5528
        %7238 = vmatpush1.msra.mxu0 %v5527
        %7239 = vmatprep.subr.mxu0 %v5546
        %7240 = vmatpush1.msra.mxu0 %v5545
        %7241 = vmatprep.subr.mxu0 %v5564
        %7242 = vmatpush1.msra.mxu0 %v5563
        %7243 = vmatprep.subr.mxu0 %v5582
        %7244 = vmatpush1.msra.mxu0 %v5581
        %7245 = vmatprep.subr.mxu0 %v5600
        %7246 = vmatpush1.msra.mxu0 %v5599
        %7247 = vmatprep.subr.mxu0 %v5618
        %7248 = vmatpush1.msra.mxu0 %v5617
        %7249 = vmatprep.subr.mxu0 %v5636
        %7250 = vmatpush1.msra.mxu0 %v5635
        %7251 = vmatprep.subr.mxu0 %v5654
        %7252 = vmatpush1.msra.mxu0 %v5653
        %7253 = vmatprep.subr.mxu0 %v5672
        %7254 = vmatpush1.msra.mxu0 %v5671
        %7255 = vmatprep.subr.mxu0 %v5690
        %7256 = vmatpush1.msra.mxu0 %v5689
        %7257 = vmatprep.subr.mxu0 %v5708
        %7258 = vmatpush1.msra.mxu0 %v5707
        %7259 = vmatprep.subr.mxu0 %v5726
        %7260 = vmatpush1.msra.mxu0 %v5725
        %7261 = vmatprep.subr.mxu0 %v5744
        %7262 = vmatpush1.msra.mxu0 %v5743
        %7263 = vmatprep.subr.mxu0 %v5762
        %7264 = vmatpush1.msra.mxu0 %v5761
        %7265 = vmatprep.subr.mxu0 %v5780
        %7266 = vmatpush1.msra.mxu0 %v5779
        %7267 = vmatprep.subr.mxu0 %v5798
        %7268 = vmatpush1.msra.mxu0 %v5797
        %7269 = vmatprep.subr.mxu0 %v5816
        %7270 = vmatpush1.msra.mxu0 %v5815
        %7271 = vmatprep.subr.mxu0 %v5834
        %7272 = vmatpush1.msra.mxu0 %v5833
        %7273 = vmatprep.subr.mxu0 %v5852
        %7274 = vmatpush1.msra.mxu0 %v5851
        %7275 = vmatprep.subr.mxu0 %v5870
        %7276 = vmatpush1.msra.mxu0 %v5869
        %7277 = vmatprep.mubr.f32.mxu0 %v5999
        %7278 = vmatmul.mubr.f32.gmra.mrb[0].mxu0 %v5998
        %v7279 = vpop.f32.mrb[0].mxu0
        %v7280 = vadd.f32 %v7209, %v7279
        %v7281 = vpop.f32.mrb[0].mxu0
        %v7282 = vadd.f32 %v7211, %v7281
        %7283 = vdwg.mxu0
        %7284 = vmatprep.subr.mxu0 %v4162
        %7285 = vmatpush1.msra.mxu0 %v4161
        %7286 = vmatprep.subr.mxu0 %v4180
        %7287 = vmatpush1.msra.mxu0 %v4179
        %7288 = vmatprep.subr.mxu0 %v4198
        %7289 = vmatpush1.msra.mxu0 %v4197
        %7290 = vmatprep.subr.mxu0 %v4216
        %7291 = vmatpush1.msra.mxu0 %v4215
        %7292 = vmatprep.subr.mxu0 %v4234
        %7293 = vmatpush1.msra.mxu0 %v4233
        %7294 = vmatprep.subr.mxu0 %v4252
        %7295 = vmatpush1.msra.mxu0 %v4251
        %7296 = vmatprep.subr.mxu0 %v4270
        %7297 = vmatpush1.msra.mxu0 %v4269
        %7298 = vmatprep.subr.mxu0 %v4288
        %7299 = vmatpush1.msra.mxu0 %v4287
        %7300 = vmatprep.subr.mxu0 %v4306
        %7301 = vmatpush1.msra.mxu0 %v4305
        %7302 = vmatprep.subr.mxu0 %v4324
        %7303 = vmatpush1.msra.mxu0 %v4323
        %7304 = vmatprep.subr.mxu0 %v4342
        %7305 = vmatpush1.msra.mxu0 %v4341
        %7306 = vmatprep.subr.mxu0 %v4360
        %7307 = vmatpush1.msra.mxu0 %v4359
        %7308 = vmatprep.subr.mxu0 %v4378
        %7309 = vmatpush1.msra.mxu0 %v4377
        %7310 = vmatprep.subr.mxu0 %v4396
        %7311 = vmatpush1.msra.mxu0 %v4395
        %7312 = vmatprep.subr.mxu0 %v4414
        %7313 = vmatpush1.msra.mxu0 %v4413
        %7314 = vmatprep.subr.mxu0 %v4432
        %7315 = vmatpush1.msra.mxu0 %v4431
        %7316 = vmatprep.subr.mxu0 %v4450
        %7317 = vmatpush1.msra.mxu0 %v4449
        %7318 = vmatprep.subr.mxu0 %v4468
        %7319 = vmatpush1.msra.mxu0 %v4467
        %7320 = vmatprep.subr.mxu0 %v4486
        %7321 = vmatpush1.msra.mxu0 %v4485
        %7322 = vmatprep.subr.mxu0 %v4504
        %7323 = vmatpush1.msra.mxu0 %v4503
        %7324 = vmatprep.subr.mxu0 %v4522
        %7325 = vmatpush1.msra.mxu0 %v4521
        %7326 = vmatprep.subr.mxu0 %v4540
        %7327 = vmatpush1.msra.mxu0 %v4539
        %7328 = vmatprep.subr.mxu0 %v4558
        %7329 = vmatpush1.msra.mxu0 %v4557
        %7330 = vmatprep.subr.mxu0 %v4576
        %7331 = vmatpush1.msra.mxu0 %v4575
        %7332 = vmatprep.subr.mxu0 %v4594
        %7333 = vmatpush1.msra.mxu0 %v4593
        %7334 = vmatprep.subr.mxu0 %v4612
        %7335 = vmatpush1.msra.mxu0 %v4611
        %7336 = vmatprep.subr.mxu0 %v4630
        %7337 = vmatpush1.msra.mxu0 %v4629
        %7338 = vmatprep.subr.mxu0 %v4648
        %7339 = vmatpush1.msra.mxu0 %v4647
        %7340 = vmatprep.subr.mxu0 %v4666
        %7341 = vmatpush1.msra.mxu0 %v4665
        %7342 = vmatprep.subr.mxu0 %v4684
        %7343 = vmatpush1.msra.mxu0 %v4683
        %7344 = vmatprep.subr.mxu0 %v4702
        %7345 = vmatpush1.msra.mxu0 %v4701
        %7346 = vmatprep.subr.mxu0 %v4720
        %7347 = vmatpush1.msra.mxu0 %v4719
        %7348 = vmatprep.mubr.f32.mxu0 %v5990
        %7349 = vmatmul.mubr.f32.gmra.mrb[0].mxu0 %v5982
        %v7350 = vpop.f32.mrb[0].mxu0
        %v7351 = vadd.f32 %v5934, %v7350
        %v7352 = vpop.f32.mrb[0].mxu0
        %v7353 = vadd.f32 %v5938, %v7352
        %7354 = vdwg.mxu0
        %7355 = vmatprep.subr.mxu0 %v4738
        %7356 = vmatpush1.msra.mxu0 %v4737
        %7357 = vmatprep.subr.mxu0 %v4756
        %7358 = vmatpush1.msra.mxu0 %v4755
        %7359 = vmatprep.subr.mxu0 %v4774
        %7360 = vmatpush1.msra.mxu0 %v4773
        %7361 = vmatprep.subr.mxu0 %v4792
        %7362 = vmatpush1.msra.mxu0 %v4791
        %7363 = vmatprep.subr.mxu0 %v4810
        %7364 = vmatpush1.msra.mxu0 %v4809
        %7365 = vmatprep.subr.mxu0 %v4828
        %7366 = vmatpush1.msra.mxu0 %v4827
        %7367 = vmatprep.subr.mxu0 %v4846
        %7368 = vmatpush1.msra.mxu0 %v4845
        %7369 = vmatprep.subr.mxu0 %v4864
        %7370 = vmatpush1.msra.mxu0 %v4863
        %7371 = vmatprep.subr.mxu0 %v4882
        %7372 = vmatpush1.msra.mxu0 %v4881
        %7373 = vmatprep.subr.mxu0 %v4900
        %7374 = vmatpush1.msra.mxu0 %v4899
        %7375 = vmatprep.subr.mxu0 %v4918
        %7376 = vmatpush1.msra.mxu0 %v4917
        %7377 = vmatprep.subr.mxu0 %v4936
        %7378 = vmatpush1.msra.mxu0 %v4935
        %7379 = vmatprep.subr.mxu0 %v4954
        %7380 = vmatpush1.msra.mxu0 %v4953
        %7381 = vmatprep.subr.mxu0 %v4972
        %7382 = vmatpush1.msra.mxu0 %v4971
        %7383 = vmatprep.subr.mxu0 %v4990
        %7384 = vmatpush1.msra.mxu0 %v4989
        %7385 = vmatprep.subr.mxu0 %v5008
        %7386 = vmatpush1.msra.mxu0 %v5007
        %7387 = vmatprep.subr.mxu0 %v5026
        %7388 = vmatpush1.msra.mxu0 %v5025
        %7389 = vmatprep.subr.mxu0 %v5044
        %7390 = vmatpush1.msra.mxu0 %v5043
        %7391 = vmatprep.subr.mxu0 %v5062
        %7392 = vmatpush1.msra.mxu0 %v5061
        %7393 = vmatprep.subr.mxu0 %v5080
        %7394 = vmatpush1.msra.mxu0 %v5079
        %7395 = vmatprep.subr.mxu0 %v5098
        %7396 = vmatpush1.msra.mxu0 %v5097
        %7397 = vmatprep.subr.mxu0 %v5116
        %7398 = vmatpush1.msra.mxu0 %v5115
        %7399 = vmatprep.subr.mxu0 %v5134
        %7400 = vmatpush1.msra.mxu0 %v5133
        %7401 = vmatprep.subr.mxu0 %v5152
        %7402 = vmatpush1.msra.mxu0 %v5151
        %7403 = vmatprep.subr.mxu0 %v5170
        %7404 = vmatpush1.msra.mxu0 %v5169
        %7405 = vmatprep.subr.mxu0 %v5188
        %7406 = vmatpush1.msra.mxu0 %v5187
        %7407 = vmatprep.subr.mxu0 %v5206
        %7408 = vmatpush1.msra.mxu0 %v5205
        %7409 = vmatprep.subr.mxu0 %v5224
        %7410 = vmatpush1.msra.mxu0 %v5223
        %7411 = vmatprep.subr.mxu0 %v5242
        %7412 = vmatpush1.msra.mxu0 %v5241
        %7413 = vmatprep.subr.mxu0 %v5260
        %7414 = vmatpush1.msra.mxu0 %v5259
        %7415 = vmatprep.subr.mxu0 %v5278
        %7416 = vmatpush1.msra.mxu0 %v5277
        %7417 = vmatprep.subr.mxu0 %v5296
        %7418 = vmatpush1.msra.mxu0 %v5295
        %7419 = vmatprep.mubr.f32.mxu0 %v5991
        %7420 = vmatmul.mubr.f32.gmra.mrb[0].mxu0 %v5989
        %v7421 = vpop.f32.mrb[0].mxu0
        %v7422 = vadd.f32 %v7351, %v7421
        %v7423 = vpop.f32.mrb[0].mxu0
        %v7424 = vadd.f32 %v7353, %v7423
        %7425 = vdwg.mxu0
        %7426 = vmatprep.subr.mxu0 %v5314
        %7427 = vmatpush1.msra.mxu0 %v5313
        %7428 = vmatprep.subr.mxu0 %v5332
        %7429 = vmatpush1.msra.mxu0 %v5331
        %7430 = vmatprep.subr.mxu0 %v5350
        %7431 = vmatpush1.msra.mxu0 %v5349
        %7432 = vmatprep.subr.mxu0 %v5368
        %7433 = vmatpush1.msra.mxu0 %v5367
        %7434 = vmatprep.subr.mxu0 %v5386
        %7435 = vmatpush1.msra.mxu0 %v5385
        %7436 = vmatprep.subr.mxu0 %v5404
        %7437 = vmatpush1.msra.mxu0 %v5403
        %7438 = vmatprep.subr.mxu0 %v5422
        %7439 = vmatpush1.msra.mxu0 %v5421
        %7440 = vmatprep.subr.mxu0 %v5440
        %7441 = vmatpush1.msra.mxu0 %v5439
        %7442 = vmatprep.subr.mxu0 %v5458
        %7443 = vmatpush1.msra.mxu0 %v5457
        %7444 = vmatprep.subr.mxu0 %v5476
        %7445 = vmatpush1.msra.mxu0 %v5475
        %7446 = vmatprep.subr.mxu0 %v5494
        %7447 = vmatpush1.msra.mxu0 %v5493
        %7448 = vmatprep.subr.mxu0 %v5512
        %7449 = vmatpush1.msra.mxu0 %v5511
        %7450 = vmatprep.subr.mxu0 %v5530
        %7451 = vmatpush1.msra.mxu0 %v5529
        %7452 = vmatprep.subr.mxu0 %v5548
        %7453 = vmatpush1.msra.mxu0 %v5547
        %7454 = vmatprep.subr.mxu0 %v5566
        %7455 = vmatpush1.msra.mxu0 %v5565
        %7456 = vmatprep.subr.mxu0 %v5584
        %7457 = vmatpush1.msra.mxu0 %v5583
        %7458 = vmatprep.subr.mxu0 %v5602
        %7459 = vmatpush1.msra.mxu0 %v5601
        %7460 = vmatprep.subr.mxu0 %v5620
        %7461 = vmatpush1.msra.mxu0 %v5619
        %7462 = vmatprep.subr.mxu0 %v5638
        %7463 = vmatpush1.msra.mxu0 %v5637
        %7464 = vmatprep.subr.mxu0 %v5656
        %7465 = vmatpush1.msra.mxu0 %v5655
        %7466 = vmatprep.subr.mxu0 %v5674
        %7467 = vmatpush1.msra.mxu0 %v5673
        %7468 = vmatprep.subr.mxu0 %v5692
        %7469 = vmatpush1.msra.mxu0 %v5691
        %7470 = vmatprep.subr.mxu0 %v5710
        %7471 = vmatpush1.msra.mxu0 %v5709
        %7472 = vmatprep.subr.mxu0 %v5728
        %7473 = vmatpush1.msra.mxu0 %v5727
        %7474 = vmatprep.subr.mxu0 %v5746
        %7475 = vmatpush1.msra.mxu0 %v5745
        %7476 = vmatprep.subr.mxu0 %v5764
        %7477 = vmatpush1.msra.mxu0 %v5763
        %7478 = vmatprep.subr.mxu0 %v5782
        %7479 = vmatpush1.msra.mxu0 %v5781
        %7480 = vmatprep.subr.mxu0 %v5800
        %7481 = vmatpush1.msra.mxu0 %v5799
        %7482 = vmatprep.subr.mxu0 %v5818
        %7483 = vmatpush1.msra.mxu0 %v5817
        %7484 = vmatprep.subr.mxu0 %v5836
        %7485 = vmatpush1.msra.mxu0 %v5835
        %7486 = vmatprep.subr.mxu0 %v5854
        %7487 = vmatpush1.msra.mxu0 %v5853
        %7488 = vmatprep.subr.mxu0 %v5872
        %7489 = vmatpush1.msra.mxu0 %v5871
        %7490 = vmatprep.mubr.f32.mxu0 %v5999
        %7491 = vmatmul.mubr.f32.gmra.mrb[0].mxu0 %v5998
        %v7492 = vpop.f32.mrb[0].mxu0
        %v7493 = vadd.f32 %v7422, %v7492
        %v7494 = vpop.f32.mrb[0].mxu0
        %v7495 = vadd.f32 %v7424, %v7494
        %7496 = vdwg.mxu0
        %7497 = vmatprep.subr.mxu0 %v4164
        %7498 = vmatpush1.msra.mxu0 %v4163
        %7499 = vmatprep.subr.mxu0 %v4182
        %7500 = vmatpush1.msra.mxu0 %v4181
        %7501 = vmatprep.subr.mxu0 %v4200
        %7502 = vmatpush1.msra.mxu0 %v4199
        %7503 = vmatprep.subr.mxu0 %v4218
        %7504 = vmatpush1.msra.mxu0 %v4217
        %7505 = vmatprep.subr.mxu0 %v4236
        %7506 = vmatpush1.msra.mxu0 %v4235
        %7507 = vmatprep.subr.mxu0 %v4254
        %7508 = vmatpush1.msra.mxu0 %v4253
        %7509 = vmatprep.subr.mxu0 %v4272
        %7510 = vmatpush1.msra.mxu0 %v4271
        %7511 = vmatprep.subr.mxu0 %v4290
        %7512 = vmatpush1.msra.mxu0 %v4289
        %7513 = vmatprep.subr.mxu0 %v4308
        %7514 = vmatpush1.msra.mxu0 %v4307
        %7515 = vmatprep.subr.mxu0 %v4326
        %7516 = vmatpush1.msra.mxu0 %v4325
        %7517 = vmatprep.subr.mxu0 %v4344
        %7518 = vmatpush1.msra.mxu0 %v4343
        %7519 = vmatprep.subr.mxu0 %v4362
        %7520 = vmatpush1.msra.mxu0 %v4361
        %7521 = vmatprep.subr.mxu0 %v4380
        %7522 = vmatpush1.msra.mxu0 %v4379
        %7523 = vmatprep.subr.mxu0 %v4398
        %7524 = vmatpush1.msra.mxu0 %v4397
        %7525 = vmatprep.subr.mxu0 %v4416
        %7526 = vmatpush1.msra.mxu0 %v4415
        %7527 = vmatprep.subr.mxu0 %v4434
        %7528 = vmatpush1.msra.mxu0 %v4433
        %7529 = vmatprep.subr.mxu0 %v4452
        %7530 = vmatpush1.msra.mxu0 %v4451
        %7531 = vmatprep.subr.mxu0 %v4470
        %7532 = vmatpush1.msra.mxu0 %v4469
        %7533 = vmatprep.subr.mxu0 %v4488
        %7534 = vmatpush1.msra.mxu0 %v4487
        %7535 = vmatprep.subr.mxu0 %v4506
        %7536 = vmatpush1.msra.mxu0 %v4505
        %7537 = vmatprep.subr.mxu0 %v4524
        %7538 = vmatpush1.msra.mxu0 %v4523
        %7539 = vmatprep.subr.mxu0 %v4542
        %7540 = vmatpush1.msra.mxu0 %v4541
        %7541 = vmatprep.subr.mxu0 %v4560
        %7542 = vmatpush1.msra.mxu0 %v4559
        %7543 = vmatprep.subr.mxu0 %v4578
        %7544 = vmatpush1.msra.mxu0 %v4577
        %7545 = vmatprep.subr.mxu0 %v4596
        %7546 = vmatpush1.msra.mxu0 %v4595
        %7547 = vmatprep.subr.mxu0 %v4614
        %7548 = vmatpush1.msra.mxu0 %v4613
        %7549 = vmatprep.subr.mxu0 %v4632
        %7550 = vmatpush1.msra.mxu0 %v4631
        %7551 = vmatprep.subr.mxu0 %v4650
        %7552 = vmatpush1.msra.mxu0 %v4649
        %7553 = vmatprep.subr.mxu0 %v4668
        %7554 = vmatpush1.msra.mxu0 %v4667
        %7555 = vmatprep.subr.mxu0 %v4686
        %7556 = vmatpush1.msra.mxu0 %v4685
        %7557 = vmatprep.subr.mxu0 %v4704
        %7558 = vmatpush1.msra.mxu0 %v4703
        %7559 = vmatprep.subr.mxu0 %v4722
        %7560 = vmatpush1.msra.mxu0 %v4721
        %7561 = vmatprep.mubr.f32.mxu0 %v5990
        %7562 = vmatmul.mubr.f32.gmra.mrb[0].mxu0 %v5982
        %v7563 = vpop.f32.mrb[0].mxu0
        %v7564 = vadd.f32 %v5942, %v7563
        %v7565 = vpop.f32.mrb[0].mxu0
        %v7566 = vadd.f32 %v5946, %v7565
        %7567 = vdwg.mxu0
        %7568 = vmatprep.subr.mxu0 %v4740
        %7569 = vmatpush1.msra.mxu0 %v4739
        %7570 = vmatprep.subr.mxu0 %v4758
        %7571 = vmatpush1.msra.mxu0 %v4757
        %7572 = vmatprep.subr.mxu0 %v4776
        %7573 = vmatpush1.msra.mxu0 %v4775
        %7574 = vmatprep.subr.mxu0 %v4794
        %7575 = vmatpush1.msra.mxu0 %v4793
        %7576 = vmatprep.subr.mxu0 %v4812
        %7577 = vmatpush1.msra.mxu0 %v4811
        %7578 = vmatprep.subr.mxu0 %v4830
        %7579 = vmatpush1.msra.mxu0 %v4829
        %7580 = vmatprep.subr.mxu0 %v4848
        %7581 = vmatpush1.msra.mxu0 %v4847
        %7582 = vmatprep.subr.mxu0 %v4866
        %7583 = vmatpush1.msra.mxu0 %v4865
        %7584 = vmatprep.subr.mxu0 %v4884
        %7585 = vmatpush1.msra.mxu0 %v4883
        %7586 = vmatprep.subr.mxu0 %v4902
        %7587 = vmatpush1.msra.mxu0 %v4901
        %7588 = vmatprep.subr.mxu0 %v4920
        %7589 = vmatpush1.msra.mxu0 %v4919
        %7590 = vmatprep.subr.mxu0 %v4938
        %7591 = vmatpush1.msra.mxu0 %v4937
        %7592 = vmatprep.subr.mxu0 %v4956
        %7593 = vmatpush1.msra.mxu0 %v4955
        %7594 = vmatprep.subr.mxu0 %v4974
        %7595 = vmatpush1.msra.mxu0 %v4973
        %7596 = vmatprep.subr.mxu0 %v4992
        %7597 = vmatpush1.msra.mxu0 %v4991
        %7598 = vmatprep.subr.mxu0 %v5010
        %7599 = vmatpush1.msra.mxu0 %v5009
        %7600 = vmatprep.subr.mxu0 %v5028
        %7601 = vmatpush1.msra.mxu0 %v5027
        %7602 = vmatprep.subr.mxu0 %v5046
        %7603 = vmatpush1.msra.mxu0 %v5045
        %7604 = vmatprep.subr.mxu0 %v5064
        %7605 = vmatpush1.msra.mxu0 %v5063
        %7606 = vmatprep.subr.mxu0 %v5082
        %7607 = vmatpush1.msra.mxu0 %v5081
        %7608 = vmatprep.subr.mxu0 %v5100
        %7609 = vmatpush1.msra.mxu0 %v5099
        %7610 = vmatprep.subr.mxu0 %v5118
        %7611 = vmatpush1.msra.mxu0 %v5117
        %7612 = vmatprep.subr.mxu0 %v5136
        %7613 = vmatpush1.msra.mxu0 %v5135
        %7614 = vmatprep.subr.mxu0 %v5154
        %7615 = vmatpush1.msra.mxu0 %v5153
        %7616 = vmatprep.subr.mxu0 %v5172
        %7617 = vmatpush1.msra.mxu0 %v5171
        %7618 = vmatprep.subr.mxu0 %v5190
        %7619 = vmatpush1.msra.mxu0 %v5189
        %7620 = vmatprep.subr.mxu0 %v5208
        %7621 = vmatpush1.msra.mxu0 %v5207
        %7622 = vmatprep.subr.mxu0 %v5226
        %7623 = vmatpush1.msra.mxu0 %v5225
        %7624 = vmatprep.subr.mxu0 %v5244
        %7625 = vmatpush1.msra.mxu0 %v5243
        %7626 = vmatprep.subr.mxu0 %v5262
        %7627 = vmatpush1.msra.mxu0 %v5261
        %7628 = vmatprep.subr.mxu0 %v5280
        %7629 = vmatpush1.msra.mxu0 %v5279
        %7630 = vmatprep.subr.mxu0 %v5298
        %7631 = vmatpush1.msra.mxu0 %v5297
        %7632 = vmatprep.mubr.f32.mxu0 %v5991
        %7633 = vmatmul.mubr.f32.gmra.mrb[0].mxu0 %v5989
        %v7634 = vpop.f32.mrb[0].mxu0
        %v7635 = vadd.f32 %v7564, %v7634
        %v7636 = vpop.f32.mrb[0].mxu0
        %v7637 = vadd.f32 %v7566, %v7636
        %7638 = vdwg.mxu0
        %7639 = vmatprep.subr.mxu0 %v5316
        %7640 = vmatpush1.msra.mxu0 %v5315
        %7641 = vmatprep.subr.mxu0 %v5334
        %7642 = vmatpush1.msra.mxu0 %v5333
        %7643 = vmatprep.subr.mxu0 %v5352
        %7644 = vmatpush1.msra.mxu0 %v5351
        %7645 = vmatprep.subr.mxu0 %v5370
        %7646 = vmatpush1.msra.mxu0 %v5369
        %7647 = vmatprep.subr.mxu0 %v5388
        %7648 = vmatpush1.msra.mxu0 %v5387
        %7649 = vmatprep.subr.mxu0 %v5406
        %7650 = vmatpush1.msra.mxu0 %v5405
        %7651 = vmatprep.subr.mxu0 %v5424
        %7652 = vmatpush1.msra.mxu0 %v5423
        %7653 = vmatprep.subr.mxu0 %v5442
        %7654 = vmatpush1.msra.mxu0 %v5441
        %7655 = vmatprep.subr.mxu0 %v5460
        %7656 = vmatpush1.msra.mxu0 %v5459
        %7657 = vmatprep.subr.mxu0 %v5478
        %7658 = vmatpush1.msra.mxu0 %v5477
        %7659 = vmatprep.subr.mxu0 %v5496
        %7660 = vmatpush1.msra.mxu0 %v5495
        %7661 = vmatprep.subr.mxu0 %v5514
        %7662 = vmatpush1.msra.mxu0 %v5513
        %7663 = vmatprep.subr.mxu0 %v5532
        %7664 = vmatpush1.msra.mxu0 %v5531
        %7665 = vmatprep.subr.mxu0 %v5550
        %7666 = vmatpush1.msra.mxu0 %v5549
        %7667 = vmatprep.subr.mxu0 %v5568
        %7668 = vmatpush1.msra.mxu0 %v5567
        %7669 = vmatprep.subr.mxu0 %v5586
        %7670 = vmatpush1.msra.mxu0 %v5585
        %7671 = vmatprep.subr.mxu0 %v5604
        %7672 = vmatpush1.msra.mxu0 %v5603
        %7673 = vmatprep.subr.mxu0 %v5622
        %7674 = vmatpush1.msra.mxu0 %v5621
        %7675 = vmatprep.subr.mxu0 %v5640
        %7676 = vmatpush1.msra.mxu0 %v5639
        %7677 = vmatprep.subr.mxu0 %v5658
        %7678 = vmatpush1.msra.mxu0 %v5657
        %7679 = vmatprep.subr.mxu0 %v5676
        %7680 = vmatpush1.msra.mxu0 %v5675
        %7681 = vmatprep.subr.mxu0 %v5694
        %7682 = vmatpush1.msra.mxu0 %v5693
        %7683 = vmatprep.subr.mxu0 %v5712
        %7684 = vmatpush1.msra.mxu0 %v5711
        %7685 = vmatprep.subr.mxu0 %v5730
        %7686 = vmatpush1.msra.mxu0 %v5729
        %7687 = vmatprep.subr.mxu0 %v5748
        %7688 = vmatpush1.msra.mxu0 %v5747
        %7689 = vmatprep.subr.mxu0 %v5766
        %7690 = vmatpush1.msra.mxu0 %v5765
        %7691 = vmatprep.subr.mxu0 %v5784
        %7692 = vmatpush1.msra.mxu0 %v5783
        %7693 = vmatprep.subr.mxu0 %v5802
        %7694 = vmatpush1.msra.mxu0 %v5801
        %7695 = vmatprep.subr.mxu0 %v5820
        %7696 = vmatpush1.msra.mxu0 %v5819
        %7697 = vmatprep.subr.mxu0 %v5838
        %7698 = vmatpush1.msra.mxu0 %v5837
        %7699 = vmatprep.subr.mxu0 %v5856
        %7700 = vmatpush1.msra.mxu0 %v5855
        %7701 = vmatprep.subr.mxu0 %v5874
        %7702 = vmatpush1.msra.mxu0 %v5873
        %7703 = vmatprep.mubr.f32.mxu0 %v5999
        %7704 = vmatmul.mubr.f32.gmra.mrb[0].mxu0 %v5998
        %v7705 = vpop.f32.mrb[0].mxu0
        %v7706 = vadd.f32 %v7635, %v7705
        %v7707 = vpop.f32.mrb[0].mxu0
        %v7708 = vadd.f32 %v7637, %v7707
        %7709 = vdwg.mxu0
        %7710 = vmatprep.subr.mxu0 %v4166
        %7711 = vmatpush1.msra.mxu0 %v4165
        %7712 = vmatprep.subr.mxu0 %v4184
        %7713 = vmatpush1.msra.mxu0 %v4183
        %7714 = vmatprep.subr.mxu0 %v4202
        %7715 = vmatpush1.msra.mxu0 %v4201
        %7716 = vmatprep.subr.mxu0 %v4220
        %7717 = vmatpush1.msra.mxu0 %v4219
        %7718 = vmatprep.subr.mxu0 %v4238
        %7719 = vmatpush1.msra.mxu0 %v4237
        %7720 = vmatprep.subr.mxu0 %v4256
        %7721 = vmatpush1.msra.mxu0 %v4255
        %7722 = vmatprep.subr.mxu0 %v4274
        %7723 = vmatpush1.msra.mxu0 %v4273
        %7724 = vmatprep.subr.mxu0 %v4292
        %7725 = vmatpush1.msra.mxu0 %v4291
        %7726 = vmatprep.subr.mxu0 %v4310
        %7727 = vmatpush1.msra.mxu0 %v4309
        %7728 = vmatprep.subr.mxu0 %v4328
        %7729 = vmatpush1.msra.mxu0 %v4327
        %7730 = vmatprep.subr.mxu0 %v4346
        %7731 = vmatpush1.msra.mxu0 %v4345
        %7732 = vmatprep.subr.mxu0 %v4364
        %7733 = vmatpush1.msra.mxu0 %v4363
        %7734 = vmatprep.subr.mxu0 %v4382
        %7735 = vmatpush1.msra.mxu0 %v4381
        %7736 = vmatprep.subr.mxu0 %v4400
        %7737 = vmatpush1.msra.mxu0 %v4399
        %7738 = vmatprep.subr.mxu0 %v4418
        %7739 = vmatpush1.msra.mxu0 %v4417
        %7740 = vmatprep.subr.mxu0 %v4436
        %7741 = vmatpush1.msra.mxu0 %v4435
        %7742 = vmatprep.subr.mxu0 %v4454
        %7743 = vmatpush1.msra.mxu0 %v4453
        %7744 = vmatprep.subr.mxu0 %v4472
        %7745 = vmatpush1.msra.mxu0 %v4471
        %7746 = vmatprep.subr.mxu0 %v4490
        %7747 = vmatpush1.msra.mxu0 %v4489
        %7748 = vmatprep.subr.mxu0 %v4508
        %7749 = vmatpush1.msra.mxu0 %v4507
        %7750 = vmatprep.subr.mxu0 %v4526
        %7751 = vmatpush1.msra.mxu0 %v4525
        %7752 = vmatprep.subr.mxu0 %v4544
        %7753 = vmatpush1.msra.mxu0 %v4543
        %7754 = vmatprep.subr.mxu0 %v4562
        %7755 = vmatpush1.msra.mxu0 %v4561
        %7756 = vmatprep.subr.mxu0 %v4580
        %7757 = vmatpush1.msra.mxu0 %v4579
        %7758 = vmatprep.subr.mxu0 %v4598
        %7759 = vmatpush1.msra.mxu0 %v4597
        %7760 = vmatprep.subr.mxu0 %v4616
        %7761 = vmatpush1.msra.mxu0 %v4615
        %7762 = vmatprep.subr.mxu0 %v4634
        %7763 = vmatpush1.msra.mxu0 %v4633
        %7764 = vmatprep.subr.mxu0 %v4652
        %7765 = vmatpush1.msra.mxu0 %v4651
        %7766 = vmatprep.subr.mxu0 %v4670
        %7767 = vmatpush1.msra.mxu0 %v4669
        %7768 = vmatprep.subr.mxu0 %v4688
        %7769 = vmatpush1.msra.mxu0 %v4687
        %7770 = vmatprep.subr.mxu0 %v4706
        %7771 = vmatpush1.msra.mxu0 %v4705
        %7772 = vmatprep.subr.mxu0 %v4724
        %7773 = vmatpush1.msra.mxu0 %v4723
        %7774 = vmatprep.mubr.f32.mxu0 %v5990
        %7775 = vmatmul.mubr.f32.gmra.mrb[0].mxu0 %v5982
        %v7776 = vpop.f32.mrb[0].mxu0
        %v7777 = vadd.f32 %v5950, %v7776
        %v7778 = vpop.f32.mrb[0].mxu0
        %v7779 = vadd.f32 %v5954, %v7778
        %7780 = vdwg.mxu0
        %7781 = vmatprep.subr.mxu0 %v4742
        %7782 = vmatpush1.msra.mxu0 %v4741
        %7783 = vmatprep.subr.mxu0 %v4760
        %7784 = vmatpush1.msra.mxu0 %v4759
        %7785 = vmatprep.subr.mxu0 %v4778
        %7786 = vmatpush1.msra.mxu0 %v4777
        %7787 = vmatprep.subr.mxu0 %v4796
        %7788 = vmatpush1.msra.mxu0 %v4795
        %7789 = vmatprep.subr.mxu0 %v4814
        %7790 = vmatpush1.msra.mxu0 %v4813
        %7791 = vmatprep.subr.mxu0 %v4832
        %7792 = vmatpush1.msra.mxu0 %v4831
        %7793 = vmatprep.subr.mxu0 %v4850
        %7794 = vmatpush1.msra.mxu0 %v4849
        %7795 = vmatprep.subr.mxu0 %v4868
        %7796 = vmatpush1.msra.mxu0 %v4867
        %7797 = vmatprep.subr.mxu0 %v4886
        %7798 = vmatpush1.msra.mxu0 %v4885
        %7799 = vmatprep.subr.mxu0 %v4904
        %7800 = vmatpush1.msra.mxu0 %v4903
        %7801 = vmatprep.subr.mxu0 %v4922
        %7802 = vmatpush1.msra.mxu0 %v4921
        %7803 = vmatprep.subr.mxu0 %v4940
        %7804 = vmatpush1.msra.mxu0 %v4939
        %7805 = vmatprep.subr.mxu0 %v4958
        %7806 = vmatpush1.msra.mxu0 %v4957
        %7807 = vmatprep.subr.mxu0 %v4976
        %7808 = vmatpush1.msra.mxu0 %v4975
        %7809 = vmatprep.subr.mxu0 %v4994
        %7810 = vmatpush1.msra.mxu0 %v4993
        %7811 = vmatprep.subr.mxu0 %v5012
        %7812 = vmatpush1.msra.mxu0 %v5011
        %7813 = vmatprep.subr.mxu0 %v5030
        %7814 = vmatpush1.msra.mxu0 %v5029
        %7815 = vmatprep.subr.mxu0 %v5048
        %7816 = vmatpush1.msra.mxu0 %v5047
        %7817 = vmatprep.subr.mxu0 %v5066
        %7818 = vmatpush1.msra.mxu0 %v5065
        %7819 = vmatprep.subr.mxu0 %v5084
        %7820 = vmatpush1.msra.mxu0 %v5083
        %7821 = vmatprep.subr.mxu0 %v5102
        %7822 = vmatpush1.msra.mxu0 %v5101
        %7823 = vmatprep.subr.mxu0 %v5120
        %7824 = vmatpush1.msra.mxu0 %v5119
        %7825 = vmatprep.subr.mxu0 %v5138
        %7826 = vmatpush1.msra.mxu0 %v5137
        %7827 = vmatprep.subr.mxu0 %v5156
        %7828 = vmatpush1.msra.mxu0 %v5155
        %7829 = vmatprep.subr.mxu0 %v5174
        %7830 = vmatpush1.msra.mxu0 %v5173
        %7831 = vmatprep.subr.mxu0 %v5192
        %7832 = vmatpush1.msra.mxu0 %v5191
        %7833 = vmatprep.subr.mxu0 %v5210
        %7834 = vmatpush1.msra.mxu0 %v5209
        %7835 = vmatprep.subr.mxu0 %v5228
        %7836 = vmatpush1.msra.mxu0 %v5227
        %7837 = vmatprep.subr.mxu0 %v5246
        %7838 = vmatpush1.msra.mxu0 %v5245
        %7839 = vmatprep.subr.mxu0 %v5264
        %7840 = vmatpush1.msra.mxu0 %v5263
        %7841 = vmatprep.subr.mxu0 %v5282
        %7842 = vmatpush1.msra.mxu0 %v5281
        %7843 = vmatprep.subr.mxu0 %v5300
        %7844 = vmatpush1.msra.mxu0 %v5299
        %7845 = vmatprep.mubr.f32.mxu0 %v5991
        %7846 = vmatmul.mubr.f32.gmra.mrb[0].mxu0 %v5989
        %v7847 = vpop.f32.mrb[0].mxu0
        %v7848 = vadd.f32 %v7777, %v7847
        %v7849 = vpop.f32.mrb[0].mxu0
        %v7850 = vadd.f32 %v7779, %v7849
        %7851 = vdwg.mxu0
        %7852 = vmatprep.subr.mxu0 %v5318
        %7853 = vmatpush1.msra.mxu0 %v5317
        %7854 = vmatprep.subr.mxu0 %v5336
        %7855 = vmatpush1.msra.mxu0 %v5335
        %7856 = vmatprep.subr.mxu0 %v5354
        %7857 = vmatpush1.msra.mxu0 %v5353
        %7858 = vmatprep.subr.mxu0 %v5372
        %7859 = vmatpush1.msra.mxu0 %v5371
        %7860 = vmatprep.subr.mxu0 %v5390
        %7861 = vmatpush1.msra.mxu0 %v5389
        %7862 = vmatprep.subr.mxu0 %v5408
        %7863 = vmatpush1.msra.mxu0 %v5407
        %7864 = vmatprep.subr.mxu0 %v5426
        %7865 = vmatpush1.msra.mxu0 %v5425
        %7866 = vmatprep.subr.mxu0 %v5444
        %7867 = vmatpush1.msra.mxu0 %v5443
        %7868 = vmatprep.subr.mxu0 %v5462
        %7869 = vmatpush1.msra.mxu0 %v5461
        %7870 = vmatprep.subr.mxu0 %v5480
        %7871 = vmatpush1.msra.mxu0 %v5479
        %7872 = vmatprep.subr.mxu0 %v5498
        %7873 = vmatpush1.msra.mxu0 %v5497
        %7874 = vmatprep.subr.mxu0 %v5516
        %7875 = vmatpush1.msra.mxu0 %v5515
        %7876 = vmatprep.subr.mxu0 %v5534
        %7877 = vmatpush1.msra.mxu0 %v5533
        %7878 = vmatprep.subr.mxu0 %v5552
        %7879 = vmatpush1.msra.mxu0 %v5551
        %7880 = vmatprep.subr.mxu0 %v5570
        %7881 = vmatpush1.msra.mxu0 %v5569
        %7882 = vmatprep.subr.mxu0 %v5588
        %7883 = vmatpush1.msra.mxu0 %v5587
        %7884 = vmatprep.subr.mxu0 %v5606
        %7885 = vmatpush1.msra.mxu0 %v5605
        %7886 = vmatprep.subr.mxu0 %v5624
        %7887 = vmatpush1.msra.mxu0 %v5623
        %7888 = vmatprep.subr.mxu0 %v5642
        %7889 = vmatpush1.msra.mxu0 %v5641
        %7890 = vmatprep.subr.mxu0 %v5660
        %7891 = vmatpush1.msra.mxu0 %v5659
        %7892 = vmatprep.subr.mxu0 %v5678
        %7893 = vmatpush1.msra.mxu0 %v5677
        %7894 = vmatprep.subr.mxu0 %v5696
        %7895 = vmatpush1.msra.mxu0 %v5695
        %7896 = vmatprep.subr.mxu0 %v5714
        %7897 = vmatpush1.msra.mxu0 %v5713
        %7898 = vmatprep.subr.mxu0 %v5732
        %7899 = vmatpush1.msra.mxu0 %v5731
        %7900 = vmatprep.subr.mxu0 %v5750
        %7901 = vmatpush1.msra.mxu0 %v5749
        %7902 = vmatprep.subr.mxu0 %v5768
        %7903 = vmatpush1.msra.mxu0 %v5767
        %7904 = vmatprep.subr.mxu0 %v5786
        %7905 = vmatpush1.msra.mxu0 %v5785
        %7906 = vmatprep.subr.mxu0 %v5804
        %7907 = vmatpush1.msra.mxu0 %v5803
        %7908 = vmatprep.subr.mxu0 %v5822
        %7909 = vmatpush1.msra.mxu0 %v5821
        %7910 = vmatprep.subr.mxu0 %v5840
        %7911 = vmatpush1.msra.mxu0 %v5839
        %7912 = vmatprep.subr.mxu0 %v5858
        %7913 = vmatpush1.msra.mxu0 %v5857
        %7914 = vmatprep.subr.mxu0 %v5876
        %7915 = vmatpush1.msra.mxu0 %v5875
        %7916 = vmatprep.mubr.f32.mxu0 %v5999
        %7917 = vmatmul.mubr.f32.gmra.mrb[0].mxu0 %v5998
        %v7918 = vpop.f32.mrb[0].mxu0
        %v7919 = vadd.f32 %v7848, %v7918
        %v7920 = vpop.f32.mrb[0].mxu0
        %v7921 = vadd.f32 %v7850, %v7920
        %7922 = vdwg.mxu0
        %v7923 = vadd.f32 %v2441, %v6215
        %v7924 = vadd.f32 %v2443, %v6217
        %v7925 = vadd.f32 %v2654, %v6428
        %v7926 = vadd.f32 %v2656, %v6430
        %v7927 = vadd.f32 %v2867, %v6641
        %v7928 = vadd.f32 %v2869, %v6643
        %v7929 = vsub.f32 0.0, %v7923
        %v7930 = vsub.f32 0.0, %v7924
        %v7931 = vsub.f32 0.0, %v7925
        %v7932 = vsub.f32 0.0, %v7926
        %v7933 = vsub.f32 0.0, %v7927
        %v7934 = vsub.f32 0.0, %v7928
        %v7935 = vmul.f32 %v7929, 1.442695
        %v7936 = vpow.pop %v7935
        %v7937 = vmul.f32 %v7930, 1.442695
        %v7938 = vpow.pop %v7937
        %v7939 = vmul.f32 %v7931, 1.442695
        %v7940 = vpow.pop %v7939
        %v7941 = vmul.f32 %v7932, 1.442695
        %v7942 = vpow.pop %v7941
        %v7943 = vmul.f32 %v7933, 1.442695
        %v7944 = vpow.pop %v7943
        %v7945 = vmul.f32 %v7934, 1.442695
        %v7946 = vpow.pop %v7945
        %v7947 = vadd.f32 %v7936, 1.0
        %v7948 = vadd.f32 %v7938, 1.0
        %v7949 = vadd.f32 %v7940, 1.0
        %v7950 = vadd.f32 %v7942, 1.0
        %v7951 = vadd.f32 %v7944, 1.0
        %v7952 = vadd.f32 %v7946, 1.0
        %v7953 = vrcp.pop %v7947
        %v7954 = vmul.f32 1.0, %v7953
        %v7955 = vrcp.pop %v7948
        %v7956 = vmul.f32 1.0, %v7955
        %v7957 = vrcp.pop %v7949
        %v7958 = vmul.f32 1.0, %v7957
        %v7959 = vrcp.pop %v7950
        %v7960 = vmul.f32 1.0, %v7959
        %v7961 = vrcp.pop %v7951
        %v7962 = vmul.f32 1.0, %v7961
        %v7963 = vrcp.pop %v7952
        %v7964 = vmul.f32 1.0, %v7963
        %v7965 = vadd.f32 %v3080, %v6854
        %v7966 = vadd.f32 %v3082, %v6856
        %v7967 = vadd.f32 %v3293, %v7067
        %v7968 = vadd.f32 %v3295, %v7069
        %v7969 = vadd.f32 %v3506, %v7280
        %v7970 = vadd.f32 %v3508, %v7282
        %v7971 = vsub.f32 0.0, %v7965
        %v7972 = vsub.f32 0.0, %v7966
        %v7973 = vsub.f32 0.0, %v7967
        %v7974 = vsub.f32 0.0, %v7968
        %v7975 = vsub.f32 0.0, %v7969
        %v7976 = vsub.f32 0.0, %v7970
        %v7977 = vmul.f32 %v7971, 1.442695
        %v7978 = vpow.pop %v7977
        %v7979 = vmul.f32 %v7972, 1.442695
        %v7980 = vpow.pop %v7979
        %v7981 = vmul.f32 %v7973, 1.442695
        %v7982 = vpow.pop %v7981
        %v7983 = vmul.f32 %v7974, 1.442695
        %v7984 = vpow.pop %v7983
        %v7985 = vmul.f32 %v7975, 1.442695
        %v7986 = vpow.pop %v7985
        %v7987 = vmul.f32 %v7976, 1.442695
        %v7988 = vpow.pop %v7987
        %v7989 = vadd.f32 %v7978, 1.0
        %v7990 = vadd.f32 %v7980, 1.0
        %v7991 = vadd.f32 %v7982, 1.0
        %v7992 = vadd.f32 %v7984, 1.0
        %v7993 = vadd.f32 %v7986, 1.0
        %v7994 = vadd.f32 %v7988, 1.0
        %v7995 = vrcp.pop %v7989
        %v7996 = vmul.f32 1.0, %v7995
        %v7997 = vrcp.pop %v7990
        %v7998 = vmul.f32 1.0, %v7997
        %v7999 = vrcp.pop %v7991
        %v8000 = vmul.f32 1.0, %v7999
        %v8001 = vrcp.pop %v7992
        %v8002 = vmul.f32 1.0, %v8001
        %v8003 = vrcp.pop %v7993
        %v8004 = vmul.f32 1.0, %v8003
        %v8005 = vrcp.pop %v7994
        %v8006 = vmul.f32 1.0, %v8005
        %v8007 = vmul.f32 %v7954, %v7493
        %v8008 = vmul.f32 %v7956, %v7495
        %v8009 = vmul.f32 %v7958, %v7706
        %v8010 = vmul.f32 %v7960, %v7708
        %v8011 = vmul.f32 %v7962, %v7919
        %v8012 = vmul.f32 %v7964, %v7921
        %v8013 = vadd.f32 %v3719, %v8007
        %v8014 = vadd.f32 %v3721, %v8008
        %v8015 = vadd.f32 %v3932, %v8009
        %v8016 = vadd.f32 %v3934, %v8010
        %v8017 = vadd.f32 %v4145, %v8011
        %v8018 = vadd.f32 %v4147, %v8012
        %v8019 = vtanh.pop %v8013
        %v8020 = vtanh.pop %v8014
        %v8021 = vtanh.pop %v8015
        %v8022 = vtanh.pop %v8016
        %v8023 = vtanh.pop %v8017
        %v8024 = vtanh.pop %v8018
        %v8025 = vsub.f32 1.0, %v7996
        %v8026 = vsub.f32 1.0, %v7998
        %v8027 = vsub.f32 1.0, %v8000
        %v8028 = vsub.f32 1.0, %v8002
        %v8029 = vsub.f32 1.0, %v8004
        %v8030 = vsub.f32 1.0, %v8006
        %v8031 = vmul.f32 %v8025, %v8019
        %v8032 = vmul.f32 %v8026, %v8020
        %v8033 = vmul.f32 %v8027, %v8021
        %v8034 = vmul.f32 %v8028, %v8022
        %v8035 = vmul.f32 %v8029, %v8023
        %v8036 = vmul.f32 %v8030, %v8024
        %v8037 = vmul.f32 %v7996, %v5982
        %v8038 = vmul.f32 %v7998, %v5990
        %v8039 = vmul.f32 %v8000, %v5989
        %v8040 = vmul.f32 %v8002, %v5991
        %v8041 = vmul.f32 %v8004, %v5998
        %v8042 = vmul.f32 %v8006, %v5999
        %v8043 = vadd.f32 %v8031, %v8037
        %v8044 = vadd.f32 %v8032, %v8038
        %v8045 = vadd.f32 %v8033, %v8039
        %v8046 = vadd.f32 %v8034, %v8040
        %v8047 = vadd.f32 %v8035, %v8041
        %v8048 = vadd.f32 %v8036, %v8042
        %v8055 = vcombine.low %v8043, %v8044
        %v8056 = vcombine.low %v8045, %v8046
        %v8058 = vunpack.c.l.s4 1983009808
        %v8059 = vunpack.c.0.s8 %v8058
        %v8060 = vlaneseq
        %v8061 = vshrl.u32 %v8060, 7
        %v8062 = vsub.s32 %v8059, %v8061
        %v8063 = vrot.slane %v8055, %v8062
        %v8065 = vunpack.c.l.s4 1983009808
        %v8066 = vunpack.c.0.s8 %v8065
        %v8067 = vlaneseq
        %v8068 = vshrl.u32 %v8067, 7
        %v8069 = vsub.s32 %v8066, %v8068
        %v8070 = vrot.slane %v8056, %v8069
        %v8071 = vcombine.low %v8063, %v8070
        %v8072 = vcombine.low %v8047, %v8048
        %v8074 = vunpack.c.l.s4 1983009808
        %v8075 = vunpack.c.0.s8 %v8074
        %v8076 = vlaneseq
        %v8077 = vshrl.u32 %v8076, 7
        %v8078 = vsub.s32 %v8075, %v8077
        %v8079 = vrot.slane %v8072, %v8078
        %8082 = vst [vmem:[#allocation2] sm:$0xff] %v8071
        %8083 = vst [vmem:[#allocation2 + $0x8] sm:$0xf] %v8079
        %8084 = vst [vmem:[%s362] sm:$0xff] %v8071
        %8085 = vst [vmem:[%s362 + $0x8] sm:$0xf] %v8079
        %p8086 = scmp.lt.s32.totalorder %s25, 3
        %s8087 = scalar_select %p8086, %s25, 3
        %p8088 = scmp.lt.s32.totalorder %s24, 0
        %s8089 = scalar_select %p8088, %s24, 0
        %s8090 = smul.addr %s8089, 6
        %s8091 = smul.addr %s8087, 6
        %s8092 = sadd.s32 %s8090, %s8091
        %s8093 = smul.addr %s8092, 2
        %s8094 = scalar_lea.vmem %s6, %s8093
        // Predicated region
        $region69: #{state_transition_forward.1} parent=43 // pred_check
          %p8095 = pneg %p190
        $region70: #{state_transition_forward.1} parent=43 // pred_check_branch
          %8097 = sbr.rel (%p8095) target = $region72
        $region71: #{state_transition_forward.1} parent=43 // pred_region
          _
        $region72: #{state_transition_forward.1} parent=43 // pred_fallthru
          _
      $region44: #{state_transition_forward.1} parent=5 // pred_fallthru
        _
      %p8098 = scmp.le.s32.totalorder 2, %s15
      // Predicated region
      $region73: #{state_transition_forward.1} parent=5 // pred_check
        %p8099 = pneg %p8098
      $region74: #{state_transition_forward.1} parent=5 // pred_check_branch
        %8101 = sbr.rel (%p8099) target = $region76
      $region75: #{state_transition_forward.1} parent=5 // pred_region
        %s8102 = ssub.s32 %s15, 2
        // Predicated region
        $region77: #{state_transition_forward.1} parent=75 // pred_check
          %p8103 = pneg %p196
        $region78: #{state_transition_forward.1} parent=75 // pred_check_branch
          %8105 = sbr.rel (%p8103) target = $region80
        $region79: #{state_transition_forward.1} parent=75 // pred_region
          %p8106 = scmp.lt.s32.totalorder %s27, 3
          %s8107 = scalar_select %p8106, %s27, 3
          %p8108 = scmp.lt.s32.totalorder %s26, 0
          %s8109 = scalar_select %p8108, %s26, 0
          %s8110 = smul.addr %s8109, 6
          %s8111 = smul.addr %s8107, 6
          %s8112 = sadd.s32 %s8110, %s8111
          %s8113 = smul.addr %s8112, 2
          %s8114 = scalar_lea.vmem %s6, %s8113
        $region80: #{state_transition_forward.1} parent=75 // pred_fallthru
          _
      $region76: #{state_transition_forward.1} parent=5 // pred_fallthru
        _
    $region6: #{state_transition_forward.1} parent=1 // loop_footer
      %s19 = sadd.s32 1, %s15
    $region7: #{state_transition_forward.1} parent=1 // loop_footer_branch
      %14 = sbr.rel target = $region3
    $region8: #{state_transition_forward.1} parent=1 // loop_exit
      _
    %8115 = vsyncpa [#allocation4], 1
    %s8116 = scalar_lea.sflag [#allocation4], 1
    %8117 = vsyncpa %s8116, 1
    %8118 = vsyncpa [#allocation6], 1
    %8119 = vsyncpa [#allocation9], 1

</llo_original>
